<compile_context>
chip_gen: v7x
topology: tpu7x:2x2x1
jax: 0.10.0
libtpu: 0.0.40
codegen_flags: <defaults>
</compile_context>

<pallas_src>
import functools

import jax
import jax.numpy as jnp
from jax.experimental import pallas as pl
from jax.experimental.pallas import tpu as pltpu

NUM_HEADS = 4
NEG_SLOPE = 0.2  # DGL GATConv default negative_slope
IN_FEAT, HIDDEN_FEAT, OUT_FEAT = 8, 8, 8
HID_COLS = NUM_HEADS * HIDDEN_FEAT             # 32   (layer-1 output width)
OUT_COLS = NUM_HEADS * NUM_HEADS * OUT_FEAT    # 128  (layer-2 output width)

# relation wiring of the synthetic heterograph: (src_type, etype, dst_type)
CANONICAL_ETYPES = [("A", "r0", "B"), ("B", "r1", "A"), ("B", "r2", "B")]


# ----------------------------------------------------------------------------
# In-kernel helpers (traced inside the Pallas body)
# ----------------------------------------------------------------------------
def _col_group_mask(groups, feat):
    """(groups, groups*feat) f32 selector: row g is 1 on columns [g*feat, (g+1)*feat)."""
    cols = groups * feat
    col = jax.lax.broadcasted_iota(jnp.int32, (groups, cols), 1)
    lo = jax.lax.broadcasted_iota(jnp.int32, (groups, cols), 0) * feat
    return ((col >= lo) & (col < lo + feat)).astype(jnp.float32)


def _edge_softmax(el, er, mask):
    """el: (Ns, G) src logits, er: (Nd, G) dst logits, mask: (1, Nd, Ns) bool.

    Returns alpha (G, Nd, Ns): per-(group, dst) softmax over sources.
    """
    e = er.T[:, :, None] + el.T[:, None, :]                      # (G, Nd, Ns)
    e = jnp.where(e > 0, e, jnp.float32(NEG_SLOPE) * e)          # LeakyReLU(0.2)
    e = jnp.where(mask, e, jnp.float32(-1e30))
    m = jnp.max(e, axis=-1, keepdims=True)                       # (G, Nd, 1)
    p = jnp.where(mask, jnp.exp(e - m), 0.0)                     # (G, Nd, Ns)
    # NOTE: approx reciprocal (~1e-4 rel err) is fine for inference tolerance;
    # zero in-degree rows fall back to bias-only output (DGL would raise).
    denom = jnp.maximum(jnp.sum(p, axis=-1, keepdims=True), jnp.float32(1e-20))
    return p * pl.reciprocal(denom, approx=True)


def _aggregate(acc, alpha, fs, colmask):
    """acc (Nd, C) += sum_g alpha[g] @ (fs column-masked to group g's columns).

    Full-width 128(/32)-lane matmuls accumulating into one f32 value -- no
    per-head concatenates, no transposes; consecutive jnp.dot contributions.
    """
    for g in range(alpha.shape[0]):            # static unroll (4 or 16)
        acc = acc + jnp.dot(alpha[g], fs * colmask[g:g + 1, :],
                            preferred_element_type=jnp.float32)
    return acc


# ----------------------------------------------------------------------------
# Fused kernel: both layers, all 3 relations, all layer-1-head prefixes.
# ----------------------------------------------------------------------------
def _fused_rgcn_kernel(n1a, n1b, n2a, n2b,
                       xa_ref, xb_ref,
                       a1r0_ref, a1r1_ref, a1r2_ref,
                       a2r0_ref, a2r1_ref, a2r2_ref,
                       p1a_ref, p1b_ref, p2a_ref, p2b_ref,
                       b1a_ref, b1b_ref, b2a_ref, b2b_ref,
                       out_a_ref, out_b_ref):
    f32 = jnp.float32

    # --- hoisted constants: column-group selectors & edge masks (built once) --
    cm1 = _col_group_mask(NUM_HEADS, HIDDEN_FEAT)                 # (4, 32)
    cm2 = _col_group_mask(NUM_HEADS * NUM_HEADS, OUT_FEAT)        # (16, 128)

    m1r0 = (a1r0_ref[...].astype(f32) > 0.0)[None, :, :]
    m1r1 = (a1r1_ref[...].astype(f32) > 0.0)[None, :, :]
    m1r2 = (a1r2_ref[...].astype(f32) > 0.0)[None, :, :]
    m2r0 = (a2r0_ref[...].astype(f32) > 0.0)[None, :, :]
    m2r1 = (a2r1_ref[...].astype(f32) > 0.0)[None, :, :]
    m2r2 = (a2r2_ref[...].astype(f32) > 0.0)[None, :, :]

    # ---------------- layer 1 : ONE packed projection per src type ----------
    pa = jnp.dot(xa_ref[...], p1a_ref[...], preferred_element_type=f32)  # (Na, 128)
    pb = jnp.dot(xb_ref[...], p1b_ref[...], preferred_element_type=f32)  # (Nb, 128)

    fs_r0, el_r0 = pa[:, 0:32], pa[:, 32:36]
    er_r1 = pa[:n1a, 40:44]                       # A is dst of r1 (prefix rows)
    fs_r1, fs_r2 = pb[:, 0:32], pb[:, 32:64]
    el_r1, el_r2 = pb[:, 64:68], pb[:, 72:76]
    er_r0, er_r2 = pb[:n1b, 80:84], pb[:n1b, 88:92]

    # accumulators initialized with the HeteroGraphConv(sum) combined biases
    y_a = jnp.broadcast_to(b1a_ref[...], (n1a, HID_COLS))
    y_b = jnp.broadcast_to(b1b_ref[...], (n1b, HID_COLS))
    y_b = _aggregate(y_b, _edge_softmax(el_r0, er_r0, m1r0), fs_r0, cm1)  # r0: A->B
    y_a = _aggregate(y_a, _edge_softmax(el_r1, er_r1, m1r1), fs_r1, cm1)  # r1: B->A
    y_b = _aggregate(y_b, _edge_softmax(el_r2, er_r2, m1r2), fs_r2, cm1)  # r2: B->B

    # -------- layer 2 : block-diag over the 4 layer-1 prefix heads ----------
    qa = jnp.dot(y_a, p2a_ref[...], preferred_element_type=f32)   # (n1a, 256)
    qb = jnp.dot(y_b, p2b_ref[...], preferred_element_type=f32)   # (n1b, 384)

    fs2_r0, el2_r0 = qa[:, 0:128], qa[:, 128:144]
    er2_r1 = qa[:n2a, 144:160]
    fs2_r1, fs2_r2 = qb[:, 0:128], qb[:, 128:256]
    el2_r1, el2_r2 = qb[:, 256:272], qb[:, 272:288]
    er2_r0, er2_r2 = qb[:n2b, 288:304], qb[:n2b, 304:320]

    out_a = jnp.broadcast_to(b2a_ref[...], (n2a, OUT_COLS))
    out_b = jnp.broadcast_to(b2b_ref[...], (n2b, OUT_COLS))
    out_b = _aggregate(out_b, _edge_softmax(el2_r0, er2_r0, m2r0), fs2_r0, cm2)
    out_a = _aggregate(out_a, _edge_softmax(el2_r1, er2_r1, m2r1), fs2_r1, cm2)
    out_b = _aggregate(out_b, _edge_softmax(el2_r2, er2_r2, m2r2), fs2_r2, cm2)

    # single lane-dense (N_dst, 128) store per dst type
    out_a_ref[...] = out_a
    out_b_ref[...] = out_b


# ----------------------------------------------------------------------------
# Host-side packing of parameters (fold W into attn vecs, block-diag layer 2)
# ----------------------------------------------------------------------------
def _fold_attn(w, attn):
    din = w.shape[0]
    h, f = attn.shape
    return jnp.einsum("dhf,hf->dh", w.reshape(din, h, f), attn)   # (Din, H)


def _block_diag(m, reps):
    k, c = m.shape
    out = jnp.zeros((reps * k, reps * c), m.dtype)
    for i in range(reps):
        out = out.at[i * k:(i + 1) * k, i * c:(i + 1) * c].set(m)
    return out


def _pack_layer1(lp):
    al = {e: _fold_attn(lp[e]["W"], lp[e]["attn_l"]) for e in ("r0", "r1", "r2")}
    ar = {e: _fold_attn(lp[e]["W"], lp[e]["attn_r"]) for e in ("r0", "r1", "r2")}
    # src-type A: [W_r0 | al_r0 | ar_r1] -> pad to 128 lanes, 8-aligned segments
    pack_a = jnp.zeros((IN_FEAT, 128), jnp.float32)
    pack_a = pack_a.at[:, 0:32].set(lp["r0"]["W"])
    pack_a = pack_a.at[:, 32:36].set(al["r0"])
    pack_a = pack_a.at[:, 40:44].set(ar["r1"])
    # src-type B: [W_r1 | W_r2 | al_r1 | al_r2 | ar_r0 | ar_r2]
    pack_b = jnp.zeros((IN_FEAT, 128), jnp.float32)
    pack_b = pack_b.at[:, 0:32].set(lp["r1"]["W"])
    pack_b = pack_b.at[:, 32:64].set(lp["r2"]["W"])
    pack_b = pack_b.at[:, 64:68].set(al["r1"])
    pack_b = pack_b.at[:, 72:76].set(al["r2"])
    pack_b = pack_b.at[:, 80:84].set(ar["r0"])
    pack_b = pack_b.at[:, 88:92].set(ar["r2"])
    bias_a = lp["r1"]["bias"].reshape(1, HID_COLS)
    bias_b = (lp["r0"]["bias"] + lp["r2"]["bias"]).reshape(1, HID_COLS)
    return pack_a, pack_b, bias_a, bias_b


def _pack_layer2(lp):
    h = NUM_HEADS
    wbd, albd, arbd, btile = {}, {}, {}, {}
    for e in ("r0", "r1", "r2"):
        prm = lp[e]
        wbd[e] = _block_diag(prm["W"], h)                                # (32, 128)
        albd[e] = _block_diag(_fold_attn(prm["W"], prm["attn_l"]), h)    # (32, 16)
        arbd[e] = _block_diag(_fold_attn(prm["W"], prm["attn_r"]), h)    # (32, 16)
        btile[e] = jnp.tile(prm["bias"].reshape(1, h * OUT_FEAT), (1, h))  # (1, 128)
    pack_a = jnp.zeros((HID_COLS, 256), jnp.float32)
    pack_a = pack_a.at[:, 0:128].set(wbd["r0"])
    pack_a = pack_a.at[:, 128:144].set(albd["r0"])
    pack_a = pack_a.at[:, 144:160].set(arbd["r1"])
    pack_b = jnp.zeros((HID_COLS, 384), jnp.float32)
    pack_b = pack_b.at[:, 0:128].set(wbd["r1"])
    pack_b = pack_b.at[:, 128:256].set(wbd["r2"])
    pack_b = pack_b.at[:, 256:272].set(albd["r1"])
    pack_b = pack_b.at[:, 272:288].set(albd["r2"])
    pack_b = pack_b.at[:, 288:304].set(arbd["r0"])
    pack_b = pack_b.at[:, 304:320].set(arbd["r2"])
    return pack_a, pack_b, btile["r1"], btile["r0"] + btile["r2"]


def stochastic_two_layer_rgcn_forward(blocks, x, params):
    blk0, blk1 = blocks
    n1a, n1b = blk0["num_dst"]["A"], blk0["num_dst"]["B"]
    n2a, n2b = blk1["num_dst"]["A"], blk1["num_dst"]["B"]

    # MFG contract: dst nodes are a prefix of src nodes; layer-2 src == layer-1 dst
    assert blk1["num_src"]["A"] == n1a and blk1["num_src"]["B"] == n1b
    assert n2a <= n1a and n2b <= n1b
    assert n1a <= x["A"].shape[0] and n1b <= x["B"].shape[0]

    p1a, p1b, b1a, b1b = _pack_layer1(params[0])
    p2a, p2b, b2a, b2b = _pack_layer2(params[1])

    # int8 adjacency masks (4x less HBM/VMEM than f32 dense masks)
    adjs = [blk0["adjs"]["r0"], blk0["adjs"]["r1"], blk0["adjs"]["r2"],
            blk1["adjs"]["r0"], blk1["adjs"]["r1"], blk1["adjs"]["r2"]]
    adjs = [a.astype(jnp.int8) for a in adjs]

    kernel = functools.partial(_fused_rgcn_kernel, n1a, n1b, n2a, n2b)
    vmem = pl.BlockSpec(memory_space=pltpu.MemorySpace.VMEM)

    out_a, out_b = pl.pallas_call(
        kernel,
        out_shape=(jax.ShapeDtypeStruct((n2a, OUT_COLS), jnp.float32),
                   jax.ShapeDtypeStruct((n2b, OUT_COLS), jnp.float32)),
        in_specs=[vmem] * 16,
        out_specs=(vmem, vmem),
        compiler_params=pltpu.CompilerParams(vmem_limit_bytes=32 * 1024 * 1024),
    )(x["A"], x["B"], *adjs, p1a, p1b, p2a, p2b, b1a, b1b, b2a, b2b)

    # DGL layout (N_dst, heads_l1, heads_l2, out_feat): pure reshape, no transpose
    return {
        "A": out_a.reshape(n2a, NUM_HEADS, NUM_HEADS, OUT_FEAT),
        "B": out_b.reshape(n2b, NUM_HEADS, NUM_HEADS, OUT_FEAT),
    }


# ----------------------------------------------------------------------------
# Pure-JAX reference (same math, no Pallas) for correctness check
# ----------------------------------------------------------------------------
def _gat_ref(x_src, x_dst, adj, params):
    W, al, ar, b = params["W"], params["attn_l"], params["attn_r"], params["bias"]
    H, F = al.shape
    fs = (x_src @ W).reshape(x_src.shape[:-1] + (H, F))
    fd = (x_dst @ W).reshape(x_dst.shape[:-1] + (H, F))
    el = jnp.sum(fs * al, axis=-1)
    er = jnp.sum(fd * ar, axis=-1)
    e = er[:, None] + el[None, :]
    e = jnp.where(e > 0, e, NEG_SLOPE * e)
    mask = (adj > 0).reshape(adj.shape + (1,) * (e.ndim - 2))
    e = jnp.where(mask, e, -1e30)
    e = e - jnp.max(e, axis=1, keepdims=True)
    p = jnp.where(mask, jnp.exp(e), 0.0)
    alpha = p / jnp.sum(p, axis=1, keepdims=True)
    out = jnp.sum(alpha[..., None] * fs[None, ...], axis=1)
    return out + b.reshape((1,) * (out.ndim - 2) + (H, F))


def _ref_forward(blocks, x, params):
    h = x
    for layer_idx, blk in enumerate(blocks):
        outs = {}
        for (stype, etype, dtype) in CANONICAL_ETYPES:
            y = _gat_ref(h[stype], h[dtype][: blk["num_dst"][dtype]],
                         blk["adjs"][etype], params[layer_idx][etype])
            outs[dtype] = y if dtype not in outs else outs[dtype] + y
        h = outs
    return h


# ----------------------------------------------------------------------------
# Deterministic parameter / graph construction
# ----------------------------------------------------------------------------
def make_gat_params(key, din, dout, heads):
    k1, k2, k3, k4 = jax.random.split(key, 4)
    return {
        "W": jax.random.normal(k1, (din, heads * dout), jnp.float32) * 0.1,
        "attn_l": jax.random.normal(k2, (heads, dout), jnp.float32) * 0.1,
        "attn_r": jax.random.normal(k3, (heads, dout), jnp.float32) * 0.1,
        "bias": jax.random.normal(k4, (heads * dout,), jnp.float32) * 0.01,
    }


def make_adj(key, nd, ns):
    a = jax.random.bernoulli(key, 0.4, (nd, ns)).astype(jnp.float32)
    # guarantee every destination has >=1 incoming edge (allow_zero_in_degree=False)
    force = (jnp.arange(ns)[None, :] == (jnp.arange(nd)[:, None] % ns)).astype(jnp.float32)
    return jnp.maximum(a, force)


if __name__ == "__main__":
    key = jax.random.PRNGKey(0)
    keys = jax.random.split(key, 16)

    # MFG blocks (destination nodes are a prefix of source nodes, per DGL)
    block0 = {"num_src": {"A": 12, "B": 10}, "num_dst": {"A": 6, "B": 5}}
    block1 = {"num_src": {"A": 6, "B": 5}, "num_dst": {"A": 3, "B": 2}}

    block0["adjs"] = {
        "r0": make_adj(keys[0], block0["num_dst"]["B"], block0["num_src"]["A"]),
        "r1": make_adj(keys[1], block0["num_dst"]["A"], block0["num_src"]["B"]),
        "r2": make_adj(keys[2], block0["num_dst"]["B"], block0["num_src"]["B"]),
    }
    block1["adjs"] = {
        "r0": make_adj(keys[3], block1["num_dst"]["B"], block1["num_src"]["A"]),
        "r1": make_adj(keys[4], block1["num_dst"]["A"], block1["num_src"]["B"]),
        "r2": make_adj(keys[5], block1["num_dst"]["B"], block1["num_src"]["B"]),
    }
    blocks = [block0, block1]

    params = [
        {e: make_gat_params(keys[6 + i], IN_FEAT, HIDDEN_FEAT, NUM_HEADS)
         for i, (_, e, _) in enumerate(CANONICAL_ETYPES)},
        {e: make_gat_params(keys[9 + i], HIDDEN_FEAT, OUT_FEAT, NUM_HEADS)
         for i, (_, e, _) in enumerate(CANONICAL_ETYPES)},
    ]

    x = {
        "A": jax.random.normal(keys[12], (block0["num_src"]["A"], IN_FEAT), jnp.float32),
        "B": jax.random.normal(keys[13], (block0["num_src"]["B"], IN_FEAT), jnp.float32),
    }

    out = stochastic_two_layer_rgcn_forward(blocks, x, params)
    out = jax.tree_util.tree_map(jax.block_until_ready, out)

    ref = _ref_forward(blocks, x, params)
    for ntype in ("A", "B"):
        assert out[ntype].shape == ref[ntype].shape, ntype
        assert jnp.allclose(out[ntype], ref[ntype], atol=2e-3, rtol=2e-3), ntype

    # final shapes: A -> (3, 4, 4, 8), B -> (2, 4, 4, 8)
    print("KERNEL_OK")
</pallas_src>

<mosaic_0001>
module attributes {stable_mosaic.version = 11 : i64} {
  func.func @_fused_rgcn_kernel(%arg0: memref<12x8xf32, #tpu.memory_space<vmem>>, %arg1: memref<10x8xf32, #tpu.memory_space<vmem>>, %arg2: memref<5x12xi8, #tpu.memory_space<vmem>>, %arg3: memref<6x10xi8, #tpu.memory_space<vmem>>, %arg4: memref<5x10xi8, #tpu.memory_space<vmem>>, %arg5: memref<2x6xi8, #tpu.memory_space<vmem>>, %arg6: memref<3x5xi8, #tpu.memory_space<vmem>>, %arg7: memref<2x5xi8, #tpu.memory_space<vmem>>, %arg8: memref<8x128xf32, #tpu.memory_space<vmem>>, %arg9: memref<8x128xf32, #tpu.memory_space<vmem>>, %arg10: memref<32x256xf32, #tpu.memory_space<vmem>>, %arg11: memref<32x384xf32, #tpu.memory_space<vmem>>, %arg12: memref<1x32xf32, #tpu.memory_space<vmem>>, %arg13: memref<1x32xf32, #tpu.memory_space<vmem>>, %arg14: memref<1x128xf32, #tpu.memory_space<vmem>>, %arg15: memref<1x128xf32, #tpu.memory_space<vmem>>, %arg16: memref<3x128xf32, #tpu.memory_space<vmem>>, %arg17: memref<2x128xf32, #tpu.memory_space<vmem>>) attributes {dimension_semantics = [], scalar_prefetch = 0 : i64, scratch_operands = 0 : i64, tpu.core_type = #tpu.core_type<tc>} {
    %0 = tpu.iota {dimensions = array<i32: 1>} : vector<4x32xi32>
    %1 = tpu.iota {dimensions = array<i32: 0>} : vector<4x32xi32>
    %c8_i32 = arith.constant 8 : i32
    %2 = vector.broadcast %c8_i32 : i32 to vector<4x32xi32>
    %3 = arith.muli %1, %2 : vector<4x32xi32>
    %4 = arith.cmpi sge, %0, %3 : vector<4x32xi32>
    %c8_i32_0 = arith.constant 8 : i32
    %5 = vector.broadcast %c8_i32_0 : i32 to vector<4x32xi32>
    %6 = arith.addi %3, %5 : vector<4x32xi32>
    %7 = arith.cmpi slt, %0, %6 : vector<4x32xi32>
    %8 = arith.andi %4, %7 : vector<4x32xi1>
    %9 = arith.extui %8 : vector<4x32xi1> to vector<4x32xi32>
    %10 = arith.sitofp %9 : vector<4x32xi32> to vector<4x32xf32>
    %11 = tpu.iota {dimensions = array<i32: 1>} : vector<16x128xi32>
    %12 = tpu.iota {dimensions = array<i32: 0>} : vector<16x128xi32>
    %c8_i32_1 = arith.constant 8 : i32
    %13 = vector.broadcast %c8_i32_1 : i32 to vector<16x128xi32>
    %14 = arith.muli %12, %13 : vector<16x128xi32>
    %15 = arith.cmpi sge, %11, %14 : vector<16x128xi32>
    %c8_i32_2 = arith.constant 8 : i32
    %16 = vector.broadcast %c8_i32_2 : i32 to vector<16x128xi32>
    %17 = arith.addi %14, %16 : vector<16x128xi32>
    %18 = arith.cmpi slt, %11, %17 : vector<16x128xi32>
    %19 = arith.andi %15, %18 : vector<16x128xi1>
    %20 = arith.extui %19 : vector<16x128xi1> to vector<16x128xi32>
    %21 = arith.sitofp %20 : vector<16x128xi32> to vector<16x128xf32>
    %c0 = arith.constant 0 : index
    %c0_3 = arith.constant 0 : index
    %22 = vector.load %arg2[%c0, %c0_3] : memref<5x12xi8, #tpu.memory_space<vmem>>, vector<5x12xi8>
    %23 = arith.sitofp %22 : vector<5x12xi8> to vector<5x12xf32>
    %cst = arith.constant 0.000000e+00 : f32
    %24 = vector.broadcast %cst : f32 to vector<5x12xf32>
    %25 = arith.cmpf ogt, %23, %24 : vector<5x12xf32>
    %26 = vector.shape_cast %25 : vector<5x12xi1> to vector<1x5x12xi1>
    %c0_4 = arith.constant 0 : index
    %c0_5 = arith.constant 0 : index
    %27 = vector.load %arg3[%c0_4, %c0_5] : memref<6x10xi8, #tpu.memory_space<vmem>>, vector<6x10xi8>
    %28 = arith.sitofp %27 : vector<6x10xi8> to vector<6x10xf32>
    %cst_6 = arith.constant 0.000000e+00 : f32
    %29 = vector.broadcast %cst_6 : f32 to vector<6x10xf32>
    %30 = arith.cmpf ogt, %28, %29 : vector<6x10xf32>
    %31 = vector.shape_cast %30 : vector<6x10xi1> to vector<1x6x10xi1>
    %c0_7 = arith.constant 0 : index
    %c0_8 = arith.constant 0 : index
    %32 = vector.load %arg4[%c0_7, %c0_8] : memref<5x10xi8, #tpu.memory_space<vmem>>, vector<5x10xi8>
    %33 = arith.sitofp %32 : vector<5x10xi8> to vector<5x10xf32>
    %cst_9 = arith.constant 0.000000e+00 : f32
    %34 = vector.broadcast %cst_9 : f32 to vector<5x10xf32>
    %35 = arith.cmpf ogt, %33, %34 : vector<5x10xf32>
    %36 = vector.shape_cast %35 : vector<5x10xi1> to vector<1x5x10xi1>
    %c0_10 = arith.constant 0 : index
    %c0_11 = arith.constant 0 : index
    %37 = vector.load %arg5[%c0_10, %c0_11] : memref<2x6xi8, #tpu.memory_space<vmem>>, vector<2x6xi8>
    %38 = arith.sitofp %37 : vector<2x6xi8> to vector<2x6xf32>
    %cst_12 = arith.constant 0.000000e+00 : f32
    %39 = vector.broadcast %cst_12 : f32 to vector<2x6xf32>
    %40 = arith.cmpf ogt, %38, %39 : vector<2x6xf32>
    %41 = vector.shape_cast %40 : vector<2x6xi1> to vector<1x2x6xi1>
    %c0_13 = arith.constant 0 : index
    %c0_14 = arith.constant 0 : index
    %42 = vector.load %arg6[%c0_13, %c0_14] : memref<3x5xi8, #tpu.memory_space<vmem>>, vector<3x5xi8>
    %43 = arith.sitofp %42 : vector<3x5xi8> to vector<3x5xf32>
    %cst_15 = arith.constant 0.000000e+00 : f32
    %44 = vector.broadcast %cst_15 : f32 to vector<3x5xf32>
    %45 = arith.cmpf ogt, %43, %44 : vector<3x5xf32>
    %46 = vector.shape_cast %45 : vector<3x5xi1> to vector<1x3x5xi1>
    %c0_16 = arith.constant 0 : index
    %c0_17 = arith.constant 0 : index
    %47 = vector.load %arg7[%c0_16, %c0_17] : memref<2x5xi8, #tpu.memory_space<vmem>>, vector<2x5xi8>
    %48 = arith.sitofp %47 : vector<2x5xi8> to vector<2x5xf32>
    %cst_18 = arith.constant 0.000000e+00 : f32
    %49 = vector.broadcast %cst_18 : f32 to vector<2x5xf32>
    %50 = arith.cmpf ogt, %48, %49 : vector<2x5xf32>
    %51 = vector.shape_cast %50 : vector<2x5xi1> to vector<1x2x5xi1>
    %c0_19 = arith.constant 0 : index
    %c0_20 = arith.constant 0 : index
    %52 = vector.load %arg0[%c0_19, %c0_20] : memref<12x8xf32, #tpu.memory_space<vmem>>, vector<12x8xf32>
    %c0_21 = arith.constant 0 : index
    %c0_22 = arith.constant 0 : index
    %53 = vector.load %arg8[%c0_21, %c0_22] : memref<8x128xf32, #tpu.memory_space<vmem>>, vector<8x128xf32>
    %cst_23 = arith.constant dense<0.000000e+00> : vector<12x128xf32>
    %54 = tpu.matmul %52, %53, %cst_23 {dimension_numbers = #tpu.dot_dimension_numbers<[1], [0], [0], [1], [0, 0, 1, 1], [], []>} : vector<12x8xf32>, vector<8x128xf32>, vector<12x128xf32> -> vector<12x128xf32>
    %c0_24 = arith.constant 0 : index
    %c0_25 = arith.constant 0 : index
    %55 = vector.load %arg1[%c0_24, %c0_25] : memref<10x8xf32, #tpu.memory_space<vmem>>, vector<10x8xf32>
    %c0_26 = arith.constant 0 : index
    %c0_27 = arith.constant 0 : index
    %56 = vector.load %arg9[%c0_26, %c0_27] : memref<8x128xf32, #tpu.memory_space<vmem>>, vector<8x128xf32>
    %cst_28 = arith.constant dense<0.000000e+00> : vector<10x128xf32>
    %57 = tpu.matmul %55, %56, %cst_28 {dimension_numbers = #tpu.dot_dimension_numbers<[1], [0], [0], [1], [0, 0, 1, 1], [], []>} : vector<10x8xf32>, vector<8x128xf32>, vector<10x128xf32> -> vector<10x128xf32>
    %58 = vector.extract_strided_slice %54 {offsets = [0, 0], sizes = [12, 32], strides = [1, 1]} : vector<12x128xf32> to vector<12x32xf32>
    %59 = vector.extract_strided_slice %54 {offsets = [0, 32], sizes = [12, 4], strides = [1, 1]} : vector<12x128xf32> to vector<12x4xf32>
    %60 = vector.extract_strided_slice %54 {offsets = [0, 40], sizes = [6, 4], strides = [1, 1]} : vector<12x128xf32> to vector<6x4xf32>
    %61 = vector.extract_strided_slice %57 {offsets = [0, 0], sizes = [10, 32], strides = [1, 1]} : vector<10x128xf32> to vector<10x32xf32>
    %62 = vector.extract_strided_slice %57 {offsets = [0, 32], sizes = [10, 32], strides = [1, 1]} : vector<10x128xf32> to vector<10x32xf32>
    %63 = vector.extract_strided_slice %57 {offsets = [0, 64], sizes = [10, 4], strides = [1, 1]} : vector<10x128xf32> to vector<10x4xf32>
    %64 = vector.extract_strided_slice %57 {offsets = [0, 72], sizes = [10, 4], strides = [1, 1]} : vector<10x128xf32> to vector<10x4xf32>
    %65 = vector.extract_strided_slice %57 {offsets = [0, 80], sizes = [5, 4], strides = [1, 1]} : vector<10x128xf32> to vector<5x4xf32>
    %66 = vector.extract_strided_slice %57 {offsets = [0, 88], sizes = [5, 4], strides = [1, 1]} : vector<10x128xf32> to vector<5x4xf32>
    %c0_29 = arith.constant 0 : index
    %c0_30 = arith.constant 0 : index
    %67 = vector.load %arg12[%c0_29, %c0_30] : memref<1x32xf32, #tpu.memory_space<vmem>>, vector<1x32xf32>
    %68 = vector.shape_cast %67 : vector<1x32xf32> to vector<1x32xf32>
    %69 = vector.broadcast %68 : vector<1x32xf32> to vector<6x32xf32>
    %c0_31 = arith.constant 0 : index
    %c0_32 = arith.constant 0 : index
    %70 = vector.load %arg13[%c0_31, %c0_32] : memref<1x32xf32, #tpu.memory_space<vmem>>, vector<1x32xf32>
    %71 = vector.shape_cast %70 : vector<1x32xf32> to vector<1x32xf32>
    %72 = vector.broadcast %71 : vector<1x32xf32> to vector<5x32xf32>
    %73 = tpu.transpose %65, [1, 0] : vector<5x4xf32> -> vector<4x5xf32>
    %74 = vector.shape_cast %73 : vector<4x5xf32> to vector<4x5x1xf32>
    %75 = tpu.transpose %59, [1, 0] : vector<12x4xf32> -> vector<4x12xf32>
    %76 = vector.shape_cast %75 : vector<4x12xf32> to vector<4x1x12xf32>
    %77 = vector.broadcast %74 : vector<4x5x1xf32> to vector<4x5x12xf32>
    %78 = vector.broadcast %76 : vector<4x1x12xf32> to vector<4x5x12xf32>
    %79 = arith.addf %77, %78 : vector<4x5x12xf32>
    %cst_33 = arith.constant 0.000000e+00 : f32
    %80 = vector.broadcast %cst_33 : f32 to vector<4x5x12xf32>
    %81 = arith.cmpf ogt, %79, %80 : vector<4x5x12xf32>
    %cst_34 = arith.constant 2.000000e-01 : f32
    %82 = vector.broadcast %cst_34 : f32 to vector<4x5x12xf32>
    %83 = arith.mulf %82, %79 : vector<4x5x12xf32>
    %84 = arith.select %81, %79, %83 : vector<4x5x12xi1>, vector<4x5x12xf32>
    %cst_35 = arith.constant -1.000000e+30 : f32
    %85 = vector.shape_cast %26 : vector<1x5x12xi1> to vector<1x5x12xi1>
    %86 = vector.broadcast %85 : vector<1x5x12xi1> to vector<4x5x12xi1>
    %87 = vector.broadcast %cst_35 : f32 to vector<4x5x12xf32>
    %88 = arith.select %86, %84, %87 : vector<4x5x12xi1>, vector<4x5x12xf32>
    %cst_36 = arith.constant dense<0xFF800000> : vector<4x5xf32>
    %89 = vector.multi_reduction <maximumf>, %88, %cst_36 [2] : vector<4x5x12xf32> to vector<4x5xf32>
    %90 = vector.shape_cast %89 : vector<4x5xf32> to vector<4x5x1xf32>
    %91 = vector.broadcast %90 : vector<4x5x1xf32> to vector<4x5x12xf32>
    %92 = arith.subf %88, %91 : vector<4x5x12xf32>
    %93 = math.exp %92 : vector<4x5x12xf32>
    %cst_37 = arith.constant 0.000000e+00 : f32
    %94 = vector.shape_cast %26 : vector<1x5x12xi1> to vector<1x5x12xi1>
    %95 = vector.broadcast %94 : vector<1x5x12xi1> to vector<4x5x12xi1>
    %96 = vector.broadcast %cst_37 : f32 to vector<4x5x12xf32>
    %97 = arith.select %95, %93, %96 : vector<4x5x12xi1>, vector<4x5x12xf32>
    %cst_38 = arith.constant dense<0.000000e+00> : vector<4x5xf32>
    %98 = vector.multi_reduction <add>, %97, %cst_38 [2] : vector<4x5x12xf32> to vector<4x5xf32>
    %99 = vector.shape_cast %98 : vector<4x5xf32> to vector<4x5x1xf32>
    %cst_39 = arith.constant 9.99999968E-21 : f32
    %100 = vector.broadcast %cst_39 : f32 to vector<4x5x1xf32>
    %101 = arith.maximumf %99, %100 : vector<4x5x1xf32>
    %102 = tpu.reciprocal %101 {approx = true} : vector<4x5x1xf32> -> vector<4x5x1xf32>
    %103 = vector.broadcast %102 : vector<4x5x1xf32> to vector<4x5x12xf32>
    %104 = arith.mulf %97, %103 : vector<4x5x12xf32>
    %105 = vector.extract_strided_slice %104 {offsets = [0, 0, 0], sizes = [1, 5, 12], strides = [1, 1, 1]} : vector<4x5x12xf32> to vector<1x5x12xf32>
    %106 = vector.shape_cast %105 : vector<1x5x12xf32> to vector<5x12xf32>
    %107 = vector.extract_strided_slice %10 {offsets = [0, 0], sizes = [1, 32], strides = [1, 1]} : vector<4x32xf32> to vector<1x32xf32>
    %108 = vector.broadcast %107 : vector<1x32xf32> to vector<12x32xf32>
    %109 = arith.mulf %58, %108 : vector<12x32xf32>
    %cst_40 = arith.constant dense<0.000000e+00> : vector<5x32xf32>
    %110 = tpu.matmul %106, %109, %cst_40 {dimension_numbers = #tpu.dot_dimension_numbers<[1], [0], [0], [1], [0, 0, 1, 1], [], []>} : vector<5x12xf32>, vector<12x32xf32>, vector<5x32xf32> -> vector<5x32xf32>
    %111 = arith.addf %72, %110 : vector<5x32xf32>
    %112 = vector.extract_strided_slice %104 {offsets = [1, 0, 0], sizes = [1, 5, 12], strides = [1, 1, 1]} : vector<4x5x12xf32> to vector<1x5x12xf32>
    %113 = vector.shape_cast %112 : vector<1x5x12xf32> to vector<5x12xf32>
    %114 = vector.extract_strided_slice %10 {offsets = [1, 0], sizes = [1, 32], strides = [1, 1]} : vector<4x32xf32> to vector<1x32xf32>
    %115 = vector.broadcast %114 : vector<1x32xf32> to vector<12x32xf32>
    %116 = arith.mulf %58, %115 : vector<12x32xf32>
    %cst_41 = arith.constant dense<0.000000e+00> : vector<5x32xf32>
    %117 = tpu.matmul %113, %116, %cst_41 {dimension_numbers = #tpu.dot_dimension_numbers<[1], [0], [0], [1], [0, 0, 1, 1], [], []>} : vector<5x12xf32>, vector<12x32xf32>, vector<5x32xf32> -> vector<5x32xf32>
    %118 = arith.addf %111, %117 : vector<5x32xf32>
    %119 = vector.extract_strided_slice %104 {offsets = [2, 0, 0], sizes = [1, 5, 12], strides = [1, 1, 1]} : vector<4x5x12xf32> to vector<1x5x12xf32>
    %120 = vector.shape_cast %119 : vector<1x5x12xf32> to vector<5x12xf32>
    %121 = vector.extract_strided_slice %10 {offsets = [2, 0], sizes = [1, 32], strides = [1, 1]} : vector<4x32xf32> to vector<1x32xf32>
    %122 = vector.broadcast %121 : vector<1x32xf32> to vector<12x32xf32>
    %123 = arith.mulf %58, %122 : vector<12x32xf32>
    %cst_42 = arith.constant dense<0.000000e+00> : vector<5x32xf32>
    %124 = tpu.matmul %120, %123, %cst_42 {dimension_numbers = #tpu.dot_dimension_numbers<[1], [0], [0], [1], [0, 0, 1, 1], [], []>} : vector<5x12xf32>, vector<12x32xf32>, vector<5x32xf32> -> vector<5x32xf32>
    %125 = arith.addf %118, %124 : vector<5x32xf32>
    %126 = vector.extract_strided_slice %104 {offsets = [3, 0, 0], sizes = [1, 5, 12], strides = [1, 1, 1]} : vector<4x5x12xf32> to vector<1x5x12xf32>
    %127 = vector.shape_cast %126 : vector<1x5x12xf32> to vector<5x12xf32>
    %128 = vector.extract_strided_slice %10 {offsets = [3, 0], sizes = [1, 32], strides = [1, 1]} : vector<4x32xf32> to vector<1x32xf32>
    %129 = vector.broadcast %128 : vector<1x32xf32> to vector<12x32xf32>
    %130 = arith.mulf %58, %129 : vector<12x32xf32>
    %cst_43 = arith.constant dense<0.000000e+00> : vector<5x32xf32>
    %131 = tpu.matmul %127, %130, %cst_43 {dimension_numbers = #tpu.dot_dimension_numbers<[1], [0], [0], [1], [0, 0, 1, 1], [], []>} : vector<5x12xf32>, vector<12x32xf32>, vector<5x32xf32> -> vector<5x32xf32>
    %132 = arith.addf %125, %131 : vector<5x32xf32>
    %133 = tpu.transpose %60, [1, 0] : vector<6x4xf32> -> vector<4x6xf32>
    %134 = vector.shape_cast %133 : vector<4x6xf32> to vector<4x6x1xf32>
    %135 = tpu.transpose %63, [1, 0] : vector<10x4xf32> -> vector<4x10xf32>
    %136 = vector.shape_cast %135 : vector<4x10xf32> to vector<4x1x10xf32>
    %137 = vector.broadcast %134 : vector<4x6x1xf32> to vector<4x6x10xf32>
    %138 = vector.broadcast %136 : vector<4x1x10xf32> to vector<4x6x10xf32>
    %139 = arith.addf %137, %138 : vector<4x6x10xf32>
    %cst_44 = arith.constant 0.000000e+00 : f32
    %140 = vector.broadcast %cst_44 : f32 to vector<4x6x10xf32>
    %141 = arith.cmpf ogt, %139, %140 : vector<4x6x10xf32>
    %cst_45 = arith.constant 2.000000e-01 : f32
    %142 = vector.broadcast %cst_45 : f32 to vector<4x6x10xf32>
    %143 = arith.mulf %142, %139 : vector<4x6x10xf32>
    %144 = arith.select %141, %139, %143 : vector<4x6x10xi1>, vector<4x6x10xf32>
    %cst_46 = arith.constant -1.000000e+30 : f32
    %145 = vector.shape_cast %31 : vector<1x6x10xi1> to vector<1x6x10xi1>
    %146 = vector.broadcast %145 : vector<1x6x10xi1> to vector<4x6x10xi1>
    %147 = vector.broadcast %cst_46 : f32 to vector<4x6x10xf32>
    %148 = arith.select %146, %144, %147 : vector<4x6x10xi1>, vector<4x6x10xf32>
    %cst_47 = arith.constant dense<0xFF800000> : vector<4x6xf32>
    %149 = vector.multi_reduction <maximumf>, %148, %cst_47 [2] : vector<4x6x10xf32> to vector<4x6xf32>
    %150 = vector.shape_cast %149 : vector<4x6xf32> to vector<4x6x1xf32>
    %151 = vector.broadcast %150 : vector<4x6x1xf32> to vector<4x6x10xf32>
    %152 = arith.subf %148, %151 : vector<4x6x10xf32>
    %153 = math.exp %152 : vector<4x6x10xf32>
    %cst_48 = arith.constant 0.000000e+00 : f32
    %154 = vector.shape_cast %31 : vector<1x6x10xi1> to vector<1x6x10xi1>
    %155 = vector.broadcast %154 : vector<1x6x10xi1> to vector<4x6x10xi1>
    %156 = vector.broadcast %cst_48 : f32 to vector<4x6x10xf32>
    %157 = arith.select %155, %153, %156 : vector<4x6x10xi1>, vector<4x6x10xf32>
    %cst_49 = arith.constant dense<0.000000e+00> : vector<4x6xf32>
    %158 = vector.multi_reduction <add>, %157, %cst_49 [2] : vector<4x6x10xf32> to vector<4x6xf32>
    %159 = vector.shape_cast %158 : vector<4x6xf32> to vector<4x6x1xf32>
    %cst_50 = arith.constant 9.99999968E-21 : f32
    %160 = vector.broadcast %cst_50 : f32 to vector<4x6x1xf32>
    %161 = arith.maximumf %159, %160 : vector<4x6x1xf32>
    %162 = tpu.reciprocal %161 {approx = true} : vector<4x6x1xf32> -> vector<4x6x1xf32>
    %163 = vector.broadcast %162 : vector<4x6x1xf32> to vector<4x6x10xf32>
    %164 = arith.mulf %157, %163 : vector<4x6x10xf32>
    %165 = vector.extract_strided_slice %164 {offsets = [0, 0, 0], sizes = [1, 6, 10], strides = [1, 1, 1]} : vector<4x6x10xf32> to vector<1x6x10xf32>
    %166 = vector.shape_cast %165 : vector<1x6x10xf32> to vector<6x10xf32>
    %167 = vector.extract_strided_slice %10 {offsets = [0, 0], sizes = [1, 32], strides = [1, 1]} : vector<4x32xf32> to vector<1x32xf32>
    %168 = vector.broadcast %167 : vector<1x32xf32> to vector<10x32xf32>
    %169 = arith.mulf %61, %168 : vector<10x32xf32>
    %cst_51 = arith.constant dense<0.000000e+00> : vector<6x32xf32>
    %170 = tpu.matmul %166, %169, %cst_51 {dimension_numbers = #tpu.dot_dimension_numbers<[1], [0], [0], [1], [0, 0, 1, 1], [], []>} : vector<6x10xf32>, vector<10x32xf32>, vector<6x32xf32> -> vector<6x32xf32>
    %171 = arith.addf %69, %170 : vector<6x32xf32>
    %172 = vector.extract_strided_slice %164 {offsets = [1, 0, 0], sizes = [1, 6, 10], strides = [1, 1, 1]} : vector<4x6x10xf32> to vector<1x6x10xf32>
    %173 = vector.shape_cast %172 : vector<1x6x10xf32> to vector<6x10xf32>
    %174 = vector.extract_strided_slice %10 {offsets = [1, 0], sizes = [1, 32], strides = [1, 1]} : vector<4x32xf32> to vector<1x32xf32>
    %175 = vector.broadcast %174 : vector<1x32xf32> to vector<10x32xf32>
    %176 = arith.mulf %61, %175 : vector<10x32xf32>
    %cst_52 = arith.constant dense<0.000000e+00> : vector<6x32xf32>
    %177 = tpu.matmul %173, %176, %cst_52 {dimension_numbers = #tpu.dot_dimension_numbers<[1], [0], [0], [1], [0, 0, 1, 1], [], []>} : vector<6x10xf32>, vector<10x32xf32>, vector<6x32xf32> -> vector<6x32xf32>
    %178 = arith.addf %171, %177 : vector<6x32xf32>
    %179 = vector.extract_strided_slice %164 {offsets = [2, 0, 0], sizes = [1, 6, 10], strides = [1, 1, 1]} : vector<4x6x10xf32> to vector<1x6x10xf32>
    %180 = vector.shape_cast %179 : vector<1x6x10xf32> to vector<6x10xf32>
    %181 = vector.extract_strided_slice %10 {offsets = [2, 0], sizes = [1, 32], strides = [1, 1]} : vector<4x32xf32> to vector<1x32xf32>
    %182 = vector.broadcast %181 : vector<1x32xf32> to vector<10x32xf32>
    %183 = arith.mulf %61, %182 : vector<10x32xf32>
    %cst_53 = arith.constant dense<0.000000e+00> : vector<6x32xf32>
    %184 = tpu.matmul %180, %183, %cst_53 {dimension_numbers = #tpu.dot_dimension_numbers<[1], [0], [0], [1], [0, 0, 1, 1], [], []>} : vector<6x10xf32>, vector<10x32xf32>, vector<6x32xf32> -> vector<6x32xf32>
    %185 = arith.addf %178, %184 : vector<6x32xf32>
    %186 = vector.extract_strided_slice %164 {offsets = [3, 0, 0], sizes = [1, 6, 10], strides = [1, 1, 1]} : vector<4x6x10xf32> to vector<1x6x10xf32>
    %187 = vector.shape_cast %186 : vector<1x6x10xf32> to vector<6x10xf32>
    %188 = vector.extract_strided_slice %10 {offsets = [3, 0], sizes = [1, 32], strides = [1, 1]} : vector<4x32xf32> to vector<1x32xf32>
    %189 = vector.broadcast %188 : vector<1x32xf32> to vector<10x32xf32>
    %190 = arith.mulf %61, %189 : vector<10x32xf32>
    %cst_54 = arith.constant dense<0.000000e+00> : vector<6x32xf32>
    %191 = tpu.matmul %187, %190, %cst_54 {dimension_numbers = #tpu.dot_dimension_numbers<[1], [0], [0], [1], [0, 0, 1, 1], [], []>} : vector<6x10xf32>, vector<10x32xf32>, vector<6x32xf32> -> vector<6x32xf32>
    %192 = arith.addf %185, %191 : vector<6x32xf32>
    %193 = tpu.transpose %66, [1, 0] : vector<5x4xf32> -> vector<4x5xf32>
    %194 = vector.shape_cast %193 : vector<4x5xf32> to vector<4x5x1xf32>
    %195 = tpu.transpose %64, [1, 0] : vector<10x4xf32> -> vector<4x10xf32>
    %196 = vector.shape_cast %195 : vector<4x10xf32> to vector<4x1x10xf32>
    %197 = vector.broadcast %194 : vector<4x5x1xf32> to vector<4x5x10xf32>
    %198 = vector.broadcast %196 : vector<4x1x10xf32> to vector<4x5x10xf32>
    %199 = arith.addf %197, %198 : vector<4x5x10xf32>
    %cst_55 = arith.constant 0.000000e+00 : f32
    %200 = vector.broadcast %cst_55 : f32 to vector<4x5x10xf32>
    %201 = arith.cmpf ogt, %199, %200 : vector<4x5x10xf32>
    %cst_56 = arith.constant 2.000000e-01 : f32
    %202 = vector.broadcast %cst_56 : f32 to vector<4x5x10xf32>
    %203 = arith.mulf %202, %199 : vector<4x5x10xf32>
    %204 = arith.select %201, %199, %203 : vector<4x5x10xi1>, vector<4x5x10xf32>
    %cst_57 = arith.constant -1.000000e+30 : f32
    %205 = vector.shape_cast %36 : vector<1x5x10xi1> to vector<1x5x10xi1>
    %206 = vector.broadcast %205 : vector<1x5x10xi1> to vector<4x5x10xi1>
    %207 = vector.broadcast %cst_57 : f32 to vector<4x5x10xf32>
    %208 = arith.select %206, %204, %207 : vector<4x5x10xi1>, vector<4x5x10xf32>
    %cst_58 = arith.constant dense<0xFF800000> : vector<4x5xf32>
    %209 = vector.multi_reduction <maximumf>, %208, %cst_58 [2] : vector<4x5x10xf32> to vector<4x5xf32>
    %210 = vector.shape_cast %209 : vector<4x5xf32> to vector<4x5x1xf32>
    %211 = vector.broadcast %210 : vector<4x5x1xf32> to vector<4x5x10xf32>
    %212 = arith.subf %208, %211 : vector<4x5x10xf32>
    %213 = math.exp %212 : vector<4x5x10xf32>
    %cst_59 = arith.constant 0.000000e+00 : f32
    %214 = vector.shape_cast %36 : vector<1x5x10xi1> to vector<1x5x10xi1>
    %215 = vector.broadcast %214 : vector<1x5x10xi1> to vector<4x5x10xi1>
    %216 = vector.broadcast %cst_59 : f32 to vector<4x5x10xf32>
    %217 = arith.select %215, %213, %216 : vector<4x5x10xi1>, vector<4x5x10xf32>
    %cst_60 = arith.constant dense<0.000000e+00> : vector<4x5xf32>
    %218 = vector.multi_reduction <add>, %217, %cst_60 [2] : vector<4x5x10xf32> to vector<4x5xf32>
    %219 = vector.shape_cast %218 : vector<4x5xf32> to vector<4x5x1xf32>
    %cst_61 = arith.constant 9.99999968E-21 : f32
    %220 = vector.broadcast %cst_61 : f32 to vector<4x5x1xf32>
    %221 = arith.maximumf %219, %220 : vector<4x5x1xf32>
    %222 = tpu.reciprocal %221 {approx = true} : vector<4x5x1xf32> -> vector<4x5x1xf32>
    %223 = vector.broadcast %222 : vector<4x5x1xf32> to vector<4x5x10xf32>
    %224 = arith.mulf %217, %223 : vector<4x5x10xf32>
    %225 = vector.extract_strided_slice %224 {offsets = [0, 0, 0], sizes = [1, 5, 10], strides = [1, 1, 1]} : vector<4x5x10xf32> to vector<1x5x10xf32>
    %226 = vector.shape_cast %225 : vector<1x5x10xf32> to vector<5x10xf32>
    %227 = vector.extract_strided_slice %10 {offsets = [0, 0], sizes = [1, 32], strides = [1, 1]} : vector<4x32xf32> to vector<1x32xf32>
    %228 = vector.broadcast %227 : vector<1x32xf32> to vector<10x32xf32>
    %229 = arith.mulf %62, %228 : vector<10x32xf32>
    %cst_62 = arith.constant dense<0.000000e+00> : vector<5x32xf32>
    %230 = tpu.matmul %226, %229, %cst_62 {dimension_numbers = #tpu.dot_dimension_numbers<[1], [0], [0], [1], [0, 0, 1, 1], [], []>} : vector<5x10xf32>, vector<10x32xf32>, vector<5x32xf32> -> vector<5x32xf32>
    %231 = arith.addf %132, %230 : vector<5x32xf32>
    %232 = vector.extract_strided_slice %224 {offsets = [1, 0, 0], sizes = [1, 5, 10], strides = [1, 1, 1]} : vector<4x5x10xf32> to vector<1x5x10xf32>
    %233 = vector.shape_cast %232 : vector<1x5x10xf32> to vector<5x10xf32>
    %234 = vector.extract_strided_slice %10 {offsets = [1, 0], sizes = [1, 32], strides = [1, 1]} : vector<4x32xf32> to vector<1x32xf32>
    %235 = vector.broadcast %234 : vector<1x32xf32> to vector<10x32xf32>
    %236 = arith.mulf %62, %235 : vector<10x32xf32>
    %cst_63 = arith.constant dense<0.000000e+00> : vector<5x32xf32>
    %237 = tpu.matmul %233, %236, %cst_63 {dimension_numbers = #tpu.dot_dimension_numbers<[1], [0], [0], [1], [0, 0, 1, 1], [], []>} : vector<5x10xf32>, vector<10x32xf32>, vector<5x32xf32> -> vector<5x32xf32>
    %238 = arith.addf %231, %237 : vector<5x32xf32>
    %239 = vector.extract_strided_slice %224 {offsets = [2, 0, 0], sizes = [1, 5, 10], strides = [1, 1, 1]} : vector<4x5x10xf32> to vector<1x5x10xf32>
    %240 = vector.shape_cast %239 : vector<1x5x10xf32> to vector<5x10xf32>
    %241 = vector.extract_strided_slice %10 {offsets = [2, 0], sizes = [1, 32], strides = [1, 1]} : vector<4x32xf32> to vector<1x32xf32>
    %242 = vector.broadcast %241 : vector<1x32xf32> to vector<10x32xf32>
    %243 = arith.mulf %62, %242 : vector<10x32xf32>
    %cst_64 = arith.constant dense<0.000000e+00> : vector<5x32xf32>
    %244 = tpu.matmul %240, %243, %cst_64 {dimension_numbers = #tpu.dot_dimension_numbers<[1], [0], [0], [1], [0, 0, 1, 1], [], []>} : vector<5x10xf32>, vector<10x32xf32>, vector<5x32xf32> -> vector<5x32xf32>
    %245 = arith.addf %238, %244 : vector<5x32xf32>
    %246 = vector.extract_strided_slice %224 {offsets = [3, 0, 0], sizes = [1, 5, 10], strides = [1, 1, 1]} : vector<4x5x10xf32> to vector<1x5x10xf32>
    %247 = vector.shape_cast %246 : vector<1x5x10xf32> to vector<5x10xf32>
    %248 = vector.extract_strided_slice %10 {offsets = [3, 0], sizes = [1, 32], strides = [1, 1]} : vector<4x32xf32> to vector<1x32xf32>
    %249 = vector.broadcast %248 : vector<1x32xf32> to vector<10x32xf32>
    %250 = arith.mulf %62, %249 : vector<10x32xf32>
    %cst_65 = arith.constant dense<0.000000e+00> : vector<5x32xf32>
    %251 = tpu.matmul %247, %250, %cst_65 {dimension_numbers = #tpu.dot_dimension_numbers<[1], [0], [0], [1], [0, 0, 1, 1], [], []>} : vector<5x10xf32>, vector<10x32xf32>, vector<5x32xf32> -> vector<5x32xf32>
    %252 = arith.addf %245, %251 : vector<5x32xf32>
    %c0_66 = arith.constant 0 : index
    %c0_67 = arith.constant 0 : index
    %253 = vector.load %arg10[%c0_66, %c0_67] : memref<32x256xf32, #tpu.memory_space<vmem>>, vector<32x256xf32>
    %cst_68 = arith.constant dense<0.000000e+00> : vector<6x256xf32>
    %254 = tpu.matmul %192, %253, %cst_68 {dimension_numbers = #tpu.dot_dimension_numbers<[1], [0], [0], [1], [0, 0, 1, 1], [], []>} : vector<6x32xf32>, vector<32x256xf32>, vector<6x256xf32> -> vector<6x256xf32>
    %c0_69 = arith.constant 0 : index
    %c0_70 = arith.constant 0 : index
    %255 = vector.load %arg11[%c0_69, %c0_70] : memref<32x384xf32, #tpu.memory_space<vmem>>, vector<32x384xf32>
    %cst_71 = arith.constant dense<0.000000e+00> : vector<5x384xf32>
    %256 = tpu.matmul %252, %255, %cst_71 {dimension_numbers = #tpu.dot_dimension_numbers<[1], [0], [0], [1], [0, 0, 1, 1], [], []>} : vector<5x32xf32>, vector<32x384xf32>, vector<5x384xf32> -> vector<5x384xf32>
    %257 = vector.extract_strided_slice %254 {offsets = [0, 0], sizes = [6, 128], strides = [1, 1]} : vector<6x256xf32> to vector<6x128xf32>
    %258 = vector.extract_strided_slice %254 {offsets = [0, 128], sizes = [6, 16], strides = [1, 1]} : vector<6x256xf32> to vector<6x16xf32>
    %259 = vector.extract_strided_slice %254 {offsets = [0, 144], sizes = [3, 16], strides = [1, 1]} : vector<6x256xf32> to vector<3x16xf32>
    %260 = vector.extract_strided_slice %256 {offsets = [0, 0], sizes = [5, 128], strides = [1, 1]} : vector<5x384xf32> to vector<5x128xf32>
    %261 = vector.extract_strided_slice %256 {offsets = [0, 128], sizes = [5, 128], strides = [1, 1]} : vector<5x384xf32> to vector<5x128xf32>
    %262 = vector.extract_strided_slice %256 {offsets = [0, 256], sizes = [5, 16], strides = [1, 1]} : vector<5x384xf32> to vector<5x16xf32>
    %263 = vector.extract_strided_slice %256 {offsets = [0, 272], sizes = [5, 16], strides = [1, 1]} : vector<5x384xf32> to vector<5x16xf32>
    %264 = vector.extract_strided_slice %256 {offsets = [0, 288], sizes = [2, 16], strides = [1, 1]} : vector<5x384xf32> to vector<2x16xf32>
    %265 = vector.extract_strided_slice %256 {offsets = [0, 304], sizes = [2, 16], strides = [1, 1]} : vector<5x384xf32> to vector<2x16xf32>
    %c0_72 = arith.constant 0 : index
    %c0_73 = arith.constant 0 : index
    %266 = vector.load %arg14[%c0_72, %c0_73] : memref<1x128xf32, #tpu.memory_space<vmem>>, vector<1x128xf32>
    %267 = vector.shape_cast %266 : vector<1x128xf32> to vector<1x128xf32>
    %268 = vector.broadcast %267 : vector<1x128xf32> to vector<3x128xf32>
    %c0_74 = arith.constant 0 : index
    %c0_75 = arith.constant 0 : index
    %269 = vector.load %arg15[%c0_74, %c0_75] : memref<1x128xf32, #tpu.memory_space<vmem>>, vector<1x128xf32>
    %270 = vector.shape_cast %269 : vector<1x128xf32> to vector<1x128xf32>
    %271 = vector.broadcast %270 : vector<1x128xf32> to vector<2x128xf32>
    %272 = tpu.transpose %264, [1, 0] : vector<2x16xf32> -> vector<16x2xf32>
    %273 = vector.shape_cast %272 : vector<16x2xf32> to vector<16x2x1xf32>
    %274 = tpu.transpose %258, [1, 0] : vector<6x16xf32> -> vector<16x6xf32>
    %275 = vector.shape_cast %274 : vector<16x6xf32> to vector<16x1x6xf32>
    %276 = vector.broadcast %273 : vector<16x2x1xf32> to vector<16x2x6xf32>
    %277 = vector.broadcast %275 : vector<16x1x6xf32> to vector<16x2x6xf32>
    %278 = arith.addf %276, %277 : vector<16x2x6xf32>
    %cst_76 = arith.constant 0.000000e+00 : f32
    %279 = vector.broadcast %cst_76 : f32 to vector<16x2x6xf32>
    %280 = arith.cmpf ogt, %278, %279 : vector<16x2x6xf32>
    %cst_77 = arith.constant 2.000000e-01 : f32
    %281 = vector.broadcast %cst_77 : f32 to vector<16x2x6xf32>
    %282 = arith.mulf %281, %278 : vector<16x2x6xf32>
    %283 = arith.select %280, %278, %282 : vector<16x2x6xi1>, vector<16x2x6xf32>
    %cst_78 = arith.constant -1.000000e+30 : f32
    %284 = vector.shape_cast %41 : vector<1x2x6xi1> to vector<1x2x6xi1>
    %285 = vector.broadcast %284 : vector<1x2x6xi1> to vector<16x2x6xi1>
    %286 = vector.broadcast %cst_78 : f32 to vector<16x2x6xf32>
    %287 = arith.select %285, %283, %286 : vector<16x2x6xi1>, vector<16x2x6xf32>
    %cst_79 = arith.constant dense<0xFF800000> : vector<16x2xf32>
    %288 = vector.multi_reduction <maximumf>, %287, %cst_79 [2] : vector<16x2x6xf32> to vector<16x2xf32>
    %289 = vector.shape_cast %288 : vector<16x2xf32> to vector<16x2x1xf32>
    %290 = vector.broadcast %289 : vector<16x2x1xf32> to vector<16x2x6xf32>
    %291 = arith.subf %287, %290 : vector<16x2x6xf32>
    %292 = math.exp %291 : vector<16x2x6xf32>
    %cst_80 = arith.constant 0.000000e+00 : f32
    %293 = vector.shape_cast %41 : vector<1x2x6xi1> to vector<1x2x6xi1>
    %294 = vector.broadcast %293 : vector<1x2x6xi1> to vector<16x2x6xi1>
    %295 = vector.broadcast %cst_80 : f32 to vector<16x2x6xf32>
    %296 = arith.select %294, %292, %295 : vector<16x2x6xi1>, vector<16x2x6xf32>
    %cst_81 = arith.constant dense<0.000000e+00> : vector<16x2xf32>
    %297 = vector.multi_reduction <add>, %296, %cst_81 [2] : vector<16x2x6xf32> to vector<16x2xf32>
    %298 = vector.shape_cast %297 : vector<16x2xf32> to vector<16x2x1xf32>
    %cst_82 = arith.constant 9.99999968E-21 : f32
    %299 = vector.broadcast %cst_82 : f32 to vector<16x2x1xf32>
    %300 = arith.maximumf %298, %299 : vector<16x2x1xf32>
    %301 = tpu.reciprocal %300 {approx = true} : vector<16x2x1xf32> -> vector<16x2x1xf32>
    %302 = vector.broadcast %301 : vector<16x2x1xf32> to vector<16x2x6xf32>
    %303 = arith.mulf %296, %302 : vector<16x2x6xf32>
    %304 = vector.extract_strided_slice %303 {offsets = [0, 0, 0], sizes = [1, 2, 6], strides = [1, 1, 1]} : vector<16x2x6xf32> to vector<1x2x6xf32>
    %305 = vector.shape_cast %304 : vector<1x2x6xf32> to vector<2x6xf32>
    %306 = vector.extract_strided_slice %21 {offsets = [0, 0], sizes = [1, 128], strides = [1, 1]} : vector<16x128xf32> to vector<1x128xf32>
    %307 = vector.broadcast %306 : vector<1x128xf32> to vector<6x128xf32>
    %308 = arith.mulf %257, %307 : vector<6x128xf32>
    %cst_83 = arith.constant dense<0.000000e+00> : vector<2x128xf32>
    %309 = tpu.matmul %305, %308, %cst_83 {dimension_numbers = #tpu.dot_dimension_numbers<[1], [0], [0], [1], [0, 0, 1, 1], [], []>} : vector<2x6xf32>, vector<6x128xf32>, vector<2x128xf32> -> vector<2x128xf32>
    %310 = arith.addf %271, %309 : vector<2x128xf32>
    %311 = vector.extract_strided_slice %303 {offsets = [1, 0, 0], sizes = [1, 2, 6], strides = [1, 1, 1]} : vector<16x2x6xf32> to vector<1x2x6xf32>
    %312 = vector.shape_cast %311 : vector<1x2x6xf32> to vector<2x6xf32>
    %313 = vector.extract_strided_slice %21 {offsets = [1, 0], sizes = [1, 128], strides = [1, 1]} : vector<16x128xf32> to vector<1x128xf32>
    %314 = vector.broadcast %313 : vector<1x128xf32> to vector<6x128xf32>
    %315 = arith.mulf %257, %314 : vector<6x128xf32>
    %cst_84 = arith.constant dense<0.000000e+00> : vector<2x128xf32>
    %316 = tpu.matmul %312, %315, %cst_84 {dimension_numbers = #tpu.dot_dimension_numbers<[1], [0], [0], [1], [0, 0, 1, 1], [], []>} : vector<2x6xf32>, vector<6x128xf32>, vector<2x128xf32> -> vector<2x128xf32>
    %317 = arith.addf %310, %316 : vector<2x128xf32>
    %318 = vector.extract_strided_slice %303 {offsets = [2, 0, 0], sizes = [1, 2, 6], strides = [1, 1, 1]} : vector<16x2x6xf32> to vector<1x2x6xf32>
    %319 = vector.shape_cast %318 : vector<1x2x6xf32> to vector<2x6xf32>
    %320 = vector.extract_strided_slice %21 {offsets = [2, 0], sizes = [1, 128], strides = [1, 1]} : vector<16x128xf32> to vector<1x128xf32>
    %321 = vector.broadcast %320 : vector<1x128xf32> to vector<6x128xf32>
    %322 = arith.mulf %257, %321 : vector<6x128xf32>
    %cst_85 = arith.constant dense<0.000000e+00> : vector<2x128xf32>
    %323 = tpu.matmul %319, %322, %cst_85 {dimension_numbers = #tpu.dot_dimension_numbers<[1], [0], [0], [1], [0, 0, 1, 1], [], []>} : vector<2x6xf32>, vector<6x128xf32>, vector<2x128xf32> -> vector<2x128xf32>
    %324 = arith.addf %317, %323 : vector<2x128xf32>
    %325 = vector.extract_strided_slice %303 {offsets = [3, 0, 0], sizes = [1, 2, 6], strides = [1, 1, 1]} : vector<16x2x6xf32> to vector<1x2x6xf32>
    %326 = vector.shape_cast %325 : vector<1x2x6xf32> to vector<2x6xf32>
    %327 = vector.extract_strided_slice %21 {offsets = [3, 0], sizes = [1, 128], strides = [1, 1]} : vector<16x128xf32> to vector<1x128xf32>
    %328 = vector.broadcast %327 : vector<1x128xf32> to vector<6x128xf32>
    %329 = arith.mulf %257, %328 : vector<6x128xf32>
    %cst_86 = arith.constant dense<0.000000e+00> : vector<2x128xf32>
    %330 = tpu.matmul %326, %329, %cst_86 {dimension_numbers = #tpu.dot_dimension_numbers<[1], [0], [0], [1], [0, 0, 1, 1], [], []>} : vector<2x6xf32>, vector<6x128xf32>, vector<2x128xf32> -> vector<2x128xf32>
    %331 = arith.addf %324, %330 : vector<2x128xf32>
    %332 = vector.extract_strided_slice %303 {offsets = [4, 0, 0], sizes = [1, 2, 6], strides = [1, 1, 1]} : vector<16x2x6xf32> to vector<1x2x6xf32>
    %333 = vector.shape_cast %332 : vector<1x2x6xf32> to vector<2x6xf32>
    %334 = vector.extract_strided_slice %21 {offsets = [4, 0], sizes = [1, 128], strides = [1, 1]} : vector<16x128xf32> to vector<1x128xf32>
    %335 = vector.broadcast %334 : vector<1x128xf32> to vector<6x128xf32>
    %336 = arith.mulf %257, %335 : vector<6x128xf32>
    %cst_87 = arith.constant dense<0.000000e+00> : vector<2x128xf32>
    %337 = tpu.matmul %333, %336, %cst_87 {dimension_numbers = #tpu.dot_dimension_numbers<[1], [0], [0], [1], [0, 0, 1, 1], [], []>} : vector<2x6xf32>, vector<6x128xf32>, vector<2x128xf32> -> vector<2x128xf32>
    %338 = arith.addf %331, %337 : vector<2x128xf32>
    %339 = vector.extract_strided_slice %303 {offsets = [5, 0, 0], sizes = [1, 2, 6], strides = [1, 1, 1]} : vector<16x2x6xf32> to vector<1x2x6xf32>
    %340 = vector.shape_cast %339 : vector<1x2x6xf32> to vector<2x6xf32>
    %341 = vector.extract_strided_slice %21 {offsets = [5, 0], sizes = [1, 128], strides = [1, 1]} : vector<16x128xf32> to vector<1x128xf32>
    %342 = vector.broadcast %341 : vector<1x128xf32> to vector<6x128xf32>
    %343 = arith.mulf %257, %342 : vector<6x128xf32>
    %cst_88 = arith.constant dense<0.000000e+00> : vector<2x128xf32>
    %344 = tpu.matmul %340, %343, %cst_88 {dimension_numbers = #tpu.dot_dimension_numbers<[1], [0], [0], [1], [0, 0, 1, 1], [], []>} : vector<2x6xf32>, vector<6x128xf32>, vector<2x128xf32> -> vector<2x128xf32>
    %345 = arith.addf %338, %344 : vector<2x128xf32>
    %346 = vector.extract_strided_slice %303 {offsets = [6, 0, 0], sizes = [1, 2, 6], strides = [1, 1, 1]} : vector<16x2x6xf32> to vector<1x2x6xf32>
    %347 = vector.shape_cast %346 : vector<1x2x6xf32> to vector<2x6xf32>
    %348 = vector.extract_strided_slice %21 {offsets = [6, 0], sizes = [1, 128], strides = [1, 1]} : vector<16x128xf32> to vector<1x128xf32>
    %349 = vector.broadcast %348 : vector<1x128xf32> to vector<6x128xf32>
    %350 = arith.mulf %257, %349 : vector<6x128xf32>
    %cst_89 = arith.constant dense<0.000000e+00> : vector<2x128xf32>
    %351 = tpu.matmul %347, %350, %cst_89 {dimension_numbers = #tpu.dot_dimension_numbers<[1], [0], [0], [1], [0, 0, 1, 1], [], []>} : vector<2x6xf32>, vector<6x128xf32>, vector<2x128xf32> -> vector<2x128xf32>
    %352 = arith.addf %345, %351 : vector<2x128xf32>
    %353 = vector.extract_strided_slice %303 {offsets = [7, 0, 0], sizes = [1, 2, 6], strides = [1, 1, 1]} : vector<16x2x6xf32> to vector<1x2x6xf32>
    %354 = vector.shape_cast %353 : vector<1x2x6xf32> to vector<2x6xf32>
    %355 = vector.extract_strided_slice %21 {offsets = [7, 0], sizes = [1, 128], strides = [1, 1]} : vector<16x128xf32> to vector<1x128xf32>
    %356 = vector.broadcast %355 : vector<1x128xf32> to vector<6x128xf32>
    %357 = arith.mulf %257, %356 : vector<6x128xf32>
    %cst_90 = arith.constant dense<0.000000e+00> : vector<2x128xf32>
    %358 = tpu.matmul %354, %357, %cst_90 {dimension_numbers = #tpu.dot_dimension_numbers<[1], [0], [0], [1], [0, 0, 1, 1], [], []>} : vector<2x6xf32>, vector<6x128xf32>, vector<2x128xf32> -> vector<2x128xf32>
    %359 = arith.addf %352, %358 : vector<2x128xf32>
    %360 = vector.extract_strided_slice %303 {offsets = [8, 0, 0], sizes = [1, 2, 6], strides = [1, 1, 1]} : vector<16x2x6xf32> to vector<1x2x6xf32>
    %361 = vector.shape_cast %360 : vector<1x2x6xf32> to vector<2x6xf32>
    %362 = vector.extract_strided_slice %21 {offsets = [8, 0], sizes = [1, 128], strides = [1, 1]} : vector<16x128xf32> to vector<1x128xf32>
    %363 = vector.broadcast %362 : vector<1x128xf32> to vector<6x128xf32>
    %364 = arith.mulf %257, %363 : vector<6x128xf32>
    %cst_91 = arith.constant dense<0.000000e+00> : vector<2x128xf32>
    %365 = tpu.matmul %361, %364, %cst_91 {dimension_numbers = #tpu.dot_dimension_numbers<[1], [0], [0], [1], [0, 0, 1, 1], [], []>} : vector<2x6xf32>, vector<6x128xf32>, vector<2x128xf32> -> vector<2x128xf32>
    %366 = arith.addf %359, %365 : vector<2x128xf32>
    %367 = vector.extract_strided_slice %303 {offsets = [9, 0, 0], sizes = [1, 2, 6], strides = [1, 1, 1]} : vector<16x2x6xf32> to vector<1x2x6xf32>
    %368 = vector.shape_cast %367 : vector<1x2x6xf32> to vector<2x6xf32>
    %369 = vector.extract_strided_slice %21 {offsets = [9, 0], sizes = [1, 128], strides = [1, 1]} : vector<16x128xf32> to vector<1x128xf32>
    %370 = vector.broadcast %369 : vector<1x128xf32> to vector<6x128xf32>
    %371 = arith.mulf %257, %370 : vector<6x128xf32>
    %cst_92 = arith.constant dense<0.000000e+00> : vector<2x128xf32>
    %372 = tpu.matmul %368, %371, %cst_92 {dimension_numbers = #tpu.dot_dimension_numbers<[1], [0], [0], [1], [0, 0, 1, 1], [], []>} : vector<2x6xf32>, vector<6x128xf32>, vector<2x128xf32> -> vector<2x128xf32>
    %373 = arith.addf %366, %372 : vector<2x128xf32>
    %374 = vector.extract_strided_slice %303 {offsets = [10, 0, 0], sizes = [1, 2, 6], strides = [1, 1, 1]} : vector<16x2x6xf32> to vector<1x2x6xf32>
    %375 = vector.shape_cast %374 : vector<1x2x6xf32> to vector<2x6xf32>
    %376 = vector.extract_strided_slice %21 {offsets = [10, 0], sizes = [1, 128], strides = [1, 1]} : vector<16x128xf32> to vector<1x128xf32>
    %377 = vector.broadcast %376 : vector<1x128xf32> to vector<6x128xf32>
    %378 = arith.mulf %257, %377 : vector<6x128xf32>
    %cst_93 = arith.constant dense<0.000000e+00> : vector<2x128xf32>
    %379 = tpu.matmul %375, %378, %cst_93 {dimension_numbers = #tpu.dot_dimension_numbers<[1], [0], [0], [1], [0, 0, 1, 1], [], []>} : vector<2x6xf32>, vector<6x128xf32>, vector<2x128xf32> -> vector<2x128xf32>
    %380 = arith.addf %373, %379 : vector<2x128xf32>
    %381 = vector.extract_strided_slice %303 {offsets = [11, 0, 0], sizes = [1, 2, 6], strides = [1, 1, 1]} : vector<16x2x6xf32> to vector<1x2x6xf32>
    %382 = vector.shape_cast %381 : vector<1x2x6xf32> to vector<2x6xf32>
    %383 = vector.extract_strided_slice %21 {offsets = [11, 0], sizes = [1, 128], strides = [1, 1]} : vector<16x128xf32> to vector<1x128xf32>
    %384 = vector.broadcast %383 : vector<1x128xf32> to vector<6x128xf32>
    %385 = arith.mulf %257, %384 : vector<6x128xf32>
    %cst_94 = arith.constant dense<0.000000e+00> : vector<2x128xf32>
    %386 = tpu.matmul %382, %385, %cst_94 {dimension_numbers = #tpu.dot_dimension_numbers<[1], [0], [0], [1], [0, 0, 1, 1], [], []>} : vector<2x6xf32>, vector<6x128xf32>, vector<2x128xf32> -> vector<2x128xf32>
    %387 = arith.addf %380, %386 : vector<2x128xf32>
    %388 = vector.extract_strided_slice %303 {offsets = [12, 0, 0], sizes = [1, 2, 6], strides = [1, 1, 1]} : vector<16x2x6xf32> to vector<1x2x6xf32>
    %389 = vector.shape_cast %388 : vector<1x2x6xf32> to vector<2x6xf32>
    %390 = vector.extract_strided_slice %21 {offsets = [12, 0], sizes = [1, 128], strides = [1, 1]} : vector<16x128xf32> to vector<1x128xf32>
    %391 = vector.broadcast %390 : vector<1x128xf32> to vector<6x128xf32>
    %392 = arith.mulf %257, %391 : vector<6x128xf32>
    %cst_95 = arith.constant dense<0.000000e+00> : vector<2x128xf32>
    %393 = tpu.matmul %389, %392, %cst_95 {dimension_numbers = #tpu.dot_dimension_numbers<[1], [0], [0], [1], [0, 0, 1, 1], [], []>} : vector<2x6xf32>, vector<6x128xf32>, vector<2x128xf32> -> vector<2x128xf32>
    %394 = arith.addf %387, %393 : vector<2x128xf32>
    %395 = vector.extract_strided_slice %303 {offsets = [13, 0, 0], sizes = [1, 2, 6], strides = [1, 1, 1]} : vector<16x2x6xf32> to vector<1x2x6xf32>
    %396 = vector.shape_cast %395 : vector<1x2x6xf32> to vector<2x6xf32>
    %397 = vector.extract_strided_slice %21 {offsets = [13, 0], sizes = [1, 128], strides = [1, 1]} : vector<16x128xf32> to vector<1x128xf32>
    %398 = vector.broadcast %397 : vector<1x128xf32> to vector<6x128xf32>
    %399 = arith.mulf %257, %398 : vector<6x128xf32>
    %cst_96 = arith.constant dense<0.000000e+00> : vector<2x128xf32>
    %400 = tpu.matmul %396, %399, %cst_96 {dimension_numbers = #tpu.dot_dimension_numbers<[1], [0], [0], [1], [0, 0, 1, 1], [], []>} : vector<2x6xf32>, vector<6x128xf32>, vector<2x128xf32> -> vector<2x128xf32>
    %401 = arith.addf %394, %400 : vector<2x128xf32>
    %402 = vector.extract_strided_slice %303 {offsets = [14, 0, 0], sizes = [1, 2, 6], strides = [1, 1, 1]} : vector<16x2x6xf32> to vector<1x2x6xf32>
    %403 = vector.shape_cast %402 : vector<1x2x6xf32> to vector<2x6xf32>
    %404 = vector.extract_strided_slice %21 {offsets = [14, 0], sizes = [1, 128], strides = [1, 1]} : vector<16x128xf32> to vector<1x128xf32>
    %405 = vector.broadcast %404 : vector<1x128xf32> to vector<6x128xf32>
    %406 = arith.mulf %257, %405 : vector<6x128xf32>
    %cst_97 = arith.constant dense<0.000000e+00> : vector<2x128xf32>
    %407 = tpu.matmul %403, %406, %cst_97 {dimension_numbers = #tpu.dot_dimension_numbers<[1], [0], [0], [1], [0, 0, 1, 1], [], []>} : vector<2x6xf32>, vector<6x128xf32>, vector<2x128xf32> -> vector<2x128xf32>
    %408 = arith.addf %401, %407 : vector<2x128xf32>
    %409 = vector.extract_strided_slice %303 {offsets = [15, 0, 0], sizes = [1, 2, 6], strides = [1, 1, 1]} : vector<16x2x6xf32> to vector<1x2x6xf32>
    %410 = vector.shape_cast %409 : vector<1x2x6xf32> to vector<2x6xf32>
    %411 = vector.extract_strided_slice %21 {offsets = [15, 0], sizes = [1, 128], strides = [1, 1]} : vector<16x128xf32> to vector<1x128xf32>
    %412 = vector.broadcast %411 : vector<1x128xf32> to vector<6x128xf32>
    %413 = arith.mulf %257, %412 : vector<6x128xf32>
    %cst_98 = arith.constant dense<0.000000e+00> : vector<2x128xf32>
    %414 = tpu.matmul %410, %413, %cst_98 {dimension_numbers = #tpu.dot_dimension_numbers<[1], [0], [0], [1], [0, 0, 1, 1], [], []>} : vector<2x6xf32>, vector<6x128xf32>, vector<2x128xf32> -> vector<2x128xf32>
    %415 = arith.addf %408, %414 : vector<2x128xf32>
    %416 = tpu.transpose %259, [1, 0] : vector<3x16xf32> -> vector<16x3xf32>
    %417 = vector.shape_cast %416 : vector<16x3xf32> to vector<16x3x1xf32>
    %418 = tpu.transpose %262, [1, 0] : vector<5x16xf32> -> vector<16x5xf32>
    %419 = vector.shape_cast %418 : vector<16x5xf32> to vector<16x1x5xf32>
    %420 = vector.broadcast %417 : vector<16x3x1xf32> to vector<16x3x5xf32>
    %421 = vector.broadcast %419 : vector<16x1x5xf32> to vector<16x3x5xf32>
    %422 = arith.addf %420, %421 : vector<16x3x5xf32>
    %cst_99 = arith.constant 0.000000e+00 : f32
    %423 = vector.broadcast %cst_99 : f32 to vector<16x3x5xf32>
    %424 = arith.cmpf ogt, %422, %423 : vector<16x3x5xf32>
    %cst_100 = arith.constant 2.000000e-01 : f32
    %425 = vector.broadcast %cst_100 : f32 to vector<16x3x5xf32>
    %426 = arith.mulf %425, %422 : vector<16x3x5xf32>
    %427 = arith.select %424, %422, %426 : vector<16x3x5xi1>, vector<16x3x5xf32>
    %cst_101 = arith.constant -1.000000e+30 : f32
    %428 = vector.shape_cast %46 : vector<1x3x5xi1> to vector<1x3x5xi1>
    %429 = vector.broadcast %428 : vector<1x3x5xi1> to vector<16x3x5xi1>
    %430 = vector.broadcast %cst_101 : f32 to vector<16x3x5xf32>
    %431 = arith.select %429, %427, %430 : vector<16x3x5xi1>, vector<16x3x5xf32>
    %cst_102 = arith.constant dense<0xFF800000> : vector<16x3xf32>
    %432 = vector.multi_reduction <maximumf>, %431, %cst_102 [2] : vector<16x3x5xf32> to vector<16x3xf32>
    %433 = vector.shape_cast %432 : vector<16x3xf32> to vector<16x3x1xf32>
    %434 = vector.broadcast %433 : vector<16x3x1xf32> to vector<16x3x5xf32>
    %435 = arith.subf %431, %434 : vector<16x3x5xf32>
    %436 = math.exp %435 : vector<16x3x5xf32>
    %cst_103 = arith.constant 0.000000e+00 : f32
    %437 = vector.shape_cast %46 : vector<1x3x5xi1> to vector<1x3x5xi1>
    %438 = vector.broadcast %437 : vector<1x3x5xi1> to vector<16x3x5xi1>
    %439 = vector.broadcast %cst_103 : f32 to vector<16x3x5xf32>
    %440 = arith.select %438, %436, %439 : vector<16x3x5xi1>, vector<16x3x5xf32>
    %cst_104 = arith.constant dense<0.000000e+00> : vector<16x3xf32>
    %441 = vector.multi_reduction <add>, %440, %cst_104 [2] : vector<16x3x5xf32> to vector<16x3xf32>
    %442 = vector.shape_cast %441 : vector<16x3xf32> to vector<16x3x1xf32>
    %cst_105 = arith.constant 9.99999968E-21 : f32
    %443 = vector.broadcast %cst_105 : f32 to vector<16x3x1xf32>
    %444 = arith.maximumf %442, %443 : vector<16x3x1xf32>
    %445 = tpu.reciprocal %444 {approx = true} : vector<16x3x1xf32> -> vector<16x3x1xf32>
    %446 = vector.broadcast %445 : vector<16x3x1xf32> to vector<16x3x5xf32>
    %447 = arith.mulf %440, %446 : vector<16x3x5xf32>
    %448 = vector.extract_strided_slice %447 {offsets = [0, 0, 0], sizes = [1, 3, 5], strides = [1, 1, 1]} : vector<16x3x5xf32> to vector<1x3x5xf32>
    %449 = vector.shape_cast %448 : vector<1x3x5xf32> to vector<3x5xf32>
    %450 = vector.extract_strided_slice %21 {offsets = [0, 0], sizes = [1, 128], strides = [1, 1]} : vector<16x128xf32> to vector<1x128xf32>
    %451 = vector.broadcast %450 : vector<1x128xf32> to vector<5x128xf32>
    %452 = arith.mulf %260, %451 : vector<5x128xf32>
    %cst_106 = arith.constant dense<0.000000e+00> : vector<3x128xf32>
    %453 = tpu.matmul %449, %452, %cst_106 {dimension_numbers = #tpu.dot_dimension_numbers<[1], [0], [0], [1], [0, 0, 1, 1], [], []>} : vector<3x5xf32>, vector<5x128xf32>, vector<3x128xf32> -> vector<3x128xf32>
    %454 = arith.addf %268, %453 : vector<3x128xf32>
    %455 = vector.extract_strided_slice %447 {offsets = [1, 0, 0], sizes = [1, 3, 5], strides = [1, 1, 1]} : vector<16x3x5xf32> to vector<1x3x5xf32>
    %456 = vector.shape_cast %455 : vector<1x3x5xf32> to vector<3x5xf32>
    %457 = vector.extract_strided_slice %21 {offsets = [1, 0], sizes = [1, 128], strides = [1, 1]} : vector<16x128xf32> to vector<1x128xf32>
    %458 = vector.broadcast %457 : vector<1x128xf32> to vector<5x128xf32>
    %459 = arith.mulf %260, %458 : vector<5x128xf32>
    %cst_107 = arith.constant dense<0.000000e+00> : vector<3x128xf32>
    %460 = tpu.matmul %456, %459, %cst_107 {dimension_numbers = #tpu.dot_dimension_numbers<[1], [0], [0], [1], [0, 0, 1, 1], [], []>} : vector<3x5xf32>, vector<5x128xf32>, vector<3x128xf32> -> vector<3x128xf32>
    %461 = arith.addf %454, %460 : vector<3x128xf32>
    %462 = vector.extract_strided_slice %447 {offsets = [2, 0, 0], sizes = [1, 3, 5], strides = [1, 1, 1]} : vector<16x3x5xf32> to vector<1x3x5xf32>
    %463 = vector.shape_cast %462 : vector<1x3x5xf32> to vector<3x5xf32>
    %464 = vector.extract_strided_slice %21 {offsets = [2, 0], sizes = [1, 128], strides = [1, 1]} : vector<16x128xf32> to vector<1x128xf32>
    %465 = vector.broadcast %464 : vector<1x128xf32> to vector<5x128xf32>
    %466 = arith.mulf %260, %465 : vector<5x128xf32>
    %cst_108 = arith.constant dense<0.000000e+00> : vector<3x128xf32>
    %467 = tpu.matmul %463, %466, %cst_108 {dimension_numbers = #tpu.dot_dimension_numbers<[1], [0], [0], [1], [0, 0, 1, 1], [], []>} : vector<3x5xf32>, vector<5x128xf32>, vector<3x128xf32> -> vector<3x128xf32>
    %468 = arith.addf %461, %467 : vector<3x128xf32>
    %469 = vector.extract_strided_slice %447 {offsets = [3, 0, 0], sizes = [1, 3, 5], strides = [1, 1, 1]} : vector<16x3x5xf32> to vector<1x3x5xf32>
    %470 = vector.shape_cast %469 : vector<1x3x5xf32> to vector<3x5xf32>
    %471 = vector.extract_strided_slice %21 {offsets = [3, 0], sizes = [1, 128], strides = [1, 1]} : vector<16x128xf32> to vector<1x128xf32>
    %472 = vector.broadcast %471 : vector<1x128xf32> to vector<5x128xf32>
    %473 = arith.mulf %260, %472 : vector<5x128xf32>
    %cst_109 = arith.constant dense<0.000000e+00> : vector<3x128xf32>
    %474 = tpu.matmul %470, %473, %cst_109 {dimension_numbers = #tpu.dot_dimension_numbers<[1], [0], [0], [1], [0, 0, 1, 1], [], []>} : vector<3x5xf32>, vector<5x128xf32>, vector<3x128xf32> -> vector<3x128xf32>
    %475 = arith.addf %468, %474 : vector<3x128xf32>
    %476 = vector.extract_strided_slice %447 {offsets = [4, 0, 0], sizes = [1, 3, 5], strides = [1, 1, 1]} : vector<16x3x5xf32> to vector<1x3x5xf32>
    %477 = vector.shape_cast %476 : vector<1x3x5xf32> to vector<3x5xf32>
    %478 = vector.extract_strided_slice %21 {offsets = [4, 0], sizes = [1, 128], strides = [1, 1]} : vector<16x128xf32> to vector<1x128xf32>
    %479 = vector.broadcast %478 : vector<1x128xf32> to vector<5x128xf32>
    %480 = arith.mulf %260, %479 : vector<5x128xf32>
    %cst_110 = arith.constant dense<0.000000e+00> : vector<3x128xf32>
    %481 = tpu.matmul %477, %480, %cst_110 {dimension_numbers = #tpu.dot_dimension_numbers<[1], [0], [0], [1], [0, 0, 1, 1], [], []>} : vector<3x5xf32>, vector<5x128xf32>, vector<3x128xf32> -> vector<3x128xf32>
    %482 = arith.addf %475, %481 : vector<3x128xf32>
    %483 = vector.extract_strided_slice %447 {offsets = [5, 0, 0], sizes = [1, 3, 5], strides = [1, 1, 1]} : vector<16x3x5xf32> to vector<1x3x5xf32>
    %484 = vector.shape_cast %483 : vector<1x3x5xf32> to vector<3x5xf32>
    %485 = vector.extract_strided_slice %21 {offsets = [5, 0], sizes = [1, 128], strides = [1, 1]} : vector<16x128xf32> to vector<1x128xf32>
    %486 = vector.broadcast %485 : vector<1x128xf32> to vector<5x128xf32>
    %487 = arith.mulf %260, %486 : vector<5x128xf32>
    %cst_111 = arith.constant dense<0.000000e+00> : vector<3x128xf32>
    %488 = tpu.matmul %484, %487, %cst_111 {dimension_numbers = #tpu.dot_dimension_numbers<[1], [0], [0], [1], [0, 0, 1, 1], [], []>} : vector<3x5xf32>, vector<5x128xf32>, vector<3x128xf32> -> vector<3x128xf32>
    %489 = arith.addf %482, %488 : vector<3x128xf32>
    %490 = vector.extract_strided_slice %447 {offsets = [6, 0, 0], sizes = [1, 3, 5], strides = [1, 1, 1]} : vector<16x3x5xf32> to vector<1x3x5xf32>
    %491 = vector.shape_cast %490 : vector<1x3x5xf32> to vector<3x5xf32>
    %492 = vector.extract_strided_slice %21 {offsets = [6, 0], sizes = [1, 128], strides = [1, 1]} : vector<16x128xf32> to vector<1x128xf32>
    %493 = vector.broadcast %492 : vector<1x128xf32> to vector<5x128xf32>
    %494 = arith.mulf %260, %493 : vector<5x128xf32>
    %cst_112 = arith.constant dense<0.000000e+00> : vector<3x128xf32>
    %495 = tpu.matmul %491, %494, %cst_112 {dimension_numbers = #tpu.dot_dimension_numbers<[1], [0], [0], [1], [0, 0, 1, 1], [], []>} : vector<3x5xf32>, vector<5x128xf32>, vector<3x128xf32> -> vector<3x128xf32>
    %496 = arith.addf %489, %495 : vector<3x128xf32>
    %497 = vector.extract_strided_slice %447 {offsets = [7, 0, 0], sizes = [1, 3, 5], strides = [1, 1, 1]} : vector<16x3x5xf32> to vector<1x3x5xf32>
    %498 = vector.shape_cast %497 : vector<1x3x5xf32> to vector<3x5xf32>
    %499 = vector.extract_strided_slice %21 {offsets = [7, 0], sizes = [1, 128], strides = [1, 1]} : vector<16x128xf32> to vector<1x128xf32>
    %500 = vector.broadcast %499 : vector<1x128xf32> to vector<5x128xf32>
    %501 = arith.mulf %260, %500 : vector<5x128xf32>
    %cst_113 = arith.constant dense<0.000000e+00> : vector<3x128xf32>
    %502 = tpu.matmul %498, %501, %cst_113 {dimension_numbers = #tpu.dot_dimension_numbers<[1], [0], [0], [1], [0, 0, 1, 1], [], []>} : vector<3x5xf32>, vector<5x128xf32>, vector<3x128xf32> -> vector<3x128xf32>
    %503 = arith.addf %496, %502 : vector<3x128xf32>
    %504 = vector.extract_strided_slice %447 {offsets = [8, 0, 0], sizes = [1, 3, 5], strides = [1, 1, 1]} : vector<16x3x5xf32> to vector<1x3x5xf32>
    %505 = vector.shape_cast %504 : vector<1x3x5xf32> to vector<3x5xf32>
    %506 = vector.extract_strided_slice %21 {offsets = [8, 0], sizes = [1, 128], strides = [1, 1]} : vector<16x128xf32> to vector<1x128xf32>
    %507 = vector.broadcast %506 : vector<1x128xf32> to vector<5x128xf32>
    %508 = arith.mulf %260, %507 : vector<5x128xf32>
    %cst_114 = arith.constant dense<0.000000e+00> : vector<3x128xf32>
    %509 = tpu.matmul %505, %508, %cst_114 {dimension_numbers = #tpu.dot_dimension_numbers<[1], [0], [0], [1], [0, 0, 1, 1], [], []>} : vector<3x5xf32>, vector<5x128xf32>, vector<3x128xf32> -> vector<3x128xf32>
    %510 = arith.addf %503, %509 : vector<3x128xf32>
    %511 = vector.extract_strided_slice %447 {offsets = [9, 0, 0], sizes = [1, 3, 5], strides = [1, 1, 1]} : vector<16x3x5xf32> to vector<1x3x5xf32>
    %512 = vector.shape_cast %511 : vector<1x3x5xf32> to vector<3x5xf32>
    %513 = vector.extract_strided_slice %21 {offsets = [9, 0], sizes = [1, 128], strides = [1, 1]} : vector<16x128xf32> to vector<1x128xf32>
    %514 = vector.broadcast %513 : vector<1x128xf32> to vector<5x128xf32>
    %515 = arith.mulf %260, %514 : vector<5x128xf32>
    %cst_115 = arith.constant dense<0.000000e+00> : vector<3x128xf32>
    %516 = tpu.matmul %512, %515, %cst_115 {dimension_numbers = #tpu.dot_dimension_numbers<[1], [0], [0], [1], [0, 0, 1, 1], [], []>} : vector<3x5xf32>, vector<5x128xf32>, vector<3x128xf32> -> vector<3x128xf32>
    %517 = arith.addf %510, %516 : vector<3x128xf32>
    %518 = vector.extract_strided_slice %447 {offsets = [10, 0, 0], sizes = [1, 3, 5], strides = [1, 1, 1]} : vector<16x3x5xf32> to vector<1x3x5xf32>
    %519 = vector.shape_cast %518 : vector<1x3x5xf32> to vector<3x5xf32>
    %520 = vector.extract_strided_slice %21 {offsets = [10, 0], sizes = [1, 128], strides = [1, 1]} : vector<16x128xf32> to vector<1x128xf32>
    %521 = vector.broadcast %520 : vector<1x128xf32> to vector<5x128xf32>
    %522 = arith.mulf %260, %521 : vector<5x128xf32>
    %cst_116 = arith.constant dense<0.000000e+00> : vector<3x128xf32>
    %523 = tpu.matmul %519, %522, %cst_116 {dimension_numbers = #tpu.dot_dimension_numbers<[1], [0], [0], [1], [0, 0, 1, 1], [], []>} : vector<3x5xf32>, vector<5x128xf32>, vector<3x128xf32> -> vector<3x128xf32>
    %524 = arith.addf %517, %523 : vector<3x128xf32>
    %525 = vector.extract_strided_slice %447 {offsets = [11, 0, 0], sizes = [1, 3, 5], strides = [1, 1, 1]} : vector<16x3x5xf32> to vector<1x3x5xf32>
    %526 = vector.shape_cast %525 : vector<1x3x5xf32> to vector<3x5xf32>
    %527 = vector.extract_strided_slice %21 {offsets = [11, 0], sizes = [1, 128], strides = [1, 1]} : vector<16x128xf32> to vector<1x128xf32>
    %528 = vector.broadcast %527 : vector<1x128xf32> to vector<5x128xf32>
    %529 = arith.mulf %260, %528 : vector<5x128xf32>
    %cst_117 = arith.constant dense<0.000000e+00> : vector<3x128xf32>
    %530 = tpu.matmul %526, %529, %cst_117 {dimension_numbers = #tpu.dot_dimension_numbers<[1], [0], [0], [1], [0, 0, 1, 1], [], []>} : vector<3x5xf32>, vector<5x128xf32>, vector<3x128xf32> -> vector<3x128xf32>
    %531 = arith.addf %524, %530 : vector<3x128xf32>
    %532 = vector.extract_strided_slice %447 {offsets = [12, 0, 0], sizes = [1, 3, 5], strides = [1, 1, 1]} : vector<16x3x5xf32> to vector<1x3x5xf32>
    %533 = vector.shape_cast %532 : vector<1x3x5xf32> to vector<3x5xf32>
    %534 = vector.extract_strided_slice %21 {offsets = [12, 0], sizes = [1, 128], strides = [1, 1]} : vector<16x128xf32> to vector<1x128xf32>
    %535 = vector.broadcast %534 : vector<1x128xf32> to vector<5x128xf32>
    %536 = arith.mulf %260, %535 : vector<5x128xf32>
    %cst_118 = arith.constant dense<0.000000e+00> : vector<3x128xf32>
    %537 = tpu.matmul %533, %536, %cst_118 {dimension_numbers = #tpu.dot_dimension_numbers<[1], [0], [0], [1], [0, 0, 1, 1], [], []>} : vector<3x5xf32>, vector<5x128xf32>, vector<3x128xf32> -> vector<3x128xf32>
    %538 = arith.addf %531, %537 : vector<3x128xf32>
    %539 = vector.extract_strided_slice %447 {offsets = [13, 0, 0], sizes = [1, 3, 5], strides = [1, 1, 1]} : vector<16x3x5xf32> to vector<1x3x5xf32>
    %540 = vector.shape_cast %539 : vector<1x3x5xf32> to vector<3x5xf32>
    %541 = vector.extract_strided_slice %21 {offsets = [13, 0], sizes = [1, 128], strides = [1, 1]} : vector<16x128xf32> to vector<1x128xf32>
    %542 = vector.broadcast %541 : vector<1x128xf32> to vector<5x128xf32>
    %543 = arith.mulf %260, %542 : vector<5x128xf32>
    %cst_119 = arith.constant dense<0.000000e+00> : vector<3x128xf32>
    %544 = tpu.matmul %540, %543, %cst_119 {dimension_numbers = #tpu.dot_dimension_numbers<[1], [0], [0], [1], [0, 0, 1, 1], [], []>} : vector<3x5xf32>, vector<5x128xf32>, vector<3x128xf32> -> vector<3x128xf32>
    %545 = arith.addf %538, %544 : vector<3x128xf32>
    %546 = vector.extract_strided_slice %447 {offsets = [14, 0, 0], sizes = [1, 3, 5], strides = [1, 1, 1]} : vector<16x3x5xf32> to vector<1x3x5xf32>
    %547 = vector.shape_cast %546 : vector<1x3x5xf32> to vector<3x5xf32>
    %548 = vector.extract_strided_slice %21 {offsets = [14, 0], sizes = [1, 128], strides = [1, 1]} : vector<16x128xf32> to vector<1x128xf32>
    %549 = vector.broadcast %548 : vector<1x128xf32> to vector<5x128xf32>
    %550 = arith.mulf %260, %549 : vector<5x128xf32>
    %cst_120 = arith.constant dense<0.000000e+00> : vector<3x128xf32>
    %551 = tpu.matmul %547, %550, %cst_120 {dimension_numbers = #tpu.dot_dimension_numbers<[1], [0], [0], [1], [0, 0, 1, 1], [], []>} : vector<3x5xf32>, vector<5x128xf32>, vector<3x128xf32> -> vector<3x128xf32>
    %552 = arith.addf %545, %551 : vector<3x128xf32>
    %553 = vector.extract_strided_slice %447 {offsets = [15, 0, 0], sizes = [1, 3, 5], strides = [1, 1, 1]} : vector<16x3x5xf32> to vector<1x3x5xf32>
    %554 = vector.shape_cast %553 : vector<1x3x5xf32> to vector<3x5xf32>
    %555 = vector.extract_strided_slice %21 {offsets = [15, 0], sizes = [1, 128], strides = [1, 1]} : vector<16x128xf32> to vector<1x128xf32>
    %556 = vector.broadcast %555 : vector<1x128xf32> to vector<5x128xf32>
    %557 = arith.mulf %260, %556 : vector<5x128xf32>
    %cst_121 = arith.constant dense<0.000000e+00> : vector<3x128xf32>
    %558 = tpu.matmul %554, %557, %cst_121 {dimension_numbers = #tpu.dot_dimension_numbers<[1], [0], [0], [1], [0, 0, 1, 1], [], []>} : vector<3x5xf32>, vector<5x128xf32>, vector<3x128xf32> -> vector<3x128xf32>
    %559 = arith.addf %552, %558 : vector<3x128xf32>
    %560 = tpu.transpose %265, [1, 0] : vector<2x16xf32> -> vector<16x2xf32>
    %561 = vector.shape_cast %560 : vector<16x2xf32> to vector<16x2x1xf32>
    %562 = tpu.transpose %263, [1, 0] : vector<5x16xf32> -> vector<16x5xf32>
    %563 = vector.shape_cast %562 : vector<16x5xf32> to vector<16x1x5xf32>
    %564 = vector.broadcast %561 : vector<16x2x1xf32> to vector<16x2x5xf32>
    %565 = vector.broadcast %563 : vector<16x1x5xf32> to vector<16x2x5xf32>
    %566 = arith.addf %564, %565 : vector<16x2x5xf32>
    %cst_122 = arith.constant 0.000000e+00 : f32
    %567 = vector.broadcast %cst_122 : f32 to vector<16x2x5xf32>
    %568 = arith.cmpf ogt, %566, %567 : vector<16x2x5xf32>
    %cst_123 = arith.constant 2.000000e-01 : f32
    %569 = vector.broadcast %cst_123 : f32 to vector<16x2x5xf32>
    %570 = arith.mulf %569, %566 : vector<16x2x5xf32>
    %571 = arith.select %568, %566, %570 : vector<16x2x5xi1>, vector<16x2x5xf32>
    %cst_124 = arith.constant -1.000000e+30 : f32
    %572 = vector.shape_cast %51 : vector<1x2x5xi1> to vector<1x2x5xi1>
    %573 = vector.broadcast %572 : vector<1x2x5xi1> to vector<16x2x5xi1>
    %574 = vector.broadcast %cst_124 : f32 to vector<16x2x5xf32>
    %575 = arith.select %573, %571, %574 : vector<16x2x5xi1>, vector<16x2x5xf32>
    %cst_125 = arith.constant dense<0xFF800000> : vector<16x2xf32>
    %576 = vector.multi_reduction <maximumf>, %575, %cst_125 [2] : vector<16x2x5xf32> to vector<16x2xf32>
    %577 = vector.shape_cast %576 : vector<16x2xf32> to vector<16x2x1xf32>
    %578 = vector.broadcast %577 : vector<16x2x1xf32> to vector<16x2x5xf32>
    %579 = arith.subf %575, %578 : vector<16x2x5xf32>
    %580 = math.exp %579 : vector<16x2x5xf32>
    %cst_126 = arith.constant 0.000000e+00 : f32
    %581 = vector.shape_cast %51 : vector<1x2x5xi1> to vector<1x2x5xi1>
    %582 = vector.broadcast %581 : vector<1x2x5xi1> to vector<16x2x5xi1>
    %583 = vector.broadcast %cst_126 : f32 to vector<16x2x5xf32>
    %584 = arith.select %582, %580, %583 : vector<16x2x5xi1>, vector<16x2x5xf32>
    %cst_127 = arith.constant dense<0.000000e+00> : vector<16x2xf32>
    %585 = vector.multi_reduction <add>, %584, %cst_127 [2] : vector<16x2x5xf32> to vector<16x2xf32>
    %586 = vector.shape_cast %585 : vector<16x2xf32> to vector<16x2x1xf32>
    %cst_128 = arith.constant 9.99999968E-21 : f32
    %587 = vector.broadcast %cst_128 : f32 to vector<16x2x1xf32>
    %588 = arith.maximumf %586, %587 : vector<16x2x1xf32>
    %589 = tpu.reciprocal %588 {approx = true} : vector<16x2x1xf32> -> vector<16x2x1xf32>
    %590 = vector.broadcast %589 : vector<16x2x1xf32> to vector<16x2x5xf32>
    %591 = arith.mulf %584, %590 : vector<16x2x5xf32>
    %592 = vector.extract_strided_slice %591 {offsets = [0, 0, 0], sizes = [1, 2, 5], strides = [1, 1, 1]} : vector<16x2x5xf32> to vector<1x2x5xf32>
    %593 = vector.shape_cast %592 : vector<1x2x5xf32> to vector<2x5xf32>
    %594 = vector.extract_strided_slice %21 {offsets = [0, 0], sizes = [1, 128], strides = [1, 1]} : vector<16x128xf32> to vector<1x128xf32>
    %595 = vector.broadcast %594 : vector<1x128xf32> to vector<5x128xf32>
    %596 = arith.mulf %261, %595 : vector<5x128xf32>
    %cst_129 = arith.constant dense<0.000000e+00> : vector<2x128xf32>
    %597 = tpu.matmul %593, %596, %cst_129 {dimension_numbers = #tpu.dot_dimension_numbers<[1], [0], [0], [1], [0, 0, 1, 1], [], []>} : vector<2x5xf32>, vector<5x128xf32>, vector<2x128xf32> -> vector<2x128xf32>
    %598 = arith.addf %415, %597 : vector<2x128xf32>
    %599 = vector.extract_strided_slice %591 {offsets = [1, 0, 0], sizes = [1, 2, 5], strides = [1, 1, 1]} : vector<16x2x5xf32> to vector<1x2x5xf32>
    %600 = vector.shape_cast %599 : vector<1x2x5xf32> to vector<2x5xf32>
    %601 = vector.extract_strided_slice %21 {offsets = [1, 0], sizes = [1, 128], strides = [1, 1]} : vector<16x128xf32> to vector<1x128xf32>
    %602 = vector.broadcast %601 : vector<1x128xf32> to vector<5x128xf32>
    %603 = arith.mulf %261, %602 : vector<5x128xf32>
    %cst_130 = arith.constant dense<0.000000e+00> : vector<2x128xf32>
    %604 = tpu.matmul %600, %603, %cst_130 {dimension_numbers = #tpu.dot_dimension_numbers<[1], [0], [0], [1], [0, 0, 1, 1], [], []>} : vector<2x5xf32>, vector<5x128xf32>, vector<2x128xf32> -> vector<2x128xf32>
    %605 = arith.addf %598, %604 : vector<2x128xf32>
    %606 = vector.extract_strided_slice %591 {offsets = [2, 0, 0], sizes = [1, 2, 5], strides = [1, 1, 1]} : vector<16x2x5xf32> to vector<1x2x5xf32>
    %607 = vector.shape_cast %606 : vector<1x2x5xf32> to vector<2x5xf32>
    %608 = vector.extract_strided_slice %21 {offsets = [2, 0], sizes = [1, 128], strides = [1, 1]} : vector<16x128xf32> to vector<1x128xf32>
    %609 = vector.broadcast %608 : vector<1x128xf32> to vector<5x128xf32>
    %610 = arith.mulf %261, %609 : vector<5x128xf32>
    %cst_131 = arith.constant dense<0.000000e+00> : vector<2x128xf32>
    %611 = tpu.matmul %607, %610, %cst_131 {dimension_numbers = #tpu.dot_dimension_numbers<[1], [0], [0], [1], [0, 0, 1, 1], [], []>} : vector<2x5xf32>, vector<5x128xf32>, vector<2x128xf32> -> vector<2x128xf32>
    %612 = arith.addf %605, %611 : vector<2x128xf32>
    %613 = vector.extract_strided_slice %591 {offsets = [3, 0, 0], sizes = [1, 2, 5], strides = [1, 1, 1]} : vector<16x2x5xf32> to vector<1x2x5xf32>
    %614 = vector.shape_cast %613 : vector<1x2x5xf32> to vector<2x5xf32>
    %615 = vector.extract_strided_slice %21 {offsets = [3, 0], sizes = [1, 128], strides = [1, 1]} : vector<16x128xf32> to vector<1x128xf32>
    %616 = vector.broadcast %615 : vector<1x128xf32> to vector<5x128xf32>
    %617 = arith.mulf %261, %616 : vector<5x128xf32>
    %cst_132 = arith.constant dense<0.000000e+00> : vector<2x128xf32>
    %618 = tpu.matmul %614, %617, %cst_132 {dimension_numbers = #tpu.dot_dimension_numbers<[1], [0], [0], [1], [0, 0, 1, 1], [], []>} : vector<2x5xf32>, vector<5x128xf32>, vector<2x128xf32> -> vector<2x128xf32>
    %619 = arith.addf %612, %618 : vector<2x128xf32>
    %620 = vector.extract_strided_slice %591 {offsets = [4, 0, 0], sizes = [1, 2, 5], strides = [1, 1, 1]} : vector<16x2x5xf32> to vector<1x2x5xf32>
    %621 = vector.shape_cast %620 : vector<1x2x5xf32> to vector<2x5xf32>
    %622 = vector.extract_strided_slice %21 {offsets = [4, 0], sizes = [1, 128], strides = [1, 1]} : vector<16x128xf32> to vector<1x128xf32>
    %623 = vector.broadcast %622 : vector<1x128xf32> to vector<5x128xf32>
    %624 = arith.mulf %261, %623 : vector<5x128xf32>
    %cst_133 = arith.constant dense<0.000000e+00> : vector<2x128xf32>
    %625 = tpu.matmul %621, %624, %cst_133 {dimension_numbers = #tpu.dot_dimension_numbers<[1], [0], [0], [1], [0, 0, 1, 1], [], []>} : vector<2x5xf32>, vector<5x128xf32>, vector<2x128xf32> -> vector<2x128xf32>
    %626 = arith.addf %619, %625 : vector<2x128xf32>
    %627 = vector.extract_strided_slice %591 {offsets = [5, 0, 0], sizes = [1, 2, 5], strides = [1, 1, 1]} : vector<16x2x5xf32> to vector<1x2x5xf32>
    %628 = vector.shape_cast %627 : vector<1x2x5xf32> to vector<2x5xf32>
    %629 = vector.extract_strided_slice %21 {offsets = [5, 0], sizes = [1, 128], strides = [1, 1]} : vector<16x128xf32> to vector<1x128xf32>
    %630 = vector.broadcast %629 : vector<1x128xf32> to vector<5x128xf32>
    %631 = arith.mulf %261, %630 : vector<5x128xf32>
    %cst_134 = arith.constant dense<0.000000e+00> : vector<2x128xf32>
    %632 = tpu.matmul %628, %631, %cst_134 {dimension_numbers = #tpu.dot_dimension_numbers<[1], [0], [0], [1], [0, 0, 1, 1], [], []>} : vector<2x5xf32>, vector<5x128xf32>, vector<2x128xf32> -> vector<2x128xf32>
    %633 = arith.addf %626, %632 : vector<2x128xf32>
    %634 = vector.extract_strided_slice %591 {offsets = [6, 0, 0], sizes = [1, 2, 5], strides = [1, 1, 1]} : vector<16x2x5xf32> to vector<1x2x5xf32>
    %635 = vector.shape_cast %634 : vector<1x2x5xf32> to vector<2x5xf32>
    %636 = vector.extract_strided_slice %21 {offsets = [6, 0], sizes = [1, 128], strides = [1, 1]} : vector<16x128xf32> to vector<1x128xf32>
    %637 = vector.broadcast %636 : vector<1x128xf32> to vector<5x128xf32>
    %638 = arith.mulf %261, %637 : vector<5x128xf32>
    %cst_135 = arith.constant dense<0.000000e+00> : vector<2x128xf32>
    %639 = tpu.matmul %635, %638, %cst_135 {dimension_numbers = #tpu.dot_dimension_numbers<[1], [0], [0], [1], [0, 0, 1, 1], [], []>} : vector<2x5xf32>, vector<5x128xf32>, vector<2x128xf32> -> vector<2x128xf32>
    %640 = arith.addf %633, %639 : vector<2x128xf32>
    %641 = vector.extract_strided_slice %591 {offsets = [7, 0, 0], sizes = [1, 2, 5], strides = [1, 1, 1]} : vector<16x2x5xf32> to vector<1x2x5xf32>
    %642 = vector.shape_cast %641 : vector<1x2x5xf32> to vector<2x5xf32>
    %643 = vector.extract_strided_slice %21 {offsets = [7, 0], sizes = [1, 128], strides = [1, 1]} : vector<16x128xf32> to vector<1x128xf32>
    %644 = vector.broadcast %643 : vector<1x128xf32> to vector<5x128xf32>
    %645 = arith.mulf %261, %644 : vector<5x128xf32>
    %cst_136 = arith.constant dense<0.000000e+00> : vector<2x128xf32>
    %646 = tpu.matmul %642, %645, %cst_136 {dimension_numbers = #tpu.dot_dimension_numbers<[1], [0], [0], [1], [0, 0, 1, 1], [], []>} : vector<2x5xf32>, vector<5x128xf32>, vector<2x128xf32> -> vector<2x128xf32>
    %647 = arith.addf %640, %646 : vector<2x128xf32>
    %648 = vector.extract_strided_slice %591 {offsets = [8, 0, 0], sizes = [1, 2, 5], strides = [1, 1, 1]} : vector<16x2x5xf32> to vector<1x2x5xf32>
    %649 = vector.shape_cast %648 : vector<1x2x5xf32> to vector<2x5xf32>
    %650 = vector.extract_strided_slice %21 {offsets = [8, 0], sizes = [1, 128], strides = [1, 1]} : vector<16x128xf32> to vector<1x128xf32>
    %651 = vector.broadcast %650 : vector<1x128xf32> to vector<5x128xf32>
    %652 = arith.mulf %261, %651 : vector<5x128xf32>
    %cst_137 = arith.constant dense<0.000000e+00> : vector<2x128xf32>
    %653 = tpu.matmul %649, %652, %cst_137 {dimension_numbers = #tpu.dot_dimension_numbers<[1], [0], [0], [1], [0, 0, 1, 1], [], []>} : vector<2x5xf32>, vector<5x128xf32>, vector<2x128xf32> -> vector<2x128xf32>
    %654 = arith.addf %647, %653 : vector<2x128xf32>
    %655 = vector.extract_strided_slice %591 {offsets = [9, 0, 0], sizes = [1, 2, 5], strides = [1, 1, 1]} : vector<16x2x5xf32> to vector<1x2x5xf32>
    %656 = vector.shape_cast %655 : vector<1x2x5xf32> to vector<2x5xf32>
    %657 = vector.extract_strided_slice %21 {offsets = [9, 0], sizes = [1, 128], strides = [1, 1]} : vector<16x128xf32> to vector<1x128xf32>
    %658 = vector.broadcast %657 : vector<1x128xf32> to vector<5x128xf32>
    %659 = arith.mulf %261, %658 : vector<5x128xf32>
    %cst_138 = arith.constant dense<0.000000e+00> : vector<2x128xf32>
    %660 = tpu.matmul %656, %659, %cst_138 {dimension_numbers = #tpu.dot_dimension_numbers<[1], [0], [0], [1], [0, 0, 1, 1], [], []>} : vector<2x5xf32>, vector<5x128xf32>, vector<2x128xf32> -> vector<2x128xf32>
    %661 = arith.addf %654, %660 : vector<2x128xf32>
    %662 = vector.extract_strided_slice %591 {offsets = [10, 0, 0], sizes = [1, 2, 5], strides = [1, 1, 1]} : vector<16x2x5xf32> to vector<1x2x5xf32>
    %663 = vector.shape_cast %662 : vector<1x2x5xf32> to vector<2x5xf32>
    %664 = vector.extract_strided_slice %21 {offsets = [10, 0], sizes = [1, 128], strides = [1, 1]} : vector<16x128xf32> to vector<1x128xf32>
    %665 = vector.broadcast %664 : vector<1x128xf32> to vector<5x128xf32>
    %666 = arith.mulf %261, %665 : vector<5x128xf32>
    %cst_139 = arith.constant dense<0.000000e+00> : vector<2x128xf32>
    %667 = tpu.matmul %663, %666, %cst_139 {dimension_numbers = #tpu.dot_dimension_numbers<[1], [0], [0], [1], [0, 0, 1, 1], [], []>} : vector<2x5xf32>, vector<5x128xf32>, vector<2x128xf32> -> vector<2x128xf32>
    %668 = arith.addf %661, %667 : vector<2x128xf32>
    %669 = vector.extract_strided_slice %591 {offsets = [11, 0, 0], sizes = [1, 2, 5], strides = [1, 1, 1]} : vector<16x2x5xf32> to vector<1x2x5xf32>
    %670 = vector.shape_cast %669 : vector<1x2x5xf32> to vector<2x5xf32>
    %671 = vector.extract_strided_slice %21 {offsets = [11, 0], sizes = [1, 128], strides = [1, 1]} : vector<16x128xf32> to vector<1x128xf32>
    %672 = vector.broadcast %671 : vector<1x128xf32> to vector<5x128xf32>
    %673 = arith.mulf %261, %672 : vector<5x128xf32>
    %cst_140 = arith.constant dense<0.000000e+00> : vector<2x128xf32>
    %674 = tpu.matmul %670, %673, %cst_140 {dimension_numbers = #tpu.dot_dimension_numbers<[1], [0], [0], [1], [0, 0, 1, 1], [], []>} : vector<2x5xf32>, vector<5x128xf32>, vector<2x128xf32> -> vector<2x128xf32>
    %675 = arith.addf %668, %674 : vector<2x128xf32>
    %676 = vector.extract_strided_slice %591 {offsets = [12, 0, 0], sizes = [1, 2, 5], strides = [1, 1, 1]} : vector<16x2x5xf32> to vector<1x2x5xf32>
    %677 = vector.shape_cast %676 : vector<1x2x5xf32> to vector<2x5xf32>
    %678 = vector.extract_strided_slice %21 {offsets = [12, 0], sizes = [1, 128], strides = [1, 1]} : vector<16x128xf32> to vector<1x128xf32>
    %679 = vector.broadcast %678 : vector<1x128xf32> to vector<5x128xf32>
    %680 = arith.mulf %261, %679 : vector<5x128xf32>
    %cst_141 = arith.constant dense<0.000000e+00> : vector<2x128xf32>
    %681 = tpu.matmul %677, %680, %cst_141 {dimension_numbers = #tpu.dot_dimension_numbers<[1], [0], [0], [1], [0, 0, 1, 1], [], []>} : vector<2x5xf32>, vector<5x128xf32>, vector<2x128xf32> -> vector<2x128xf32>
    %682 = arith.addf %675, %681 : vector<2x128xf32>
    %683 = vector.extract_strided_slice %591 {offsets = [13, 0, 0], sizes = [1, 2, 5], strides = [1, 1, 1]} : vector<16x2x5xf32> to vector<1x2x5xf32>
    %684 = vector.shape_cast %683 : vector<1x2x5xf32> to vector<2x5xf32>
    %685 = vector.extract_strided_slice %21 {offsets = [13, 0], sizes = [1, 128], strides = [1, 1]} : vector<16x128xf32> to vector<1x128xf32>
    %686 = vector.broadcast %685 : vector<1x128xf32> to vector<5x128xf32>
    %687 = arith.mulf %261, %686 : vector<5x128xf32>
    %cst_142 = arith.constant dense<0.000000e+00> : vector<2x128xf32>
    %688 = tpu.matmul %684, %687, %cst_142 {dimension_numbers = #tpu.dot_dimension_numbers<[1], [0], [0], [1], [0, 0, 1, 1], [], []>} : vector<2x5xf32>, vector<5x128xf32>, vector<2x128xf32> -> vector<2x128xf32>
    %689 = arith.addf %682, %688 : vector<2x128xf32>
    %690 = vector.extract_strided_slice %591 {offsets = [14, 0, 0], sizes = [1, 2, 5], strides = [1, 1, 1]} : vector<16x2x5xf32> to vector<1x2x5xf32>
    %691 = vector.shape_cast %690 : vector<1x2x5xf32> to vector<2x5xf32>
    %692 = vector.extract_strided_slice %21 {offsets = [14, 0], sizes = [1, 128], strides = [1, 1]} : vector<16x128xf32> to vector<1x128xf32>
    %693 = vector.broadcast %692 : vector<1x128xf32> to vector<5x128xf32>
    %694 = arith.mulf %261, %693 : vector<5x128xf32>
    %cst_143 = arith.constant dense<0.000000e+00> : vector<2x128xf32>
    %695 = tpu.matmul %691, %694, %cst_143 {dimension_numbers = #tpu.dot_dimension_numbers<[1], [0], [0], [1], [0, 0, 1, 1], [], []>} : vector<2x5xf32>, vector<5x128xf32>, vector<2x128xf32> -> vector<2x128xf32>
    %696 = arith.addf %689, %695 : vector<2x128xf32>
    %697 = vector.extract_strided_slice %591 {offsets = [15, 0, 0], sizes = [1, 2, 5], strides = [1, 1, 1]} : vector<16x2x5xf32> to vector<1x2x5xf32>
    %698 = vector.shape_cast %697 : vector<1x2x5xf32> to vector<2x5xf32>
    %699 = vector.extract_strided_slice %21 {offsets = [15, 0], sizes = [1, 128], strides = [1, 1]} : vector<16x128xf32> to vector<1x128xf32>
    %700 = vector.broadcast %699 : vector<1x128xf32> to vector<5x128xf32>
    %701 = arith.mulf %261, %700 : vector<5x128xf32>
    %cst_144 = arith.constant dense<0.000000e+00> : vector<2x128xf32>
    %702 = tpu.matmul %698, %701, %cst_144 {dimension_numbers = #tpu.dot_dimension_numbers<[1], [0], [0], [1], [0, 0, 1, 1], [], []>} : vector<2x5xf32>, vector<5x128xf32>, vector<2x128xf32> -> vector<2x128xf32>
    %703 = arith.addf %696, %702 : vector<2x128xf32>
    %c0_145 = arith.constant 0 : index
    %c0_146 = arith.constant 0 : index
    %704 = vector.load %arg16[%c0_145, %c0_146] : memref<3x128xf32, #tpu.memory_space<vmem>>, vector<3x128xf32>
    tpu.vector_store %arg16[%c0_145, %c0_146], %559 {strides = array<i32>} : memref<3x128xf32, #tpu.memory_space<vmem>>, vector<3x128xf32>,
    %c0_147 = arith.constant 0 : index
    %c0_148 = arith.constant 0 : index
    %705 = vector.load %arg17[%c0_147, %c0_148] : memref<2x128xf32, #tpu.memory_space<vmem>>, vector<2x128xf32>
    tpu.vector_store %arg17[%c0_147, %c0_148], %703 {strides = array<i32>} : memref<2x128xf32, #tpu.memory_space<vmem>>, vector<2x128xf32>,
    return
  }
}

</mosaic_0001>

<llo_original>
// kernel: tpu_custom_call.1
$region0: #{tpu_custom_call.1}
  #allocation0 [shape = 'u32[]', space=smem, size = 0x4, offset = 0x4, fixed_abs, tag = 'smem constant byte address 0x4 - core index']
  #allocation1 [shape = 'u32[144,128]{1,0:T(1,128)}', space=vmem, size = 0x12000, scoped, tag = 'internal scratch']
  %s0 = inlined_call_operand.vmem [shape: f32[12,8], index: 0, kind: input, shape index: {}]
  %s1 = inlined_call_operand.vmem [shape: f32[10,8], index: 1, kind: input, shape index: {}]
  %s2 = inlined_call_operand.vmem [shape: s8[5,12], index: 2, kind: input, shape index: {}]
  %s3 = inlined_call_operand.vmem [shape: s8[6,10], index: 3, kind: input, shape index: {}]
  %s4 = inlined_call_operand.hbm [shape: s8[5,10], index: 4, kind: input, shape index: {}]
  %s5 = inlined_call_operand.vmem [shape: s8[2,6], index: 5, kind: input, shape index: {}]
  %s6 = inlined_call_operand.hbm [shape: s8[3,5], index: 6, kind: input, shape index: {}]
  %s7 = inlined_call_operand.hbm [shape: s8[2,5], index: 7, kind: input, shape index: {}]
  %s8 = inlined_call_operand.vmem [shape: f32[8,128], index: 8, kind: input, shape index: {}]
  %s9 = inlined_call_operand.vmem [shape: f32[8,128], index: 9, kind: input, shape index: {}]
  %s10 = inlined_call_operand.vmem [shape: f32[32,256], index: 10, kind: input, shape index: {}]
  %s11 = inlined_call_operand.hbm [shape: f32[32,384], index: 11, kind: input, shape index: {}]
  %s12 = inlined_call_operand.vmem [shape: f32[1,32], index: 12, kind: input, shape index: {}]
  %s13 = inlined_call_operand.vmem [shape: f32[1,32], index: 13, kind: input, shape index: {}]
  %s14 = inlined_call_operand.vmem [shape: f32[1,128], index: 14, kind: input, shape index: {}]
  %s15 = inlined_call_operand.vmem [shape: f32[1,128], index: 15, kind: input, shape index: {}]
  %s16 = inlined_call_operand.hbm [shape: f32[3,128], index: 16, kind: output, shape index: {0}]
  %s17 = inlined_call_operand.hbm [shape: f32[2,128], index: 17, kind: output, shape index: {1}]
  %18 = xla_tuple %s16, %s17
  %s19 = sld [smem:[#allocation0]]
  $region98: #{tpu_custom_call.1} parent=0
    _
  %s21 = ssub.s32 1, %s19
  %s22 = scalar_select 0, %s21, %s19
  $region1: #{tpu_custom_call.1} parent=0
    #allocation2 [shape = 'u8[1024]{0}', space=vmem, size = 0x400, scoped, tag = 'input window, operand 4, single buffered']
    #allocation3 [shape = 's32[1]{0}', space=sflag, size = 0x4, scoped, tag = 'scoped memory for tpu_custom_call.1']
    #allocation4 [shape = 's32[1]{0}', space=sflag, size = 0x4, scoped, tag = 'scoped memory for tpu_custom_call.1']
    #allocation5 [shape = 'u8[512]{0}', space=vmem, size = 0x400, scoped, tag = 'input window, operand 6, single buffered']
    #allocation6 [shape = 's32[1]{0}', space=sflag, size = 0x4, scoped, tag = 'scoped memory for tpu_custom_call.1']
    #allocation7 [shape = 'u8[512]{0}', space=vmem, size = 0x400, scoped, tag = 'input window, operand 7, single buffered']
    #allocation8 [shape = 'u8[49152]{0}', space=vmem, size = 0xc000, scoped, tag = 'input window, operand 11, single buffered']
    #allocation9 [shape = 's32[1]{0}', space=sflag, size = 0x4, scoped, tag = 'scoped memory for tpu_custom_call.1']
    #allocation10 [shape = 'u8[2048]{0}', space=vmem, size = 0x800, scoped, tag = 'output window, operand 0, single buffered']
    #allocation11 [shape = 'u8[1024]{0}', space=vmem, size = 0x400, scoped, tag = 'output window, operand 1, single buffered']
    #allocation12 [shape = 's32[1]{0}', space=sflag, size = 0x4, scoped, tag = 'scoped memory for tpu_custom_call.1']
    %23 = vsyncpa [#allocation3], 0
    %24 = vsyncpa [#allocation6], 0
    %25 = vsyncpa [#allocation9], 0
    %26 = vsyncpa [#allocation4], 0
    %27 = vsyncpa [#allocation12], 0
    // Predicated region
    $region2: #{tpu_custom_call.1} parent=1 // pred_check
      _
    $region3: #{tpu_custom_call.1} parent=1 // pred_check_branch
      %29 = sbr.rel (0) target = $region5
    $region4: #{tpu_custom_call.1} parent=1 // pred_region
      _
    $region5: #{tpu_custom_call.1} parent=1 // pred_fallthru
      _
    // Predicated region
    $region6: #{tpu_custom_call.1} parent=1 // pred_check
      _
    $region7: #{tpu_custom_call.1} parent=1 // pred_check_branch
      %31 = sbr.rel (0) target = $region9
    $region8: #{tpu_custom_call.1} parent=1 // pred_region
      _
    $region9: #{tpu_custom_call.1} parent=1 // pred_fallthru
      _
    // Predicated region
    $region10: #{tpu_custom_call.1} parent=1 // pred_check
      _
    $region11: #{tpu_custom_call.1} parent=1 // pred_check_branch
      %33 = sbr.rel (0) target = $region13
    $region12: #{tpu_custom_call.1} parent=1 // pred_region
      _
    $region13: #{tpu_custom_call.1} parent=1 // pred_fallthru
      _
    // Predicated region
    $region14: #{tpu_custom_call.1} parent=1 // pred_check
      _
    $region15: #{tpu_custom_call.1} parent=1 // pred_check_branch
      %35 = sbr.rel (0) target = $region17
    $region16: #{tpu_custom_call.1} parent=1 // pred_region
      _
    $region17: #{tpu_custom_call.1} parent=1 // pred_fallthru
      _
    // Predicated region
    $region18: #{tpu_custom_call.1} parent=1 // pred_check
      _
    $region19: #{tpu_custom_call.1} parent=1 // pred_check_branch
      %37 = sbr.rel (0) target = $region21
    $region20: #{tpu_custom_call.1} parent=1 // pred_region
      %s39 = ssub.s32 32, 32
      %40 = vsyncadd [#allocation3], %s39
      %s42 = sshll.u32 [#allocation2], 4
      %s43 = int_to_ptr.vmem [resolvable:$true] %s42
      %45 = dma.hbm_to_vmem [thread:$0]  %s4, 32, %s43, [#allocation3]
    $region21: #{tpu_custom_call.1} parent=1 // pred_fallthru
      _
    // Predicated region
    $region22: #{tpu_custom_call.1} parent=1 // pred_check
      _
    $region23: #{tpu_custom_call.1} parent=1 // pred_check_branch
      %47 = sbr.rel (0) target = $region25
    $region24: #{tpu_custom_call.1} parent=1 // pred_region
      _
    $region25: #{tpu_custom_call.1} parent=1 // pred_fallthru
      _
    // Predicated region
    $region26: #{tpu_custom_call.1} parent=1 // pred_check
      _
    $region27: #{tpu_custom_call.1} parent=1 // pred_check_branch
      %49 = sbr.rel (0) target = $region29
    $region28: #{tpu_custom_call.1} parent=1 // pred_region
      %s51 = ssub.s32 16, 16
      %52 = vsyncadd [#allocation6], %s51
      %s54 = sshll.u32 [#allocation5], 4
      %s55 = int_to_ptr.vmem [resolvable:$true] %s54
      %57 = dma.hbm_to_vmem [thread:$0]  %s6, 16, %s55, [#allocation6]
    $region29: #{tpu_custom_call.1} parent=1 // pred_fallthru
      _
    // Predicated region
    $region30: #{tpu_custom_call.1} parent=1 // pred_check
      _
    $region31: #{tpu_custom_call.1} parent=1 // pred_check_branch
      %59 = sbr.rel (0) target = $region33
    $region32: #{tpu_custom_call.1} parent=1 // pred_region
      %s61 = ssub.s32 16, 16
      %62 = vsyncadd [#allocation6], %s61
      %s64 = sshll.u32 [#allocation7], 4
      %s65 = int_to_ptr.vmem [resolvable:$true] %s64
      %67 = dma.hbm_to_vmem [thread:$0]  %s7, 16, %s65, [#allocation6]
    $region33: #{tpu_custom_call.1} parent=1 // pred_fallthru
      _
    // Predicated region
    $region34: #{tpu_custom_call.1} parent=1 // pred_check
      _
    $region35: #{tpu_custom_call.1} parent=1 // pred_check_branch
      %69 = sbr.rel (0) target = $region37
    $region36: #{tpu_custom_call.1} parent=1 // pred_region
      _
    $region37: #{tpu_custom_call.1} parent=1 // pred_fallthru
      _
    // Predicated region
    $region38: #{tpu_custom_call.1} parent=1 // pred_check
      _
    $region39: #{tpu_custom_call.1} parent=1 // pred_check_branch
      %71 = sbr.rel (0) target = $region41
    $region40: #{tpu_custom_call.1} parent=1 // pred_region
      _
    $region41: #{tpu_custom_call.1} parent=1 // pred_fallthru
      _
    // Predicated region
    $region42: #{tpu_custom_call.1} parent=1 // pred_check
      _
    $region43: #{tpu_custom_call.1} parent=1 // pred_check_branch
      %73 = sbr.rel (0) target = $region45
    $region44: #{tpu_custom_call.1} parent=1 // pred_region
      _
    $region45: #{tpu_custom_call.1} parent=1 // pred_fallthru
      _
    // Predicated region
    $region46: #{tpu_custom_call.1} parent=1 // pred_check
      _
    $region47: #{tpu_custom_call.1} parent=1 // pred_check_branch
      %75 = sbr.rel (0) target = $region49
    $region48: #{tpu_custom_call.1} parent=1 // pred_region
      %s77 = ssub.s32 1536, 1536
      %78 = vsyncadd [#allocation9], %s77
      %s79 = sshll.u32 [#allocation8], 4
      %s80 = int_to_ptr.vmem [resolvable:$true] %s79
      %85 = dma.hbm_to_vmem [thread:$0]  %s11, 1536, %s80, [#allocation9], 384, 384, 24
    $region49: #{tpu_custom_call.1} parent=1 // pred_fallthru
      _
    // Predicated region
    $region50: #{tpu_custom_call.1} parent=1 // pred_check
      _
    $region51: #{tpu_custom_call.1} parent=1 // pred_check_branch
      %87 = sbr.rel (0) target = $region53
    $region52: #{tpu_custom_call.1} parent=1 // pred_region
      _
    $region53: #{tpu_custom_call.1} parent=1 // pred_fallthru
      _
    // Predicated region
    $region54: #{tpu_custom_call.1} parent=1 // pred_check
      _
    $region55: #{tpu_custom_call.1} parent=1 // pred_check_branch
      %89 = sbr.rel (0) target = $region57
    $region56: #{tpu_custom_call.1} parent=1 // pred_region
      _
    $region57: #{tpu_custom_call.1} parent=1 // pred_fallthru
      _
    // Predicated region
    $region58: #{tpu_custom_call.1} parent=1 // pred_check
      _
    $region59: #{tpu_custom_call.1} parent=1 // pred_check_branch
      %91 = sbr.rel (0) target = $region61
    $region60: #{tpu_custom_call.1} parent=1 // pred_region
      _
    $region61: #{tpu_custom_call.1} parent=1 // pred_fallthru
      _
    // Predicated region
    $region62: #{tpu_custom_call.1} parent=1 // pred_check
      _
    $region63: #{tpu_custom_call.1} parent=1 // pred_check_branch
      %93 = sbr.rel (0) target = $region65
    $region64: #{tpu_custom_call.1} parent=1 // pred_region
      _
    $region65: #{tpu_custom_call.1} parent=1 // pred_fallthru
      _
    // Predicated region
    $region66: #{tpu_custom_call.1} parent=1 // pred_check
      _
    $region67: #{tpu_custom_call.1} parent=1 // pred_check_branch
      %95 = sbr.rel (0) target = $region69
    $region68: #{tpu_custom_call.1} parent=1 // pred_region
      %96 = dma.done [#allocation3], 32
    $region69: #{tpu_custom_call.1} parent=1 // pred_fallthru
      _
    // Predicated region
    $region70: #{tpu_custom_call.1} parent=1 // pred_check
      _
    $region71: #{tpu_custom_call.1} parent=1 // pred_check_branch
      %98 = sbr.rel (0) target = $region73
    $region72: #{tpu_custom_call.1} parent=1 // pred_region
      %99 = dma.done [#allocation6], 16
    $region73: #{tpu_custom_call.1} parent=1 // pred_fallthru
      _
    // Predicated region
    $region74: #{tpu_custom_call.1} parent=1 // pred_check
      _
    $region75: #{tpu_custom_call.1} parent=1 // pred_check_branch
      %101 = sbr.rel (0) target = $region77
    $region76: #{tpu_custom_call.1} parent=1 // pred_region
      %102 = dma.done [#allocation6], 16
    $region77: #{tpu_custom_call.1} parent=1 // pred_fallthru
      _
    // Predicated region
    $region78: #{tpu_custom_call.1} parent=1 // pred_check
      _
    $region79: #{tpu_custom_call.1} parent=1 // pred_check_branch
      %104 = sbr.rel (0) target = $region81
    $region80: #{tpu_custom_call.1} parent=1 // pred_region
      %105 = dma.done [#allocation9], 1536
    $region81: #{tpu_custom_call.1} parent=1 // pred_fallthru
      _
    %v106 = vlaneseq
    %v107 = vand.u32 %v106, 127
    %v108 = vlaneseq
    %v109 = vshrl.u32 %v108, 7
    %v110 = vmul.u32 %v109, 8
    %vm111 = vcmp.ge.s32.totalorder %v107, %v110
    %v112 = vadd.s32 %v110, 8
    %vm113 = vcmp.lt.s32.totalorder %v107, %v112
    %vm114 = vmand %vm111, %vm113
    %v115 = vsel %vm114, 1, 0
    %v116 = vcvt.s32.f32 %v115
    %v117 = vadd.s32 %v109, 8
    %v118 = vmul.u32 %v117, 8
    %vm119 = vcmp.ge.s32.totalorder %v107, %v118
    %v120 = vadd.s32 %v118, 8
    %vm121 = vcmp.lt.s32.totalorder %v107, %v120
    %vm122 = vmand %vm119, %vm121
    %v123 = vsel %vm122, 1, 0
    %v124 = vcvt.s32.f32 %v123
    %v125 = vld [vmem:[%s2] sm:$0x3]
    %v126 = vunpack.c.0.s8 %v125
    %v127 = vcvt.s32.f32 %v126
    %vm128 = vcmp.gt.f32.partialorder %v127, 0.0
    %v129 = vld [vmem:[%s3] sm:$0x3]
    %v130 = vunpack.c.0.s8 %v129
    %v131 = vcvt.s32.f32 %v130
    %vm132 = vcmp.gt.f32.partialorder %v131, 0.0
    %v133 = vld [vmem:[#allocation2] sm:$0x3]
    %v134 = vunpack.c.0.s8 %v133
    %v135 = vcvt.s32.f32 %v134
    %vm136 = vcmp.gt.f32.partialorder %v135, 0.0
    %v137 = vld [vmem:[%s5] sm:$0x1]
    %v138 = vunpack.c.0.s8 %v137
    %v139 = vcvt.s32.f32 %v138
    %vm140 = vcmp.gt.f32.partialorder %v139, 0.0
    %v141 = vld [vmem:[#allocation5] sm:$0x1]
    %v142 = vunpack.c.0.s8 %v141
    %v143 = vcvt.s32.f32 %v142
    %vm144 = vcmp.gt.f32.partialorder %v143, 0.0
    %v145 = vld [vmem:[#allocation7] sm:$0x1]
    %v146 = vunpack.c.0.s8 %v145
    %v147 = vcvt.s32.f32 %v146
    %vm148 = vcmp.gt.f32.partialorder %v147, 0.0
    %v149 = vld [vmem:[%s0] sm:$0xff]
    %v150 = vld [vmem:[%s0 + $0x8] sm:$0xf]
    %v151 = vld [vmem:[%s8] sm:$0xff]
    %vm152 = vcmask 64512
    %v154 = vsel %vm152, %v149, 0
    %v157 = vsel %vm152, %v150, 0
    %159 = vmatprep.subr.mxu0 0.0
    %160 = vmatpush1.msra.mxu0 %v151
    %161 = vmatprep.subr.mxu0 0.0
    %162 = vmatpush1.msra.mxu0 0.0
    %163 = vmatprep.subr.mxu0 0.0
    %164 = vmatpush1.msra.mxu0 0.0
    %165 = vmatprep.subr.mxu0 0.0
    %166 = vmatpush1.msra.mxu0 0.0
    %167 = vmatprep.subr.mxu0 0.0
    %168 = vmatpush1.msra.mxu0 0.0
    %169 = vmatprep.subr.mxu0 0.0
    %170 = vmatpush1.msra.mxu0 0.0
    %171 = vmatprep.subr.mxu0 0.0
    %172 = vmatpush1.msra.mxu0 0.0
    %173 = vmatprep.subr.mxu0 0.0
    %174 = vmatpush1.msra.mxu0 0.0
    %175 = vmatprep.subr.mxu0 0.0
    %176 = vmatpush1.msra.mxu0 0.0
    %177 = vmatprep.subr.mxu0 0.0
    %178 = vmatpush1.msra.mxu0 0.0
    %179 = vmatprep.subr.mxu0 0.0
    %180 = vmatpush1.msra.mxu0 0.0
    %181 = vmatprep.subr.mxu0 0.0
    %182 = vmatpush1.msra.mxu0 0.0
    %183 = vmatprep.subr.mxu0 0.0
    %184 = vmatpush1.msra.mxu0 0.0
    %185 = vmatprep.subr.mxu0 0.0
    %186 = vmatpush1.msra.mxu0 0.0
    %187 = vmatprep.subr.mxu0 0.0
    %188 = vmatpush1.msra.mxu0 0.0
    %189 = vmatprep.subr.mxu0 0.0
    %190 = vmatpush1.msra.mxu0 0.0
    %191 = vmatprep.subr.mxu0 0.0
    %192 = vmatpush1.msra.mxu0 0.0
    %193 = vmatprep.subr.mxu0 0.0
    %194 = vmatpush1.msra.mxu0 0.0
    %195 = vmatprep.subr.mxu0 0.0
    %196 = vmatpush1.msra.mxu0 0.0
    %197 = vmatprep.subr.mxu0 0.0
    %198 = vmatpush1.msra.mxu0 0.0
    %199 = vmatprep.subr.mxu0 0.0
    %200 = vmatpush1.msra.mxu0 0.0
    %201 = vmatprep.subr.mxu0 0.0
    %202 = vmatpush1.msra.mxu0 0.0
    %203 = vmatprep.subr.mxu0 0.0
    %204 = vmatpush1.msra.mxu0 0.0
    %205 = vmatprep.subr.mxu0 0.0
    %206 = vmatpush1.msra.mxu0 0.0
    %207 = vmatprep.subr.mxu0 0.0
    %208 = vmatpush1.msra.mxu0 0.0
    %209 = vmatprep.subr.mxu0 0.0
    %210 = vmatpush1.msra.mxu0 0.0
    %211 = vmatprep.subr.mxu0 0.0
    %212 = vmatpush1.msra.mxu0 0.0
    %213 = vmatprep.subr.mxu0 0.0
    %214 = vmatpush1.msra.mxu0 0.0
    %215 = vmatprep.subr.mxu0 0.0
    %216 = vmatpush1.msra.mxu0 0.0
    %217 = vmatprep.subr.mxu0 0.0
    %218 = vmatpush1.msra.mxu0 0.0
    %219 = vmatprep.subr.mxu0 0.0
    %220 = vmatpush1.msra.mxu0 0.0
    %221 = vmatprep.subr.mxu0 0.0
    %222 = vmatpush1.msra.mxu0 0.0
    %223 = vmatprep.mubr.f32.mxu0 0.0
    %224 = vmatmul.mubr.f32.gmra.mrb[0].mxu0 %v154
    %v225 = vpop.f32.mrb[0].mxu0
    %v226 = vadd.f32 0.0, %v225
    %v227 = vpop.f32.mrb[0].mxu0
    %228 = vmatprep.mubr.f32.mxu0 0.0
    %229 = vmatmul.mubr.f32.gmra.mrb[0].mxu0 %v157
    %v230 = vpop.f32.mrb[0].mxu0
    %v231 = vadd.f32 0.0, %v230
    %v232 = vpop.f32.mrb[0].mxu0
    %233 = vdwg.mxu0
    %v234 = vld [vmem:[%s1] sm:$0xff]
    %v235 = vld [vmem:[%s1 + $0x8] sm:$0x3]
    %v236 = vld [vmem:[%s9] sm:$0xff]
    %v238 = vsel %vm152, %v234, 0
    %v241 = vsel %vm152, %v235, 0
    %243 = vmatprep.subr.mxu0 0.0
    %244 = vmatpush1.msra.mxu0 %v236
    %245 = vmatprep.subr.mxu0 0.0
    %246 = vmatpush1.msra.mxu0 0.0
    %247 = vmatprep.subr.mxu0 0.0
    %248 = vmatpush1.msra.mxu0 0.0
    %249 = vmatprep.subr.mxu0 0.0
    %250 = vmatpush1.msra.mxu0 0.0
    %251 = vmatprep.subr.mxu0 0.0
    %252 = vmatpush1.msra.mxu0 0.0
    %253 = vmatprep.subr.mxu0 0.0
    %254 = vmatpush1.msra.mxu0 0.0
    %255 = vmatprep.subr.mxu0 0.0
    %256 = vmatpush1.msra.mxu0 0.0
    %257 = vmatprep.subr.mxu0 0.0
    %258 = vmatpush1.msra.mxu0 0.0
    %259 = vmatprep.subr.mxu0 0.0
    %260 = vmatpush1.msra.mxu0 0.0
    %261 = vmatprep.subr.mxu0 0.0
    %262 = vmatpush1.msra.mxu0 0.0
    %263 = vmatprep.subr.mxu0 0.0
    %264 = vmatpush1.msra.mxu0 0.0
    %265 = vmatprep.subr.mxu0 0.0
    %266 = vmatpush1.msra.mxu0 0.0
    %267 = vmatprep.subr.mxu0 0.0
    %268 = vmatpush1.msra.mxu0 0.0
    %269 = vmatprep.subr.mxu0 0.0
    %270 = vmatpush1.msra.mxu0 0.0
    %271 = vmatprep.subr.mxu0 0.0
    %272 = vmatpush1.msra.mxu0 0.0
    %273 = vmatprep.subr.mxu0 0.0
    %274 = vmatpush1.msra.mxu0 0.0
    %275 = vmatprep.subr.mxu0 0.0
    %276 = vmatpush1.msra.mxu0 0.0
    %277 = vmatprep.subr.mxu0 0.0
    %278 = vmatpush1.msra.mxu0 0.0
    %279 = vmatprep.subr.mxu0 0.0
    %280 = vmatpush1.msra.mxu0 0.0
    %281 = vmatprep.subr.mxu0 0.0
    %282 = vmatpush1.msra.mxu0 0.0
    %283 = vmatprep.subr.mxu0 0.0
    %284 = vmatpush1.msra.mxu0 0.0
    %285 = vmatprep.subr.mxu0 0.0
    %286 = vmatpush1.msra.mxu0 0.0
    %287 = vmatprep.subr.mxu0 0.0
    %288 = vmatpush1.msra.mxu0 0.0
    %289 = vmatprep.subr.mxu0 0.0
    %290 = vmatpush1.msra.mxu0 0.0
    %291 = vmatprep.subr.mxu0 0.0
    %292 = vmatpush1.msra.mxu0 0.0
    %293 = vmatprep.subr.mxu0 0.0
    %294 = vmatpush1.msra.mxu0 0.0
    %295 = vmatprep.subr.mxu0 0.0
    %296 = vmatpush1.msra.mxu0 0.0
    %297 = vmatprep.subr.mxu0 0.0
    %298 = vmatpush1.msra.mxu0 0.0
    %299 = vmatprep.subr.mxu0 0.0
    %300 = vmatpush1.msra.mxu0 0.0
    %301 = vmatprep.subr.mxu0 0.0
    %302 = vmatpush1.msra.mxu0 0.0
    %303 = vmatprep.subr.mxu0 0.0
    %304 = vmatpush1.msra.mxu0 0.0
    %305 = vmatprep.subr.mxu0 0.0
    %306 = vmatpush1.msra.mxu0 0.0
    %307 = vmatprep.mubr.f32.mxu0 0.0
    %308 = vmatmul.mubr.f32.gmra.mrb[0].mxu0 %v238
    %v309 = vpop.f32.mrb[0].mxu0
    %v310 = vadd.f32 0.0, %v309
    %v311 = vpop.f32.mrb[0].mxu0
    %312 = vmatprep.mubr.f32.mxu0 0.0
    %313 = vmatmul.mubr.f32.gmra.mrb[0].mxu0 %v241
    %v314 = vpop.f32.mrb[0].mxu0
    %v315 = vadd.f32 0.0, %v314
    %v316 = vpop.f32.mrb[0].mxu0
    %317 = vdwg.mxu0
    %v318 = vld [vmem:[%s12] sm:$0x1]
    %v320 = vlaneseq
    %v321 = vshrl.u32 %v320, 7
    %v322 = vsub.s32 0, %v321
    %v323 = vrot.slane %v318, %v322
    %v325 = vld [vmem:[%s13] sm:$0x1]
    %v327 = vlaneseq
    %v328 = vshrl.u32 %v327, 7
    %v329 = vsub.s32 0, %v328
    %v330 = vrot.slane %v325, %v329
    %333 = vrot.lane.b32.xlu0 %v310, 48
    %v334 = vpop.permute.xlu0 %333
    %336 = vxpose.xlu0.b32.start [1/16] %v334, 128
    %337 = vxpose.xlu0.b32.cont [2/16] 0.0, 128
    %338 = vxpose.xlu0.b32.cont [3/16] 0.0, 128
    %339 = vxpose.xlu0.b32.cont [4/16] 0.0, 128
    %340 = vxpose.xlu0.b32.cont [5/16] 0.0, 128
    %341 = vxpose.xlu0.b32.cont [6/16] 0.0, 128
    %342 = vxpose.xlu0.b32.cont [7/16] 0.0, 128
    %343 = vxpose.xlu0.b32.cont [8/16] 0.0, 128
    %344 = vxpose.xlu0.b32.cont [9/16] 0.0, 128
    %345 = vxpose.xlu0.b32.cont [10/16] 0.0, 128
    %346 = vxpose.xlu0.b32.cont [11/16] 0.0, 128
    %347 = vxpose.xlu0.b32.cont [12/16] 0.0, 128
    %348 = vxpose.xlu0.b32.cont [13/16] 0.0, 128
    %349 = vxpose.xlu0.b32.cont [14/16] 0.0, 128
    %350 = vxpose.xlu0.b32.cont [15/16] 0.0, 128
    %351 = vxpose.xlu0.b32.end [16/16] 0.0, 128
    %v352 = vpop.trf.xlu0
    %v353 = vpop.trf.xlu0
    %v354 = vpop.trf.xlu0
    %v355 = vpop.trf.xlu0
    %v356 = vpop.trf.xlu0
    %v357 = vpop.trf.xlu0
    %v358 = vpop.trf.xlu0
    %v359 = vpop.trf.xlu0
    %v360 = vpop.trf.xlu0
    %v361 = vpop.trf.xlu0
    %v362 = vpop.trf.xlu0
    %v363 = vpop.trf.xlu0
    %v364 = vpop.trf.xlu0
    %v365 = vpop.trf.xlu0
    %v366 = vpop.trf.xlu0
    %v367 = vpop.trf.xlu0
    %v368 = vlaneseq
    %v369 = vshrl.u32 %v368, 7
    %v370 = vsub.s32 0, %v369
    %v371 = vrot.slane %v352, %v370
    %373 = vbcast.lane.b32.xlu0 %v371, 256
    %v374 = vpop.permute.xlu0 %373
    %v375 = vlaneseq
    %v376 = vshrl.u32 %v375, 7
    %v377 = vsub.s32 1, %v376
    %v378 = vrot.slane %v352, %v377
    %380 = vbcast.lane.b32.xlu0 %v378, 256
    %v381 = vpop.permute.xlu0 %380
    %v382 = vlaneseq
    %v383 = vshrl.u32 %v382, 7
    %v384 = vsub.s32 2, %v383
    %v385 = vrot.slane %v352, %v384
    %387 = vbcast.lane.b32.xlu0 %v385, 256
    %v388 = vpop.permute.xlu0 %387
    %v389 = vlaneseq
    %v390 = vshrl.u32 %v389, 7
    %v391 = vsub.s32 3, %v390
    %v392 = vrot.slane %v352, %v391
    %394 = vbcast.lane.b32.xlu0 %v392, 256
    %v395 = vpop.permute.xlu0 %394
    %398 = vrot.lane.b32.xlu0 %v226, 96
    %v399 = vpop.permute.xlu0 %398
    %400 = vrot.lane.b32.xlu0 %v231, 96
    %v401 = vpop.permute.xlu0 %400
    %404 = vxpose.xlu0.b32.start [1/16] %v399, 128
    %405 = vxpose.xlu0.b32.cont [2/16] %v401, 128
    %406 = vxpose.xlu0.b32.cont [3/16] 0.0, 128
    %407 = vxpose.xlu0.b32.cont [4/16] 0.0, 128
    %408 = vxpose.xlu0.b32.cont [5/16] 0.0, 128
    %409 = vxpose.xlu0.b32.cont [6/16] 0.0, 128
    %410 = vxpose.xlu0.b32.cont [7/16] 0.0, 128
    %411 = vxpose.xlu0.b32.cont [8/16] 0.0, 128
    %412 = vxpose.xlu0.b32.cont [9/16] 0.0, 128
    %413 = vxpose.xlu0.b32.cont [10/16] 0.0, 128
    %414 = vxpose.xlu0.b32.cont [11/16] 0.0, 128
    %415 = vxpose.xlu0.b32.cont [12/16] 0.0, 128
    %416 = vxpose.xlu0.b32.cont [13/16] 0.0, 128
    %417 = vxpose.xlu0.b32.cont [14/16] 0.0, 128
    %418 = vxpose.xlu0.b32.cont [15/16] 0.0, 128
    %419 = vxpose.xlu0.b32.end [16/16] 0.0, 128
    %v420 = vpop.trf.xlu0
    %v421 = vpop.trf.xlu0
    %v422 = vpop.trf.xlu0
    %v423 = vpop.trf.xlu0
    %v424 = vpop.trf.xlu0
    %v425 = vpop.trf.xlu0
    %v426 = vpop.trf.xlu0
    %v427 = vpop.trf.xlu0
    %v428 = vpop.trf.xlu0
    %v429 = vpop.trf.xlu0
    %v430 = vpop.trf.xlu0
    %v431 = vpop.trf.xlu0
    %v432 = vpop.trf.xlu0
    %v433 = vpop.trf.xlu0
    %v434 = vpop.trf.xlu0
    %v435 = vpop.trf.xlu0
    %v438 = vunpack.c.l.s4 1966171168
    %v439 = vunpack.c.0.s8 %v438
    %v440 = vlaneseq
    %v441 = vshrl.u32 %v440, 7
    %v442 = vsub.s32 %v439, %v441
    %v443 = vrot.slane %v420, %v442
    %v444 = vcombine.high %v443, %v443
    %v446 = vunpack.c.l.s4 1966171168
    %v447 = vunpack.c.0.s8 %v446
    %v448 = vlaneseq
    %v449 = vshrl.u32 %v448, 7
    %v450 = vsub.s32 %v447, %v449
    %v451 = vrot.slane %v443, %v450
    %v453 = vunpack.c.l.s4 1966171168
    %v454 = vunpack.c.0.s8 %v453
    %v455 = vlaneseq
    %v456 = vshrl.u32 %v455, 7
    %v457 = vsub.s32 %v454, %v456
    %v458 = vrot.slane %v444, %v457
    %v459 = vcombine.high %v451, %v451
    %v460 = vcombine.high %v458, %v458
    %v461 = vlaneseq
    %v462 = vshrl.u32 %v461, 7
    %v463 = vsub.s32 0, %v462
    %v464 = vrot.slane %v451, %v463
    %v465 = vlaneseq
    %v466 = vshrl.u32 %v465, 7
    %v467 = vsub.s32 0, %v466
    %v468 = vrot.slane %v458, %v467
    %v469 = vlaneseq
    %v470 = vshrl.u32 %v469, 7
    %v471 = vsub.s32 0, %v470
    %v472 = vrot.slane %v459, %v471
    %v473 = vlaneseq
    %v474 = vshrl.u32 %v473, 7
    %v475 = vsub.s32 0, %v474
    %v476 = vrot.slane %v460, %v475
    %v481 = vadd.f32 %v374, %v464
    %v482 = vadd.f32 %v381, %v468
    %v483 = vadd.f32 %v388, %v472
    %v484 = vadd.f32 %v395, %v476
    %vm485 = vcmp.gt.f32.partialorder %v481, 0.0
    %vm486 = vcmp.gt.f32.partialorder %v482, 0.0
    %vm487 = vcmp.gt.f32.partialorder %v483, 0.0
    %vm488 = vcmp.gt.f32.partialorder %v484, 0.0
    %v489 = vmul.f32 %v481, 0.2
    %v490 = vmul.f32 %v482, 0.2
    %v491 = vmul.f32 %v483, 0.2
    %v492 = vmul.f32 %v484, 0.2
    %v493 = vsel %vm485, %v481, %v489
    %v494 = vsel %vm486, %v482, %v490
    %v495 = vsel %vm487, %v483, %v491
    %v496 = vsel %vm488, %v484, %v492
    %v497 = vsel %vm128, 1, 0
    %vm498 = vcmp.eq.s32.totalorder %v497, 1
    %v499 = vsel %vm498, %v493, -1e+30
    %v500 = vsel %vm498, %v494, -1e+30
    %v501 = vsel %vm498, %v495, -1e+30
    %v502 = vsel %vm498, %v496, -1e+30
    %vm503 = vcmask 94208
    %v504 = vsel %vm503, %v499, -inf
    %505 = vmax.xlane.f32.xlu0 %v504
    %v506 = vpop.xlane.xlu0 %505
    %v507 = vsel %vm503, %v500, -inf
    %508 = vmax.xlane.f32.xlu0 %v507
    %v509 = vpop.xlane.xlu0 %508
    %v510 = vsel %vm503, %v501, -inf
    %511 = vmax.xlane.f32.xlu0 %v510
    %v512 = vpop.xlane.xlu0 %511
    %v513 = vsel %vm503, %v502, -inf
    %514 = vmax.xlane.f32.xlu0 %v513
    %v515 = vpop.xlane.xlu0 %514
    %v516 = vsub.f32 %v499, %v506
    %v517 = vsub.f32 %v500, %v509
    %v518 = vsub.f32 %v501, %v512
    %v519 = vsub.f32 %v502, %v515
    %v520 = vmul.f32 %v516, 1.442695
    %v521 = vpow.pop %v520
    %v522 = vmul.f32 %v517, 1.442695
    %v523 = vpow.pop %v522
    %v524 = vmul.f32 %v518, 1.442695
    %v525 = vpow.pop %v524
    %v526 = vmul.f32 %v519, 1.442695
    %v527 = vpow.pop %v526
    %v528 = vsel %vm498, %v521, 0.0
    %v529 = vsel %vm498, %v523, 0.0
    %v530 = vsel %vm498, %v525, 0.0
    %v531 = vsel %vm498, %v527, 0.0
    %v532 = vsel %vm503, %v528, 0.0
    %533 = vadd.xlane.f32.xlu0 %v532
    %v534 = vpop.xlane.xlu0 %533
    %v535 = vsel %vm503, %v529, 0.0
    %536 = vadd.xlane.f32.xlu0 %v535
    %v537 = vpop.xlane.xlu0 %536
    %v538 = vsel %vm503, %v530, 0.0
    %539 = vadd.xlane.f32.xlu0 %v538
    %v540 = vpop.xlane.xlu0 %539
    %v541 = vsel %vm503, %v531, 0.0
    %542 = vadd.xlane.f32.xlu0 %v541
    %v543 = vpop.xlane.xlu0 %542
    %v544 = vmax.f32 %v534, 1e-20
    %v545 = vmax.f32 %v537, 1e-20
    %v546 = vmax.f32 %v540, 1e-20
    %v547 = vmax.f32 %v543, 1e-20
    %v548 = vrcp.pop %v544
    %v549 = vrcp.pop %v545
    %v550 = vrcp.pop %v546
    %v551 = vrcp.pop %v547
    %v552 = vmul.f32 %v528, %v548
    %v553 = vmul.f32 %v529, %v549
    %v554 = vmul.f32 %v530, %v550
    %v555 = vmul.f32 %v531, %v551
    %v556 = vlaneseq
    %v557 = vshrl.u32 %v556, 7
    %v558 = vsub.s32 0, %v557
    %v559 = vrot.slane %v116, %v558
    %v560 = vmul.f32 %v226, %v559
    %v561 = vmul.f32 %v231, %v559
    %vm562 = vcmask 97280
    %v564 = vsel %vm562, %v552, 0
    %vm566 = vcmask 1043456
    %v568 = vsel %vm566, %v561, 0
    %570 = vmatprep.subr.mxu0 0.0
    %571 = vmatpush1.msra.mxu0 %v560
    %572 = vmatprep.subr.mxu0 0.0
    %573 = vmatpush1.msra.mxu0 %v568
    %574 = vmatprep.subr.mxu0 0.0
    %575 = vmatpush1.msra.mxu0 0.0
    %576 = vmatprep.subr.mxu0 0.0
    %577 = vmatpush1.msra.mxu0 0.0
    %578 = vmatprep.subr.mxu0 0.0
    %579 = vmatpush1.msra.mxu0 0.0
    %580 = vmatprep.subr.mxu0 0.0
    %581 = vmatpush1.msra.mxu0 0.0
    %582 = vmatprep.subr.mxu0 0.0
    %583 = vmatpush1.msra.mxu0 0.0
    %584 = vmatprep.subr.mxu0 0.0
    %585 = vmatpush1.msra.mxu0 0.0
    %586 = vmatprep.subr.mxu0 0.0
    %587 = vmatpush1.msra.mxu0 0.0
    %588 = vmatprep.subr.mxu0 0.0
    %589 = vmatpush1.msra.mxu0 0.0
    %590 = vmatprep.subr.mxu0 0.0
    %591 = vmatpush1.msra.mxu0 0.0
    %592 = vmatprep.subr.mxu0 0.0
    %593 = vmatpush1.msra.mxu0 0.0
    %594 = vmatprep.subr.mxu0 0.0
    %595 = vmatpush1.msra.mxu0 0.0
    %596 = vmatprep.subr.mxu0 0.0
    %597 = vmatpush1.msra.mxu0 0.0
    %598 = vmatprep.subr.mxu0 0.0
    %599 = vmatpush1.msra.mxu0 0.0
    %600 = vmatprep.subr.mxu0 0.0
    %601 = vmatpush1.msra.mxu0 0.0
    %602 = vmatprep.subr.mxu0 0.0
    %603 = vmatpush1.msra.mxu0 0.0
    %604 = vmatprep.subr.mxu0 0.0
    %605 = vmatpush1.msra.mxu0 0.0
    %606 = vmatprep.subr.mxu0 0.0
    %607 = vmatpush1.msra.mxu0 0.0
    %608 = vmatprep.subr.mxu0 0.0
    %609 = vmatpush1.msra.mxu0 0.0
    %610 = vmatprep.subr.mxu0 0.0
    %611 = vmatpush1.msra.mxu0 0.0
    %612 = vmatprep.subr.mxu0 0.0
    %613 = vmatpush1.msra.mxu0 0.0
    %614 = vmatprep.subr.mxu0 0.0
    %615 = vmatpush1.msra.mxu0 0.0
    %616 = vmatprep.subr.mxu0 0.0
    %617 = vmatpush1.msra.mxu0 0.0
    %618 = vmatprep.subr.mxu0 0.0
    %619 = vmatpush1.msra.mxu0 0.0
    %620 = vmatprep.subr.mxu0 0.0
    %621 = vmatpush1.msra.mxu0 0.0
    %622 = vmatprep.subr.mxu0 0.0
    %623 = vmatpush1.msra.mxu0 0.0
    %624 = vmatprep.subr.mxu0 0.0
    %625 = vmatpush1.msra.mxu0 0.0
    %626 = vmatprep.subr.mxu0 0.0
    %627 = vmatpush1.msra.mxu0 0.0
    %628 = vmatprep.subr.mxu0 0.0
    %629 = vmatpush1.msra.mxu0 0.0
    %630 = vmatprep.subr.mxu0 0.0
    %631 = vmatpush1.msra.mxu0 0.0
    %632 = vmatprep.subr.mxu0 0.0
    %633 = vmatpush1.msra.mxu0 0.0
    %634 = vmatprep.mubr.f32.mxu0 0.0
    %635 = vmatmul.mubr.f32.gmra.mrb[0].mxu0 %v564
    %v636 = vpop.f32.mrb[0].mxu0
    %v637 = vadd.f32 0.0, %v636
    %v638 = vpop.f32.mrb[0].mxu0
    %639 = vdwg.mxu0
    %v640 = vadd.f32 %v330, %v637
    %v641 = vlaneseq
    %v642 = vshrl.u32 %v641, 7
    %v643 = vsub.s32 1, %v642
    %v644 = vrot.slane %v116, %v643
    %v645 = vmul.f32 %v226, %v644
    %v646 = vmul.f32 %v231, %v644
    %v648 = vsel %vm562, %v553, 0
    %v651 = vsel %vm566, %v646, 0
    %653 = vmatprep.subr.mxu0 0.0
    %654 = vmatpush1.msra.mxu0 %v645
    %655 = vmatprep.subr.mxu0 0.0
    %656 = vmatpush1.msra.mxu0 %v651
    %657 = vmatprep.subr.mxu0 0.0
    %658 = vmatpush1.msra.mxu0 0.0
    %659 = vmatprep.subr.mxu0 0.0
    %660 = vmatpush1.msra.mxu0 0.0
    %661 = vmatprep.subr.mxu0 0.0
    %662 = vmatpush1.msra.mxu0 0.0
    %663 = vmatprep.subr.mxu0 0.0
    %664 = vmatpush1.msra.mxu0 0.0
    %665 = vmatprep.subr.mxu0 0.0
    %666 = vmatpush1.msra.mxu0 0.0
    %667 = vmatprep.subr.mxu0 0.0
    %668 = vmatpush1.msra.mxu0 0.0
    %669 = vmatprep.subr.mxu0 0.0
    %670 = vmatpush1.msra.mxu0 0.0
    %671 = vmatprep.subr.mxu0 0.0
    %672 = vmatpush1.msra.mxu0 0.0
    %673 = vmatprep.subr.mxu0 0.0
    %674 = vmatpush1.msra.mxu0 0.0
    %675 = vmatprep.subr.mxu0 0.0
    %676 = vmatpush1.msra.mxu0 0.0
    %677 = vmatprep.subr.mxu0 0.0
    %678 = vmatpush1.msra.mxu0 0.0
    %679 = vmatprep.subr.mxu0 0.0
    %680 = vmatpush1.msra.mxu0 0.0
    %681 = vmatprep.subr.mxu0 0.0
    %682 = vmatpush1.msra.mxu0 0.0
    %683 = vmatprep.subr.mxu0 0.0
    %684 = vmatpush1.msra.mxu0 0.0
    %685 = vmatprep.subr.mxu0 0.0
    %686 = vmatpush1.msra.mxu0 0.0
    %687 = vmatprep.subr.mxu0 0.0
    %688 = vmatpush1.msra.mxu0 0.0
    %689 = vmatprep.subr.mxu0 0.0
    %690 = vmatpush1.msra.mxu0 0.0
    %691 = vmatprep.subr.mxu0 0.0
    %692 = vmatpush1.msra.mxu0 0.0
    %693 = vmatprep.subr.mxu0 0.0
    %694 = vmatpush1.msra.mxu0 0.0
    %695 = vmatprep.subr.mxu0 0.0
    %696 = vmatpush1.msra.mxu0 0.0
    %697 = vmatprep.subr.mxu0 0.0
    %698 = vmatpush1.msra.mxu0 0.0
    %699 = vmatprep.subr.mxu0 0.0
    %700 = vmatpush1.msra.mxu0 0.0
    %701 = vmatprep.subr.mxu0 0.0
    %702 = vmatpush1.msra.mxu0 0.0
    %703 = vmatprep.subr.mxu0 0.0
    %704 = vmatpush1.msra.mxu0 0.0
    %705 = vmatprep.subr.mxu0 0.0
    %706 = vmatpush1.msra.mxu0 0.0
    %707 = vmatprep.subr.mxu0 0.0
    %708 = vmatpush1.msra.mxu0 0.0
    %709 = vmatprep.subr.mxu0 0.0
    %710 = vmatpush1.msra.mxu0 0.0
    %711 = vmatprep.subr.mxu0 0.0
    %712 = vmatpush1.msra.mxu0 0.0
    %713 = vmatprep.subr.mxu0 0.0
    %714 = vmatpush1.msra.mxu0 0.0
    %715 = vmatprep.subr.mxu0 0.0
    %716 = vmatpush1.msra.mxu0 0.0
    %717 = vmatprep.mubr.f32.mxu0 0.0
    %718 = vmatmul.mubr.f32.gmra.mrb[0].mxu0 %v648
    %v719 = vpop.f32.mrb[0].mxu0
    %v720 = vadd.f32 0.0, %v719
    %v721 = vpop.f32.mrb[0].mxu0
    %722 = vdwg.mxu0
    %v723 = vadd.f32 %v640, %v720
    %v724 = vlaneseq
    %v725 = vshrl.u32 %v724, 7
    %v726 = vsub.s32 2, %v725
    %v727 = vrot.slane %v116, %v726
    %v728 = vmul.f32 %v226, %v727
    %v729 = vmul.f32 %v231, %v727
    %v731 = vsel %vm562, %v554, 0
    %v734 = vsel %vm566, %v729, 0
    %736 = vmatprep.subr.mxu0 0.0
    %737 = vmatpush1.msra.mxu0 %v728
    %738 = vmatprep.subr.mxu0 0.0
    %739 = vmatpush1.msra.mxu0 %v734
    %740 = vmatprep.subr.mxu0 0.0
    %741 = vmatpush1.msra.mxu0 0.0
    %742 = vmatprep.subr.mxu0 0.0
    %743 = vmatpush1.msra.mxu0 0.0
    %744 = vmatprep.subr.mxu0 0.0
    %745 = vmatpush1.msra.mxu0 0.0
    %746 = vmatprep.subr.mxu0 0.0
    %747 = vmatpush1.msra.mxu0 0.0
    %748 = vmatprep.subr.mxu0 0.0
    %749 = vmatpush1.msra.mxu0 0.0
    %750 = vmatprep.subr.mxu0 0.0
    %751 = vmatpush1.msra.mxu0 0.0
    %752 = vmatprep.subr.mxu0 0.0
    %753 = vmatpush1.msra.mxu0 0.0
    %754 = vmatprep.subr.mxu0 0.0
    %755 = vmatpush1.msra.mxu0 0.0
    %756 = vmatprep.subr.mxu0 0.0
    %757 = vmatpush1.msra.mxu0 0.0
    %758 = vmatprep.subr.mxu0 0.0
    %759 = vmatpush1.msra.mxu0 0.0
    %760 = vmatprep.subr.mxu0 0.0
    %761 = vmatpush1.msra.mxu0 0.0
    %762 = vmatprep.subr.mxu0 0.0
    %763 = vmatpush1.msra.mxu0 0.0
    %764 = vmatprep.subr.mxu0 0.0
    %765 = vmatpush1.msra.mxu0 0.0
    %766 = vmatprep.subr.mxu0 0.0
    %767 = vmatpush1.msra.mxu0 0.0
    %768 = vmatprep.subr.mxu0 0.0
    %769 = vmatpush1.msra.mxu0 0.0
    %770 = vmatprep.subr.mxu0 0.0
    %771 = vmatpush1.msra.mxu0 0.0
    %772 = vmatprep.subr.mxu0 0.0
    %773 = vmatpush1.msra.mxu0 0.0
    %774 = vmatprep.subr.mxu0 0.0
    %775 = vmatpush1.msra.mxu0 0.0
    %776 = vmatprep.subr.mxu0 0.0
    %777 = vmatpush1.msra.mxu0 0.0
    %778 = vmatprep.subr.mxu0 0.0
    %779 = vmatpush1.msra.mxu0 0.0
    %780 = vmatprep.subr.mxu0 0.0
    %781 = vmatpush1.msra.mxu0 0.0
    %782 = vmatprep.subr.mxu0 0.0
    %783 = vmatpush1.msra.mxu0 0.0
    %784 = vmatprep.subr.mxu0 0.0
    %785 = vmatpush1.msra.mxu0 0.0
    %786 = vmatprep.subr.mxu0 0.0
    %787 = vmatpush1.msra.mxu0 0.0
    %788 = vmatprep.subr.mxu0 0.0
    %789 = vmatpush1.msra.mxu0 0.0
    %790 = vmatprep.subr.mxu0 0.0
    %791 = vmatpush1.msra.mxu0 0.0
    %792 = vmatprep.subr.mxu0 0.0
    %793 = vmatpush1.msra.mxu0 0.0
    %794 = vmatprep.subr.mxu0 0.0
    %795 = vmatpush1.msra.mxu0 0.0
    %796 = vmatprep.subr.mxu0 0.0
    %797 = vmatpush1.msra.mxu0 0.0
    %798 = vmatprep.subr.mxu0 0.0
    %799 = vmatpush1.msra.mxu0 0.0
    %800 = vmatprep.mubr.f32.mxu0 0.0
    %801 = vmatmul.mubr.f32.gmra.mrb[0].mxu0 %v731
    %v802 = vpop.f32.mrb[0].mxu0
    %v803 = vadd.f32 0.0, %v802
    %v804 = vpop.f32.mrb[0].mxu0
    %805 = vdwg.mxu0
    %v806 = vadd.f32 %v723, %v803
    %v807 = vlaneseq
    %v808 = vshrl.u32 %v807, 7
    %v809 = vsub.s32 3, %v808
    %v810 = vrot.slane %v116, %v809
    %v811 = vmul.f32 %v226, %v810
    %v812 = vmul.f32 %v231, %v810
    %v814 = vsel %vm562, %v555, 0
    %v817 = vsel %vm566, %v812, 0
    %819 = vmatprep.subr.mxu0 0.0
    %820 = vmatpush1.msra.mxu0 %v811
    %821 = vmatprep.subr.mxu0 0.0
    %822 = vmatpush1.msra.mxu0 %v817
    %823 = vmatprep.subr.mxu0 0.0
    %824 = vmatpush1.msra.mxu0 0.0
    %825 = vmatprep.subr.mxu0 0.0
    %826 = vmatpush1.msra.mxu0 0.0
    %827 = vmatprep.subr.mxu0 0.0
    %828 = vmatpush1.msra.mxu0 0.0
    %829 = vmatprep.subr.mxu0 0.0
    %830 = vmatpush1.msra.mxu0 0.0
    %831 = vmatprep.subr.mxu0 0.0
    %832 = vmatpush1.msra.mxu0 0.0
    %833 = vmatprep.subr.mxu0 0.0
    %834 = vmatpush1.msra.mxu0 0.0
    %835 = vmatprep.subr.mxu0 0.0
    %836 = vmatpush1.msra.mxu0 0.0
    %837 = vmatprep.subr.mxu0 0.0
    %838 = vmatpush1.msra.mxu0 0.0
    %839 = vmatprep.subr.mxu0 0.0
    %840 = vmatpush1.msra.mxu0 0.0
    %841 = vmatprep.subr.mxu0 0.0
    %842 = vmatpush1.msra.mxu0 0.0
    %843 = vmatprep.subr.mxu0 0.0
    %844 = vmatpush1.msra.mxu0 0.0
    %845 = vmatprep.subr.mxu0 0.0
    %846 = vmatpush1.msra.mxu0 0.0
    %847 = vmatprep.subr.mxu0 0.0
    %848 = vmatpush1.msra.mxu0 0.0
    %849 = vmatprep.subr.mxu0 0.0
    %850 = vmatpush1.msra.mxu0 0.0
    %851 = vmatprep.subr.mxu0 0.0
    %852 = vmatpush1.msra.mxu0 0.0
    %853 = vmatprep.subr.mxu0 0.0
    %854 = vmatpush1.msra.mxu0 0.0
    %855 = vmatprep.subr.mxu0 0.0
    %856 = vmatpush1.msra.mxu0 0.0
    %857 = vmatprep.subr.mxu0 0.0
    %858 = vmatpush1.msra.mxu0 0.0
    %859 = vmatprep.subr.mxu0 0.0
    %860 = vmatpush1.msra.mxu0 0.0
    %861 = vmatprep.subr.mxu0 0.0
    %862 = vmatpush1.msra.mxu0 0.0
    %863 = vmatprep.subr.mxu0 0.0
    %864 = vmatpush1.msra.mxu0 0.0
    %865 = vmatprep.subr.mxu0 0.0
    %866 = vmatpush1.msra.mxu0 0.0
    %867 = vmatprep.subr.mxu0 0.0
    %868 = vmatpush1.msra.mxu0 0.0
    %869 = vmatprep.subr.mxu0 0.0
    %870 = vmatpush1.msra.mxu0 0.0
    %871 = vmatprep.subr.mxu0 0.0
    %872 = vmatpush1.msra.mxu0 0.0
    %873 = vmatprep.subr.mxu0 0.0
    %874 = vmatpush1.msra.mxu0 0.0
    %875 = vmatprep.subr.mxu0 0.0
    %876 = vmatpush1.msra.mxu0 0.0
    %877 = vmatprep.subr.mxu0 0.0
    %878 = vmatpush1.msra.mxu0 0.0
    %879 = vmatprep.subr.mxu0 0.0
    %880 = vmatpush1.msra.mxu0 0.0
    %881 = vmatprep.subr.mxu0 0.0
    %882 = vmatpush1.msra.mxu0 0.0
    %883 = vmatprep.mubr.f32.mxu0 0.0
    %884 = vmatmul.mubr.f32.gmra.mrb[0].mxu0 %v814
    %v885 = vpop.f32.mrb[0].mxu0
    %v886 = vadd.f32 0.0, %v885
    %v887 = vpop.f32.mrb[0].mxu0
    %888 = vdwg.mxu0
    %v889 = vadd.f32 %v806, %v886
    %890 = vrot.lane.b32.xlu0 %v226, 88
    %v891 = vpop.permute.xlu0 %890
    %893 = vxpose.xlu0.b32.start [1/16] %v891, 128
    %894 = vxpose.xlu0.b32.cont [2/16] 0.0, 128
    %895 = vxpose.xlu0.b32.cont [3/16] 0.0, 128
    %896 = vxpose.xlu0.b32.cont [4/16] 0.0, 128
    %897 = vxpose.xlu0.b32.cont [5/16] 0.0, 128
    %898 = vxpose.xlu0.b32.cont [6/16] 0.0, 128
    %899 = vxpose.xlu0.b32.cont [7/16] 0.0, 128
    %900 = vxpose.xlu0.b32.cont [8/16] 0.0, 128
    %901 = vxpose.xlu0.b32.cont [9/16] 0.0, 128
    %902 = vxpose.xlu0.b32.cont [10/16] 0.0, 128
    %903 = vxpose.xlu0.b32.cont [11/16] 0.0, 128
    %904 = vxpose.xlu0.b32.cont [12/16] 0.0, 128
    %905 = vxpose.xlu0.b32.cont [13/16] 0.0, 128
    %906 = vxpose.xlu0.b32.cont [14/16] 0.0, 128
    %907 = vxpose.xlu0.b32.cont [15/16] 0.0, 128
    %908 = vxpose.xlu0.b32.end [16/16] 0.0, 128
    %v909 = vpop.trf.xlu0
    %v910 = vpop.trf.xlu0
    %v911 = vpop.trf.xlu0
    %v912 = vpop.trf.xlu0
    %v913 = vpop.trf.xlu0
    %v914 = vpop.trf.xlu0
    %v915 = vpop.trf.xlu0
    %v916 = vpop.trf.xlu0
    %v917 = vpop.trf.xlu0
    %v918 = vpop.trf.xlu0
    %v919 = vpop.trf.xlu0
    %v920 = vpop.trf.xlu0
    %v921 = vpop.trf.xlu0
    %v922 = vpop.trf.xlu0
    %v923 = vpop.trf.xlu0
    %v924 = vpop.trf.xlu0
    %v925 = vlaneseq
    %v926 = vshrl.u32 %v925, 7
    %v927 = vsub.s32 0, %v926
    %v928 = vrot.slane %v909, %v927
    %930 = vbcast.lane.b32.xlu0 %v928, 256
    %v931 = vpop.permute.xlu0 %930
    %v932 = vlaneseq
    %v933 = vshrl.u32 %v932, 7
    %v934 = vsub.s32 1, %v933
    %v935 = vrot.slane %v909, %v934
    %937 = vbcast.lane.b32.xlu0 %v935, 256
    %v938 = vpop.permute.xlu0 %937
    %v939 = vlaneseq
    %v940 = vshrl.u32 %v939, 7
    %v941 = vsub.s32 2, %v940
    %v942 = vrot.slane %v909, %v941
    %944 = vbcast.lane.b32.xlu0 %v942, 256
    %v945 = vpop.permute.xlu0 %944
    %v946 = vlaneseq
    %v947 = vshrl.u32 %v946, 7
    %v948 = vsub.s32 3, %v947
    %v949 = vrot.slane %v909, %v948
    %951 = vbcast.lane.b32.xlu0 %v949, 256
    %v952 = vpop.permute.xlu0 %951
    %954 = vrot.lane.b32.xlu0 %v310, 64
    %v955 = vpop.permute.xlu0 %954
    %956 = vrot.lane.b32.xlu0 %v315, 64
    %v957 = vpop.permute.xlu0 %956
    %960 = vxpose.xlu0.b32.start [1/16] %v955, 128
    %961 = vxpose.xlu0.b32.cont [2/16] %v957, 128
    %962 = vxpose.xlu0.b32.cont [3/16] 0.0, 128
    %963 = vxpose.xlu0.b32.cont [4/16] 0.0, 128
    %964 = vxpose.xlu0.b32.cont [5/16] 0.0, 128
    %965 = vxpose.xlu0.b32.cont [6/16] 0.0, 128
    %966 = vxpose.xlu0.b32.cont [7/16] 0.0, 128
    %967 = vxpose.xlu0.b32.cont [8/16] 0.0, 128
    %968 = vxpose.xlu0.b32.cont [9/16] 0.0, 128
    %969 = vxpose.xlu0.b32.cont [10/16] 0.0, 128
    %970 = vxpose.xlu0.b32.cont [11/16] 0.0, 128
    %971 = vxpose.xlu0.b32.cont [12/16] 0.0, 128
    %972 = vxpose.xlu0.b32.cont [13/16] 0.0, 128
    %973 = vxpose.xlu0.b32.cont [14/16] 0.0, 128
    %974 = vxpose.xlu0.b32.cont [15/16] 0.0, 128
    %975 = vxpose.xlu0.b32.end [16/16] 0.0, 128
    %v976 = vpop.trf.xlu0
    %v977 = vpop.trf.xlu0
    %v978 = vpop.trf.xlu0
    %v979 = vpop.trf.xlu0
    %v980 = vpop.trf.xlu0
    %v981 = vpop.trf.xlu0
    %v982 = vpop.trf.xlu0
    %v983 = vpop.trf.xlu0
    %v984 = vpop.trf.xlu0
    %v985 = vpop.trf.xlu0
    %v986 = vpop.trf.xlu0
    %v987 = vpop.trf.xlu0
    %v988 = vpop.trf.xlu0
    %v989 = vpop.trf.xlu0
    %v990 = vpop.trf.xlu0
    %v991 = vpop.trf.xlu0
    %v994 = vunpack.c.l.s4 1966171168
    %v995 = vunpack.c.0.s8 %v994
    %v996 = vlaneseq
    %v997 = vshrl.u32 %v996, 7
    %v998 = vsub.s32 %v995, %v997
    %v999 = vrot.slane %v976, %v998
    %v1000 = vcombine.high %v999, %v999
    %v1002 = vunpack.c.l.s4 1966171168
    %v1003 = vunpack.c.0.s8 %v1002
    %v1004 = vlaneseq
    %v1005 = vshrl.u32 %v1004, 7
    %v1006 = vsub.s32 %v1003, %v1005
    %v1007 = vrot.slane %v999, %v1006
    %v1009 = vunpack.c.l.s4 1966171168
    %v1010 = vunpack.c.0.s8 %v1009
    %v1011 = vlaneseq
    %v1012 = vshrl.u32 %v1011, 7
    %v1013 = vsub.s32 %v1010, %v1012
    %v1014 = vrot.slane %v1000, %v1013
    %v1015 = vcombine.high %v1007, %v1007
    %v1016 = vcombine.high %v1014, %v1014
    %v1017 = vlaneseq
    %v1018 = vshrl.u32 %v1017, 7
    %v1019 = vsub.s32 0, %v1018
    %v1020 = vrot.slane %v1007, %v1019
    %v1021 = vlaneseq
    %v1022 = vshrl.u32 %v1021, 7
    %v1023 = vsub.s32 0, %v1022
    %v1024 = vrot.slane %v1014, %v1023
    %v1025 = vlaneseq
    %v1026 = vshrl.u32 %v1025, 7
    %v1027 = vsub.s32 0, %v1026
    %v1028 = vrot.slane %v1015, %v1027
    %v1029 = vlaneseq
    %v1030 = vshrl.u32 %v1029, 7
    %v1031 = vsub.s32 0, %v1030
    %v1032 = vrot.slane %v1016, %v1031
    %v1037 = vadd.f32 %v931, %v1020
    %v1038 = vadd.f32 %v938, %v1024
    %v1039 = vadd.f32 %v945, %v1028
    %v1040 = vadd.f32 %v952, %v1032
    %vm1041 = vcmp.gt.f32.partialorder %v1037, 0.0
    %vm1042 = vcmp.gt.f32.partialorder %v1038, 0.0
    %vm1043 = vcmp.gt.f32.partialorder %v1039, 0.0
    %vm1044 = vcmp.gt.f32.partialorder %v1040, 0.0
    %v1045 = vmul.f32 %v1037, 0.2
    %v1046 = vmul.f32 %v1038, 0.2
    %v1047 = vmul.f32 %v1039, 0.2
    %v1048 = vmul.f32 %v1040, 0.2
    %v1049 = vsel %vm1041, %v1037, %v1045
    %v1050 = vsel %vm1042, %v1038, %v1046
    %v1051 = vsel %vm1043, %v1039, %v1047
    %v1052 = vsel %vm1044, %v1040, %v1048
    %v1053 = vsel %vm132, 1, 0
    %vm1054 = vcmp.eq.s32.totalorder %v1053, 1
    %v1055 = vsel %vm1054, %v1049, -1e+30
    %v1056 = vsel %vm1054, %v1050, -1e+30
    %v1057 = vsel %vm1054, %v1051, -1e+30
    %v1058 = vsel %vm1054, %v1052, -1e+30
    %vm1059 = vcmask 78848
    %v1060 = vsel %vm1059, %v1055, -inf
    %1061 = vmax.xlane.f32.xlu0 %v1060
    %v1062 = vpop.xlane.xlu0 %1061
    %v1063 = vsel %vm1059, %v1056, -inf
    %1064 = vmax.xlane.f32.xlu0 %v1063
    %v1065 = vpop.xlane.xlu0 %1064
    %v1066 = vsel %vm1059, %v1057, -inf
    %1067 = vmax.xlane.f32.xlu0 %v1066
    %v1068 = vpop.xlane.xlu0 %1067
    %v1069 = vsel %vm1059, %v1058, -inf
    %1070 = vmax.xlane.f32.xlu0 %v1069
    %v1071 = vpop.xlane.xlu0 %1070
    %v1072 = vsub.f32 %v1055, %v1062
    %v1073 = vsub.f32 %v1056, %v1065
    %v1074 = vsub.f32 %v1057, %v1068
    %v1075 = vsub.f32 %v1058, %v1071
    %v1076 = vmul.f32 %v1072, 1.442695
    %v1077 = vpow.pop %v1076
    %v1078 = vmul.f32 %v1073, 1.442695
    %v1079 = vpow.pop %v1078
    %v1080 = vmul.f32 %v1074, 1.442695
    %v1081 = vpow.pop %v1080
    %v1082 = vmul.f32 %v1075, 1.442695
    %v1083 = vpow.pop %v1082
    %v1084 = vsel %vm1054, %v1077, 0.0
    %v1085 = vsel %vm1054, %v1079, 0.0
    %v1086 = vsel %vm1054, %v1081, 0.0
    %v1087 = vsel %vm1054, %v1083, 0.0
    %v1088 = vsel %vm1059, %v1084, 0.0
    %1089 = vadd.xlane.f32.xlu0 %v1088
    %v1090 = vpop.xlane.xlu0 %1089
    %v1091 = vsel %vm1059, %v1085, 0.0
    %1092 = vadd.xlane.f32.xlu0 %v1091
    %v1093 = vpop.xlane.xlu0 %1092
    %v1094 = vsel %vm1059, %v1086, 0.0
    %1095 = vadd.xlane.f32.xlu0 %v1094
    %v1096 = vpop.xlane.xlu0 %1095
    %v1097 = vsel %vm1059, %v1087, 0.0
    %1098 = vadd.xlane.f32.xlu0 %v1097
    %v1099 = vpop.xlane.xlu0 %1098
    %v1100 = vmax.f32 %v1090, 1e-20
    %v1101 = vmax.f32 %v1093, 1e-20
    %v1102 = vmax.f32 %v1096, 1e-20
    %v1103 = vmax.f32 %v1099, 1e-20
    %v1104 = vrcp.pop %v1100
    %v1105 = vrcp.pop %v1101
    %v1106 = vrcp.pop %v1102
    %v1107 = vrcp.pop %v1103
    %v1108 = vmul.f32 %v1084, %v1104
    %v1109 = vmul.f32 %v1085, %v1105
    %v1110 = vmul.f32 %v1086, %v1106
    %v1111 = vmul.f32 %v1087, %v1107
    %v1112 = vmul.f32 %v310, %v559
    %v1113 = vmul.f32 %v315, %v559
    %vm1114 = vcmask 80896
    %v1116 = vsel %vm1114, %v1108, 0
    %vm1118 = vcmask 1041408
    %v1120 = vsel %vm1118, %v1113, 0
    %1122 = vmatprep.subr.mxu0 0.0
    %1123 = vmatpush1.msra.mxu0 %v1112
    %1124 = vmatprep.subr.mxu0 0.0
    %1125 = vmatpush1.msra.mxu0 %v1120
    %1126 = vmatprep.subr.mxu0 0.0
    %1127 = vmatpush1.msra.mxu0 0.0
    %1128 = vmatprep.subr.mxu0 0.0
    %1129 = vmatpush1.msra.mxu0 0.0
    %1130 = vmatprep.subr.mxu0 0.0
    %1131 = vmatpush1.msra.mxu0 0.0
    %1132 = vmatprep.subr.mxu0 0.0
    %1133 = vmatpush1.msra.mxu0 0.0
    %1134 = vmatprep.subr.mxu0 0.0
    %1135 = vmatpush1.msra.mxu0 0.0
    %1136 = vmatprep.subr.mxu0 0.0
    %1137 = vmatpush1.msra.mxu0 0.0
    %1138 = vmatprep.subr.mxu0 0.0
    %1139 = vmatpush1.msra.mxu0 0.0
    %1140 = vmatprep.subr.mxu0 0.0
    %1141 = vmatpush1.msra.mxu0 0.0
    %1142 = vmatprep.subr.mxu0 0.0
    %1143 = vmatpush1.msra.mxu0 0.0
    %1144 = vmatprep.subr.mxu0 0.0
    %1145 = vmatpush1.msra.mxu0 0.0
    %1146 = vmatprep.subr.mxu0 0.0
    %1147 = vmatpush1.msra.mxu0 0.0
    %1148 = vmatprep.subr.mxu0 0.0
    %1149 = vmatpush1.msra.mxu0 0.0
    %1150 = vmatprep.subr.mxu0 0.0
    %1151 = vmatpush1.msra.mxu0 0.0
    %1152 = vmatprep.subr.mxu0 0.0
    %1153 = vmatpush1.msra.mxu0 0.0
    %1154 = vmatprep.subr.mxu0 0.0
    %1155 = vmatpush1.msra.mxu0 0.0
    %1156 = vmatprep.subr.mxu0 0.0
    %1157 = vmatpush1.msra.mxu0 0.0
    %1158 = vmatprep.subr.mxu0 0.0
    %1159 = vmatpush1.msra.mxu0 0.0
    %1160 = vmatprep.subr.mxu0 0.0
    %1161 = vmatpush1.msra.mxu0 0.0
    %1162 = vmatprep.subr.mxu0 0.0
    %1163 = vmatpush1.msra.mxu0 0.0
    %1164 = vmatprep.subr.mxu0 0.0
    %1165 = vmatpush1.msra.mxu0 0.0
    %1166 = vmatprep.subr.mxu0 0.0
    %1167 = vmatpush1.msra.mxu0 0.0
    %1168 = vmatprep.subr.mxu0 0.0
    %1169 = vmatpush1.msra.mxu0 0.0
    %1170 = vmatprep.subr.mxu0 0.0
    %1171 = vmatpush1.msra.mxu0 0.0
    %1172 = vmatprep.subr.mxu0 0.0
    %1173 = vmatpush1.msra.mxu0 0.0
    %1174 = vmatprep.subr.mxu0 0.0
    %1175 = vmatpush1.msra.mxu0 0.0
    %1176 = vmatprep.subr.mxu0 0.0
    %1177 = vmatpush1.msra.mxu0 0.0
    %1178 = vmatprep.subr.mxu0 0.0
    %1179 = vmatpush1.msra.mxu0 0.0
    %1180 = vmatprep.subr.mxu0 0.0
    %1181 = vmatpush1.msra.mxu0 0.0
    %1182 = vmatprep.subr.mxu0 0.0
    %1183 = vmatpush1.msra.mxu0 0.0
    %1184 = vmatprep.subr.mxu0 0.0
    %1185 = vmatpush1.msra.mxu0 0.0
    %1186 = vmatprep.mubr.f32.mxu0 0.0
    %1187 = vmatmul.mubr.f32.gmra.mrb[0].mxu0 %v1116
    %v1188 = vpop.f32.mrb[0].mxu0
    %v1189 = vadd.f32 0.0, %v1188
    %v1190 = vpop.f32.mrb[0].mxu0
    %1191 = vdwg.mxu0
    %v1192 = vadd.f32 %v323, %v1189
    %v1193 = vmul.f32 %v310, %v644
    %v1194 = vmul.f32 %v315, %v644
    %v1196 = vsel %vm1114, %v1109, 0
    %v1199 = vsel %vm1118, %v1194, 0
    %1201 = vmatprep.subr.mxu0 0.0
    %1202 = vmatpush1.msra.mxu0 %v1193
    %1203 = vmatprep.subr.mxu0 0.0
    %1204 = vmatpush1.msra.mxu0 %v1199
    %1205 = vmatprep.subr.mxu0 0.0
    %1206 = vmatpush1.msra.mxu0 0.0
    %1207 = vmatprep.subr.mxu0 0.0
    %1208 = vmatpush1.msra.mxu0 0.0
    %1209 = vmatprep.subr.mxu0 0.0
    %1210 = vmatpush1.msra.mxu0 0.0
    %1211 = vmatprep.subr.mxu0 0.0
    %1212 = vmatpush1.msra.mxu0 0.0
    %1213 = vmatprep.subr.mxu0 0.0
    %1214 = vmatpush1.msra.mxu0 0.0
    %1215 = vmatprep.subr.mxu0 0.0
    %1216 = vmatpush1.msra.mxu0 0.0
    %1217 = vmatprep.subr.mxu0 0.0
    %1218 = vmatpush1.msra.mxu0 0.0
    %1219 = vmatprep.subr.mxu0 0.0
    %1220 = vmatpush1.msra.mxu0 0.0
    %1221 = vmatprep.subr.mxu0 0.0
    %1222 = vmatpush1.msra.mxu0 0.0
    %1223 = vmatprep.subr.mxu0 0.0
    %1224 = vmatpush1.msra.mxu0 0.0
    %1225 = vmatprep.subr.mxu0 0.0
    %1226 = vmatpush1.msra.mxu0 0.0
    %1227 = vmatprep.subr.mxu0 0.0
    %1228 = vmatpush1.msra.mxu0 0.0
    %1229 = vmatprep.subr.mxu0 0.0
    %1230 = vmatpush1.msra.mxu0 0.0
    %1231 = vmatprep.subr.mxu0 0.0
    %1232 = vmatpush1.msra.mxu0 0.0
    %1233 = vmatprep.subr.mxu0 0.0
    %1234 = vmatpush1.msra.mxu0 0.0
    %1235 = vmatprep.subr.mxu0 0.0
    %1236 = vmatpush1.msra.mxu0 0.0
    %1237 = vmatprep.subr.mxu0 0.0
    %1238 = vmatpush1.msra.mxu0 0.0
    %1239 = vmatprep.subr.mxu0 0.0
    %1240 = vmatpush1.msra.mxu0 0.0
    %1241 = vmatprep.subr.mxu0 0.0
    %1242 = vmatpush1.msra.mxu0 0.0
    %1243 = vmatprep.subr.mxu0 0.0
    %1244 = vmatpush1.msra.mxu0 0.0
    %1245 = vmatprep.subr.mxu0 0.0
    %1246 = vmatpush1.msra.mxu0 0.0
    %1247 = vmatprep.subr.mxu0 0.0
    %1248 = vmatpush1.msra.mxu0 0.0
    %1249 = vmatprep.subr.mxu0 0.0
    %1250 = vmatpush1.msra.mxu0 0.0
    %1251 = vmatprep.subr.mxu0 0.0
    %1252 = vmatpush1.msra.mxu0 0.0
    %1253 = vmatprep.subr.mxu0 0.0
    %1254 = vmatpush1.msra.mxu0 0.0
    %1255 = vmatprep.subr.mxu0 0.0
    %1256 = vmatpush1.msra.mxu0 0.0
    %1257 = vmatprep.subr.mxu0 0.0
    %1258 = vmatpush1.msra.mxu0 0.0
    %1259 = vmatprep.subr.mxu0 0.0
    %1260 = vmatpush1.msra.mxu0 0.0
    %1261 = vmatprep.subr.mxu0 0.0
    %1262 = vmatpush1.msra.mxu0 0.0
    %1263 = vmatprep.subr.mxu0 0.0
    %1264 = vmatpush1.msra.mxu0 0.0
    %1265 = vmatprep.mubr.f32.mxu0 0.0
    %1266 = vmatmul.mubr.f32.gmra.mrb[0].mxu0 %v1196
    %v1267 = vpop.f32.mrb[0].mxu0
    %v1268 = vadd.f32 0.0, %v1267
    %v1269 = vpop.f32.mrb[0].mxu0
    %1270 = vdwg.mxu0
    %v1271 = vadd.f32 %v1192, %v1268
    %v1272 = vmul.f32 %v310, %v727
    %v1273 = vmul.f32 %v315, %v727
    %v1275 = vsel %vm1114, %v1110, 0
    %v1278 = vsel %vm1118, %v1273, 0
    %1280 = vmatprep.subr.mxu0 0.0
    %1281 = vmatpush1.msra.mxu0 %v1272
    %1282 = vmatprep.subr.mxu0 0.0
    %1283 = vmatpush1.msra.mxu0 %v1278
    %1284 = vmatprep.subr.mxu0 0.0
    %1285 = vmatpush1.msra.mxu0 0.0
    %1286 = vmatprep.subr.mxu0 0.0
    %1287 = vmatpush1.msra.mxu0 0.0
    %1288 = vmatprep.subr.mxu0 0.0
    %1289 = vmatpush1.msra.mxu0 0.0
    %1290 = vmatprep.subr.mxu0 0.0
    %1291 = vmatpush1.msra.mxu0 0.0
    %1292 = vmatprep.subr.mxu0 0.0
    %1293 = vmatpush1.msra.mxu0 0.0
    %1294 = vmatprep.subr.mxu0 0.0
    %1295 = vmatpush1.msra.mxu0 0.0
    %1296 = vmatprep.subr.mxu0 0.0
    %1297 = vmatpush1.msra.mxu0 0.0
    %1298 = vmatprep.subr.mxu0 0.0
    %1299 = vmatpush1.msra.mxu0 0.0
    %1300 = vmatprep.subr.mxu0 0.0
    %1301 = vmatpush1.msra.mxu0 0.0
    %1302 = vmatprep.subr.mxu0 0.0
    %1303 = vmatpush1.msra.mxu0 0.0
    %1304 = vmatprep.subr.mxu0 0.0
    %1305 = vmatpush1.msra.mxu0 0.0
    %1306 = vmatprep.subr.mxu0 0.0
    %1307 = vmatpush1.msra.mxu0 0.0
    %1308 = vmatprep.subr.mxu0 0.0
    %1309 = vmatpush1.msra.mxu0 0.0
    %1310 = vmatprep.subr.mxu0 0.0
    %1311 = vmatpush1.msra.mxu0 0.0
    %1312 = vmatprep.subr.mxu0 0.0
    %1313 = vmatpush1.msra.mxu0 0.0
    %1314 = vmatprep.subr.mxu0 0.0
    %1315 = vmatpush1.msra.mxu0 0.0
    %1316 = vmatprep.subr.mxu0 0.0
    %1317 = vmatpush1.msra.mxu0 0.0
    %1318 = vmatprep.subr.mxu0 0.0
    %1319 = vmatpush1.msra.mxu0 0.0
    %1320 = vmatprep.subr.mxu0 0.0
    %1321 = vmatpush1.msra.mxu0 0.0
    %1322 = vmatprep.subr.mxu0 0.0
    %1323 = vmatpush1.msra.mxu0 0.0
    %1324 = vmatprep.subr.mxu0 0.0
    %1325 = vmatpush1.msra.mxu0 0.0
    %1326 = vmatprep.subr.mxu0 0.0
    %1327 = vmatpush1.msra.mxu0 0.0
    %1328 = vmatprep.subr.mxu0 0.0
    %1329 = vmatpush1.msra.mxu0 0.0
    %1330 = vmatprep.subr.mxu0 0.0
    %1331 = vmatpush1.msra.mxu0 0.0
    %1332 = vmatprep.subr.mxu0 0.0
    %1333 = vmatpush1.msra.mxu0 0.0
    %1334 = vmatprep.subr.mxu0 0.0
    %1335 = vmatpush1.msra.mxu0 0.0
    %1336 = vmatprep.subr.mxu0 0.0
    %1337 = vmatpush1.msra.mxu0 0.0
    %1338 = vmatprep.subr.mxu0 0.0
    %1339 = vmatpush1.msra.mxu0 0.0
    %1340 = vmatprep.subr.mxu0 0.0
    %1341 = vmatpush1.msra.mxu0 0.0
    %1342 = vmatprep.subr.mxu0 0.0
    %1343 = vmatpush1.msra.mxu0 0.0
    %1344 = vmatprep.mubr.f32.mxu0 0.0
    %1345 = vmatmul.mubr.f32.gmra.mrb[0].mxu0 %v1275
    %v1346 = vpop.f32.mrb[0].mxu0
    %v1347 = vadd.f32 0.0, %v1346
    %v1348 = vpop.f32.mrb[0].mxu0
    %1349 = vdwg.mxu0
    %v1350 = vadd.f32 %v1271, %v1347
    %v1351 = vmul.f32 %v310, %v810
    %v1352 = vmul.f32 %v315, %v810
    %v1354 = vsel %vm1114, %v1111, 0
    %v1357 = vsel %vm1118, %v1352, 0
    %1359 = vmatprep.subr.mxu0 0.0
    %1360 = vmatpush1.msra.mxu0 %v1351
    %1361 = vmatprep.subr.mxu0 0.0
    %1362 = vmatpush1.msra.mxu0 %v1357
    %1363 = vmatprep.subr.mxu0 0.0
    %1364 = vmatpush1.msra.mxu0 0.0
    %1365 = vmatprep.subr.mxu0 0.0
    %1366 = vmatpush1.msra.mxu0 0.0
    %1367 = vmatprep.subr.mxu0 0.0
    %1368 = vmatpush1.msra.mxu0 0.0
    %1369 = vmatprep.subr.mxu0 0.0
    %1370 = vmatpush1.msra.mxu0 0.0
    %1371 = vmatprep.subr.mxu0 0.0
    %1372 = vmatpush1.msra.mxu0 0.0
    %1373 = vmatprep.subr.mxu0 0.0
    %1374 = vmatpush1.msra.mxu0 0.0
    %1375 = vmatprep.subr.mxu0 0.0
    %1376 = vmatpush1.msra.mxu0 0.0
    %1377 = vmatprep.subr.mxu0 0.0
    %1378 = vmatpush1.msra.mxu0 0.0
    %1379 = vmatprep.subr.mxu0 0.0
    %1380 = vmatpush1.msra.mxu0 0.0
    %1381 = vmatprep.subr.mxu0 0.0
    %1382 = vmatpush1.msra.mxu0 0.0
    %1383 = vmatprep.subr.mxu0 0.0
    %1384 = vmatpush1.msra.mxu0 0.0
    %1385 = vmatprep.subr.mxu0 0.0
    %1386 = vmatpush1.msra.mxu0 0.0
    %1387 = vmatprep.subr.mxu0 0.0
    %1388 = vmatpush1.msra.mxu0 0.0
    %1389 = vmatprep.subr.mxu0 0.0
    %1390 = vmatpush1.msra.mxu0 0.0
    %1391 = vmatprep.subr.mxu0 0.0
    %1392 = vmatpush1.msra.mxu0 0.0
    %1393 = vmatprep.subr.mxu0 0.0
    %1394 = vmatpush1.msra.mxu0 0.0
    %1395 = vmatprep.subr.mxu0 0.0
    %1396 = vmatpush1.msra.mxu0 0.0
    %1397 = vmatprep.subr.mxu0 0.0
    %1398 = vmatpush1.msra.mxu0 0.0
    %1399 = vmatprep.subr.mxu0 0.0
    %1400 = vmatpush1.msra.mxu0 0.0
    %1401 = vmatprep.subr.mxu0 0.0
    %1402 = vmatpush1.msra.mxu0 0.0
    %1403 = vmatprep.subr.mxu0 0.0
    %1404 = vmatpush1.msra.mxu0 0.0
    %1405 = vmatprep.subr.mxu0 0.0
    %1406 = vmatpush1.msra.mxu0 0.0
    %1407 = vmatprep.subr.mxu0 0.0
    %1408 = vmatpush1.msra.mxu0 0.0
    %1409 = vmatprep.subr.mxu0 0.0
    %1410 = vmatpush1.msra.mxu0 0.0
    %1411 = vmatprep.subr.mxu0 0.0
    %1412 = vmatpush1.msra.mxu0 0.0
    %1413 = vmatprep.subr.mxu0 0.0
    %1414 = vmatpush1.msra.mxu0 0.0
    %1415 = vmatprep.subr.mxu0 0.0
    %1416 = vmatpush1.msra.mxu0 0.0
    %1417 = vmatprep.subr.mxu0 0.0
    %1418 = vmatpush1.msra.mxu0 0.0
    %1419 = vmatprep.subr.mxu0 0.0
    %1420 = vmatpush1.msra.mxu0 0.0
    %1421 = vmatprep.subr.mxu0 0.0
    %1422 = vmatpush1.msra.mxu0 0.0
    %1423 = vmatprep.mubr.f32.mxu0 0.0
    %1424 = vmatmul.mubr.f32.gmra.mrb[0].mxu0 %v1354
    %v1425 = vpop.f32.mrb[0].mxu0
    %v1426 = vadd.f32 0.0, %v1425
    %v1427 = vpop.f32.mrb[0].mxu0
    %1428 = vdwg.mxu0
    %v1429 = vadd.f32 %v1350, %v1426
    %1430 = vrot.lane.b32.xlu0 %v310, 40
    %v1431 = vpop.permute.xlu0 %1430
    %1433 = vxpose.xlu0.b32.start [1/16] %v1431, 128
    %1434 = vxpose.xlu0.b32.cont [2/16] 0.0, 128
    %1435 = vxpose.xlu0.b32.cont [3/16] 0.0, 128
    %1436 = vxpose.xlu0.b32.cont [4/16] 0.0, 128
    %1437 = vxpose.xlu0.b32.cont [5/16] 0.0, 128
    %1438 = vxpose.xlu0.b32.cont [6/16] 0.0, 128
    %1439 = vxpose.xlu0.b32.cont [7/16] 0.0, 128
    %1440 = vxpose.xlu0.b32.cont [8/16] 0.0, 128
    %1441 = vxpose.xlu0.b32.cont [9/16] 0.0, 128
    %1442 = vxpose.xlu0.b32.cont [10/16] 0.0, 128
    %1443 = vxpose.xlu0.b32.cont [11/16] 0.0, 128
    %1444 = vxpose.xlu0.b32.cont [12/16] 0.0, 128
    %1445 = vxpose.xlu0.b32.cont [13/16] 0.0, 128
    %1446 = vxpose.xlu0.b32.cont [14/16] 0.0, 128
    %1447 = vxpose.xlu0.b32.cont [15/16] 0.0, 128
    %1448 = vxpose.xlu0.b32.end [16/16] 0.0, 128
    %v1449 = vpop.trf.xlu0
    %v1450 = vpop.trf.xlu0
    %v1451 = vpop.trf.xlu0
    %v1452 = vpop.trf.xlu0
    %v1453 = vpop.trf.xlu0
    %v1454 = vpop.trf.xlu0
    %v1455 = vpop.trf.xlu0
    %v1456 = vpop.trf.xlu0
    %v1457 = vpop.trf.xlu0
    %v1458 = vpop.trf.xlu0
    %v1459 = vpop.trf.xlu0
    %v1460 = vpop.trf.xlu0
    %v1461 = vpop.trf.xlu0
    %v1462 = vpop.trf.xlu0
    %v1463 = vpop.trf.xlu0
    %v1464 = vpop.trf.xlu0
    %v1465 = vlaneseq
    %v1466 = vshrl.u32 %v1465, 7
    %v1467 = vsub.s32 0, %v1466
    %v1468 = vrot.slane %v1449, %v1467
    %1470 = vbcast.lane.b32.xlu0 %v1468, 256
    %v1471 = vpop.permute.xlu0 %1470
    %v1472 = vlaneseq
    %v1473 = vshrl.u32 %v1472, 7
    %v1474 = vsub.s32 1, %v1473
    %v1475 = vrot.slane %v1449, %v1474
    %1477 = vbcast.lane.b32.xlu0 %v1475, 256
    %v1478 = vpop.permute.xlu0 %1477
    %v1479 = vlaneseq
    %v1480 = vshrl.u32 %v1479, 7
    %v1481 = vsub.s32 2, %v1480
    %v1482 = vrot.slane %v1449, %v1481
    %1484 = vbcast.lane.b32.xlu0 %v1482, 256
    %v1485 = vpop.permute.xlu0 %1484
    %v1486 = vlaneseq
    %v1487 = vshrl.u32 %v1486, 7
    %v1488 = vsub.s32 3, %v1487
    %v1489 = vrot.slane %v1449, %v1488
    %1491 = vbcast.lane.b32.xlu0 %v1489, 256
    %v1492 = vpop.permute.xlu0 %1491
    %1493 = vrot.lane.b32.xlu0 %v310, 56
    %v1494 = vpop.permute.xlu0 %1493
    %1495 = vrot.lane.b32.xlu0 %v315, 56
    %v1496 = vpop.permute.xlu0 %1495
    %1499 = vxpose.xlu0.b32.start [1/16] %v1494, 128
    %1500 = vxpose.xlu0.b32.cont [2/16] %v1496, 128
    %1501 = vxpose.xlu0.b32.cont [3/16] 0.0, 128
    %1502 = vxpose.xlu0.b32.cont [4/16] 0.0, 128
    %1503 = vxpose.xlu0.b32.cont [5/16] 0.0, 128
    %1504 = vxpose.xlu0.b32.cont [6/16] 0.0, 128
    %1505 = vxpose.xlu0.b32.cont [7/16] 0.0, 128
    %1506 = vxpose.xlu0.b32.cont [8/16] 0.0, 128
    %1507 = vxpose.xlu0.b32.cont [9/16] 0.0, 128
    %1508 = vxpose.xlu0.b32.cont [10/16] 0.0, 128
    %1509 = vxpose.xlu0.b32.cont [11/16] 0.0, 128
    %1510 = vxpose.xlu0.b32.cont [12/16] 0.0, 128
    %1511 = vxpose.xlu0.b32.cont [13/16] 0.0, 128
    %1512 = vxpose.xlu0.b32.cont [14/16] 0.0, 128
    %1513 = vxpose.xlu0.b32.cont [15/16] 0.0, 128
    %1514 = vxpose.xlu0.b32.end [16/16] 0.0, 128
    %v1515 = vpop.trf.xlu0
    %v1516 = vpop.trf.xlu0
    %v1517 = vpop.trf.xlu0
    %v1518 = vpop.trf.xlu0
    %v1519 = vpop.trf.xlu0
    %v1520 = vpop.trf.xlu0
    %v1521 = vpop.trf.xlu0
    %v1522 = vpop.trf.xlu0
    %v1523 = vpop.trf.xlu0
    %v1524 = vpop.trf.xlu0
    %v1525 = vpop.trf.xlu0
    %v1526 = vpop.trf.xlu0
    %v1527 = vpop.trf.xlu0
    %v1528 = vpop.trf.xlu0
    %v1529 = vpop.trf.xlu0
    %v1530 = vpop.trf.xlu0
    %v1533 = vunpack.c.l.s4 1966171168
    %v1534 = vunpack.c.0.s8 %v1533
    %v1535 = vlaneseq
    %v1536 = vshrl.u32 %v1535, 7
    %v1537 = vsub.s32 %v1534, %v1536
    %v1538 = vrot.slane %v1515, %v1537
    %v1539 = vcombine.high %v1538, %v1538
    %v1541 = vunpack.c.l.s4 1966171168
    %v1542 = vunpack.c.0.s8 %v1541
    %v1543 = vlaneseq
    %v1544 = vshrl.u32 %v1543, 7
    %v1545 = vsub.s32 %v1542, %v1544
    %v1546 = vrot.slane %v1538, %v1545
    %v1548 = vunpack.c.l.s4 1966171168
    %v1549 = vunpack.c.0.s8 %v1548
    %v1550 = vlaneseq
    %v1551 = vshrl.u32 %v1550, 7
    %v1552 = vsub.s32 %v1549, %v1551
    %v1553 = vrot.slane %v1539, %v1552
    %v1554 = vcombine.high %v1546, %v1546
    %v1555 = vcombine.high %v1553, %v1553
    %v1556 = vlaneseq
    %v1557 = vshrl.u32 %v1556, 7
    %v1558 = vsub.s32 0, %v1557
    %v1559 = vrot.slane %v1546, %v1558
    %v1560 = vlaneseq
    %v1561 = vshrl.u32 %v1560, 7
    %v1562 = vsub.s32 0, %v1561
    %v1563 = vrot.slane %v1553, %v1562
    %v1564 = vlaneseq
    %v1565 = vshrl.u32 %v1564, 7
    %v1566 = vsub.s32 0, %v1565
    %v1567 = vrot.slane %v1554, %v1566
    %v1568 = vlaneseq
    %v1569 = vshrl.u32 %v1568, 7
    %v1570 = vsub.s32 0, %v1569
    %v1571 = vrot.slane %v1555, %v1570
    %v1576 = vadd.f32 %v1471, %v1559
    %v1577 = vadd.f32 %v1478, %v1563
    %v1578 = vadd.f32 %v1485, %v1567
    %v1579 = vadd.f32 %v1492, %v1571
    %vm1580 = vcmp.gt.f32.partialorder %v1576, 0.0
    %vm1581 = vcmp.gt.f32.partialorder %v1577, 0.0
    %vm1582 = vcmp.gt.f32.partialorder %v1578, 0.0
    %vm1583 = vcmp.gt.f32.partialorder %v1579, 0.0
    %v1584 = vmul.f32 %v1576, 0.2
    %v1585 = vmul.f32 %v1577, 0.2
    %v1586 = vmul.f32 %v1578, 0.2
    %v1587 = vmul.f32 %v1579, 0.2
    %v1588 = vsel %vm1580, %v1576, %v1584
    %v1589 = vsel %vm1581, %v1577, %v1585
    %v1590 = vsel %vm1582, %v1578, %v1586
    %v1591 = vsel %vm1583, %v1579, %v1587
    %v1592 = vsel %vm136, 1, 0
    %vm1593 = vcmp.eq.s32.totalorder %v1592, 1
    %v1594 = vsel %vm1593, %v1588, -1e+30
    %v1595 = vsel %vm1593, %v1589, -1e+30
    %v1596 = vsel %vm1593, %v1590, -1e+30
    %v1597 = vsel %vm1593, %v1591, -1e+30
    %vm1598 = vcmask 77824
    %v1599 = vsel %vm1598, %v1594, -inf
    %1600 = vmax.xlane.f32.xlu0 %v1599
    %v1601 = vpop.xlane.xlu0 %1600
    %v1602 = vsel %vm1598, %v1595, -inf
    %1603 = vmax.xlane.f32.xlu0 %v1602
    %v1604 = vpop.xlane.xlu0 %1603
    %v1605 = vsel %vm1598, %v1596, -inf
    %1606 = vmax.xlane.f32.xlu0 %v1605
    %v1607 = vpop.xlane.xlu0 %1606
    %v1608 = vsel %vm1598, %v1597, -inf
    %1609 = vmax.xlane.f32.xlu0 %v1608
    %v1610 = vpop.xlane.xlu0 %1609
    %v1611 = vsub.f32 %v1594, %v1601
    %v1612 = vsub.f32 %v1595, %v1604
    %v1613 = vsub.f32 %v1596, %v1607
    %v1614 = vsub.f32 %v1597, %v1610
    %v1615 = vmul.f32 %v1611, 1.442695
    %v1616 = vpow.pop %v1615
    %v1617 = vmul.f32 %v1612, 1.442695
    %v1618 = vpow.pop %v1617
    %v1619 = vmul.f32 %v1613, 1.442695
    %v1620 = vpow.pop %v1619
    %v1621 = vmul.f32 %v1614, 1.442695
    %v1622 = vpow.pop %v1621
    %v1623 = vsel %vm1593, %v1616, 0.0
    %v1624 = vsel %vm1593, %v1618, 0.0
    %v1625 = vsel %vm1593, %v1620, 0.0
    %v1626 = vsel %vm1593, %v1622, 0.0
    %v1627 = vsel %vm1598, %v1623, 0.0
    %1628 = vadd.xlane.f32.xlu0 %v1627
    %v1629 = vpop.xlane.xlu0 %1628
    %v1630 = vsel %vm1598, %v1624, 0.0
    %1631 = vadd.xlane.f32.xlu0 %v1630
    %v1632 = vpop.xlane.xlu0 %1631
    %v1633 = vsel %vm1598, %v1625, 0.0
    %1634 = vadd.xlane.f32.xlu0 %v1633
    %v1635 = vpop.xlane.xlu0 %1634
    %v1636 = vsel %vm1598, %v1626, 0.0
    %1637 = vadd.xlane.f32.xlu0 %v1636
    %v1638 = vpop.xlane.xlu0 %1637
    %v1639 = vmax.f32 %v1629, 1e-20
    %v1640 = vmax.f32 %v1632, 1e-20
    %v1641 = vmax.f32 %v1635, 1e-20
    %v1642 = vmax.f32 %v1638, 1e-20
    %v1643 = vrcp.pop %v1639
    %v1644 = vrcp.pop %v1640
    %v1645 = vrcp.pop %v1641
    %v1646 = vrcp.pop %v1642
    %v1647 = vmul.f32 %v1623, %v1643
    %v1648 = vmul.f32 %v1624, %v1644
    %v1649 = vmul.f32 %v1625, %v1645
    %v1650 = vmul.f32 %v1626, %v1646
    %1652 = vrot.lane.b32.xlu0 %v559, 32
    %v1653 = vpop.permute.xlu0 %1652
    %v1655 = vmul.f32 %v310, %v1653
    %v1656 = vmul.f32 %v315, %v1653
    %1659 = vrot.lane.b32.xlu0 %v1655, 96
    %v1660 = vpop.permute.xlu0 %1659
    %1661 = vrot.lane.b32.xlu0 %v1656, 96
    %v1662 = vpop.permute.xlu0 %1661
    %v1665 = vsel %vm1114, %v1647, 0
    %v1667 = vsel %vm1118, %v1662, 0
    %1669 = vmatprep.subr.mxu0 0.0
    %1670 = vmatpush1.msra.mxu0 %v1660
    %1671 = vmatprep.subr.mxu0 0.0
    %1672 = vmatpush1.msra.mxu0 %v1667
    %1673 = vmatprep.subr.mxu0 0.0
    %1674 = vmatpush1.msra.mxu0 0.0
    %1675 = vmatprep.subr.mxu0 0.0
    %1676 = vmatpush1.msra.mxu0 0.0
    %1677 = vmatprep.subr.mxu0 0.0
    %1678 = vmatpush1.msra.mxu0 0.0
    %1679 = vmatprep.subr.mxu0 0.0
    %1680 = vmatpush1.msra.mxu0 0.0
    %1681 = vmatprep.subr.mxu0 0.0
    %1682 = vmatpush1.msra.mxu0 0.0
    %1683 = vmatprep.subr.mxu0 0.0
    %1684 = vmatpush1.msra.mxu0 0.0
    %1685 = vmatprep.subr.mxu0 0.0
    %1686 = vmatpush1.msra.mxu0 0.0
    %1687 = vmatprep.subr.mxu0 0.0
    %1688 = vmatpush1.msra.mxu0 0.0
    %1689 = vmatprep.subr.mxu0 0.0
    %1690 = vmatpush1.msra.mxu0 0.0
    %1691 = vmatprep.subr.mxu0 0.0
    %1692 = vmatpush1.msra.mxu0 0.0
    %1693 = vmatprep.subr.mxu0 0.0
    %1694 = vmatpush1.msra.mxu0 0.0
    %1695 = vmatprep.subr.mxu0 0.0
    %1696 = vmatpush1.msra.mxu0 0.0
    %1697 = vmatprep.subr.mxu0 0.0
    %1698 = vmatpush1.msra.mxu0 0.0
    %1699 = vmatprep.subr.mxu0 0.0
    %1700 = vmatpush1.msra.mxu0 0.0
    %1701 = vmatprep.subr.mxu0 0.0
    %1702 = vmatpush1.msra.mxu0 0.0
    %1703 = vmatprep.subr.mxu0 0.0
    %1704 = vmatpush1.msra.mxu0 0.0
    %1705 = vmatprep.subr.mxu0 0.0
    %1706 = vmatpush1.msra.mxu0 0.0
    %1707 = vmatprep.subr.mxu0 0.0
    %1708 = vmatpush1.msra.mxu0 0.0
    %1709 = vmatprep.subr.mxu0 0.0
    %1710 = vmatpush1.msra.mxu0 0.0
    %1711 = vmatprep.subr.mxu0 0.0
    %1712 = vmatpush1.msra.mxu0 0.0
    %1713 = vmatprep.subr.mxu0 0.0
    %1714 = vmatpush1.msra.mxu0 0.0
    %1715 = vmatprep.subr.mxu0 0.0
    %1716 = vmatpush1.msra.mxu0 0.0
    %1717 = vmatprep.subr.mxu0 0.0
    %1718 = vmatpush1.msra.mxu0 0.0
    %1719 = vmatprep.subr.mxu0 0.0
    %1720 = vmatpush1.msra.mxu0 0.0
    %1721 = vmatprep.subr.mxu0 0.0
    %1722 = vmatpush1.msra.mxu0 0.0
    %1723 = vmatprep.subr.mxu0 0.0
    %1724 = vmatpush1.msra.mxu0 0.0
    %1725 = vmatprep.subr.mxu0 0.0
    %1726 = vmatpush1.msra.mxu0 0.0
    %1727 = vmatprep.subr.mxu0 0.0
    %1728 = vmatpush1.msra.mxu0 0.0
    %1729 = vmatprep.subr.mxu0 0.0
    %1730 = vmatpush1.msra.mxu0 0.0
    %1731 = vmatprep.subr.mxu0 0.0
    %1732 = vmatpush1.msra.mxu0 0.0
    %1733 = vmatprep.mubr.f32.mxu0 0.0
    %1734 = vmatmul.mubr.f32.gmra.mrb[0].mxu0 %v1665
    %v1735 = vpop.f32.mrb[0].mxu0
    %v1736 = vadd.f32 0.0, %v1735
    %v1737 = vpop.f32.mrb[0].mxu0
    %1738 = vdwg.mxu0
    %v1739 = vadd.f32 %v889, %v1736
    %1741 = vrot.lane.b32.xlu0 %v644, 32
    %v1742 = vpop.permute.xlu0 %1741
    %v1744 = vmul.f32 %v310, %v1742
    %v1745 = vmul.f32 %v315, %v1742
    %1748 = vrot.lane.b32.xlu0 %v1744, 96
    %v1749 = vpop.permute.xlu0 %1748
    %1750 = vrot.lane.b32.xlu0 %v1745, 96
    %v1751 = vpop.permute.xlu0 %1750
    %v1754 = vsel %vm1114, %v1648, 0
    %v1756 = vsel %vm1118, %v1751, 0
    %1758 = vmatprep.subr.mxu0 0.0
    %1759 = vmatpush1.msra.mxu0 %v1749
    %1760 = vmatprep.subr.mxu0 0.0
    %1761 = vmatpush1.msra.mxu0 %v1756
    %1762 = vmatprep.subr.mxu0 0.0
    %1763 = vmatpush1.msra.mxu0 0.0
    %1764 = vmatprep.subr.mxu0 0.0
    %1765 = vmatpush1.msra.mxu0 0.0
    %1766 = vmatprep.subr.mxu0 0.0
    %1767 = vmatpush1.msra.mxu0 0.0
    %1768 = vmatprep.subr.mxu0 0.0
    %1769 = vmatpush1.msra.mxu0 0.0
    %1770 = vmatprep.subr.mxu0 0.0
    %1771 = vmatpush1.msra.mxu0 0.0
    %1772 = vmatprep.subr.mxu0 0.0
    %1773 = vmatpush1.msra.mxu0 0.0
    %1774 = vmatprep.subr.mxu0 0.0
    %1775 = vmatpush1.msra.mxu0 0.0
    %1776 = vmatprep.subr.mxu0 0.0
    %1777 = vmatpush1.msra.mxu0 0.0
    %1778 = vmatprep.subr.mxu0 0.0
    %1779 = vmatpush1.msra.mxu0 0.0
    %1780 = vmatprep.subr.mxu0 0.0
    %1781 = vmatpush1.msra.mxu0 0.0
    %1782 = vmatprep.subr.mxu0 0.0
    %1783 = vmatpush1.msra.mxu0 0.0
    %1784 = vmatprep.subr.mxu0 0.0
    %1785 = vmatpush1.msra.mxu0 0.0
    %1786 = vmatprep.subr.mxu0 0.0
    %1787 = vmatpush1.msra.mxu0 0.0
    %1788 = vmatprep.subr.mxu0 0.0
    %1789 = vmatpush1.msra.mxu0 0.0
    %1790 = vmatprep.subr.mxu0 0.0
    %1791 = vmatpush1.msra.mxu0 0.0
    %1792 = vmatprep.subr.mxu0 0.0
    %1793 = vmatpush1.msra.mxu0 0.0
    %1794 = vmatprep.subr.mxu0 0.0
    %1795 = vmatpush1.msra.mxu0 0.0
    %1796 = vmatprep.subr.mxu0 0.0
    %1797 = vmatpush1.msra.mxu0 0.0
    %1798 = vmatprep.subr.mxu0 0.0
    %1799 = vmatpush1.msra.mxu0 0.0
    %1800 = vmatprep.subr.mxu0 0.0
    %1801 = vmatpush1.msra.mxu0 0.0
    %1802 = vmatprep.subr.mxu0 0.0
    %1803 = vmatpush1.msra.mxu0 0.0
    %1804 = vmatprep.subr.mxu0 0.0
    %1805 = vmatpush1.msra.mxu0 0.0
    %1806 = vmatprep.subr.mxu0 0.0
    %1807 = vmatpush1.msra.mxu0 0.0
    %1808 = vmatprep.subr.mxu0 0.0
    %1809 = vmatpush1.msra.mxu0 0.0
    %1810 = vmatprep.subr.mxu0 0.0
    %1811 = vmatpush1.msra.mxu0 0.0
    %1812 = vmatprep.subr.mxu0 0.0
    %1813 = vmatpush1.msra.mxu0 0.0
    %1814 = vmatprep.subr.mxu0 0.0
    %1815 = vmatpush1.msra.mxu0 0.0
    %1816 = vmatprep.subr.mxu0 0.0
    %1817 = vmatpush1.msra.mxu0 0.0
    %1818 = vmatprep.subr.mxu0 0.0
    %1819 = vmatpush1.msra.mxu0 0.0
    %1820 = vmatprep.subr.mxu0 0.0
    %1821 = vmatpush1.msra.mxu0 0.0
    %1822 = vmatprep.mubr.f32.mxu0 0.0
    %1823 = vmatmul.mubr.f32.gmra.mrb[0].mxu0 %v1754
    %v1824 = vpop.f32.mrb[0].mxu0
    %v1825 = vadd.f32 0.0, %v1824
    %v1826 = vpop.f32.mrb[0].mxu0
    %1827 = vdwg.mxu0
    %v1828 = vadd.f32 %v1739, %v1825
    %1830 = vrot.lane.b32.xlu0 %v727, 32
    %v1831 = vpop.permute.xlu0 %1830
    %v1833 = vmul.f32 %v310, %v1831
    %v1834 = vmul.f32 %v315, %v1831
    %1837 = vrot.lane.b32.xlu0 %v1833, 96
    %v1838 = vpop.permute.xlu0 %1837
    %1839 = vrot.lane.b32.xlu0 %v1834, 96
    %v1840 = vpop.permute.xlu0 %1839
    %v1843 = vsel %vm1114, %v1649, 0
    %v1845 = vsel %vm1118, %v1840, 0
    %1847 = vmatprep.subr.mxu0 0.0
    %1848 = vmatpush1.msra.mxu0 %v1838
    %1849 = vmatprep.subr.mxu0 0.0
    %1850 = vmatpush1.msra.mxu0 %v1845
    %1851 = vmatprep.subr.mxu0 0.0
    %1852 = vmatpush1.msra.mxu0 0.0
    %1853 = vmatprep.subr.mxu0 0.0
    %1854 = vmatpush1.msra.mxu0 0.0
    %1855 = vmatprep.subr.mxu0 0.0
    %1856 = vmatpush1.msra.mxu0 0.0
    %1857 = vmatprep.subr.mxu0 0.0
    %1858 = vmatpush1.msra.mxu0 0.0
    %1859 = vmatprep.subr.mxu0 0.0
    %1860 = vmatpush1.msra.mxu0 0.0
    %1861 = vmatprep.subr.mxu0 0.0
    %1862 = vmatpush1.msra.mxu0 0.0
    %1863 = vmatprep.subr.mxu0 0.0
    %1864 = vmatpush1.msra.mxu0 0.0
    %1865 = vmatprep.subr.mxu0 0.0
    %1866 = vmatpush1.msra.mxu0 0.0
    %1867 = vmatprep.subr.mxu0 0.0
    %1868 = vmatpush1.msra.mxu0 0.0
    %1869 = vmatprep.subr.mxu0 0.0
    %1870 = vmatpush1.msra.mxu0 0.0
    %1871 = vmatprep.subr.mxu0 0.0
    %1872 = vmatpush1.msra.mxu0 0.0
    %1873 = vmatprep.subr.mxu0 0.0
    %1874 = vmatpush1.msra.mxu0 0.0
    %1875 = vmatprep.subr.mxu0 0.0
    %1876 = vmatpush1.msra.mxu0 0.0
    %1877 = vmatprep.subr.mxu0 0.0
    %1878 = vmatpush1.msra.mxu0 0.0
    %1879 = vmatprep.subr.mxu0 0.0
    %1880 = vmatpush1.msra.mxu0 0.0
    %1881 = vmatprep.subr.mxu0 0.0
    %1882 = vmatpush1.msra.mxu0 0.0
    %1883 = vmatprep.subr.mxu0 0.0
    %1884 = vmatpush1.msra.mxu0 0.0
    %1885 = vmatprep.subr.mxu0 0.0
    %1886 = vmatpush1.msra.mxu0 0.0
    %1887 = vmatprep.subr.mxu0 0.0
    %1888 = vmatpush1.msra.mxu0 0.0
    %1889 = vmatprep.subr.mxu0 0.0
    %1890 = vmatpush1.msra.mxu0 0.0
    %1891 = vmatprep.subr.mxu0 0.0
    %1892 = vmatpush1.msra.mxu0 0.0
    %1893 = vmatprep.subr.mxu0 0.0
    %1894 = vmatpush1.msra.mxu0 0.0
    %1895 = vmatprep.subr.mxu0 0.0
    %1896 = vmatpush1.msra.mxu0 0.0
    %1897 = vmatprep.subr.mxu0 0.0
    %1898 = vmatpush1.msra.mxu0 0.0
    %1899 = vmatprep.subr.mxu0 0.0
    %1900 = vmatpush1.msra.mxu0 0.0
    %1901 = vmatprep.subr.mxu0 0.0
    %1902 = vmatpush1.msra.mxu0 0.0
    %1903 = vmatprep.subr.mxu0 0.0
    %1904 = vmatpush1.msra.mxu0 0.0
    %1905 = vmatprep.subr.mxu0 0.0
    %1906 = vmatpush1.msra.mxu0 0.0
    %1907 = vmatprep.subr.mxu0 0.0
    %1908 = vmatpush1.msra.mxu0 0.0
    %1909 = vmatprep.subr.mxu0 0.0
    %1910 = vmatpush1.msra.mxu0 0.0
    %1911 = vmatprep.mubr.f32.mxu0 0.0
    %1912 = vmatmul.mubr.f32.gmra.mrb[0].mxu0 %v1843
    %v1913 = vpop.f32.mrb[0].mxu0
    %v1914 = vadd.f32 0.0, %v1913
    %v1915 = vpop.f32.mrb[0].mxu0
    %1916 = vdwg.mxu0
    %v1917 = vadd.f32 %v1828, %v1914
    %1919 = vrot.lane.b32.xlu0 %v810, 32
    %v1920 = vpop.permute.xlu0 %1919
    %v1922 = vmul.f32 %v310, %v1920
    %v1923 = vmul.f32 %v315, %v1920
    %1926 = vrot.lane.b32.xlu0 %v1922, 96
    %v1927 = vpop.permute.xlu0 %1926
    %1928 = vrot.lane.b32.xlu0 %v1923, 96
    %v1929 = vpop.permute.xlu0 %1928
    %v1932 = vsel %vm1114, %v1650, 0
    %v1934 = vsel %vm1118, %v1929, 0
    %1936 = vmatprep.subr.mxu0 0.0
    %1937 = vmatpush1.msra.mxu0 %v1927
    %1938 = vmatprep.subr.mxu0 0.0
    %1939 = vmatpush1.msra.mxu0 %v1934
    %1940 = vmatprep.subr.mxu0 0.0
    %1941 = vmatpush1.msra.mxu0 0.0
    %1942 = vmatprep.subr.mxu0 0.0
    %1943 = vmatpush1.msra.mxu0 0.0
    %1944 = vmatprep.subr.mxu0 0.0
    %1945 = vmatpush1.msra.mxu0 0.0
    %1946 = vmatprep.subr.mxu0 0.0
    %1947 = vmatpush1.msra.mxu0 0.0
    %1948 = vmatprep.subr.mxu0 0.0
    %1949 = vmatpush1.msra.mxu0 0.0
    %1950 = vmatprep.subr.mxu0 0.0
    %1951 = vmatpush1.msra.mxu0 0.0
    %1952 = vmatprep.subr.mxu0 0.0
    %1953 = vmatpush1.msra.mxu0 0.0
    %1954 = vmatprep.subr.mxu0 0.0
    %1955 = vmatpush1.msra.mxu0 0.0
    %1956 = vmatprep.subr.mxu0 0.0
    %1957 = vmatpush1.msra.mxu0 0.0
    %1958 = vmatprep.subr.mxu0 0.0
    %1959 = vmatpush1.msra.mxu0 0.0
    %1960 = vmatprep.subr.mxu0 0.0
    %1961 = vmatpush1.msra.mxu0 0.0
    %1962 = vmatprep.subr.mxu0 0.0
    %1963 = vmatpush1.msra.mxu0 0.0
    %1964 = vmatprep.subr.mxu0 0.0
    %1965 = vmatpush1.msra.mxu0 0.0
    %1966 = vmatprep.subr.mxu0 0.0
    %1967 = vmatpush1.msra.mxu0 0.0
    %1968 = vmatprep.subr.mxu0 0.0
    %1969 = vmatpush1.msra.mxu0 0.0
    %1970 = vmatprep.subr.mxu0 0.0
    %1971 = vmatpush1.msra.mxu0 0.0
    %1972 = vmatprep.subr.mxu0 0.0
    %1973 = vmatpush1.msra.mxu0 0.0
    %1974 = vmatprep.subr.mxu0 0.0
    %1975 = vmatpush1.msra.mxu0 0.0
    %1976 = vmatprep.subr.mxu0 0.0
    %1977 = vmatpush1.msra.mxu0 0.0
    %1978 = vmatprep.subr.mxu0 0.0
    %1979 = vmatpush1.msra.mxu0 0.0
    %1980 = vmatprep.subr.mxu0 0.0
    %1981 = vmatpush1.msra.mxu0 0.0
    %1982 = vmatprep.subr.mxu0 0.0
    %1983 = vmatpush1.msra.mxu0 0.0
    %1984 = vmatprep.subr.mxu0 0.0
    %1985 = vmatpush1.msra.mxu0 0.0
    %1986 = vmatprep.subr.mxu0 0.0
    %1987 = vmatpush1.msra.mxu0 0.0
    %1988 = vmatprep.subr.mxu0 0.0
    %1989 = vmatpush1.msra.mxu0 0.0
    %1990 = vmatprep.subr.mxu0 0.0
    %1991 = vmatpush1.msra.mxu0 0.0
    %1992 = vmatprep.subr.mxu0 0.0
    %1993 = vmatpush1.msra.mxu0 0.0
    %1994 = vmatprep.subr.mxu0 0.0
    %1995 = vmatpush1.msra.mxu0 0.0
    %1996 = vmatprep.subr.mxu0 0.0
    %1997 = vmatpush1.msra.mxu0 0.0
    %1998 = vmatprep.subr.mxu0 0.0
    %1999 = vmatpush1.msra.mxu0 0.0
    %2000 = vmatprep.mubr.f32.mxu0 0.0
    %2001 = vmatmul.mubr.f32.gmra.mrb[0].mxu0 %v1932
    %v2002 = vpop.f32.mrb[0].mxu0
    %v2003 = vadd.f32 0.0, %v2002
    %v2004 = vpop.f32.mrb[0].mxu0
    %2005 = vdwg.mxu0
    %v2006 = vadd.f32 %v1917, %v2003
    %v2007 = vld [vmem:[%s10] sm:$0xff]
    %v2008 = vld [vmem:[%s10 + $0x8] sm:$0xff]
    %v2009 = vld [vmem:[%s10 + $0x10] sm:$0xff]
    %v2010 = vld [vmem:[%s10 + $0x18] sm:$0xff]
    %v2011 = vld [vmem:[%s10 + $0x20] sm:$0xff]
    %v2012 = vld [vmem:[%s10 + $0x28] sm:$0xff]
    %v2013 = vld [vmem:[%s10 + $0x30] sm:$0xff]
    %v2014 = vld [vmem:[%s10 + $0x38] sm:$0xff]
    %vm2015 = vcmask 261120
    %v2017 = vsel %vm2015, %v1429, 0
    %2019 = vmatprep.subr.mxu0 %v2008
    %2020 = vmatpush1.msra.mxu0 %v2007
    %2021 = vmatprep.subr.mxu0 %v2010
    %2022 = vmatpush1.msra.mxu0 %v2009
    %2023 = vmatprep.subr.mxu0 %v2012
    %2024 = vmatpush1.msra.mxu0 %v2011
    %2025 = vmatprep.subr.mxu0 %v2014
    %2026 = vmatpush1.msra.mxu0 %v2013
    %2027 = vmatprep.subr.mxu0 0.0
    %2028 = vmatpush1.msra.mxu0 0.0
    %2029 = vmatprep.subr.mxu0 0.0
    %2030 = vmatpush1.msra.mxu0 0.0
    %2031 = vmatprep.subr.mxu0 0.0
    %2032 = vmatpush1.msra.mxu0 0.0
    %2033 = vmatprep.subr.mxu0 0.0
    %2034 = vmatpush1.msra.mxu0 0.0
    %2035 = vmatprep.subr.mxu0 0.0
    %2036 = vmatpush1.msra.mxu0 0.0
    %2037 = vmatprep.subr.mxu0 0.0
    %2038 = vmatpush1.msra.mxu0 0.0
    %2039 = vmatprep.subr.mxu0 0.0
    %2040 = vmatpush1.msra.mxu0 0.0
    %2041 = vmatprep.subr.mxu0 0.0
    %2042 = vmatpush1.msra.mxu0 0.0
    %2043 = vmatprep.subr.mxu0 0.0
    %2044 = vmatpush1.msra.mxu0 0.0
    %2045 = vmatprep.subr.mxu0 0.0
    %2046 = vmatpush1.msra.mxu0 0.0
    %2047 = vmatprep.subr.mxu0 0.0
    %2048 = vmatpush1.msra.mxu0 0.0
    %2049 = vmatprep.subr.mxu0 0.0
    %2050 = vmatpush1.msra.mxu0 0.0
    %2051 = vmatprep.subr.mxu0 0.0
    %2052 = vmatpush1.msra.mxu0 0.0
    %2053 = vmatprep.subr.mxu0 0.0
    %2054 = vmatpush1.msra.mxu0 0.0
    %2055 = vmatprep.subr.mxu0 0.0
    %2056 = vmatpush1.msra.mxu0 0.0
    %2057 = vmatprep.subr.mxu0 0.0
    %2058 = vmatpush1.msra.mxu0 0.0
    %2059 = vmatprep.subr.mxu0 0.0
    %2060 = vmatpush1.msra.mxu0 0.0
    %2061 = vmatprep.subr.mxu0 0.0
    %2062 = vmatpush1.msra.mxu0 0.0
    %2063 = vmatprep.subr.mxu0 0.0
    %2064 = vmatpush1.msra.mxu0 0.0
    %2065 = vmatprep.subr.mxu0 0.0
    %2066 = vmatpush1.msra.mxu0 0.0
    %2067 = vmatprep.subr.mxu0 0.0
    %2068 = vmatpush1.msra.mxu0 0.0
    %2069 = vmatprep.subr.mxu0 0.0
    %2070 = vmatpush1.msra.mxu0 0.0
    %2071 = vmatprep.subr.mxu0 0.0
    %2072 = vmatpush1.msra.mxu0 0.0
    %2073 = vmatprep.subr.mxu0 0.0
    %2074 = vmatpush1.msra.mxu0 0.0
    %2075 = vmatprep.subr.mxu0 0.0
    %2076 = vmatpush1.msra.mxu0 0.0
    %2077 = vmatprep.subr.mxu0 0.0
    %2078 = vmatpush1.msra.mxu0 0.0
    %2079 = vmatprep.subr.mxu0 0.0
    %2080 = vmatpush1.msra.mxu0 0.0
    %2081 = vmatprep.subr.mxu0 0.0
    %2082 = vmatpush1.msra.mxu0 0.0
    %2083 = vmatprep.mubr.f32.mxu0 0.0
    %2084 = vmatmul.mubr.f32.gmra.mrb[0].mxu0 %v2017
    %v2085 = vpop.f32.mrb[0].mxu0
    %v2086 = vadd.f32 0.0, %v2085
    %v2087 = vpop.f32.mrb[0].mxu0
    %v2088 = vadd.f32 0.0, %v2087
    %2089 = vdwg.mxu0
    %v2090 = vld [vmem:[#allocation8] sm:$0xff]
    %v2091 = vld [vmem:[#allocation8 + $0x8] sm:$0xff]
    %v2092 = vld [vmem:[#allocation8 + $0x10] sm:$0xff]
    %v2093 = vld [vmem:[#allocation8 + $0x18] sm:$0xff]
    %v2094 = vld [vmem:[#allocation8 + $0x20] sm:$0xff]
    %v2095 = vld [vmem:[#allocation8 + $0x28] sm:$0xff]
    %v2096 = vld [vmem:[#allocation8 + $0x30] sm:$0xff]
    %v2097 = vld [vmem:[#allocation8 + $0x38] sm:$0xff]
    %v2098 = vld [vmem:[#allocation8 + $0x40] sm:$0xff]
    %v2099 = vld [vmem:[#allocation8 + $0x48] sm:$0xff]
    %v2100 = vld [vmem:[#allocation8 + $0x50] sm:$0xff]
    %v2101 = vld [vmem:[#allocation8 + $0x58] sm:$0xff]
    %v2103 = vsel %vm2015, %v2006, 0
    %2105 = vmatprep.subr.mxu0 %v2091
    %2106 = vmatpush1.msra.mxu0 %v2090
    %2107 = vmatprep.subr.mxu0 %v2094
    %2108 = vmatpush1.msra.mxu0 %v2093
    %2109 = vmatprep.subr.mxu0 %v2097
    %2110 = vmatpush1.msra.mxu0 %v2096
    %2111 = vmatprep.subr.mxu0 %v2100
    %2112 = vmatpush1.msra.mxu0 %v2099
    %2113 = vmatprep.subr.mxu0 0.0
    %2114 = vmatpush1.msra.mxu0 0.0
    %2115 = vmatprep.subr.mxu0 0.0
    %2116 = vmatpush1.msra.mxu0 0.0
    %2117 = vmatprep.subr.mxu0 0.0
    %2118 = vmatpush1.msra.mxu0 0.0
    %2119 = vmatprep.subr.mxu0 0.0
    %2120 = vmatpush1.msra.mxu0 0.0
    %2121 = vmatprep.subr.mxu0 0.0
    %2122 = vmatpush1.msra.mxu0 0.0
    %2123 = vmatprep.subr.mxu0 0.0
    %2124 = vmatpush1.msra.mxu0 0.0
    %2125 = vmatprep.subr.mxu0 0.0
    %2126 = vmatpush1.msra.mxu0 0.0
    %2127 = vmatprep.subr.mxu0 0.0
    %2128 = vmatpush1.msra.mxu0 0.0
    %2129 = vmatprep.subr.mxu0 0.0
    %2130 = vmatpush1.msra.mxu0 0.0
    %2131 = vmatprep.subr.mxu0 0.0
    %2132 = vmatpush1.msra.mxu0 0.0
    %2133 = vmatprep.subr.mxu0 0.0
    %2134 = vmatpush1.msra.mxu0 0.0
    %2135 = vmatprep.subr.mxu0 0.0
    %2136 = vmatpush1.msra.mxu0 0.0
    %2137 = vmatprep.subr.mxu0 0.0
    %2138 = vmatpush1.msra.mxu0 0.0
    %2139 = vmatprep.subr.mxu0 0.0
    %2140 = vmatpush1.msra.mxu0 0.0
    %2141 = vmatprep.subr.mxu0 0.0
    %2142 = vmatpush1.msra.mxu0 0.0
    %2143 = vmatprep.subr.mxu0 0.0
    %2144 = vmatpush1.msra.mxu0 0.0
    %2145 = vmatprep.subr.mxu0 0.0
    %2146 = vmatpush1.msra.mxu0 0.0
    %2147 = vmatprep.subr.mxu0 0.0
    %2148 = vmatpush1.msra.mxu0 0.0
    %2149 = vmatprep.subr.mxu0 0.0
    %2150 = vmatpush1.msra.mxu0 0.0
    %2151 = vmatprep.subr.mxu0 0.0
    %2152 = vmatpush1.msra.mxu0 0.0
    %2153 = vmatprep.subr.mxu0 0.0
    %2154 = vmatpush1.msra.mxu0 0.0
    %2155 = vmatprep.subr.mxu0 0.0
    %2156 = vmatpush1.msra.mxu0 0.0
    %2157 = vmatprep.subr.mxu0 0.0
    %2158 = vmatpush1.msra.mxu0 0.0
    %2159 = vmatprep.subr.mxu0 0.0
    %2160 = vmatpush1.msra.mxu0 0.0
    %2161 = vmatprep.subr.mxu0 0.0
    %2162 = vmatpush1.msra.mxu0 0.0
    %2163 = vmatprep.subr.mxu0 0.0
    %2164 = vmatpush1.msra.mxu0 0.0
    %2165 = vmatprep.subr.mxu0 0.0
    %2166 = vmatpush1.msra.mxu0 0.0
    %2167 = vmatprep.subr.mxu0 0.0
    %2168 = vmatpush1.msra.mxu0 0.0
    %2169 = vmatprep.mubr.f32.mxu0 0.0
    %2170 = vmatmul.mubr.f32.gmra.mrb[0].mxu0 %v2103
    %v2171 = vpop.f32.mrb[0].mxu0
    %v2172 = vadd.f32 0.0, %v2171
    %v2173 = vpop.f32.mrb[0].mxu0
    %v2174 = vadd.f32 0.0, %v2173
    %2175 = vdwg.mxu0
    %2176 = vmatprep.subr.mxu0 0.0
    %2177 = vmatpush1.msra.mxu0 %v2092
    %2178 = vmatprep.subr.mxu0 0.0
    %2179 = vmatpush1.msra.mxu0 %v2095
    %2180 = vmatprep.subr.mxu0 0.0
    %2181 = vmatpush1.msra.mxu0 %v2098
    %2182 = vmatprep.subr.mxu0 0.0
    %2183 = vmatpush1.msra.mxu0 %v2101
    %2184 = vmatprep.subr.mxu0 0.0
    %2185 = vmatpush1.msra.mxu0 0.0
    %2186 = vmatprep.subr.mxu0 0.0
    %2187 = vmatpush1.msra.mxu0 0.0
    %2188 = vmatprep.subr.mxu0 0.0
    %2189 = vmatpush1.msra.mxu0 0.0
    %2190 = vmatprep.subr.mxu0 0.0
    %2191 = vmatpush1.msra.mxu0 0.0
    %2192 = vmatprep.subr.mxu0 0.0
    %2193 = vmatpush1.msra.mxu0 0.0
    %2194 = vmatprep.subr.mxu0 0.0
    %2195 = vmatpush1.msra.mxu0 0.0
    %2196 = vmatprep.subr.mxu0 0.0
    %2197 = vmatpush1.msra.mxu0 0.0
    %2198 = vmatprep.subr.mxu0 0.0
    %2199 = vmatpush1.msra.mxu0 0.0
    %2200 = vmatprep.subr.mxu0 0.0
    %2201 = vmatpush1.msra.mxu0 0.0
    %2202 = vmatprep.subr.mxu0 0.0
    %2203 = vmatpush1.msra.mxu0 0.0
    %2204 = vmatprep.subr.mxu0 0.0
    %2205 = vmatpush1.msra.mxu0 0.0
    %2206 = vmatprep.subr.mxu0 0.0
    %2207 = vmatpush1.msra.mxu0 0.0
    %2208 = vmatprep.subr.mxu0 0.0
    %2209 = vmatpush1.msra.mxu0 0.0
    %2210 = vmatprep.subr.mxu0 0.0
    %2211 = vmatpush1.msra.mxu0 0.0
    %2212 = vmatprep.subr.mxu0 0.0
    %2213 = vmatpush1.msra.mxu0 0.0
    %2214 = vmatprep.subr.mxu0 0.0
    %2215 = vmatpush1.msra.mxu0 0.0
    %2216 = vmatprep.subr.mxu0 0.0
    %2217 = vmatpush1.msra.mxu0 0.0
    %2218 = vmatprep.subr.mxu0 0.0
    %2219 = vmatpush1.msra.mxu0 0.0
    %2220 = vmatprep.subr.mxu0 0.0
    %2221 = vmatpush1.msra.mxu0 0.0
    %2222 = vmatprep.subr.mxu0 0.0
    %2223 = vmatpush1.msra.mxu0 0.0
    %2224 = vmatprep.subr.mxu0 0.0
    %2225 = vmatpush1.msra.mxu0 0.0
    %2226 = vmatprep.subr.mxu0 0.0
    %2227 = vmatpush1.msra.mxu0 0.0
    %2228 = vmatprep.subr.mxu0 0.0
    %2229 = vmatpush1.msra.mxu0 0.0
    %2230 = vmatprep.subr.mxu0 0.0
    %2231 = vmatpush1.msra.mxu0 0.0
    %2232 = vmatprep.subr.mxu0 0.0
    %2233 = vmatpush1.msra.mxu0 0.0
    %2234 = vmatprep.subr.mxu0 0.0
    %2235 = vmatpush1.msra.mxu0 0.0
    %2236 = vmatprep.subr.mxu0 0.0
    %2237 = vmatpush1.msra.mxu0 0.0
    %2238 = vmatprep.subr.mxu0 0.0
    %2239 = vmatpush1.msra.mxu0 0.0
    %2240 = vmatprep.mubr.f32.mxu0 0.0
    %2241 = vmatmul.mubr.f32.gmra.mrb[0].mxu0 %v2103
    %v2242 = vpop.f32.mrb[0].mxu0
    %v2243 = vadd.f32 0.0, %v2242
    %v2244 = vpop.f32.mrb[0].mxu0
    %2245 = vdwg.mxu0
    %v2246 = vld [vmem:[%s14] sm:$0x1]
    %v2248 = vlaneseq
    %v2249 = vshrl.u32 %v2248, 7
    %v2250 = vsub.s32 0, %v2249
    %v2251 = vrot.slane %v2246, %v2250
    %v2253 = vld [vmem:[%s15] sm:$0x1]
    %v2255 = vlaneseq
    %v2256 = vshrl.u32 %v2255, 7
    %v2257 = vsub.s32 0, %v2256
    %v2258 = vrot.slane %v2253, %v2257
    %2261 = vrot.lane.b32.xlu0 %v2243, 96
    %v2262 = vpop.permute.xlu0 %2261
    %2264 = vxpose.xlu0.b32.start [1/16] %v2262, 128
    %2265 = vxpose.xlu0.b32.cont [2/16] 0.0, 128
    %2266 = vxpose.xlu0.b32.cont [3/16] 0.0, 128
    %2267 = vxpose.xlu0.b32.cont [4/16] 0.0, 128
    %2268 = vxpose.xlu0.b32.cont [5/16] 0.0, 128
    %2269 = vxpose.xlu0.b32.cont [6/16] 0.0, 128
    %2270 = vxpose.xlu0.b32.cont [7/16] 0.0, 128
    %2271 = vxpose.xlu0.b32.cont [8/16] 0.0, 128
    %2272 = vxpose.xlu0.b32.cont [9/16] 0.0, 128
    %2273 = vxpose.xlu0.b32.cont [10/16] 0.0, 128
    %2274 = vxpose.xlu0.b32.cont [11/16] 0.0, 128
    %2275 = vxpose.xlu0.b32.cont [12/16] 0.0, 128
    %2276 = vxpose.xlu0.b32.cont [13/16] 0.0, 128
    %2277 = vxpose.xlu0.b32.cont [14/16] 0.0, 128
    %2278 = vxpose.xlu0.b32.cont [15/16] 0.0, 128
    %2279 = vxpose.xlu0.b32.end [16/16] 0.0, 128
    %v2280 = vpop.trf.xlu0
    %v2281 = vpop.trf.xlu0
    %v2282 = vpop.trf.xlu0
    %v2283 = vpop.trf.xlu0
    %v2284 = vpop.trf.xlu0
    %v2285 = vpop.trf.xlu0
    %v2286 = vpop.trf.xlu0
    %v2287 = vpop.trf.xlu0
    %v2288 = vpop.trf.xlu0
    %v2289 = vpop.trf.xlu0
    %v2290 = vpop.trf.xlu0
    %v2291 = vpop.trf.xlu0
    %v2292 = vpop.trf.xlu0
    %v2293 = vpop.trf.xlu0
    %v2294 = vpop.trf.xlu0
    %v2295 = vpop.trf.xlu0
    %v2296 = vlaneseq
    %v2297 = vshrl.u32 %v2296, 7
    %v2298 = vsub.s32 0, %v2297
    %v2299 = vrot.slane %v2280, %v2298
    %2301 = vbcast.lane.b32.xlu0 %v2299, 256
    %v2302 = vpop.permute.xlu0 %2301
    %v2303 = vlaneseq
    %v2304 = vshrl.u32 %v2303, 7
    %v2305 = vsub.s32 1, %v2304
    %v2306 = vrot.slane %v2280, %v2305
    %2308 = vbcast.lane.b32.xlu0 %v2306, 256
    %v2309 = vpop.permute.xlu0 %2308
    %v2310 = vlaneseq
    %v2311 = vshrl.u32 %v2310, 7
    %v2312 = vsub.s32 2, %v2311
    %v2313 = vrot.slane %v2280, %v2312
    %2315 = vbcast.lane.b32.xlu0 %v2313, 256
    %v2316 = vpop.permute.xlu0 %2315
    %v2317 = vlaneseq
    %v2318 = vshrl.u32 %v2317, 7
    %v2319 = vsub.s32 3, %v2318
    %v2320 = vrot.slane %v2280, %v2319
    %2322 = vbcast.lane.b32.xlu0 %v2320, 256
    %v2323 = vpop.permute.xlu0 %2322
    %v2324 = vlaneseq
    %v2325 = vshrl.u32 %v2324, 7
    %v2326 = vsub.s32 4, %v2325
    %v2327 = vrot.slane %v2280, %v2326
    %2329 = vbcast.lane.b32.xlu0 %v2327, 256
    %v2330 = vpop.permute.xlu0 %2329
    %v2331 = vlaneseq
    %v2332 = vshrl.u32 %v2331, 7
    %v2333 = vsub.s32 5, %v2332
    %v2334 = vrot.slane %v2280, %v2333
    %2336 = vbcast.lane.b32.xlu0 %v2334, 256
    %v2337 = vpop.permute.xlu0 %2336
    %v2338 = vlaneseq
    %v2339 = vshrl.u32 %v2338, 7
    %v2340 = vsub.s32 6, %v2339
    %v2341 = vrot.slane %v2280, %v2340
    %2343 = vbcast.lane.b32.xlu0 %v2341, 256
    %v2344 = vpop.permute.xlu0 %2343
    %v2345 = vlaneseq
    %v2346 = vshrl.u32 %v2345, 7
    %v2347 = vsub.s32 7, %v2346
    %v2348 = vrot.slane %v2280, %v2347
    %2350 = vbcast.lane.b32.xlu0 %v2348, 256
    %v2351 = vpop.permute.xlu0 %2350
    %v2352 = vlaneseq
    %v2353 = vshrl.u32 %v2352, 7
    %v2354 = vsub.s32 0, %v2353
    %v2355 = vrot.slane %v2281, %v2354
    %2357 = vbcast.lane.b32.xlu0 %v2355, 256
    %v2358 = vpop.permute.xlu0 %2357
    %v2359 = vlaneseq
    %v2360 = vshrl.u32 %v2359, 7
    %v2361 = vsub.s32 1, %v2360
    %v2362 = vrot.slane %v2281, %v2361
    %2364 = vbcast.lane.b32.xlu0 %v2362, 256
    %v2365 = vpop.permute.xlu0 %2364
    %v2366 = vlaneseq
    %v2367 = vshrl.u32 %v2366, 7
    %v2368 = vsub.s32 2, %v2367
    %v2369 = vrot.slane %v2281, %v2368
    %2371 = vbcast.lane.b32.xlu0 %v2369, 256
    %v2372 = vpop.permute.xlu0 %2371
    %v2373 = vlaneseq
    %v2374 = vshrl.u32 %v2373, 7
    %v2375 = vsub.s32 3, %v2374
    %v2376 = vrot.slane %v2281, %v2375
    %2378 = vbcast.lane.b32.xlu0 %v2376, 256
    %v2379 = vpop.permute.xlu0 %2378
    %v2380 = vlaneseq
    %v2381 = vshrl.u32 %v2380, 7
    %v2382 = vsub.s32 4, %v2381
    %v2383 = vrot.slane %v2281, %v2382
    %2385 = vbcast.lane.b32.xlu0 %v2383, 256
    %v2386 = vpop.permute.xlu0 %2385
    %v2387 = vlaneseq
    %v2388 = vshrl.u32 %v2387, 7
    %v2389 = vsub.s32 5, %v2388
    %v2390 = vrot.slane %v2281, %v2389
    %2392 = vbcast.lane.b32.xlu0 %v2390, 256
    %v2393 = vpop.permute.xlu0 %2392
    %v2394 = vlaneseq
    %v2395 = vshrl.u32 %v2394, 7
    %v2396 = vsub.s32 6, %v2395
    %v2397 = vrot.slane %v2281, %v2396
    %2399 = vbcast.lane.b32.xlu0 %v2397, 256
    %v2400 = vpop.permute.xlu0 %2399
    %v2401 = vlaneseq
    %v2402 = vshrl.u32 %v2401, 7
    %v2403 = vsub.s32 7, %v2402
    %v2404 = vrot.slane %v2281, %v2403
    %2406 = vbcast.lane.b32.xlu0 %v2404, 256
    %v2407 = vpop.permute.xlu0 %2406
    %2408 = vxpose.xlu0.b32.start [1/16] %v2088, 128
    %2409 = vxpose.xlu0.b32.cont [2/16] 0.0, 128
    %2410 = vxpose.xlu0.b32.cont [3/16] 0.0, 128
    %2411 = vxpose.xlu0.b32.cont [4/16] 0.0, 128
    %2412 = vxpose.xlu0.b32.cont [5/16] 0.0, 128
    %2413 = vxpose.xlu0.b32.cont [6/16] 0.0, 128
    %2414 = vxpose.xlu0.b32.cont [7/16] 0.0, 128
    %2415 = vxpose.xlu0.b32.cont [8/16] 0.0, 128
    %2416 = vxpose.xlu0.b32.cont [9/16] 0.0, 128
    %2417 = vxpose.xlu0.b32.cont [10/16] 0.0, 128
    %2418 = vxpose.xlu0.b32.cont [11/16] 0.0, 128
    %2419 = vxpose.xlu0.b32.cont [12/16] 0.0, 128
    %2420 = vxpose.xlu0.b32.cont [13/16] 0.0, 128
    %2421 = vxpose.xlu0.b32.cont [14/16] 0.0, 128
    %2422 = vxpose.xlu0.b32.cont [15/16] 0.0, 128
    %2423 = vxpose.xlu0.b32.end [16/16] 0.0, 128
    %v2424 = vpop.trf.xlu0
    %v2425 = vpop.trf.xlu0
    %v2426 = vpop.trf.xlu0
    %v2427 = vpop.trf.xlu0
    %v2428 = vpop.trf.xlu0
    %v2429 = vpop.trf.xlu0
    %v2430 = vpop.trf.xlu0
    %v2431 = vpop.trf.xlu0
    %v2432 = vpop.trf.xlu0
    %v2433 = vpop.trf.xlu0
    %v2434 = vpop.trf.xlu0
    %v2435 = vpop.trf.xlu0
    %v2436 = vpop.trf.xlu0
    %v2437 = vpop.trf.xlu0
    %v2438 = vpop.trf.xlu0
    %v2439 = vpop.trf.xlu0
    %v2442 = vcombine.high %v2424, %v2424
    %v2444 = vunpack.c.l.s4 1966171168
    %v2445 = vunpack.c.0.s8 %v2444
    %v2446 = vlaneseq
    %v2447 = vshrl.u32 %v2446, 7
    %v2448 = vsub.s32 %v2445, %v2447
    %v2449 = vrot.slane %v2424, %v2448
    %v2451 = vunpack.c.l.s4 1966171168
    %v2452 = vunpack.c.0.s8 %v2451
    %v2453 = vlaneseq
    %v2454 = vshrl.u32 %v2453, 7
    %v2455 = vsub.s32 %v2452, %v2454
    %v2456 = vrot.slane %v2442, %v2455
    %v2457 = vcombine.high %v2449, %v2449
    %v2458 = vcombine.high %v2456, %v2456
    %v2460 = vunpack.c.l.s4 1966171168
    %v2461 = vunpack.c.0.s8 %v2460
    %v2462 = vlaneseq
    %v2463 = vshrl.u32 %v2462, 7
    %v2464 = vsub.s32 %v2461, %v2463
    %v2465 = vrot.slane %v2449, %v2464
    %v2467 = vunpack.c.l.s4 1966171168
    %v2468 = vunpack.c.0.s8 %v2467
    %v2469 = vlaneseq
    %v2470 = vshrl.u32 %v2469, 7
    %v2471 = vsub.s32 %v2468, %v2470
    %v2472 = vrot.slane %v2456, %v2471
    %v2474 = vunpack.c.l.s4 1966171168
    %v2475 = vunpack.c.0.s8 %v2474
    %v2476 = vlaneseq
    %v2477 = vshrl.u32 %v2476, 7
    %v2478 = vsub.s32 %v2475, %v2477
    %v2479 = vrot.slane %v2457, %v2478
    %v2481 = vunpack.c.l.s4 1966171168
    %v2482 = vunpack.c.0.s8 %v2481
    %v2483 = vlaneseq
    %v2484 = vshrl.u32 %v2483, 7
    %v2485 = vsub.s32 %v2482, %v2484
    %v2486 = vrot.slane %v2458, %v2485
    %v2487 = vcombine.high %v2465, %v2465
    %v2488 = vcombine.high %v2472, %v2472
    %v2489 = vcombine.high %v2479, %v2479
    %v2490 = vcombine.high %v2486, %v2486
    %v2491 = vcombine.high %v2425, %v2425
    %v2493 = vunpack.c.l.s4 1966171168
    %v2494 = vunpack.c.0.s8 %v2493
    %v2495 = vlaneseq
    %v2496 = vshrl.u32 %v2495, 7
    %v2497 = vsub.s32 %v2494, %v2496
    %v2498 = vrot.slane %v2425, %v2497
    %v2500 = vunpack.c.l.s4 1966171168
    %v2501 = vunpack.c.0.s8 %v2500
    %v2502 = vlaneseq
    %v2503 = vshrl.u32 %v2502, 7
    %v2504 = vsub.s32 %v2501, %v2503
    %v2505 = vrot.slane %v2491, %v2504
    %v2506 = vcombine.high %v2498, %v2498
    %v2507 = vcombine.high %v2505, %v2505
    %v2509 = vunpack.c.l.s4 1966171168
    %v2510 = vunpack.c.0.s8 %v2509
    %v2511 = vlaneseq
    %v2512 = vshrl.u32 %v2511, 7
    %v2513 = vsub.s32 %v2510, %v2512
    %v2514 = vrot.slane %v2498, %v2513
    %v2516 = vunpack.c.l.s4 1966171168
    %v2517 = vunpack.c.0.s8 %v2516
    %v2518 = vlaneseq
    %v2519 = vshrl.u32 %v2518, 7
    %v2520 = vsub.s32 %v2517, %v2519
    %v2521 = vrot.slane %v2505, %v2520
    %v2523 = vunpack.c.l.s4 1966171168
    %v2524 = vunpack.c.0.s8 %v2523
    %v2525 = vlaneseq
    %v2526 = vshrl.u32 %v2525, 7
    %v2527 = vsub.s32 %v2524, %v2526
    %v2528 = vrot.slane %v2506, %v2527
    %v2530 = vunpack.c.l.s4 1966171168
    %v2531 = vunpack.c.0.s8 %v2530
    %v2532 = vlaneseq
    %v2533 = vshrl.u32 %v2532, 7
    %v2534 = vsub.s32 %v2531, %v2533
    %v2535 = vrot.slane %v2507, %v2534
    %v2536 = vcombine.high %v2514, %v2514
    %v2537 = vcombine.high %v2521, %v2521
    %v2538 = vcombine.high %v2528, %v2528
    %v2539 = vcombine.high %v2535, %v2535
    %v2540 = vlaneseq
    %v2541 = vshrl.u32 %v2540, 7
    %v2542 = vsub.s32 0, %v2541
    %v2543 = vrot.slane %v2465, %v2542
    %v2544 = vlaneseq
    %v2545 = vshrl.u32 %v2544, 7
    %v2546 = vsub.s32 0, %v2545
    %v2547 = vrot.slane %v2479, %v2546
    %v2548 = vlaneseq
    %v2549 = vshrl.u32 %v2548, 7
    %v2550 = vsub.s32 0, %v2549
    %v2551 = vrot.slane %v2487, %v2550
    %v2552 = vlaneseq
    %v2553 = vshrl.u32 %v2552, 7
    %v2554 = vsub.s32 0, %v2553
    %v2555 = vrot.slane %v2489, %v2554
    %v2556 = vlaneseq
    %v2557 = vshrl.u32 %v2556, 7
    %v2558 = vsub.s32 0, %v2557
    %v2559 = vrot.slane %v2472, %v2558
    %v2560 = vlaneseq
    %v2561 = vshrl.u32 %v2560, 7
    %v2562 = vsub.s32 0, %v2561
    %v2563 = vrot.slane %v2486, %v2562
    %v2564 = vlaneseq
    %v2565 = vshrl.u32 %v2564, 7
    %v2566 = vsub.s32 0, %v2565
    %v2567 = vrot.slane %v2488, %v2566
    %v2568 = vlaneseq
    %v2569 = vshrl.u32 %v2568, 7
    %v2570 = vsub.s32 0, %v2569
    %v2571 = vrot.slane %v2490, %v2570
    %v2572 = vlaneseq
    %v2573 = vshrl.u32 %v2572, 7
    %v2574 = vsub.s32 0, %v2573
    %v2575 = vrot.slane %v2514, %v2574
    %v2576 = vlaneseq
    %v2577 = vshrl.u32 %v2576, 7
    %v2578 = vsub.s32 0, %v2577
    %v2579 = vrot.slane %v2528, %v2578
    %v2580 = vlaneseq
    %v2581 = vshrl.u32 %v2580, 7
    %v2582 = vsub.s32 0, %v2581
    %v2583 = vrot.slane %v2536, %v2582
    %v2584 = vlaneseq
    %v2585 = vshrl.u32 %v2584, 7
    %v2586 = vsub.s32 0, %v2585
    %v2587 = vrot.slane %v2538, %v2586
    %v2588 = vlaneseq
    %v2589 = vshrl.u32 %v2588, 7
    %v2590 = vsub.s32 0, %v2589
    %v2591 = vrot.slane %v2521, %v2590
    %v2592 = vlaneseq
    %v2593 = vshrl.u32 %v2592, 7
    %v2594 = vsub.s32 0, %v2593
    %v2595 = vrot.slane %v2535, %v2594
    %v2596 = vlaneseq
    %v2597 = vshrl.u32 %v2596, 7
    %v2598 = vsub.s32 0, %v2597
    %v2599 = vrot.slane %v2537, %v2598
    %v2600 = vlaneseq
    %v2601 = vshrl.u32 %v2600, 7
    %v2602 = vsub.s32 0, %v2601
    %v2603 = vrot.slane %v2539, %v2602
    %v2620 = vadd.f32 %v2302, %v2543
    %v2621 = vadd.f32 %v2309, %v2547
    %v2622 = vadd.f32 %v2316, %v2551
    %v2623 = vadd.f32 %v2323, %v2555
    %v2624 = vadd.f32 %v2330, %v2559
    %v2625 = vadd.f32 %v2337, %v2563
    %v2626 = vadd.f32 %v2344, %v2567
    %v2627 = vadd.f32 %v2351, %v2571
    %v2628 = vadd.f32 %v2358, %v2575
    %v2629 = vadd.f32 %v2365, %v2579
    %v2630 = vadd.f32 %v2372, %v2583
    %v2631 = vadd.f32 %v2379, %v2587
    %v2632 = vadd.f32 %v2386, %v2591
    %v2633 = vadd.f32 %v2393, %v2595
    %v2634 = vadd.f32 %v2400, %v2599
    %v2635 = vadd.f32 %v2407, %v2603
    %vm2636 = vcmp.gt.f32.partialorder %v2620, 0.0
    %vm2637 = vcmp.gt.f32.partialorder %v2621, 0.0
    %vm2638 = vcmp.gt.f32.partialorder %v2622, 0.0
    %vm2639 = vcmp.gt.f32.partialorder %v2623, 0.0
    %vm2640 = vcmp.gt.f32.partialorder %v2624, 0.0
    %vm2641 = vcmp.gt.f32.partialorder %v2625, 0.0
    %vm2642 = vcmp.gt.f32.partialorder %v2626, 0.0
    %vm2643 = vcmp.gt.f32.partialorder %v2627, 0.0
    %vm2644 = vcmp.gt.f32.partialorder %v2628, 0.0
    %vm2645 = vcmp.gt.f32.partialorder %v2629, 0.0
    %vm2646 = vcmp.gt.f32.partialorder %v2630, 0.0
    %vm2647 = vcmp.gt.f32.partialorder %v2631, 0.0
    %vm2648 = vcmp.gt.f32.partialorder %v2632, 0.0
    %vm2649 = vcmp.gt.f32.partialorder %v2633, 0.0
    %vm2650 = vcmp.gt.f32.partialorder %v2634, 0.0
    %vm2651 = vcmp.gt.f32.partialorder %v2635, 0.0
    %v2652 = vmul.f32 %v2620, 0.2
    %v2653 = vmul.f32 %v2621, 0.2
    %v2654 = vmul.f32 %v2622, 0.2
    %v2655 = vmul.f32 %v2623, 0.2
    %v2656 = vmul.f32 %v2624, 0.2
    %v2657 = vmul.f32 %v2625, 0.2
    %v2658 = vmul.f32 %v2626, 0.2
    %v2659 = vmul.f32 %v2627, 0.2
    %v2660 = vmul.f32 %v2628, 0.2
    %v2661 = vmul.f32 %v2629, 0.2
    %v2662 = vmul.f32 %v2630, 0.2
    %v2663 = vmul.f32 %v2631, 0.2
    %v2664 = vmul.f32 %v2632, 0.2
    %v2665 = vmul.f32 %v2633, 0.2
    %v2666 = vmul.f32 %v2634, 0.2
    %v2667 = vmul.f32 %v2635, 0.2
    %v2668 = vsel %vm2636, %v2620, %v2652
    %v2669 = vsel %vm2637, %v2621, %v2653
    %v2670 = vsel %vm2638, %v2622, %v2654
    %v2671 = vsel %vm2639, %v2623, %v2655
    %v2672 = vsel %vm2640, %v2624, %v2656
    %v2673 = vsel %vm2641, %v2625, %v2657
    %v2674 = vsel %vm2642, %v2626, %v2658
    %v2675 = vsel %vm2643, %v2627, %v2659
    %v2676 = vsel %vm2644, %v2628, %v2660
    %v2677 = vsel %vm2645, %v2629, %v2661
    %v2678 = vsel %vm2646, %v2630, %v2662
    %v2679 = vsel %vm2647, %v2631, %v2663
    %v2680 = vsel %vm2648, %v2632, %v2664
    %v2681 = vsel %vm2649, %v2633, %v2665
    %v2682 = vsel %vm2650, %v2634, %v2666
    %v2683 = vsel %vm2651, %v2635, %v2667
    %v2684 = vsel %vm140, 1, 0
    %vm2685 = vcmp.eq.s32.totalorder %v2684, 1
    %v2686 = vsel %vm2685, %v2668, -1e+30
    %v2687 = vsel %vm2685, %v2669, -1e+30
    %v2688 = vsel %vm2685, %v2670, -1e+30
    %v2689 = vsel %vm2685, %v2671, -1e+30
    %v2690 = vsel %vm2685, %v2672, -1e+30
    %v2691 = vsel %vm2685, %v2673, -1e+30
    %v2692 = vsel %vm2685, %v2674, -1e+30
    %v2693 = vsel %vm2685, %v2675, -1e+30
    %v2694 = vsel %vm2685, %v2676, -1e+30
    %v2695 = vsel %vm2685, %v2677, -1e+30
    %v2696 = vsel %vm2685, %v2678, -1e+30
    %v2697 = vsel %vm2685, %v2679, -1e+30
    %v2698 = vsel %vm2685, %v2680, -1e+30
    %v2699 = vsel %vm2685, %v2681, -1e+30
    %v2700 = vsel %vm2685, %v2682, -1e+30
    %v2701 = vsel %vm2685, %v2683, -1e+30
    %vm2702 = vcmask 41984
    %v2703 = vsel %vm2702, %v2686, -inf
    %2704 = vmax.xlane.f32.xlu0 %v2703
    %v2705 = vpop.xlane.xlu0 %2704
    %v2706 = vsel %vm2702, %v2687, -inf
    %2707 = vmax.xlane.f32.xlu0 %v2706
    %v2708 = vpop.xlane.xlu0 %2707
    %v2709 = vsel %vm2702, %v2688, -inf
    %2710 = vmax.xlane.f32.xlu0 %v2709
    %v2711 = vpop.xlane.xlu0 %2710
    %v2712 = vsel %vm2702, %v2689, -inf
    %2713 = vmax.xlane.f32.xlu0 %v2712
    %v2714 = vpop.xlane.xlu0 %2713
    %v2715 = vsel %vm2702, %v2690, -inf
    %2716 = vmax.xlane.f32.xlu0 %v2715
    %v2717 = vpop.xlane.xlu0 %2716
    %v2718 = vsel %vm2702, %v2691, -inf
    %2719 = vmax.xlane.f32.xlu0 %v2718
    %v2720 = vpop.xlane.xlu0 %2719
    %v2721 = vsel %vm2702, %v2692, -inf
    %2722 = vmax.xlane.f32.xlu0 %v2721
    %v2723 = vpop.xlane.xlu0 %2722
    %v2724 = vsel %vm2702, %v2693, -inf
    %2725 = vmax.xlane.f32.xlu0 %v2724
    %v2726 = vpop.xlane.xlu0 %2725
    %v2727 = vsel %vm2702, %v2694, -inf
    %2728 = vmax.xlane.f32.xlu0 %v2727
    %v2729 = vpop.xlane.xlu0 %2728
    %v2730 = vsel %vm2702, %v2695, -inf
    %2731 = vmax.xlane.f32.xlu0 %v2730
    %v2732 = vpop.xlane.xlu0 %2731
    %v2733 = vsel %vm2702, %v2696, -inf
    %2734 = vmax.xlane.f32.xlu0 %v2733
    %v2735 = vpop.xlane.xlu0 %2734
    %v2736 = vsel %vm2702, %v2697, -inf
    %2737 = vmax.xlane.f32.xlu0 %v2736
    %v2738 = vpop.xlane.xlu0 %2737
    %v2739 = vsel %vm2702, %v2698, -inf
    %2740 = vmax.xlane.f32.xlu0 %v2739
    %v2741 = vpop.xlane.xlu0 %2740
    %v2742 = vsel %vm2702, %v2699, -inf
    %2743 = vmax.xlane.f32.xlu0 %v2742
    %v2744 = vpop.xlane.xlu0 %2743
    %v2745 = vsel %vm2702, %v2700, -inf
    %2746 = vmax.xlane.f32.xlu0 %v2745
    %v2747 = vpop.xlane.xlu0 %2746
    %v2748 = vsel %vm2702, %v2701, -inf
    %2749 = vmax.xlane.f32.xlu0 %v2748
    %v2750 = vpop.xlane.xlu0 %2749
    %v2751 = vsub.f32 %v2686, %v2705
    %v2752 = vsub.f32 %v2687, %v2708
    %v2753 = vsub.f32 %v2688, %v2711
    %v2754 = vsub.f32 %v2689, %v2714
    %v2755 = vsub.f32 %v2690, %v2717
    %v2756 = vsub.f32 %v2691, %v2720
    %v2757 = vsub.f32 %v2692, %v2723
    %v2758 = vsub.f32 %v2693, %v2726
    %v2759 = vsub.f32 %v2694, %v2729
    %v2760 = vsub.f32 %v2695, %v2732
    %v2761 = vsub.f32 %v2696, %v2735
    %v2762 = vsub.f32 %v2697, %v2738
    %v2763 = vsub.f32 %v2698, %v2741
    %v2764 = vsub.f32 %v2699, %v2744
    %v2765 = vsub.f32 %v2700, %v2747
    %v2766 = vsub.f32 %v2701, %v2750
    %v2767 = vmul.f32 %v2751, 1.442695
    %v2768 = vpow.pop %v2767
    %v2769 = vmul.f32 %v2752, 1.442695
    %v2770 = vpow.pop %v2769
    %v2771 = vmul.f32 %v2753, 1.442695
    %v2772 = vpow.pop %v2771
    %v2773 = vmul.f32 %v2754, 1.442695
    %v2774 = vpow.pop %v2773
    %v2775 = vmul.f32 %v2755, 1.442695
    %v2776 = vpow.pop %v2775
    %v2777 = vmul.f32 %v2756, 1.442695
    %v2778 = vpow.pop %v2777
    %v2779 = vmul.f32 %v2757, 1.442695
    %v2780 = vpow.pop %v2779
    %v2781 = vmul.f32 %v2758, 1.442695
    %v2782 = vpow.pop %v2781
    %v2783 = vmul.f32 %v2759, 1.442695
    %v2784 = vpow.pop %v2783
    %v2785 = vmul.f32 %v2760, 1.442695
    %v2786 = vpow.pop %v2785
    %v2787 = vmul.f32 %v2761, 1.442695
    %v2788 = vpow.pop %v2787
    %v2789 = vmul.f32 %v2762, 1.442695
    %v2790 = vpow.pop %v2789
    %v2791 = vmul.f32 %v2763, 1.442695
    %v2792 = vpow.pop %v2791
    %v2793 = vmul.f32 %v2764, 1.442695
    %v2794 = vpow.pop %v2793
    %v2795 = vmul.f32 %v2765, 1.442695
    %v2796 = vpow.pop %v2795
    %v2797 = vmul.f32 %v2766, 1.442695
    %v2798 = vpow.pop %v2797
    %v2799 = vsel %vm2685, %v2768, 0.0
    %v2800 = vsel %vm2685, %v2770, 0.0
    %v2801 = vsel %vm2685, %v2772, 0.0
    %v2802 = vsel %vm2685, %v2774, 0.0
    %v2803 = vsel %vm2685, %v2776, 0.0
    %v2804 = vsel %vm2685, %v2778, 0.0
    %v2805 = vsel %vm2685, %v2780, 0.0
    %v2806 = vsel %vm2685, %v2782, 0.0
    %v2807 = vsel %vm2685, %v2784, 0.0
    %v2808 = vsel %vm2685, %v2786, 0.0
    %v2809 = vsel %vm2685, %v2788, 0.0
    %v2810 = vsel %vm2685, %v2790, 0.0
    %v2811 = vsel %vm2685, %v2792, 0.0
    %v2812 = vsel %vm2685, %v2794, 0.0
    %v2813 = vsel %vm2685, %v2796, 0.0
    %v2814 = vsel %vm2685, %v2798, 0.0
    %v2815 = vsel %vm2702, %v2799, 0.0
    %2816 = vadd.xlane.f32.xlu0 %v2815
    %v2817 = vpop.xlane.xlu0 %2816
    %v2818 = vsel %vm2702, %v2800, 0.0
    %2819 = vadd.xlane.f32.xlu0 %v2818
    %v2820 = vpop.xlane.xlu0 %2819
    %v2821 = vsel %vm2702, %v2801, 0.0
    %2822 = vadd.xlane.f32.xlu0 %v2821
    %v2823 = vpop.xlane.xlu0 %2822
    %v2824 = vsel %vm2702, %v2802, 0.0
    %2825 = vadd.xlane.f32.xlu0 %v2824
    %v2826 = vpop.xlane.xlu0 %2825
    %v2827 = vsel %vm2702, %v2803, 0.0
    %2828 = vadd.xlane.f32.xlu0 %v2827
    %v2829 = vpop.xlane.xlu0 %2828
    %v2830 = vsel %vm2702, %v2804, 0.0
    %2831 = vadd.xlane.f32.xlu0 %v2830
    %v2832 = vpop.xlane.xlu0 %2831
    %v2833 = vsel %vm2702, %v2805, 0.0
    %2834 = vadd.xlane.f32.xlu0 %v2833
    %v2835 = vpop.xlane.xlu0 %2834
    %v2836 = vsel %vm2702, %v2806, 0.0
    %2837 = vadd.xlane.f32.xlu0 %v2836
    %v2838 = vpop.xlane.xlu0 %2837
    %v2839 = vsel %vm2702, %v2807, 0.0
    %2840 = vadd.xlane.f32.xlu0 %v2839
    %v2841 = vpop.xlane.xlu0 %2840
    %v2842 = vsel %vm2702, %v2808, 0.0
    %2843 = vadd.xlane.f32.xlu0 %v2842
    %v2844 = vpop.xlane.xlu0 %2843
    %v2845 = vsel %vm2702, %v2809, 0.0
    %2846 = vadd.xlane.f32.xlu0 %v2845
    %v2847 = vpop.xlane.xlu0 %2846
    %v2848 = vsel %vm2702, %v2810, 0.0
    %2849 = vadd.xlane.f32.xlu0 %v2848
    %v2850 = vpop.xlane.xlu0 %2849
    %v2851 = vsel %vm2702, %v2811, 0.0
    %2852 = vadd.xlane.f32.xlu0 %v2851
    %v2853 = vpop.xlane.xlu0 %2852
    %v2854 = vsel %vm2702, %v2812, 0.0
    %2855 = vadd.xlane.f32.xlu0 %v2854
    %v2856 = vpop.xlane.xlu0 %2855
    %v2857 = vsel %vm2702, %v2813, 0.0
    %2858 = vadd.xlane.f32.xlu0 %v2857
    %v2859 = vpop.xlane.xlu0 %2858
    %v2860 = vsel %vm2702, %v2814, 0.0
    %2861 = vadd.xlane.f32.xlu0 %v2860
    %v2862 = vpop.xlane.xlu0 %2861
    %v2863 = vmax.f32 %v2817, 1e-20
    %v2864 = vmax.f32 %v2820, 1e-20
    %v2865 = vmax.f32 %v2823, 1e-20
    %v2866 = vmax.f32 %v2826, 1e-20
    %v2867 = vmax.f32 %v2829, 1e-20
    %v2868 = vmax.f32 %v2832, 1e-20
    %v2869 = vmax.f32 %v2835, 1e-20
    %v2870 = vmax.f32 %v2838, 1e-20
    %v2871 = vmax.f32 %v2841, 1e-20
    %v2872 = vmax.f32 %v2844, 1e-20
    %v2873 = vmax.f32 %v2847, 1e-20
    %v2874 = vmax.f32 %v2850, 1e-20
    %v2875 = vmax.f32 %v2853, 1e-20
    %v2876 = vmax.f32 %v2856, 1e-20
    %v2877 = vmax.f32 %v2859, 1e-20
    %v2878 = vmax.f32 %v2862, 1e-20
    %v2879 = vrcp.pop %v2863
    %v2880 = vrcp.pop %v2864
    %v2881 = vrcp.pop %v2865
    %v2882 = vrcp.pop %v2866
    %v2883 = vrcp.pop %v2867
    %v2884 = vrcp.pop %v2868
    %v2885 = vrcp.pop %v2869
    %v2886 = vrcp.pop %v2870
    %v2887 = vrcp.pop %v2871
    %v2888 = vrcp.pop %v2872
    %v2889 = vrcp.pop %v2873
    %v2890 = vrcp.pop %v2874
    %v2891 = vrcp.pop %v2875
    %v2892 = vrcp.pop %v2876
    %v2893 = vrcp.pop %v2877
    %v2894 = vrcp.pop %v2878
    %v2895 = vmul.f32 %v2799, %v2879
    %v2896 = vmul.f32 %v2800, %v2880
    %v2897 = vmul.f32 %v2801, %v2881
    %v2898 = vmul.f32 %v2802, %v2882
    %v2899 = vmul.f32 %v2803, %v2883
    %v2900 = vmul.f32 %v2804, %v2884
    %v2901 = vmul.f32 %v2805, %v2885
    %v2902 = vmul.f32 %v2806, %v2886
    %v2903 = vmul.f32 %v2807, %v2887
    %v2904 = vmul.f32 %v2808, %v2888
    %v2905 = vmul.f32 %v2809, %v2889
    %v2906 = vmul.f32 %v2810, %v2890
    %v2907 = vmul.f32 %v2811, %v2891
    %v2908 = vmul.f32 %v2812, %v2892
    %v2909 = vmul.f32 %v2813, %v2893
    %v2910 = vmul.f32 %v2814, %v2894
    %v2911 = vmul.f32 %v2086, %v559
    %vm2912 = vcmask 48128
    %v2914 = vsel %vm2912, %v2895, 0
    %vm2916 = vcmask 1045504
    %v2918 = vsel %vm2916, %v2911, 0
    %2920 = vmatprep.subr.mxu0 0.0
    %2921 = vmatpush1.msra.mxu0 %v2918
    %2922 = vmatprep.subr.mxu0 0.0
    %2923 = vmatpush1.msra.mxu0 0.0
    %2924 = vmatprep.subr.mxu0 0.0
    %2925 = vmatpush1.msra.mxu0 0.0
    %2926 = vmatprep.subr.mxu0 0.0
    %2927 = vmatpush1.msra.mxu0 0.0
    %2928 = vmatprep.subr.mxu0 0.0
    %2929 = vmatpush1.msra.mxu0 0.0
    %2930 = vmatprep.subr.mxu0 0.0
    %2931 = vmatpush1.msra.mxu0 0.0
    %2932 = vmatprep.subr.mxu0 0.0
    %2933 = vmatpush1.msra.mxu0 0.0
    %2934 = vmatprep.subr.mxu0 0.0
    %2935 = vmatpush1.msra.mxu0 0.0
    %2936 = vmatprep.subr.mxu0 0.0
    %2937 = vmatpush1.msra.mxu0 0.0
    %2938 = vmatprep.subr.mxu0 0.0
    %2939 = vmatpush1.msra.mxu0 0.0
    %2940 = vmatprep.subr.mxu0 0.0
    %2941 = vmatpush1.msra.mxu0 0.0
    %2942 = vmatprep.subr.mxu0 0.0
    %2943 = vmatpush1.msra.mxu0 0.0
    %2944 = vmatprep.subr.mxu0 0.0
    %2945 = vmatpush1.msra.mxu0 0.0
    %2946 = vmatprep.subr.mxu0 0.0
    %2947 = vmatpush1.msra.mxu0 0.0
    %2948 = vmatprep.subr.mxu0 0.0
    %2949 = vmatpush1.msra.mxu0 0.0
    %2950 = vmatprep.subr.mxu0 0.0
    %2951 = vmatpush1.msra.mxu0 0.0
    %2952 = vmatprep.subr.mxu0 0.0
    %2953 = vmatpush1.msra.mxu0 0.0
    %2954 = vmatprep.subr.mxu0 0.0
    %2955 = vmatpush1.msra.mxu0 0.0
    %2956 = vmatprep.subr.mxu0 0.0
    %2957 = vmatpush1.msra.mxu0 0.0
    %2958 = vmatprep.subr.mxu0 0.0
    %2959 = vmatpush1.msra.mxu0 0.0
    %2960 = vmatprep.subr.mxu0 0.0
    %2961 = vmatpush1.msra.mxu0 0.0
    %2962 = vmatprep.subr.mxu0 0.0
    %2963 = vmatpush1.msra.mxu0 0.0
    %2964 = vmatprep.subr.mxu0 0.0
    %2965 = vmatpush1.msra.mxu0 0.0
    %2966 = vmatprep.subr.mxu0 0.0
    %2967 = vmatpush1.msra.mxu0 0.0
    %2968 = vmatprep.subr.mxu0 0.0
    %2969 = vmatpush1.msra.mxu0 0.0
    %2970 = vmatprep.subr.mxu0 0.0
    %2971 = vmatpush1.msra.mxu0 0.0
    %2972 = vmatprep.subr.mxu0 0.0
    %2973 = vmatpush1.msra.mxu0 0.0
    %2974 = vmatprep.subr.mxu0 0.0
    %2975 = vmatpush1.msra.mxu0 0.0
    %2976 = vmatprep.subr.mxu0 0.0
    %2977 = vmatpush1.msra.mxu0 0.0
    %2978 = vmatprep.subr.mxu0 0.0
    %2979 = vmatpush1.msra.mxu0 0.0
    %2980 = vmatprep.subr.mxu0 0.0
    %2981 = vmatpush1.msra.mxu0 0.0
    %2982 = vmatprep.subr.mxu0 0.0
    %2983 = vmatpush1.msra.mxu0 0.0
    %2984 = vmatprep.mubr.f32.mxu0 0.0
    %2985 = vmatmul.mubr.f32.gmra.mrb[0].mxu0 %v2914
    %v2986 = vpop.f32.mrb[0].mxu0
    %v2987 = vadd.f32 0.0, %v2986
    %v2988 = vpop.f32.mrb[0].mxu0
    %2989 = vdwg.mxu0
    %v2990 = vadd.f32 %v2258, %v2987
    %v2991 = vmul.f32 %v2086, %v644
    %v2993 = vsel %vm2912, %v2896, 0
    %v2996 = vsel %vm2916, %v2991, 0
    %2998 = vmatprep.subr.mxu0 0.0
    %2999 = vmatpush1.msra.mxu0 %v2996
    %3000 = vmatprep.subr.mxu0 0.0
    %3001 = vmatpush1.msra.mxu0 0.0
    %3002 = vmatprep.subr.mxu0 0.0
    %3003 = vmatpush1.msra.mxu0 0.0
    %3004 = vmatprep.subr.mxu0 0.0
    %3005 = vmatpush1.msra.mxu0 0.0
    %3006 = vmatprep.subr.mxu0 0.0
    %3007 = vmatpush1.msra.mxu0 0.0
    %3008 = vmatprep.subr.mxu0 0.0
    %3009 = vmatpush1.msra.mxu0 0.0
    %3010 = vmatprep.subr.mxu0 0.0
    %3011 = vmatpush1.msra.mxu0 0.0
    %3012 = vmatprep.subr.mxu0 0.0
    %3013 = vmatpush1.msra.mxu0 0.0
    %3014 = vmatprep.subr.mxu0 0.0
    %3015 = vmatpush1.msra.mxu0 0.0
    %3016 = vmatprep.subr.mxu0 0.0
    %3017 = vmatpush1.msra.mxu0 0.0
    %3018 = vmatprep.subr.mxu0 0.0
    %3019 = vmatpush1.msra.mxu0 0.0
    %3020 = vmatprep.subr.mxu0 0.0
    %3021 = vmatpush1.msra.mxu0 0.0
    %3022 = vmatprep.subr.mxu0 0.0
    %3023 = vmatpush1.msra.mxu0 0.0
    %3024 = vmatprep.subr.mxu0 0.0
    %3025 = vmatpush1.msra.mxu0 0.0
    %3026 = vmatprep.subr.mxu0 0.0
    %3027 = vmatpush1.msra.mxu0 0.0
    %3028 = vmatprep.subr.mxu0 0.0
    %3029 = vmatpush1.msra.mxu0 0.0
    %3030 = vmatprep.subr.mxu0 0.0
    %3031 = vmatpush1.msra.mxu0 0.0
    %3032 = vmatprep.subr.mxu0 0.0
    %3033 = vmatpush1.msra.mxu0 0.0
    %3034 = vmatprep.subr.mxu0 0.0
    %3035 = vmatpush1.msra.mxu0 0.0
    %3036 = vmatprep.subr.mxu0 0.0
    %3037 = vmatpush1.msra.mxu0 0.0
    %3038 = vmatprep.subr.mxu0 0.0
    %3039 = vmatpush1.msra.mxu0 0.0
    %3040 = vmatprep.subr.mxu0 0.0
    %3041 = vmatpush1.msra.mxu0 0.0
    %3042 = vmatprep.subr.mxu0 0.0
    %3043 = vmatpush1.msra.mxu0 0.0
    %3044 = vmatprep.subr.mxu0 0.0
    %3045 = vmatpush1.msra.mxu0 0.0
    %3046 = vmatprep.subr.mxu0 0.0
    %3047 = vmatpush1.msra.mxu0 0.0
    %3048 = vmatprep.subr.mxu0 0.0
    %3049 = vmatpush1.msra.mxu0 0.0
    %3050 = vmatprep.subr.mxu0 0.0
    %3051 = vmatpush1.msra.mxu0 0.0
    %3052 = vmatprep.subr.mxu0 0.0
    %3053 = vmatpush1.msra.mxu0 0.0
    %3054 = vmatprep.subr.mxu0 0.0
    %3055 = vmatpush1.msra.mxu0 0.0
    %3056 = vmatprep.subr.mxu0 0.0
    %3057 = vmatpush1.msra.mxu0 0.0
    %3058 = vmatprep.subr.mxu0 0.0
    %3059 = vmatpush1.msra.mxu0 0.0
    %3060 = vmatprep.subr.mxu0 0.0
    %3061 = vmatpush1.msra.mxu0 0.0
    %3062 = vmatprep.mubr.f32.mxu0 0.0
    %3063 = vmatmul.mubr.f32.gmra.mrb[0].mxu0 %v2993
    %v3064 = vpop.f32.mrb[0].mxu0
    %v3065 = vadd.f32 0.0, %v3064
    %v3066 = vpop.f32.mrb[0].mxu0
    %3067 = vdwg.mxu0
    %v3068 = vadd.f32 %v2990, %v3065
    %v3069 = vmul.f32 %v2086, %v727
    %v3071 = vsel %vm2912, %v2897, 0
    %v3074 = vsel %vm2916, %v3069, 0
    %3076 = vmatprep.subr.mxu0 0.0
    %3077 = vmatpush1.msra.mxu0 %v3074
    %3078 = vmatprep.subr.mxu0 0.0
    %3079 = vmatpush1.msra.mxu0 0.0
    %3080 = vmatprep.subr.mxu0 0.0
    %3081 = vmatpush1.msra.mxu0 0.0
    %3082 = vmatprep.subr.mxu0 0.0
    %3083 = vmatpush1.msra.mxu0 0.0
    %3084 = vmatprep.subr.mxu0 0.0
    %3085 = vmatpush1.msra.mxu0 0.0
    %3086 = vmatprep.subr.mxu0 0.0
    %3087 = vmatpush1.msra.mxu0 0.0
    %3088 = vmatprep.subr.mxu0 0.0
    %3089 = vmatpush1.msra.mxu0 0.0
    %3090 = vmatprep.subr.mxu0 0.0
    %3091 = vmatpush1.msra.mxu0 0.0
    %3092 = vmatprep.subr.mxu0 0.0
    %3093 = vmatpush1.msra.mxu0 0.0
    %3094 = vmatprep.subr.mxu0 0.0
    %3095 = vmatpush1.msra.mxu0 0.0
    %3096 = vmatprep.subr.mxu0 0.0
    %3097 = vmatpush1.msra.mxu0 0.0
    %3098 = vmatprep.subr.mxu0 0.0
    %3099 = vmatpush1.msra.mxu0 0.0
    %3100 = vmatprep.subr.mxu0 0.0
    %3101 = vmatpush1.msra.mxu0 0.0
    %3102 = vmatprep.subr.mxu0 0.0
    %3103 = vmatpush1.msra.mxu0 0.0
    %3104 = vmatprep.subr.mxu0 0.0
    %3105 = vmatpush1.msra.mxu0 0.0
    %3106 = vmatprep.subr.mxu0 0.0
    %3107 = vmatpush1.msra.mxu0 0.0
    %3108 = vmatprep.subr.mxu0 0.0
    %3109 = vmatpush1.msra.mxu0 0.0
    %3110 = vmatprep.subr.mxu0 0.0
    %3111 = vmatpush1.msra.mxu0 0.0
    %3112 = vmatprep.subr.mxu0 0.0
    %3113 = vmatpush1.msra.mxu0 0.0
    %3114 = vmatprep.subr.mxu0 0.0
    %3115 = vmatpush1.msra.mxu0 0.0
    %3116 = vmatprep.subr.mxu0 0.0
    %3117 = vmatpush1.msra.mxu0 0.0
    %3118 = vmatprep.subr.mxu0 0.0
    %3119 = vmatpush1.msra.mxu0 0.0
    %3120 = vmatprep.subr.mxu0 0.0
    %3121 = vmatpush1.msra.mxu0 0.0
    %3122 = vmatprep.subr.mxu0 0.0
    %3123 = vmatpush1.msra.mxu0 0.0
    %3124 = vmatprep.subr.mxu0 0.0
    %3125 = vmatpush1.msra.mxu0 0.0
    %3126 = vmatprep.subr.mxu0 0.0
    %3127 = vmatpush1.msra.mxu0 0.0
    %3128 = vmatprep.subr.mxu0 0.0
    %3129 = vmatpush1.msra.mxu0 0.0
    %3130 = vmatprep.subr.mxu0 0.0
    %3131 = vmatpush1.msra.mxu0 0.0
    %3132 = vmatprep.subr.mxu0 0.0
    %3133 = vmatpush1.msra.mxu0 0.0
    %3134 = vmatprep.subr.mxu0 0.0
    %3135 = vmatpush1.msra.mxu0 0.0
    %3136 = vmatprep.subr.mxu0 0.0
    %3137 = vmatpush1.msra.mxu0 0.0
    %3138 = vmatprep.subr.mxu0 0.0
    %3139 = vmatpush1.msra.mxu0 0.0
    %3140 = vmatprep.mubr.f32.mxu0 0.0
    %3141 = vmatmul.mubr.f32.gmra.mrb[0].mxu0 %v3071
    %v3142 = vpop.f32.mrb[0].mxu0
    %v3143 = vadd.f32 0.0, %v3142
    %v3144 = vpop.f32.mrb[0].mxu0
    %3145 = vdwg.mxu0
    %v3146 = vadd.f32 %v3068, %v3143
    %v3147 = vmul.f32 %v2086, %v810
    %v3149 = vsel %vm2912, %v2898, 0
    %v3152 = vsel %vm2916, %v3147, 0
    %3154 = vmatprep.subr.mxu0 0.0
    %3155 = vmatpush1.msra.mxu0 %v3152
    %3156 = vmatprep.subr.mxu0 0.0
    %3157 = vmatpush1.msra.mxu0 0.0
    %3158 = vmatprep.subr.mxu0 0.0
    %3159 = vmatpush1.msra.mxu0 0.0
    %3160 = vmatprep.subr.mxu0 0.0
    %3161 = vmatpush1.msra.mxu0 0.0
    %3162 = vmatprep.subr.mxu0 0.0
    %3163 = vmatpush1.msra.mxu0 0.0
    %3164 = vmatprep.subr.mxu0 0.0
    %3165 = vmatpush1.msra.mxu0 0.0
    %3166 = vmatprep.subr.mxu0 0.0
    %3167 = vmatpush1.msra.mxu0 0.0
    %3168 = vmatprep.subr.mxu0 0.0
    %3169 = vmatpush1.msra.mxu0 0.0
    %3170 = vmatprep.subr.mxu0 0.0
    %3171 = vmatpush1.msra.mxu0 0.0
    %3172 = vmatprep.subr.mxu0 0.0
    %3173 = vmatpush1.msra.mxu0 0.0
    %3174 = vmatprep.subr.mxu0 0.0
    %3175 = vmatpush1.msra.mxu0 0.0
    %3176 = vmatprep.subr.mxu0 0.0
    %3177 = vmatpush1.msra.mxu0 0.0
    %3178 = vmatprep.subr.mxu0 0.0
    %3179 = vmatpush1.msra.mxu0 0.0
    %3180 = vmatprep.subr.mxu0 0.0
    %3181 = vmatpush1.msra.mxu0 0.0
    %3182 = vmatprep.subr.mxu0 0.0
    %3183 = vmatpush1.msra.mxu0 0.0
    %3184 = vmatprep.subr.mxu0 0.0
    %3185 = vmatpush1.msra.mxu0 0.0
    %3186 = vmatprep.subr.mxu0 0.0
    %3187 = vmatpush1.msra.mxu0 0.0
    %3188 = vmatprep.subr.mxu0 0.0
    %3189 = vmatpush1.msra.mxu0 0.0
    %3190 = vmatprep.subr.mxu0 0.0
    %3191 = vmatpush1.msra.mxu0 0.0
    %3192 = vmatprep.subr.mxu0 0.0
    %3193 = vmatpush1.msra.mxu0 0.0
    %3194 = vmatprep.subr.mxu0 0.0
    %3195 = vmatpush1.msra.mxu0 0.0
    %3196 = vmatprep.subr.mxu0 0.0
    %3197 = vmatpush1.msra.mxu0 0.0
    %3198 = vmatprep.subr.mxu0 0.0
    %3199 = vmatpush1.msra.mxu0 0.0
    %3200 = vmatprep.subr.mxu0 0.0
    %3201 = vmatpush1.msra.mxu0 0.0
    %3202 = vmatprep.subr.mxu0 0.0
    %3203 = vmatpush1.msra.mxu0 0.0
    %3204 = vmatprep.subr.mxu0 0.0
    %3205 = vmatpush1.msra.mxu0 0.0
    %3206 = vmatprep.subr.mxu0 0.0
    %3207 = vmatpush1.msra.mxu0 0.0
    %3208 = vmatprep.subr.mxu0 0.0
    %3209 = vmatpush1.msra.mxu0 0.0
    %3210 = vmatprep.subr.mxu0 0.0
    %3211 = vmatpush1.msra.mxu0 0.0
    %3212 = vmatprep.subr.mxu0 0.0
    %3213 = vmatpush1.msra.mxu0 0.0
    %3214 = vmatprep.subr.mxu0 0.0
    %3215 = vmatpush1.msra.mxu0 0.0
    %3216 = vmatprep.subr.mxu0 0.0
    %3217 = vmatpush1.msra.mxu0 0.0
    %3218 = vmatprep.mubr.f32.mxu0 0.0
    %3219 = vmatmul.mubr.f32.gmra.mrb[0].mxu0 %v3149
    %v3220 = vpop.f32.mrb[0].mxu0
    %v3221 = vadd.f32 0.0, %v3220
    %v3222 = vpop.f32.mrb[0].mxu0
    %3223 = vdwg.mxu0
    %v3224 = vadd.f32 %v3146, %v3221
    %v3225 = vlaneseq
    %v3226 = vshrl.u32 %v3225, 7
    %v3227 = vsub.s32 4, %v3226
    %v3228 = vrot.slane %v116, %v3227
    %v3229 = vmul.f32 %v2086, %v3228
    %v3231 = vsel %vm2912, %v2899, 0
    %v3234 = vsel %vm2916, %v3229, 0
    %3236 = vmatprep.subr.mxu0 0.0
    %3237 = vmatpush1.msra.mxu0 %v3234
    %3238 = vmatprep.subr.mxu0 0.0
    %3239 = vmatpush1.msra.mxu0 0.0
    %3240 = vmatprep.subr.mxu0 0.0
    %3241 = vmatpush1.msra.mxu0 0.0
    %3242 = vmatprep.subr.mxu0 0.0
    %3243 = vmatpush1.msra.mxu0 0.0
    %3244 = vmatprep.subr.mxu0 0.0
    %3245 = vmatpush1.msra.mxu0 0.0
    %3246 = vmatprep.subr.mxu0 0.0
    %3247 = vmatpush1.msra.mxu0 0.0
    %3248 = vmatprep.subr.mxu0 0.0
    %3249 = vmatpush1.msra.mxu0 0.0
    %3250 = vmatprep.subr.mxu0 0.0
    %3251 = vmatpush1.msra.mxu0 0.0
    %3252 = vmatprep.subr.mxu0 0.0
    %3253 = vmatpush1.msra.mxu0 0.0
    %3254 = vmatprep.subr.mxu0 0.0
    %3255 = vmatpush1.msra.mxu0 0.0
    %3256 = vmatprep.subr.mxu0 0.0
    %3257 = vmatpush1.msra.mxu0 0.0
    %3258 = vmatprep.subr.mxu0 0.0
    %3259 = vmatpush1.msra.mxu0 0.0
    %3260 = vmatprep.subr.mxu0 0.0
    %3261 = vmatpush1.msra.mxu0 0.0
    %3262 = vmatprep.subr.mxu0 0.0
    %3263 = vmatpush1.msra.mxu0 0.0
    %3264 = vmatprep.subr.mxu0 0.0
    %3265 = vmatpush1.msra.mxu0 0.0
    %3266 = vmatprep.subr.mxu0 0.0
    %3267 = vmatpush1.msra.mxu0 0.0
    %3268 = vmatprep.subr.mxu0 0.0
    %3269 = vmatpush1.msra.mxu0 0.0
    %3270 = vmatprep.subr.mxu0 0.0
    %3271 = vmatpush1.msra.mxu0 0.0
    %3272 = vmatprep.subr.mxu0 0.0
    %3273 = vmatpush1.msra.mxu0 0.0
    %3274 = vmatprep.subr.mxu0 0.0
    %3275 = vmatpush1.msra.mxu0 0.0
    %3276 = vmatprep.subr.mxu0 0.0
    %3277 = vmatpush1.msra.mxu0 0.0
    %3278 = vmatprep.subr.mxu0 0.0
    %3279 = vmatpush1.msra.mxu0 0.0
    %3280 = vmatprep.subr.mxu0 0.0
    %3281 = vmatpush1.msra.mxu0 0.0
    %3282 = vmatprep.subr.mxu0 0.0
    %3283 = vmatpush1.msra.mxu0 0.0
    %3284 = vmatprep.subr.mxu0 0.0
    %3285 = vmatpush1.msra.mxu0 0.0
    %3286 = vmatprep.subr.mxu0 0.0
    %3287 = vmatpush1.msra.mxu0 0.0
    %3288 = vmatprep.subr.mxu0 0.0
    %3289 = vmatpush1.msra.mxu0 0.0
    %3290 = vmatprep.subr.mxu0 0.0
    %3291 = vmatpush1.msra.mxu0 0.0
    %3292 = vmatprep.subr.mxu0 0.0
    %3293 = vmatpush1.msra.mxu0 0.0
    %3294 = vmatprep.subr.mxu0 0.0
    %3295 = vmatpush1.msra.mxu0 0.0
    %3296 = vmatprep.subr.mxu0 0.0
    %3297 = vmatpush1.msra.mxu0 0.0
    %3298 = vmatprep.subr.mxu0 0.0
    %3299 = vmatpush1.msra.mxu0 0.0
    %3300 = vmatprep.mubr.f32.mxu0 0.0
    %3301 = vmatmul.mubr.f32.gmra.mrb[0].mxu0 %v3231
    %v3302 = vpop.f32.mrb[0].mxu0
    %v3303 = vadd.f32 0.0, %v3302
    %v3304 = vpop.f32.mrb[0].mxu0
    %3305 = vdwg.mxu0
    %v3306 = vadd.f32 %v3224, %v3303
    %v3307 = vlaneseq
    %v3308 = vshrl.u32 %v3307, 7
    %v3309 = vsub.s32 5, %v3308
    %v3310 = vrot.slane %v116, %v3309
    %v3311 = vmul.f32 %v2086, %v3310
    %v3313 = vsel %vm2912, %v2900, 0
    %v3316 = vsel %vm2916, %v3311, 0
    %3318 = vmatprep.subr.mxu0 0.0
    %3319 = vmatpush1.msra.mxu0 %v3316
    %3320 = vmatprep.subr.mxu0 0.0
    %3321 = vmatpush1.msra.mxu0 0.0
    %3322 = vmatprep.subr.mxu0 0.0
    %3323 = vmatpush1.msra.mxu0 0.0
    %3324 = vmatprep.subr.mxu0 0.0
    %3325 = vmatpush1.msra.mxu0 0.0
    %3326 = vmatprep.subr.mxu0 0.0
    %3327 = vmatpush1.msra.mxu0 0.0
    %3328 = vmatprep.subr.mxu0 0.0
    %3329 = vmatpush1.msra.mxu0 0.0
    %3330 = vmatprep.subr.mxu0 0.0
    %3331 = vmatpush1.msra.mxu0 0.0
    %3332 = vmatprep.subr.mxu0 0.0
    %3333 = vmatpush1.msra.mxu0 0.0
    %3334 = vmatprep.subr.mxu0 0.0
    %3335 = vmatpush1.msra.mxu0 0.0
    %3336 = vmatprep.subr.mxu0 0.0
    %3337 = vmatpush1.msra.mxu0 0.0
    %3338 = vmatprep.subr.mxu0 0.0
    %3339 = vmatpush1.msra.mxu0 0.0
    %3340 = vmatprep.subr.mxu0 0.0
    %3341 = vmatpush1.msra.mxu0 0.0
    %3342 = vmatprep.subr.mxu0 0.0
    %3343 = vmatpush1.msra.mxu0 0.0
    %3344 = vmatprep.subr.mxu0 0.0
    %3345 = vmatpush1.msra.mxu0 0.0
    %3346 = vmatprep.subr.mxu0 0.0
    %3347 = vmatpush1.msra.mxu0 0.0
    %3348 = vmatprep.subr.mxu0 0.0
    %3349 = vmatpush1.msra.mxu0 0.0
    %3350 = vmatprep.subr.mxu0 0.0
    %3351 = vmatpush1.msra.mxu0 0.0
    %3352 = vmatprep.subr.mxu0 0.0
    %3353 = vmatpush1.msra.mxu0 0.0
    %3354 = vmatprep.subr.mxu0 0.0
    %3355 = vmatpush1.msra.mxu0 0.0
    %3356 = vmatprep.subr.mxu0 0.0
    %3357 = vmatpush1.msra.mxu0 0.0
    %3358 = vmatprep.subr.mxu0 0.0
    %3359 = vmatpush1.msra.mxu0 0.0
    %3360 = vmatprep.subr.mxu0 0.0
    %3361 = vmatpush1.msra.mxu0 0.0
    %3362 = vmatprep.subr.mxu0 0.0
    %3363 = vmatpush1.msra.mxu0 0.0
    %3364 = vmatprep.subr.mxu0 0.0
    %3365 = vmatpush1.msra.mxu0 0.0
    %3366 = vmatprep.subr.mxu0 0.0
    %3367 = vmatpush1.msra.mxu0 0.0
    %3368 = vmatprep.subr.mxu0 0.0
    %3369 = vmatpush1.msra.mxu0 0.0
    %3370 = vmatprep.subr.mxu0 0.0
    %3371 = vmatpush1.msra.mxu0 0.0
    %3372 = vmatprep.subr.mxu0 0.0
    %3373 = vmatpush1.msra.mxu0 0.0
    %3374 = vmatprep.subr.mxu0 0.0
    %3375 = vmatpush1.msra.mxu0 0.0
    %3376 = vmatprep.subr.mxu0 0.0
    %3377 = vmatpush1.msra.mxu0 0.0
    %3378 = vmatprep.subr.mxu0 0.0
    %3379 = vmatpush1.msra.mxu0 0.0
    %3380 = vmatprep.subr.mxu0 0.0
    %3381 = vmatpush1.msra.mxu0 0.0
    %3382 = vmatprep.mubr.f32.mxu0 0.0
    %3383 = vmatmul.mubr.f32.gmra.mrb[0].mxu0 %v3313
    %v3384 = vpop.f32.mrb[0].mxu0
    %v3385 = vadd.f32 0.0, %v3384
    %v3386 = vpop.f32.mrb[0].mxu0
    %3387 = vdwg.mxu0
    %v3388 = vadd.f32 %v3306, %v3385
    %v3389 = vlaneseq
    %v3390 = vshrl.u32 %v3389, 7
    %v3391 = vsub.s32 6, %v3390
    %v3392 = vrot.slane %v116, %v3391
    %v3393 = vmul.f32 %v2086, %v3392
    %v3395 = vsel %vm2912, %v2901, 0
    %v3398 = vsel %vm2916, %v3393, 0
    %3400 = vmatprep.subr.mxu0 0.0
    %3401 = vmatpush1.msra.mxu0 %v3398
    %3402 = vmatprep.subr.mxu0 0.0
    %3403 = vmatpush1.msra.mxu0 0.0
    %3404 = vmatprep.subr.mxu0 0.0
    %3405 = vmatpush1.msra.mxu0 0.0
    %3406 = vmatprep.subr.mxu0 0.0
    %3407 = vmatpush1.msra.mxu0 0.0
    %3408 = vmatprep.subr.mxu0 0.0
    %3409 = vmatpush1.msra.mxu0 0.0
    %3410 = vmatprep.subr.mxu0 0.0
    %3411 = vmatpush1.msra.mxu0 0.0
    %3412 = vmatprep.subr.mxu0 0.0
    %3413 = vmatpush1.msra.mxu0 0.0
    %3414 = vmatprep.subr.mxu0 0.0
    %3415 = vmatpush1.msra.mxu0 0.0
    %3416 = vmatprep.subr.mxu0 0.0
    %3417 = vmatpush1.msra.mxu0 0.0
    %3418 = vmatprep.subr.mxu0 0.0
    %3419 = vmatpush1.msra.mxu0 0.0
    %3420 = vmatprep.subr.mxu0 0.0
    %3421 = vmatpush1.msra.mxu0 0.0
    %3422 = vmatprep.subr.mxu0 0.0
    %3423 = vmatpush1.msra.mxu0 0.0
    %3424 = vmatprep.subr.mxu0 0.0
    %3425 = vmatpush1.msra.mxu0 0.0
    %3426 = vmatprep.subr.mxu0 0.0
    %3427 = vmatpush1.msra.mxu0 0.0
    %3428 = vmatprep.subr.mxu0 0.0
    %3429 = vmatpush1.msra.mxu0 0.0
    %3430 = vmatprep.subr.mxu0 0.0
    %3431 = vmatpush1.msra.mxu0 0.0
    %3432 = vmatprep.subr.mxu0 0.0
    %3433 = vmatpush1.msra.mxu0 0.0
    %3434 = vmatprep.subr.mxu0 0.0
    %3435 = vmatpush1.msra.mxu0 0.0
    %3436 = vmatprep.subr.mxu0 0.0
    %3437 = vmatpush1.msra.mxu0 0.0
    %3438 = vmatprep.subr.mxu0 0.0
    %3439 = vmatpush1.msra.mxu0 0.0
    %3440 = vmatprep.subr.mxu0 0.0
    %3441 = vmatpush1.msra.mxu0 0.0
    %3442 = vmatprep.subr.mxu0 0.0
    %3443 = vmatpush1.msra.mxu0 0.0
    %3444 = vmatprep.subr.mxu0 0.0
    %3445 = vmatpush1.msra.mxu0 0.0
    %3446 = vmatprep.subr.mxu0 0.0
    %3447 = vmatpush1.msra.mxu0 0.0
    %3448 = vmatprep.subr.mxu0 0.0
    %3449 = vmatpush1.msra.mxu0 0.0
    %3450 = vmatprep.subr.mxu0 0.0
    %3451 = vmatpush1.msra.mxu0 0.0
    %3452 = vmatprep.subr.mxu0 0.0
    %3453 = vmatpush1.msra.mxu0 0.0
    %3454 = vmatprep.subr.mxu0 0.0
    %3455 = vmatpush1.msra.mxu0 0.0
    %3456 = vmatprep.subr.mxu0 0.0
    %3457 = vmatpush1.msra.mxu0 0.0
    %3458 = vmatprep.subr.mxu0 0.0
    %3459 = vmatpush1.msra.mxu0 0.0
    %3460 = vmatprep.subr.mxu0 0.0
    %3461 = vmatpush1.msra.mxu0 0.0
    %3462 = vmatprep.subr.mxu0 0.0
    %3463 = vmatpush1.msra.mxu0 0.0
    %3464 = vmatprep.mubr.f32.mxu0 0.0
    %3465 = vmatmul.mubr.f32.gmra.mrb[0].mxu0 %v3395
    %v3466 = vpop.f32.mrb[0].mxu0
    %v3467 = vadd.f32 0.0, %v3466
    %v3468 = vpop.f32.mrb[0].mxu0
    %3469 = vdwg.mxu0
    %v3470 = vadd.f32 %v3388, %v3467
    %v3471 = vlaneseq
    %v3472 = vshrl.u32 %v3471, 7
    %v3473 = vsub.s32 7, %v3472
    %v3474 = vrot.slane %v116, %v3473
    %v3475 = vmul.f32 %v2086, %v3474
    %v3477 = vsel %vm2912, %v2902, 0
    %v3480 = vsel %vm2916, %v3475, 0
    %3482 = vmatprep.subr.mxu0 0.0
    %3483 = vmatpush1.msra.mxu0 %v3480
    %3484 = vmatprep.subr.mxu0 0.0
    %3485 = vmatpush1.msra.mxu0 0.0
    %3486 = vmatprep.subr.mxu0 0.0
    %3487 = vmatpush1.msra.mxu0 0.0
    %3488 = vmatprep.subr.mxu0 0.0
    %3489 = vmatpush1.msra.mxu0 0.0
    %3490 = vmatprep.subr.mxu0 0.0
    %3491 = vmatpush1.msra.mxu0 0.0
    %3492 = vmatprep.subr.mxu0 0.0
    %3493 = vmatpush1.msra.mxu0 0.0
    %3494 = vmatprep.subr.mxu0 0.0
    %3495 = vmatpush1.msra.mxu0 0.0
    %3496 = vmatprep.subr.mxu0 0.0
    %3497 = vmatpush1.msra.mxu0 0.0
    %3498 = vmatprep.subr.mxu0 0.0
    %3499 = vmatpush1.msra.mxu0 0.0
    %3500 = vmatprep.subr.mxu0 0.0
    %3501 = vmatpush1.msra.mxu0 0.0
    %3502 = vmatprep.subr.mxu0 0.0
    %3503 = vmatpush1.msra.mxu0 0.0
    %3504 = vmatprep.subr.mxu0 0.0
    %3505 = vmatpush1.msra.mxu0 0.0
    %3506 = vmatprep.subr.mxu0 0.0
    %3507 = vmatpush1.msra.mxu0 0.0
    %3508 = vmatprep.subr.mxu0 0.0
    %3509 = vmatpush1.msra.mxu0 0.0
    %3510 = vmatprep.subr.mxu0 0.0
    %3511 = vmatpush1.msra.mxu0 0.0
    %3512 = vmatprep.subr.mxu0 0.0
    %3513 = vmatpush1.msra.mxu0 0.0
    %3514 = vmatprep.subr.mxu0 0.0
    %3515 = vmatpush1.msra.mxu0 0.0
    %3516 = vmatprep.subr.mxu0 0.0
    %3517 = vmatpush1.msra.mxu0 0.0
    %3518 = vmatprep.subr.mxu0 0.0
    %3519 = vmatpush1.msra.mxu0 0.0
    %3520 = vmatprep.subr.mxu0 0.0
    %3521 = vmatpush1.msra.mxu0 0.0
    %3522 = vmatprep.subr.mxu0 0.0
    %3523 = vmatpush1.msra.mxu0 0.0
    %3524 = vmatprep.subr.mxu0 0.0
    %3525 = vmatpush1.msra.mxu0 0.0
    %3526 = vmatprep.subr.mxu0 0.0
    %3527 = vmatpush1.msra.mxu0 0.0
    %3528 = vmatprep.subr.mxu0 0.0
    %3529 = vmatpush1.msra.mxu0 0.0
    %3530 = vmatprep.subr.mxu0 0.0
    %3531 = vmatpush1.msra.mxu0 0.0
    %3532 = vmatprep.subr.mxu0 0.0
    %3533 = vmatpush1.msra.mxu0 0.0
    %3534 = vmatprep.subr.mxu0 0.0
    %3535 = vmatpush1.msra.mxu0 0.0
    %3536 = vmatprep.subr.mxu0 0.0
    %3537 = vmatpush1.msra.mxu0 0.0
    %3538 = vmatprep.subr.mxu0 0.0
    %3539 = vmatpush1.msra.mxu0 0.0
    %3540 = vmatprep.subr.mxu0 0.0
    %3541 = vmatpush1.msra.mxu0 0.0
    %3542 = vmatprep.subr.mxu0 0.0
    %3543 = vmatpush1.msra.mxu0 0.0
    %3544 = vmatprep.subr.mxu0 0.0
    %3545 = vmatpush1.msra.mxu0 0.0
    %3546 = vmatprep.mubr.f32.mxu0 0.0
    %3547 = vmatmul.mubr.f32.gmra.mrb[0].mxu0 %v3477
    %v3548 = vpop.f32.mrb[0].mxu0
    %v3549 = vadd.f32 0.0, %v3548
    %v3550 = vpop.f32.mrb[0].mxu0
    %3551 = vdwg.mxu0
    %v3552 = vadd.f32 %v3470, %v3549
    %v3553 = vlaneseq
    %v3554 = vshrl.u32 %v3553, 7
    %v3555 = vsub.s32 0, %v3554
    %v3556 = vrot.slane %v124, %v3555
    %v3557 = vmul.f32 %v2086, %v3556
    %v3559 = vsel %vm2912, %v2903, 0
    %v3562 = vsel %vm2916, %v3557, 0
    %3564 = vmatprep.subr.mxu0 0.0
    %3565 = vmatpush1.msra.mxu0 %v3562
    %3566 = vmatprep.subr.mxu0 0.0
    %3567 = vmatpush1.msra.mxu0 0.0
    %3568 = vmatprep.subr.mxu0 0.0
    %3569 = vmatpush1.msra.mxu0 0.0
    %3570 = vmatprep.subr.mxu0 0.0
    %3571 = vmatpush1.msra.mxu0 0.0
    %3572 = vmatprep.subr.mxu0 0.0
    %3573 = vmatpush1.msra.mxu0 0.0
    %3574 = vmatprep.subr.mxu0 0.0
    %3575 = vmatpush1.msra.mxu0 0.0
    %3576 = vmatprep.subr.mxu0 0.0
    %3577 = vmatpush1.msra.mxu0 0.0
    %3578 = vmatprep.subr.mxu0 0.0
    %3579 = vmatpush1.msra.mxu0 0.0
    %3580 = vmatprep.subr.mxu0 0.0
    %3581 = vmatpush1.msra.mxu0 0.0
    %3582 = vmatprep.subr.mxu0 0.0
    %3583 = vmatpush1.msra.mxu0 0.0
    %3584 = vmatprep.subr.mxu0 0.0
    %3585 = vmatpush1.msra.mxu0 0.0
    %3586 = vmatprep.subr.mxu0 0.0
    %3587 = vmatpush1.msra.mxu0 0.0
    %3588 = vmatprep.subr.mxu0 0.0
    %3589 = vmatpush1.msra.mxu0 0.0
    %3590 = vmatprep.subr.mxu0 0.0
    %3591 = vmatpush1.msra.mxu0 0.0
    %3592 = vmatprep.subr.mxu0 0.0
    %3593 = vmatpush1.msra.mxu0 0.0
    %3594 = vmatprep.subr.mxu0 0.0
    %3595 = vmatpush1.msra.mxu0 0.0
    %3596 = vmatprep.subr.mxu0 0.0
    %3597 = vmatpush1.msra.mxu0 0.0
    %3598 = vmatprep.subr.mxu0 0.0
    %3599 = vmatpush1.msra.mxu0 0.0
    %3600 = vmatprep.subr.mxu0 0.0
    %3601 = vmatpush1.msra.mxu0 0.0
    %3602 = vmatprep.subr.mxu0 0.0
    %3603 = vmatpush1.msra.mxu0 0.0
    %3604 = vmatprep.subr.mxu0 0.0
    %3605 = vmatpush1.msra.mxu0 0.0
    %3606 = vmatprep.subr.mxu0 0.0
    %3607 = vmatpush1.msra.mxu0 0.0
    %3608 = vmatprep.subr.mxu0 0.0
    %3609 = vmatpush1.msra.mxu0 0.0
    %3610 = vmatprep.subr.mxu0 0.0
    %3611 = vmatpush1.msra.mxu0 0.0
    %3612 = vmatprep.subr.mxu0 0.0
    %3613 = vmatpush1.msra.mxu0 0.0
    %3614 = vmatprep.subr.mxu0 0.0
    %3615 = vmatpush1.msra.mxu0 0.0
    %3616 = vmatprep.subr.mxu0 0.0
    %3617 = vmatpush1.msra.mxu0 0.0
    %3618 = vmatprep.subr.mxu0 0.0
    %3619 = vmatpush1.msra.mxu0 0.0
    %3620 = vmatprep.subr.mxu0 0.0
    %3621 = vmatpush1.msra.mxu0 0.0
    %3622 = vmatprep.subr.mxu0 0.0
    %3623 = vmatpush1.msra.mxu0 0.0
    %3624 = vmatprep.subr.mxu0 0.0
    %3625 = vmatpush1.msra.mxu0 0.0
    %3626 = vmatprep.subr.mxu0 0.0
    %3627 = vmatpush1.msra.mxu0 0.0
    %3628 = vmatprep.mubr.f32.mxu0 0.0
    %3629 = vmatmul.mubr.f32.gmra.mrb[0].mxu0 %v3559
    %v3630 = vpop.f32.mrb[0].mxu0
    %v3631 = vadd.f32 0.0, %v3630
    %v3632 = vpop.f32.mrb[0].mxu0
    %3633 = vdwg.mxu0
    %v3634 = vadd.f32 %v3552, %v3631
    %v3635 = vlaneseq
    %v3636 = vshrl.u32 %v3635, 7
    %v3637 = vsub.s32 1, %v3636
    %v3638 = vrot.slane %v124, %v3637
    %v3639 = vmul.f32 %v2086, %v3638
    %v3641 = vsel %vm2912, %v2904, 0
    %v3644 = vsel %vm2916, %v3639, 0
    %3646 = vmatprep.subr.mxu0 0.0
    %3647 = vmatpush1.msra.mxu0 %v3644
    %3648 = vmatprep.subr.mxu0 0.0
    %3649 = vmatpush1.msra.mxu0 0.0
    %3650 = vmatprep.subr.mxu0 0.0
    %3651 = vmatpush1.msra.mxu0 0.0
    %3652 = vmatprep.subr.mxu0 0.0
    %3653 = vmatpush1.msra.mxu0 0.0
    %3654 = vmatprep.subr.mxu0 0.0
    %3655 = vmatpush1.msra.mxu0 0.0
    %3656 = vmatprep.subr.mxu0 0.0
    %3657 = vmatpush1.msra.mxu0 0.0
    %3658 = vmatprep.subr.mxu0 0.0
    %3659 = vmatpush1.msra.mxu0 0.0
    %3660 = vmatprep.subr.mxu0 0.0
    %3661 = vmatpush1.msra.mxu0 0.0
    %3662 = vmatprep.subr.mxu0 0.0
    %3663 = vmatpush1.msra.mxu0 0.0
    %3664 = vmatprep.subr.mxu0 0.0
    %3665 = vmatpush1.msra.mxu0 0.0
    %3666 = vmatprep.subr.mxu0 0.0
    %3667 = vmatpush1.msra.mxu0 0.0
    %3668 = vmatprep.subr.mxu0 0.0
    %3669 = vmatpush1.msra.mxu0 0.0
    %3670 = vmatprep.subr.mxu0 0.0
    %3671 = vmatpush1.msra.mxu0 0.0
    %3672 = vmatprep.subr.mxu0 0.0
    %3673 = vmatpush1.msra.mxu0 0.0
    %3674 = vmatprep.subr.mxu0 0.0
    %3675 = vmatpush1.msra.mxu0 0.0
    %3676 = vmatprep.subr.mxu0 0.0
    %3677 = vmatpush1.msra.mxu0 0.0
    %3678 = vmatprep.subr.mxu0 0.0
    %3679 = vmatpush1.msra.mxu0 0.0
    %3680 = vmatprep.subr.mxu0 0.0
    %3681 = vmatpush1.msra.mxu0 0.0
    %3682 = vmatprep.subr.mxu0 0.0
    %3683 = vmatpush1.msra.mxu0 0.0
    %3684 = vmatprep.subr.mxu0 0.0
    %3685 = vmatpush1.msra.mxu0 0.0
    %3686 = vmatprep.subr.mxu0 0.0
    %3687 = vmatpush1.msra.mxu0 0.0
    %3688 = vmatprep.subr.mxu0 0.0
    %3689 = vmatpush1.msra.mxu0 0.0
    %3690 = vmatprep.subr.mxu0 0.0
    %3691 = vmatpush1.msra.mxu0 0.0
    %3692 = vmatprep.subr.mxu0 0.0
    %3693 = vmatpush1.msra.mxu0 0.0
    %3694 = vmatprep.subr.mxu0 0.0
    %3695 = vmatpush1.msra.mxu0 0.0
    %3696 = vmatprep.subr.mxu0 0.0
    %3697 = vmatpush1.msra.mxu0 0.0
    %3698 = vmatprep.subr.mxu0 0.0
    %3699 = vmatpush1.msra.mxu0 0.0
    %3700 = vmatprep.subr.mxu0 0.0
    %3701 = vmatpush1.msra.mxu0 0.0
    %3702 = vmatprep.subr.mxu0 0.0
    %3703 = vmatpush1.msra.mxu0 0.0
    %3704 = vmatprep.subr.mxu0 0.0
    %3705 = vmatpush1.msra.mxu0 0.0
    %3706 = vmatprep.subr.mxu0 0.0
    %3707 = vmatpush1.msra.mxu0 0.0
    %3708 = vmatprep.subr.mxu0 0.0
    %3709 = vmatpush1.msra.mxu0 0.0
    %3710 = vmatprep.mubr.f32.mxu0 0.0
    %3711 = vmatmul.mubr.f32.gmra.mrb[0].mxu0 %v3641
    %v3712 = vpop.f32.mrb[0].mxu0
    %v3713 = vadd.f32 0.0, %v3712
    %v3714 = vpop.f32.mrb[0].mxu0
    %3715 = vdwg.mxu0
    %v3716 = vadd.f32 %v3634, %v3713
    %v3717 = vlaneseq
    %v3718 = vshrl.u32 %v3717, 7
    %v3719 = vsub.s32 2, %v3718
    %v3720 = vrot.slane %v124, %v3719
    %v3721 = vmul.f32 %v2086, %v3720
    %v3723 = vsel %vm2912, %v2905, 0
    %v3726 = vsel %vm2916, %v3721, 0
    %3728 = vmatprep.subr.mxu0 0.0
    %3729 = vmatpush1.msra.mxu0 %v3726
    %3730 = vmatprep.subr.mxu0 0.0
    %3731 = vmatpush1.msra.mxu0 0.0
    %3732 = vmatprep.subr.mxu0 0.0
    %3733 = vmatpush1.msra.mxu0 0.0
    %3734 = vmatprep.subr.mxu0 0.0
    %3735 = vmatpush1.msra.mxu0 0.0
    %3736 = vmatprep.subr.mxu0 0.0
    %3737 = vmatpush1.msra.mxu0 0.0
    %3738 = vmatprep.subr.mxu0 0.0
    %3739 = vmatpush1.msra.mxu0 0.0
    %3740 = vmatprep.subr.mxu0 0.0
    %3741 = vmatpush1.msra.mxu0 0.0
    %3742 = vmatprep.subr.mxu0 0.0
    %3743 = vmatpush1.msra.mxu0 0.0
    %3744 = vmatprep.subr.mxu0 0.0
    %3745 = vmatpush1.msra.mxu0 0.0
    %3746 = vmatprep.subr.mxu0 0.0
    %3747 = vmatpush1.msra.mxu0 0.0
    %3748 = vmatprep.subr.mxu0 0.0
    %3749 = vmatpush1.msra.mxu0 0.0
    %3750 = vmatprep.subr.mxu0 0.0
    %3751 = vmatpush1.msra.mxu0 0.0
    %3752 = vmatprep.subr.mxu0 0.0
    %3753 = vmatpush1.msra.mxu0 0.0
    %3754 = vmatprep.subr.mxu0 0.0
    %3755 = vmatpush1.msra.mxu0 0.0
    %3756 = vmatprep.subr.mxu0 0.0
    %3757 = vmatpush1.msra.mxu0 0.0
    %3758 = vmatprep.subr.mxu0 0.0
    %3759 = vmatpush1.msra.mxu0 0.0
    %3760 = vmatprep.subr.mxu0 0.0
    %3761 = vmatpush1.msra.mxu0 0.0
    %3762 = vmatprep.subr.mxu0 0.0
    %3763 = vmatpush1.msra.mxu0 0.0
    %3764 = vmatprep.subr.mxu0 0.0
    %3765 = vmatpush1.msra.mxu0 0.0
    %3766 = vmatprep.subr.mxu0 0.0
    %3767 = vmatpush1.msra.mxu0 0.0
    %3768 = vmatprep.subr.mxu0 0.0
    %3769 = vmatpush1.msra.mxu0 0.0
    %3770 = vmatprep.subr.mxu0 0.0
    %3771 = vmatpush1.msra.mxu0 0.0
    %3772 = vmatprep.subr.mxu0 0.0
    %3773 = vmatpush1.msra.mxu0 0.0
    %3774 = vmatprep.subr.mxu0 0.0
    %3775 = vmatpush1.msra.mxu0 0.0
    %3776 = vmatprep.subr.mxu0 0.0
    %3777 = vmatpush1.msra.mxu0 0.0
    %3778 = vmatprep.subr.mxu0 0.0
    %3779 = vmatpush1.msra.mxu0 0.0
    %3780 = vmatprep.subr.mxu0 0.0
    %3781 = vmatpush1.msra.mxu0 0.0
    %3782 = vmatprep.subr.mxu0 0.0
    %3783 = vmatpush1.msra.mxu0 0.0
    %3784 = vmatprep.subr.mxu0 0.0
    %3785 = vmatpush1.msra.mxu0 0.0
    %3786 = vmatprep.subr.mxu0 0.0
    %3787 = vmatpush1.msra.mxu0 0.0
    %3788 = vmatprep.subr.mxu0 0.0
    %3789 = vmatpush1.msra.mxu0 0.0
    %3790 = vmatprep.subr.mxu0 0.0
    %3791 = vmatpush1.msra.mxu0 0.0
    %3792 = vmatprep.mubr.f32.mxu0 0.0
    %3793 = vmatmul.mubr.f32.gmra.mrb[0].mxu0 %v3723
    %v3794 = vpop.f32.mrb[0].mxu0
    %v3795 = vadd.f32 0.0, %v3794
    %v3796 = vpop.f32.mrb[0].mxu0
    %3797 = vdwg.mxu0
    %v3798 = vadd.f32 %v3716, %v3795
    %v3799 = vlaneseq
    %v3800 = vshrl.u32 %v3799, 7
    %v3801 = vsub.s32 3, %v3800
    %v3802 = vrot.slane %v124, %v3801
    %v3803 = vmul.f32 %v2086, %v3802
    %v3805 = vsel %vm2912, %v2906, 0
    %v3808 = vsel %vm2916, %v3803, 0
    %3810 = vmatprep.subr.mxu0 0.0
    %3811 = vmatpush1.msra.mxu0 %v3808
    %3812 = vmatprep.subr.mxu0 0.0
    %3813 = vmatpush1.msra.mxu0 0.0
    %3814 = vmatprep.subr.mxu0 0.0
    %3815 = vmatpush1.msra.mxu0 0.0
    %3816 = vmatprep.subr.mxu0 0.0
    %3817 = vmatpush1.msra.mxu0 0.0
    %3818 = vmatprep.subr.mxu0 0.0
    %3819 = vmatpush1.msra.mxu0 0.0
    %3820 = vmatprep.subr.mxu0 0.0
    %3821 = vmatpush1.msra.mxu0 0.0
    %3822 = vmatprep.subr.mxu0 0.0
    %3823 = vmatpush1.msra.mxu0 0.0
    %3824 = vmatprep.subr.mxu0 0.0
    %3825 = vmatpush1.msra.mxu0 0.0
    %3826 = vmatprep.subr.mxu0 0.0
    %3827 = vmatpush1.msra.mxu0 0.0
    %3828 = vmatprep.subr.mxu0 0.0
    %3829 = vmatpush1.msra.mxu0 0.0
    %3830 = vmatprep.subr.mxu0 0.0
    %3831 = vmatpush1.msra.mxu0 0.0
    %3832 = vmatprep.subr.mxu0 0.0
    %3833 = vmatpush1.msra.mxu0 0.0
    %3834 = vmatprep.subr.mxu0 0.0
    %3835 = vmatpush1.msra.mxu0 0.0
    %3836 = vmatprep.subr.mxu0 0.0
    %3837 = vmatpush1.msra.mxu0 0.0
    %3838 = vmatprep.subr.mxu0 0.0
    %3839 = vmatpush1.msra.mxu0 0.0
    %3840 = vmatprep.subr.mxu0 0.0
    %3841 = vmatpush1.msra.mxu0 0.0
    %3842 = vmatprep.subr.mxu0 0.0
    %3843 = vmatpush1.msra.mxu0 0.0
    %3844 = vmatprep.subr.mxu0 0.0
    %3845 = vmatpush1.msra.mxu0 0.0
    %3846 = vmatprep.subr.mxu0 0.0
    %3847 = vmatpush1.msra.mxu0 0.0
    %3848 = vmatprep.subr.mxu0 0.0
    %3849 = vmatpush1.msra.mxu0 0.0
    %3850 = vmatprep.subr.mxu0 0.0
    %3851 = vmatpush1.msra.mxu0 0.0
    %3852 = vmatprep.subr.mxu0 0.0
    %3853 = vmatpush1.msra.mxu0 0.0
    %3854 = vmatprep.subr.mxu0 0.0
    %3855 = vmatpush1.msra.mxu0 0.0
    %3856 = vmatprep.subr.mxu0 0.0
    %3857 = vmatpush1.msra.mxu0 0.0
    %3858 = vmatprep.subr.mxu0 0.0
    %3859 = vmatpush1.msra.mxu0 0.0
    %3860 = vmatprep.subr.mxu0 0.0
    %3861 = vmatpush1.msra.mxu0 0.0
    %3862 = vmatprep.subr.mxu0 0.0
    %3863 = vmatpush1.msra.mxu0 0.0
    %3864 = vmatprep.subr.mxu0 0.0
    %3865 = vmatpush1.msra.mxu0 0.0
    %3866 = vmatprep.subr.mxu0 0.0
    %3867 = vmatpush1.msra.mxu0 0.0
    %3868 = vmatprep.subr.mxu0 0.0
    %3869 = vmatpush1.msra.mxu0 0.0
    %3870 = vmatprep.subr.mxu0 0.0
    %3871 = vmatpush1.msra.mxu0 0.0
    %3872 = vmatprep.subr.mxu0 0.0
    %3873 = vmatpush1.msra.mxu0 0.0
    %3874 = vmatprep.mubr.f32.mxu0 0.0
    %3875 = vmatmul.mubr.f32.gmra.mrb[0].mxu0 %v3805
    %v3876 = vpop.f32.mrb[0].mxu0
    %v3877 = vadd.f32 0.0, %v3876
    %v3878 = vpop.f32.mrb[0].mxu0
    %3879 = vdwg.mxu0
    %v3880 = vadd.f32 %v3798, %v3877
    %v3881 = vlaneseq
    %v3882 = vshrl.u32 %v3881, 7
    %v3883 = vsub.s32 4, %v3882
    %v3884 = vrot.slane %v124, %v3883
    %v3885 = vmul.f32 %v2086, %v3884
    %v3887 = vsel %vm2912, %v2907, 0
    %v3890 = vsel %vm2916, %v3885, 0
    %3892 = vmatprep.subr.mxu0 0.0
    %3893 = vmatpush1.msra.mxu0 %v3890
    %3894 = vmatprep.subr.mxu0 0.0
    %3895 = vmatpush1.msra.mxu0 0.0
    %3896 = vmatprep.subr.mxu0 0.0
    %3897 = vmatpush1.msra.mxu0 0.0
    %3898 = vmatprep.subr.mxu0 0.0
    %3899 = vmatpush1.msra.mxu0 0.0
    %3900 = vmatprep.subr.mxu0 0.0
    %3901 = vmatpush1.msra.mxu0 0.0
    %3902 = vmatprep.subr.mxu0 0.0
    %3903 = vmatpush1.msra.mxu0 0.0
    %3904 = vmatprep.subr.mxu0 0.0
    %3905 = vmatpush1.msra.mxu0 0.0
    %3906 = vmatprep.subr.mxu0 0.0
    %3907 = vmatpush1.msra.mxu0 0.0
    %3908 = vmatprep.subr.mxu0 0.0
    %3909 = vmatpush1.msra.mxu0 0.0
    %3910 = vmatprep.subr.mxu0 0.0
    %3911 = vmatpush1.msra.mxu0 0.0
    %3912 = vmatprep.subr.mxu0 0.0
    %3913 = vmatpush1.msra.mxu0 0.0
    %3914 = vmatprep.subr.mxu0 0.0
    %3915 = vmatpush1.msra.mxu0 0.0
    %3916 = vmatprep.subr.mxu0 0.0
    %3917 = vmatpush1.msra.mxu0 0.0
    %3918 = vmatprep.subr.mxu0 0.0
    %3919 = vmatpush1.msra.mxu0 0.0
    %3920 = vmatprep.subr.mxu0 0.0
    %3921 = vmatpush1.msra.mxu0 0.0
    %3922 = vmatprep.subr.mxu0 0.0
    %3923 = vmatpush1.msra.mxu0 0.0
    %3924 = vmatprep.subr.mxu0 0.0
    %3925 = vmatpush1.msra.mxu0 0.0
    %3926 = vmatprep.subr.mxu0 0.0
    %3927 = vmatpush1.msra.mxu0 0.0
    %3928 = vmatprep.subr.mxu0 0.0
    %3929 = vmatpush1.msra.mxu0 0.0
    %3930 = vmatprep.subr.mxu0 0.0
    %3931 = vmatpush1.msra.mxu0 0.0
    %3932 = vmatprep.subr.mxu0 0.0
    %3933 = vmatpush1.msra.mxu0 0.0
    %3934 = vmatprep.subr.mxu0 0.0
    %3935 = vmatpush1.msra.mxu0 0.0
    %3936 = vmatprep.subr.mxu0 0.0
    %3937 = vmatpush1.msra.mxu0 0.0
    %3938 = vmatprep.subr.mxu0 0.0
    %3939 = vmatpush1.msra.mxu0 0.0
    %3940 = vmatprep.subr.mxu0 0.0
    %3941 = vmatpush1.msra.mxu0 0.0
    %3942 = vmatprep.subr.mxu0 0.0
    %3943 = vmatpush1.msra.mxu0 0.0
    %3944 = vmatprep.subr.mxu0 0.0
    %3945 = vmatpush1.msra.mxu0 0.0
    %3946 = vmatprep.subr.mxu0 0.0
    %3947 = vmatpush1.msra.mxu0 0.0
    %3948 = vmatprep.subr.mxu0 0.0
    %3949 = vmatpush1.msra.mxu0 0.0
    %3950 = vmatprep.subr.mxu0 0.0
    %3951 = vmatpush1.msra.mxu0 0.0
    %3952 = vmatprep.subr.mxu0 0.0
    %3953 = vmatpush1.msra.mxu0 0.0
    %3954 = vmatprep.subr.mxu0 0.0
    %3955 = vmatpush1.msra.mxu0 0.0
    %3956 = vmatprep.mubr.f32.mxu0 0.0
    %3957 = vmatmul.mubr.f32.gmra.mrb[0].mxu0 %v3887
    %v3958 = vpop.f32.mrb[0].mxu0
    %v3959 = vadd.f32 0.0, %v3958
    %v3960 = vpop.f32.mrb[0].mxu0
    %3961 = vdwg.mxu0
    %v3962 = vadd.f32 %v3880, %v3959
    %v3963 = vlaneseq
    %v3964 = vshrl.u32 %v3963, 7
    %v3965 = vsub.s32 5, %v3964
    %v3966 = vrot.slane %v124, %v3965
    %v3967 = vmul.f32 %v2086, %v3966
    %v3969 = vsel %vm2912, %v2908, 0
    %v3972 = vsel %vm2916, %v3967, 0
    %3974 = vmatprep.subr.mxu0 0.0
    %3975 = vmatpush1.msra.mxu0 %v3972
    %3976 = vmatprep.subr.mxu0 0.0
    %3977 = vmatpush1.msra.mxu0 0.0
    %3978 = vmatprep.subr.mxu0 0.0
    %3979 = vmatpush1.msra.mxu0 0.0
    %3980 = vmatprep.subr.mxu0 0.0
    %3981 = vmatpush1.msra.mxu0 0.0
    %3982 = vmatprep.subr.mxu0 0.0
    %3983 = vmatpush1.msra.mxu0 0.0
    %3984 = vmatprep.subr.mxu0 0.0
    %3985 = vmatpush1.msra.mxu0 0.0
    %3986 = vmatprep.subr.mxu0 0.0
    %3987 = vmatpush1.msra.mxu0 0.0
    %3988 = vmatprep.subr.mxu0 0.0
    %3989 = vmatpush1.msra.mxu0 0.0
    %3990 = vmatprep.subr.mxu0 0.0
    %3991 = vmatpush1.msra.mxu0 0.0
    %3992 = vmatprep.subr.mxu0 0.0
    %3993 = vmatpush1.msra.mxu0 0.0
    %3994 = vmatprep.subr.mxu0 0.0
    %3995 = vmatpush1.msra.mxu0 0.0
    %3996 = vmatprep.subr.mxu0 0.0
    %3997 = vmatpush1.msra.mxu0 0.0
    %3998 = vmatprep.subr.mxu0 0.0
    %3999 = vmatpush1.msra.mxu0 0.0
    %4000 = vmatprep.subr.mxu0 0.0
    %4001 = vmatpush1.msra.mxu0 0.0
    %4002 = vmatprep.subr.mxu0 0.0
    %4003 = vmatpush1.msra.mxu0 0.0
    %4004 = vmatprep.subr.mxu0 0.0
    %4005 = vmatpush1.msra.mxu0 0.0
    %4006 = vmatprep.subr.mxu0 0.0
    %4007 = vmatpush1.msra.mxu0 0.0
    %4008 = vmatprep.subr.mxu0 0.0
    %4009 = vmatpush1.msra.mxu0 0.0
    %4010 = vmatprep.subr.mxu0 0.0
    %4011 = vmatpush1.msra.mxu0 0.0
    %4012 = vmatprep.subr.mxu0 0.0
    %4013 = vmatpush1.msra.mxu0 0.0
    %4014 = vmatprep.subr.mxu0 0.0
    %4015 = vmatpush1.msra.mxu0 0.0
    %4016 = vmatprep.subr.mxu0 0.0
    %4017 = vmatpush1.msra.mxu0 0.0
    %4018 = vmatprep.subr.mxu0 0.0
    %4019 = vmatpush1.msra.mxu0 0.0
    %4020 = vmatprep.subr.mxu0 0.0
    %4021 = vmatpush1.msra.mxu0 0.0
    %4022 = vmatprep.subr.mxu0 0.0
    %4023 = vmatpush1.msra.mxu0 0.0
    %4024 = vmatprep.subr.mxu0 0.0
    %4025 = vmatpush1.msra.mxu0 0.0
    %4026 = vmatprep.subr.mxu0 0.0
    %4027 = vmatpush1.msra.mxu0 0.0
    %4028 = vmatprep.subr.mxu0 0.0
    %4029 = vmatpush1.msra.mxu0 0.0
    %4030 = vmatprep.subr.mxu0 0.0
    %4031 = vmatpush1.msra.mxu0 0.0
    %4032 = vmatprep.subr.mxu0 0.0
    %4033 = vmatpush1.msra.mxu0 0.0
    %4034 = vmatprep.subr.mxu0 0.0
    %4035 = vmatpush1.msra.mxu0 0.0
    %4036 = vmatprep.subr.mxu0 0.0
    %4037 = vmatpush1.msra.mxu0 0.0
    %4038 = vmatprep.mubr.f32.mxu0 0.0
    %4039 = vmatmul.mubr.f32.gmra.mrb[0].mxu0 %v3969
    %v4040 = vpop.f32.mrb[0].mxu0
    %v4041 = vadd.f32 0.0, %v4040
    %v4042 = vpop.f32.mrb[0].mxu0
    %4043 = vdwg.mxu0
    %v4044 = vadd.f32 %v3962, %v4041
    %v4045 = vlaneseq
    %v4046 = vshrl.u32 %v4045, 7
    %v4047 = vsub.s32 6, %v4046
    %v4048 = vrot.slane %v124, %v4047
    %v4049 = vmul.f32 %v2086, %v4048
    %v4051 = vsel %vm2912, %v2909, 0
    %v4054 = vsel %vm2916, %v4049, 0
    %4056 = vmatprep.subr.mxu0 0.0
    %4057 = vmatpush1.msra.mxu0 %v4054
    %4058 = vmatprep.subr.mxu0 0.0
    %4059 = vmatpush1.msra.mxu0 0.0
    %4060 = vmatprep.subr.mxu0 0.0
    %4061 = vmatpush1.msra.mxu0 0.0
    %4062 = vmatprep.subr.mxu0 0.0
    %4063 = vmatpush1.msra.mxu0 0.0
    %4064 = vmatprep.subr.mxu0 0.0
    %4065 = vmatpush1.msra.mxu0 0.0
    %4066 = vmatprep.subr.mxu0 0.0
    %4067 = vmatpush1.msra.mxu0 0.0
    %4068 = vmatprep.subr.mxu0 0.0
    %4069 = vmatpush1.msra.mxu0 0.0
    %4070 = vmatprep.subr.mxu0 0.0
    %4071 = vmatpush1.msra.mxu0 0.0
    %4072 = vmatprep.subr.mxu0 0.0
    %4073 = vmatpush1.msra.mxu0 0.0
    %4074 = vmatprep.subr.mxu0 0.0
    %4075 = vmatpush1.msra.mxu0 0.0
    %4076 = vmatprep.subr.mxu0 0.0
    %4077 = vmatpush1.msra.mxu0 0.0
    %4078 = vmatprep.subr.mxu0 0.0
    %4079 = vmatpush1.msra.mxu0 0.0
    %4080 = vmatprep.subr.mxu0 0.0
    %4081 = vmatpush1.msra.mxu0 0.0
    %4082 = vmatprep.subr.mxu0 0.0
    %4083 = vmatpush1.msra.mxu0 0.0
    %4084 = vmatprep.subr.mxu0 0.0
    %4085 = vmatpush1.msra.mxu0 0.0
    %4086 = vmatprep.subr.mxu0 0.0
    %4087 = vmatpush1.msra.mxu0 0.0
    %4088 = vmatprep.subr.mxu0 0.0
    %4089 = vmatpush1.msra.mxu0 0.0
    %4090 = vmatprep.subr.mxu0 0.0
    %4091 = vmatpush1.msra.mxu0 0.0
    %4092 = vmatprep.subr.mxu0 0.0
    %4093 = vmatpush1.msra.mxu0 0.0
    %4094 = vmatprep.subr.mxu0 0.0
    %4095 = vmatpush1.msra.mxu0 0.0
    %4096 = vmatprep.subr.mxu0 0.0
    %4097 = vmatpush1.msra.mxu0 0.0
    %4098 = vmatprep.subr.mxu0 0.0
    %4099 = vmatpush1.msra.mxu0 0.0
    %4100 = vmatprep.subr.mxu0 0.0
    %4101 = vmatpush1.msra.mxu0 0.0
    %4102 = vmatprep.subr.mxu0 0.0
    %4103 = vmatpush1.msra.mxu0 0.0
    %4104 = vmatprep.subr.mxu0 0.0
    %4105 = vmatpush1.msra.mxu0 0.0
    %4106 = vmatprep.subr.mxu0 0.0
    %4107 = vmatpush1.msra.mxu0 0.0
    %4108 = vmatprep.subr.mxu0 0.0
    %4109 = vmatpush1.msra.mxu0 0.0
    %4110 = vmatprep.subr.mxu0 0.0
    %4111 = vmatpush1.msra.mxu0 0.0
    %4112 = vmatprep.subr.mxu0 0.0
    %4113 = vmatpush1.msra.mxu0 0.0
    %4114 = vmatprep.subr.mxu0 0.0
    %4115 = vmatpush1.msra.mxu0 0.0
    %4116 = vmatprep.subr.mxu0 0.0
    %4117 = vmatpush1.msra.mxu0 0.0
    %4118 = vmatprep.subr.mxu0 0.0
    %4119 = vmatpush1.msra.mxu0 0.0
    %4120 = vmatprep.mubr.f32.mxu0 0.0
    %4121 = vmatmul.mubr.f32.gmra.mrb[0].mxu0 %v4051
    %v4122 = vpop.f32.mrb[0].mxu0
    %v4123 = vadd.f32 0.0, %v4122
    %v4124 = vpop.f32.mrb[0].mxu0
    %4125 = vdwg.mxu0
    %v4126 = vadd.f32 %v4044, %v4123
    %v4127 = vlaneseq
    %v4128 = vshrl.u32 %v4127, 7
    %v4129 = vsub.s32 7, %v4128
    %v4130 = vrot.slane %v124, %v4129
    %v4131 = vmul.f32 %v2086, %v4130
    %v4133 = vsel %vm2912, %v2910, 0
    %v4136 = vsel %vm2916, %v4131, 0
    %4138 = vmatprep.subr.mxu0 0.0
    %4139 = vmatpush1.msra.mxu0 %v4136
    %4140 = vmatprep.subr.mxu0 0.0
    %4141 = vmatpush1.msra.mxu0 0.0
    %4142 = vmatprep.subr.mxu0 0.0
    %4143 = vmatpush1.msra.mxu0 0.0
    %4144 = vmatprep.subr.mxu0 0.0
    %4145 = vmatpush1.msra.mxu0 0.0
    %4146 = vmatprep.subr.mxu0 0.0
    %4147 = vmatpush1.msra.mxu0 0.0
    %4148 = vmatprep.subr.mxu0 0.0
    %4149 = vmatpush1.msra.mxu0 0.0
    %4150 = vmatprep.subr.mxu0 0.0
    %4151 = vmatpush1.msra.mxu0 0.0
    %4152 = vmatprep.subr.mxu0 0.0
    %4153 = vmatpush1.msra.mxu0 0.0
    %4154 = vmatprep.subr.mxu0 0.0
    %4155 = vmatpush1.msra.mxu0 0.0
    %4156 = vmatprep.subr.mxu0 0.0
    %4157 = vmatpush1.msra.mxu0 0.0
    %4158 = vmatprep.subr.mxu0 0.0
    %4159 = vmatpush1.msra.mxu0 0.0
    %4160 = vmatprep.subr.mxu0 0.0
    %4161 = vmatpush1.msra.mxu0 0.0
    %4162 = vmatprep.subr.mxu0 0.0
    %4163 = vmatpush1.msra.mxu0 0.0
    %4164 = vmatprep.subr.mxu0 0.0
    %4165 = vmatpush1.msra.mxu0 0.0
    %4166 = vmatprep.subr.mxu0 0.0
    %4167 = vmatpush1.msra.mxu0 0.0
    %4168 = vmatprep.subr.mxu0 0.0
    %4169 = vmatpush1.msra.mxu0 0.0
    %4170 = vmatprep.subr.mxu0 0.0
    %4171 = vmatpush1.msra.mxu0 0.0
    %4172 = vmatprep.subr.mxu0 0.0
    %4173 = vmatpush1.msra.mxu0 0.0
    %4174 = vmatprep.subr.mxu0 0.0
    %4175 = vmatpush1.msra.mxu0 0.0
    %4176 = vmatprep.subr.mxu0 0.0
    %4177 = vmatpush1.msra.mxu0 0.0
    %4178 = vmatprep.subr.mxu0 0.0
    %4179 = vmatpush1.msra.mxu0 0.0
    %4180 = vmatprep.subr.mxu0 0.0
    %4181 = vmatpush1.msra.mxu0 0.0
    %4182 = vmatprep.subr.mxu0 0.0
    %4183 = vmatpush1.msra.mxu0 0.0
    %4184 = vmatprep.subr.mxu0 0.0
    %4185 = vmatpush1.msra.mxu0 0.0
    %4186 = vmatprep.subr.mxu0 0.0
    %4187 = vmatpush1.msra.mxu0 0.0
    %4188 = vmatprep.subr.mxu0 0.0
    %4189 = vmatpush1.msra.mxu0 0.0
    %4190 = vmatprep.subr.mxu0 0.0
    %4191 = vmatpush1.msra.mxu0 0.0
    %4192 = vmatprep.subr.mxu0 0.0
    %4193 = vmatpush1.msra.mxu0 0.0
    %4194 = vmatprep.subr.mxu0 0.0
    %4195 = vmatpush1.msra.mxu0 0.0
    %4196 = vmatprep.subr.mxu0 0.0
    %4197 = vmatpush1.msra.mxu0 0.0
    %4198 = vmatprep.subr.mxu0 0.0
    %4199 = vmatpush1.msra.mxu0 0.0
    %4200 = vmatprep.subr.mxu0 0.0
    %4201 = vmatpush1.msra.mxu0 0.0
    %4202 = vmatprep.mubr.f32.mxu0 0.0
    %4203 = vmatmul.mubr.f32.gmra.mrb[0].mxu0 %v4133
    %v4204 = vpop.f32.mrb[0].mxu0
    %v4205 = vadd.f32 0.0, %v4204
    %v4206 = vpop.f32.mrb[0].mxu0
    %4207 = vdwg.mxu0
    %v4208 = vadd.f32 %v4126, %v4205
    %4210 = vrot.lane.b32.xlu0 %v2088, 112
    %v4211 = vpop.permute.xlu0 %4210
    %4213 = vxpose.xlu0.b32.start [1/16] %v4211, 128
    %4214 = vxpose.xlu0.b32.cont [2/16] 0.0, 128
    %4215 = vxpose.xlu0.b32.cont [3/16] 0.0, 128
    %4216 = vxpose.xlu0.b32.cont [4/16] 0.0, 128
    %4217 = vxpose.xlu0.b32.cont [5/16] 0.0, 128
    %4218 = vxpose.xlu0.b32.cont [6/16] 0.0, 128
    %4219 = vxpose.xlu0.b32.cont [7/16] 0.0, 128
    %4220 = vxpose.xlu0.b32.cont [8/16] 0.0, 128
    %4221 = vxpose.xlu0.b32.cont [9/16] 0.0, 128
    %4222 = vxpose.xlu0.b32.cont [10/16] 0.0, 128
    %4223 = vxpose.xlu0.b32.cont [11/16] 0.0, 128
    %4224 = vxpose.xlu0.b32.cont [12/16] 0.0, 128
    %4225 = vxpose.xlu0.b32.cont [13/16] 0.0, 128
    %4226 = vxpose.xlu0.b32.cont [14/16] 0.0, 128
    %4227 = vxpose.xlu0.b32.cont [15/16] 0.0, 128
    %4228 = vxpose.xlu0.b32.end [16/16] 0.0, 128
    %v4229 = vpop.trf.xlu0
    %v4230 = vpop.trf.xlu0
    %v4231 = vpop.trf.xlu0
    %v4232 = vpop.trf.xlu0
    %v4233 = vpop.trf.xlu0
    %v4234 = vpop.trf.xlu0
    %v4235 = vpop.trf.xlu0
    %v4236 = vpop.trf.xlu0
    %v4237 = vpop.trf.xlu0
    %v4238 = vpop.trf.xlu0
    %v4239 = vpop.trf.xlu0
    %v4240 = vpop.trf.xlu0
    %v4241 = vpop.trf.xlu0
    %v4242 = vpop.trf.xlu0
    %v4243 = vpop.trf.xlu0
    %v4244 = vpop.trf.xlu0
    %v4245 = vlaneseq
    %v4246 = vshrl.u32 %v4245, 7
    %v4247 = vsub.s32 0, %v4246
    %v4248 = vrot.slane %v4229, %v4247
    %4250 = vbcast.lane.b32.xlu0 %v4248, 256
    %v4251 = vpop.permute.xlu0 %4250
    %v4252 = vlaneseq
    %v4253 = vshrl.u32 %v4252, 7
    %v4254 = vsub.s32 1, %v4253
    %v4255 = vrot.slane %v4229, %v4254
    %4257 = vbcast.lane.b32.xlu0 %v4255, 256
    %v4258 = vpop.permute.xlu0 %4257
    %v4259 = vlaneseq
    %v4260 = vshrl.u32 %v4259, 7
    %v4261 = vsub.s32 2, %v4260
    %v4262 = vrot.slane %v4229, %v4261
    %4264 = vbcast.lane.b32.xlu0 %v4262, 256
    %v4265 = vpop.permute.xlu0 %4264
    %v4266 = vlaneseq
    %v4267 = vshrl.u32 %v4266, 7
    %v4268 = vsub.s32 3, %v4267
    %v4269 = vrot.slane %v4229, %v4268
    %4271 = vbcast.lane.b32.xlu0 %v4269, 256
    %v4272 = vpop.permute.xlu0 %4271
    %v4273 = vlaneseq
    %v4274 = vshrl.u32 %v4273, 7
    %v4275 = vsub.s32 4, %v4274
    %v4276 = vrot.slane %v4229, %v4275
    %4278 = vbcast.lane.b32.xlu0 %v4276, 256
    %v4279 = vpop.permute.xlu0 %4278
    %v4280 = vlaneseq
    %v4281 = vshrl.u32 %v4280, 7
    %v4282 = vsub.s32 5, %v4281
    %v4283 = vrot.slane %v4229, %v4282
    %4285 = vbcast.lane.b32.xlu0 %v4283, 256
    %v4286 = vpop.permute.xlu0 %4285
    %v4287 = vlaneseq
    %v4288 = vshrl.u32 %v4287, 7
    %v4289 = vsub.s32 6, %v4288
    %v4290 = vrot.slane %v4229, %v4289
    %4292 = vbcast.lane.b32.xlu0 %v4290, 256
    %v4293 = vpop.permute.xlu0 %4292
    %v4294 = vlaneseq
    %v4295 = vshrl.u32 %v4294, 7
    %v4296 = vsub.s32 7, %v4295
    %v4297 = vrot.slane %v4229, %v4296
    %4299 = vbcast.lane.b32.xlu0 %v4297, 256
    %v4300 = vpop.permute.xlu0 %4299
    %v4301 = vlaneseq
    %v4302 = vshrl.u32 %v4301, 7
    %v4303 = vsub.s32 0, %v4302
    %v4304 = vrot.slane %v4230, %v4303
    %4306 = vbcast.lane.b32.xlu0 %v4304, 256
    %v4307 = vpop.permute.xlu0 %4306
    %v4308 = vlaneseq
    %v4309 = vshrl.u32 %v4308, 7
    %v4310 = vsub.s32 1, %v4309
    %v4311 = vrot.slane %v4230, %v4310
    %4313 = vbcast.lane.b32.xlu0 %v4311, 256
    %v4314 = vpop.permute.xlu0 %4313
    %v4315 = vlaneseq
    %v4316 = vshrl.u32 %v4315, 7
    %v4317 = vsub.s32 2, %v4316
    %v4318 = vrot.slane %v4230, %v4317
    %4320 = vbcast.lane.b32.xlu0 %v4318, 256
    %v4321 = vpop.permute.xlu0 %4320
    %v4322 = vlaneseq
    %v4323 = vshrl.u32 %v4322, 7
    %v4324 = vsub.s32 3, %v4323
    %v4325 = vrot.slane %v4230, %v4324
    %4327 = vbcast.lane.b32.xlu0 %v4325, 256
    %v4328 = vpop.permute.xlu0 %4327
    %v4329 = vlaneseq
    %v4330 = vshrl.u32 %v4329, 7
    %v4331 = vsub.s32 4, %v4330
    %v4332 = vrot.slane %v4230, %v4331
    %4334 = vbcast.lane.b32.xlu0 %v4332, 256
    %v4335 = vpop.permute.xlu0 %4334
    %v4336 = vlaneseq
    %v4337 = vshrl.u32 %v4336, 7
    %v4338 = vsub.s32 5, %v4337
    %v4339 = vrot.slane %v4230, %v4338
    %4341 = vbcast.lane.b32.xlu0 %v4339, 256
    %v4342 = vpop.permute.xlu0 %4341
    %v4343 = vlaneseq
    %v4344 = vshrl.u32 %v4343, 7
    %v4345 = vsub.s32 6, %v4344
    %v4346 = vrot.slane %v4230, %v4345
    %4348 = vbcast.lane.b32.xlu0 %v4346, 256
    %v4349 = vpop.permute.xlu0 %4348
    %v4350 = vlaneseq
    %v4351 = vshrl.u32 %v4350, 7
    %v4352 = vsub.s32 7, %v4351
    %v4353 = vrot.slane %v4230, %v4352
    %4355 = vbcast.lane.b32.xlu0 %v4353, 256
    %v4356 = vpop.permute.xlu0 %4355
    %4357 = vxpose.xlu0.b32.start [1/16] %v2243, 128
    %4358 = vxpose.xlu0.b32.cont [2/16] 0.0, 128
    %4359 = vxpose.xlu0.b32.cont [3/16] 0.0, 128
    %4360 = vxpose.xlu0.b32.cont [4/16] 0.0, 128
    %4361 = vxpose.xlu0.b32.cont [5/16] 0.0, 128
    %4362 = vxpose.xlu0.b32.cont [6/16] 0.0, 128
    %4363 = vxpose.xlu0.b32.cont [7/16] 0.0, 128
    %4364 = vxpose.xlu0.b32.cont [8/16] 0.0, 128
    %4365 = vxpose.xlu0.b32.cont [9/16] 0.0, 128
    %4366 = vxpose.xlu0.b32.cont [10/16] 0.0, 128
    %4367 = vxpose.xlu0.b32.cont [11/16] 0.0, 128
    %4368 = vxpose.xlu0.b32.cont [12/16] 0.0, 128
    %4369 = vxpose.xlu0.b32.cont [13/16] 0.0, 128
    %4370 = vxpose.xlu0.b32.cont [14/16] 0.0, 128
    %4371 = vxpose.xlu0.b32.cont [15/16] 0.0, 128
    %4372 = vxpose.xlu0.b32.end [16/16] 0.0, 128
    %v4373 = vpop.trf.xlu0
    %v4374 = vpop.trf.xlu0
    %v4375 = vpop.trf.xlu0
    %v4376 = vpop.trf.xlu0
    %v4377 = vpop.trf.xlu0
    %v4378 = vpop.trf.xlu0
    %v4379 = vpop.trf.xlu0
    %v4380 = vpop.trf.xlu0
    %v4381 = vpop.trf.xlu0
    %v4382 = vpop.trf.xlu0
    %v4383 = vpop.trf.xlu0
    %v4384 = vpop.trf.xlu0
    %v4385 = vpop.trf.xlu0
    %v4386 = vpop.trf.xlu0
    %v4387 = vpop.trf.xlu0
    %v4388 = vpop.trf.xlu0
    %v4391 = vcombine.high %v4373, %v4373
    %v4393 = vunpack.c.l.s4 1966171168
    %v4394 = vunpack.c.0.s8 %v4393
    %v4395 = vlaneseq
    %v4396 = vshrl.u32 %v4395, 7
    %v4397 = vsub.s32 %v4394, %v4396
    %v4398 = vrot.slane %v4373, %v4397
    %v4400 = vunpack.c.l.s4 1966171168
    %v4401 = vunpack.c.0.s8 %v4400
    %v4402 = vlaneseq
    %v4403 = vshrl.u32 %v4402, 7
    %v4404 = vsub.s32 %v4401, %v4403
    %v4405 = vrot.slane %v4391, %v4404
    %v4406 = vcombine.high %v4398, %v4398
    %v4407 = vcombine.high %v4405, %v4405
    %v4409 = vunpack.c.l.s4 1966171168
    %v4410 = vunpack.c.0.s8 %v4409
    %v4411 = vlaneseq
    %v4412 = vshrl.u32 %v4411, 7
    %v4413 = vsub.s32 %v4410, %v4412
    %v4414 = vrot.slane %v4398, %v4413
    %v4416 = vunpack.c.l.s4 1966171168
    %v4417 = vunpack.c.0.s8 %v4416
    %v4418 = vlaneseq
    %v4419 = vshrl.u32 %v4418, 7
    %v4420 = vsub.s32 %v4417, %v4419
    %v4421 = vrot.slane %v4405, %v4420
    %v4423 = vunpack.c.l.s4 1966171168
    %v4424 = vunpack.c.0.s8 %v4423
    %v4425 = vlaneseq
    %v4426 = vshrl.u32 %v4425, 7
    %v4427 = vsub.s32 %v4424, %v4426
    %v4428 = vrot.slane %v4406, %v4427
    %v4430 = vunpack.c.l.s4 1966171168
    %v4431 = vunpack.c.0.s8 %v4430
    %v4432 = vlaneseq
    %v4433 = vshrl.u32 %v4432, 7
    %v4434 = vsub.s32 %v4431, %v4433
    %v4435 = vrot.slane %v4407, %v4434
    %v4436 = vcombine.high %v4414, %v4414
    %v4437 = vcombine.high %v4421, %v4421
    %v4438 = vcombine.high %v4428, %v4428
    %v4439 = vcombine.high %v4435, %v4435
    %v4440 = vcombine.high %v4374, %v4374
    %v4442 = vunpack.c.l.s4 1966171168
    %v4443 = vunpack.c.0.s8 %v4442
    %v4444 = vlaneseq
    %v4445 = vshrl.u32 %v4444, 7
    %v4446 = vsub.s32 %v4443, %v4445
    %v4447 = vrot.slane %v4374, %v4446
    %v4449 = vunpack.c.l.s4 1966171168
    %v4450 = vunpack.c.0.s8 %v4449
    %v4451 = vlaneseq
    %v4452 = vshrl.u32 %v4451, 7
    %v4453 = vsub.s32 %v4450, %v4452
    %v4454 = vrot.slane %v4440, %v4453
    %v4455 = vcombine.high %v4447, %v4447
    %v4456 = vcombine.high %v4454, %v4454
    %v4458 = vunpack.c.l.s4 1966171168
    %v4459 = vunpack.c.0.s8 %v4458
    %v4460 = vlaneseq
    %v4461 = vshrl.u32 %v4460, 7
    %v4462 = vsub.s32 %v4459, %v4461
    %v4463 = vrot.slane %v4447, %v4462
    %v4465 = vunpack.c.l.s4 1966171168
    %v4466 = vunpack.c.0.s8 %v4465
    %v4467 = vlaneseq
    %v4468 = vshrl.u32 %v4467, 7
    %v4469 = vsub.s32 %v4466, %v4468
    %v4470 = vrot.slane %v4454, %v4469
    %v4472 = vunpack.c.l.s4 1966171168
    %v4473 = vunpack.c.0.s8 %v4472
    %v4474 = vlaneseq
    %v4475 = vshrl.u32 %v4474, 7
    %v4476 = vsub.s32 %v4473, %v4475
    %v4477 = vrot.slane %v4455, %v4476
    %v4479 = vunpack.c.l.s4 1966171168
    %v4480 = vunpack.c.0.s8 %v4479
    %v4481 = vlaneseq
    %v4482 = vshrl.u32 %v4481, 7
    %v4483 = vsub.s32 %v4480, %v4482
    %v4484 = vrot.slane %v4456, %v4483
    %v4485 = vcombine.high %v4463, %v4463
    %v4486 = vcombine.high %v4470, %v4470
    %v4487 = vcombine.high %v4477, %v4477
    %v4488 = vcombine.high %v4484, %v4484
    %v4489 = vlaneseq
    %v4490 = vshrl.u32 %v4489, 7
    %v4491 = vsub.s32 0, %v4490
    %v4492 = vrot.slane %v4414, %v4491
    %v4493 = vlaneseq
    %v4494 = vshrl.u32 %v4493, 7
    %v4495 = vsub.s32 0, %v4494
    %v4496 = vrot.slane %v4428, %v4495
    %v4497 = vlaneseq
    %v4498 = vshrl.u32 %v4497, 7
    %v4499 = vsub.s32 0, %v4498
    %v4500 = vrot.slane %v4436, %v4499
    %v4501 = vlaneseq
    %v4502 = vshrl.u32 %v4501, 7
    %v4503 = vsub.s32 0, %v4502
    %v4504 = vrot.slane %v4438, %v4503
    %v4505 = vlaneseq
    %v4506 = vshrl.u32 %v4505, 7
    %v4507 = vsub.s32 0, %v4506
    %v4508 = vrot.slane %v4421, %v4507
    %v4509 = vlaneseq
    %v4510 = vshrl.u32 %v4509, 7
    %v4511 = vsub.s32 0, %v4510
    %v4512 = vrot.slane %v4435, %v4511
    %v4513 = vlaneseq
    %v4514 = vshrl.u32 %v4513, 7
    %v4515 = vsub.s32 0, %v4514
    %v4516 = vrot.slane %v4437, %v4515
    %v4517 = vlaneseq
    %v4518 = vshrl.u32 %v4517, 7
    %v4519 = vsub.s32 0, %v4518
    %v4520 = vrot.slane %v4439, %v4519
    %v4521 = vlaneseq
    %v4522 = vshrl.u32 %v4521, 7
    %v4523 = vsub.s32 0, %v4522
    %v4524 = vrot.slane %v4463, %v4523
    %v4525 = vlaneseq
    %v4526 = vshrl.u32 %v4525, 7
    %v4527 = vsub.s32 0, %v4526
    %v4528 = vrot.slane %v4477, %v4527
    %v4529 = vlaneseq
    %v4530 = vshrl.u32 %v4529, 7
    %v4531 = vsub.s32 0, %v4530
    %v4532 = vrot.slane %v4485, %v4531
    %v4533 = vlaneseq
    %v4534 = vshrl.u32 %v4533, 7
    %v4535 = vsub.s32 0, %v4534
    %v4536 = vrot.slane %v4487, %v4535
    %v4537 = vlaneseq
    %v4538 = vshrl.u32 %v4537, 7
    %v4539 = vsub.s32 0, %v4538
    %v4540 = vrot.slane %v4470, %v4539
    %v4541 = vlaneseq
    %v4542 = vshrl.u32 %v4541, 7
    %v4543 = vsub.s32 0, %v4542
    %v4544 = vrot.slane %v4484, %v4543
    %v4545 = vlaneseq
    %v4546 = vshrl.u32 %v4545, 7
    %v4547 = vsub.s32 0, %v4546
    %v4548 = vrot.slane %v4486, %v4547
    %v4549 = vlaneseq
    %v4550 = vshrl.u32 %v4549, 7
    %v4551 = vsub.s32 0, %v4550
    %v4552 = vrot.slane %v4488, %v4551
    %v4569 = vadd.f32 %v4251, %v4492
    %v4570 = vadd.f32 %v4258, %v4496
    %v4571 = vadd.f32 %v4265, %v4500
    %v4572 = vadd.f32 %v4272, %v4504
    %v4573 = vadd.f32 %v4279, %v4508
    %v4574 = vadd.f32 %v4286, %v4512
    %v4575 = vadd.f32 %v4293, %v4516
    %v4576 = vadd.f32 %v4300, %v4520
    %v4577 = vadd.f32 %v4307, %v4524
    %v4578 = vadd.f32 %v4314, %v4528
    %v4579 = vadd.f32 %v4321, %v4532
    %v4580 = vadd.f32 %v4328, %v4536
    %v4581 = vadd.f32 %v4335, %v4540
    %v4582 = vadd.f32 %v4342, %v4544
    %v4583 = vadd.f32 %v4349, %v4548
    %v4584 = vadd.f32 %v4356, %v4552
    %vm4585 = vcmp.gt.f32.partialorder %v4569, 0.0
    %vm4586 = vcmp.gt.f32.partialorder %v4570, 0.0
    %vm4587 = vcmp.gt.f32.partialorder %v4571, 0.0
    %vm4588 = vcmp.gt.f32.partialorder %v4572, 0.0
    %vm4589 = vcmp.gt.f32.partialorder %v4573, 0.0
    %vm4590 = vcmp.gt.f32.partialorder %v4574, 0.0
    %vm4591 = vcmp.gt.f32.partialorder %v4575, 0.0
    %vm4592 = vcmp.gt.f32.partialorder %v4576, 0.0
    %vm4593 = vcmp.gt.f32.partialorder %v4577, 0.0
    %vm4594 = vcmp.gt.f32.partialorder %v4578, 0.0
    %vm4595 = vcmp.gt.f32.partialorder %v4579, 0.0
    %vm4596 = vcmp.gt.f32.partialorder %v4580, 0.0
    %vm4597 = vcmp.gt.f32.partialorder %v4581, 0.0
    %vm4598 = vcmp.gt.f32.partialorder %v4582, 0.0
    %vm4599 = vcmp.gt.f32.partialorder %v4583, 0.0
    %vm4600 = vcmp.gt.f32.partialorder %v4584, 0.0
    %v4601 = vmul.f32 %v4569, 0.2
    %v4602 = vmul.f32 %v4570, 0.2
    %v4603 = vmul.f32 %v4571, 0.2
    %v4604 = vmul.f32 %v4572, 0.2
    %v4605 = vmul.f32 %v4573, 0.2
    %v4606 = vmul.f32 %v4574, 0.2
    %v4607 = vmul.f32 %v4575, 0.2
    %v4608 = vmul.f32 %v4576, 0.2
    %v4609 = vmul.f32 %v4577, 0.2
    %v4610 = vmul.f32 %v4578, 0.2
    %v4611 = vmul.f32 %v4579, 0.2
    %v4612 = vmul.f32 %v4580, 0.2
    %v4613 = vmul.f32 %v4581, 0.2
    %v4614 = vmul.f32 %v4582, 0.2
    %v4615 = vmul.f32 %v4583, 0.2
    %v4616 = vmul.f32 %v4584, 0.2
    %v4617 = vsel %vm4585, %v4569, %v4601
    %v4618 = vsel %vm4586, %v4570, %v4602
    %v4619 = vsel %vm4587, %v4571, %v4603
    %v4620 = vsel %vm4588, %v4572, %v4604
    %v4621 = vsel %vm4589, %v4573, %v4605
    %v4622 = vsel %vm4590, %v4574, %v4606
    %v4623 = vsel %vm4591, %v4575, %v4607
    %v4624 = vsel %vm4592, %v4576, %v4608
    %v4625 = vsel %vm4593, %v4577, %v4609
    %v4626 = vsel %vm4594, %v4578, %v4610
    %v4627 = vsel %vm4595, %v4579, %v4611
    %v4628 = vsel %vm4596, %v4580, %v4612
    %v4629 = vsel %vm4597, %v4581, %v4613
    %v4630 = vsel %vm4598, %v4582, %v4614
    %v4631 = vsel %vm4599, %v4583, %v4615
    %v4632 = vsel %vm4600, %v4584, %v4616
    %v4633 = vsel %vm144, 1, 0
    %vm4634 = vcmp.eq.s32.totalorder %v4633, 1
    %v4635 = vsel %vm4634, %v4617, -1e+30
    %v4636 = vsel %vm4634, %v4618, -1e+30
    %v4637 = vsel %vm4634, %v4619, -1e+30
    %v4638 = vsel %vm4634, %v4620, -1e+30
    %v4639 = vsel %vm4634, %v4621, -1e+30
    %v4640 = vsel %vm4634, %v4622, -1e+30
    %v4641 = vsel %vm4634, %v4623, -1e+30
    %v4642 = vsel %vm4634, %v4624, -1e+30
    %v4643 = vsel %vm4634, %v4625, -1e+30
    %v4644 = vsel %vm4634, %v4626, -1e+30
    %v4645 = vsel %vm4634, %v4627, -1e+30
    %v4646 = vsel %vm4634, %v4628, -1e+30
    %v4647 = vsel %vm4634, %v4629, -1e+30
    %v4648 = vsel %vm4634, %v4630, -1e+30
    %v4649 = vsel %vm4634, %v4631, -1e+30
    %v4650 = vsel %vm4634, %v4632, -1e+30
    %vm4651 = vcmask 34816
    %v4652 = vsel %vm4651, %v4635, -inf
    %4653 = vmax.xlane.f32.xlu0 %v4652
    %v4654 = vpop.xlane.xlu0 %4653
    %v4655 = vsel %vm4651, %v4636, -inf
    %4656 = vmax.xlane.f32.xlu0 %v4655
    %v4657 = vpop.xlane.xlu0 %4656
    %v4658 = vsel %vm4651, %v4637, -inf
    %4659 = vmax.xlane.f32.xlu0 %v4658
    %v4660 = vpop.xlane.xlu0 %4659
    %v4661 = vsel %vm4651, %v4638, -inf
    %4662 = vmax.xlane.f32.xlu0 %v4661
    %v4663 = vpop.xlane.xlu0 %4662
    %v4664 = vsel %vm4651, %v4639, -inf
    %4665 = vmax.xlane.f32.xlu0 %v4664
    %v4666 = vpop.xlane.xlu0 %4665
    %v4667 = vsel %vm4651, %v4640, -inf
    %4668 = vmax.xlane.f32.xlu0 %v4667
    %v4669 = vpop.xlane.xlu0 %4668
    %v4670 = vsel %vm4651, %v4641, -inf
    %4671 = vmax.xlane.f32.xlu0 %v4670
    %v4672 = vpop.xlane.xlu0 %4671
    %v4673 = vsel %vm4651, %v4642, -inf
    %4674 = vmax.xlane.f32.xlu0 %v4673
    %v4675 = vpop.xlane.xlu0 %4674
    %v4676 = vsel %vm4651, %v4643, -inf
    %4677 = vmax.xlane.f32.xlu0 %v4676
    %v4678 = vpop.xlane.xlu0 %4677
    %v4679 = vsel %vm4651, %v4644, -inf
    %4680 = vmax.xlane.f32.xlu0 %v4679
    %v4681 = vpop.xlane.xlu0 %4680
    %v4682 = vsel %vm4651, %v4645, -inf
    %4683 = vmax.xlane.f32.xlu0 %v4682
    %v4684 = vpop.xlane.xlu0 %4683
    %v4685 = vsel %vm4651, %v4646, -inf
    %4686 = vmax.xlane.f32.xlu0 %v4685
    %v4687 = vpop.xlane.xlu0 %4686
    %v4688 = vsel %vm4651, %v4647, -inf
    %4689 = vmax.xlane.f32.xlu0 %v4688
    %v4690 = vpop.xlane.xlu0 %4689
    %v4691 = vsel %vm4651, %v4648, -inf
    %4692 = vmax.xlane.f32.xlu0 %v4691
    %v4693 = vpop.xlane.xlu0 %4692
    %v4694 = vsel %vm4651, %v4649, -inf
    %4695 = vmax.xlane.f32.xlu0 %v4694
    %v4696 = vpop.xlane.xlu0 %4695
    %v4697 = vsel %vm4651, %v4650, -inf
    %4698 = vmax.xlane.f32.xlu0 %v4697
    %v4699 = vpop.xlane.xlu0 %4698
    %v4700 = vsub.f32 %v4635, %v4654
    %v4701 = vsub.f32 %v4636, %v4657
    %v4702 = vsub.f32 %v4637, %v4660
    %v4703 = vsub.f32 %v4638, %v4663
    %v4704 = vsub.f32 %v4639, %v4666
    %v4705 = vsub.f32 %v4640, %v4669
    %v4706 = vsub.f32 %v4641, %v4672
    %v4707 = vsub.f32 %v4642, %v4675
    %v4708 = vsub.f32 %v4643, %v4678
    %v4709 = vsub.f32 %v4644, %v4681
    %v4710 = vsub.f32 %v4645, %v4684
    %v4711 = vsub.f32 %v4646, %v4687
    %v4712 = vsub.f32 %v4647, %v4690
    %v4713 = vsub.f32 %v4648, %v4693
    %v4714 = vsub.f32 %v4649, %v4696
    %v4715 = vsub.f32 %v4650, %v4699
    %v4716 = vmul.f32 %v4700, 1.442695
    %v4717 = vpow.pop %v4716
    %v4718 = vmul.f32 %v4701, 1.442695
    %v4719 = vpow.pop %v4718
    %v4720 = vmul.f32 %v4702, 1.442695
    %v4721 = vpow.pop %v4720
    %v4722 = vmul.f32 %v4703, 1.442695
    %v4723 = vpow.pop %v4722
    %v4724 = vmul.f32 %v4704, 1.442695
    %v4725 = vpow.pop %v4724
    %v4726 = vmul.f32 %v4705, 1.442695
    %v4727 = vpow.pop %v4726
    %v4728 = vmul.f32 %v4706, 1.442695
    %v4729 = vpow.pop %v4728
    %v4730 = vmul.f32 %v4707, 1.442695
    %v4731 = vpow.pop %v4730
    %v4732 = vmul.f32 %v4708, 1.442695
    %v4733 = vpow.pop %v4732
    %v4734 = vmul.f32 %v4709, 1.442695
    %v4735 = vpow.pop %v4734
    %v4736 = vmul.f32 %v4710, 1.442695
    %v4737 = vpow.pop %v4736
    %v4738 = vmul.f32 %v4711, 1.442695
    %v4739 = vpow.pop %v4738
    %v4740 = vmul.f32 %v4712, 1.442695
    %v4741 = vpow.pop %v4740
    %v4742 = vmul.f32 %v4713, 1.442695
    %v4743 = vpow.pop %v4742
    %v4744 = vmul.f32 %v4714, 1.442695
    %v4745 = vpow.pop %v4744
    %v4746 = vmul.f32 %v4715, 1.442695
    %v4747 = vpow.pop %v4746
    %v4748 = vsel %vm4634, %v4717, 0.0
    %v4749 = vsel %vm4634, %v4719, 0.0
    %v4750 = vsel %vm4634, %v4721, 0.0
    %v4751 = vsel %vm4634, %v4723, 0.0
    %v4752 = vsel %vm4634, %v4725, 0.0
    %v4753 = vsel %vm4634, %v4727, 0.0
    %v4754 = vsel %vm4634, %v4729, 0.0
    %v4755 = vsel %vm4634, %v4731, 0.0
    %v4756 = vsel %vm4634, %v4733, 0.0
    %v4757 = vsel %vm4634, %v4735, 0.0
    %v4758 = vsel %vm4634, %v4737, 0.0
    %v4759 = vsel %vm4634, %v4739, 0.0
    %v4760 = vsel %vm4634, %v4741, 0.0
    %v4761 = vsel %vm4634, %v4743, 0.0
    %v4762 = vsel %vm4634, %v4745, 0.0
    %v4763 = vsel %vm4634, %v4747, 0.0
    %v4764 = vsel %vm4651, %v4748, 0.0
    %4765 = vadd.xlane.f32.xlu0 %v4764
    %v4766 = vpop.xlane.xlu0 %4765
    %v4767 = vsel %vm4651, %v4749, 0.0
    %4768 = vadd.xlane.f32.xlu0 %v4767
    %v4769 = vpop.xlane.xlu0 %4768
    %v4770 = vsel %vm4651, %v4750, 0.0
    %4771 = vadd.xlane.f32.xlu0 %v4770
    %v4772 = vpop.xlane.xlu0 %4771
    %v4773 = vsel %vm4651, %v4751, 0.0
    %4774 = vadd.xlane.f32.xlu0 %v4773
    %v4775 = vpop.xlane.xlu0 %4774
    %v4776 = vsel %vm4651, %v4752, 0.0
    %4777 = vadd.xlane.f32.xlu0 %v4776
    %v4778 = vpop.xlane.xlu0 %4777
    %v4779 = vsel %vm4651, %v4753, 0.0
    %4780 = vadd.xlane.f32.xlu0 %v4779
    %v4781 = vpop.xlane.xlu0 %4780
    %v4782 = vsel %vm4651, %v4754, 0.0
    %4783 = vadd.xlane.f32.xlu0 %v4782
    %v4784 = vpop.xlane.xlu0 %4783
    %v4785 = vsel %vm4651, %v4755, 0.0
    %4786 = vadd.xlane.f32.xlu0 %v4785
    %v4787 = vpop.xlane.xlu0 %4786
    %v4788 = vsel %vm4651, %v4756, 0.0
    %4789 = vadd.xlane.f32.xlu0 %v4788
    %v4790 = vpop.xlane.xlu0 %4789
    %v4791 = vsel %vm4651, %v4757, 0.0
    %4792 = vadd.xlane.f32.xlu0 %v4791
    %v4793 = vpop.xlane.xlu0 %4792
    %v4794 = vsel %vm4651, %v4758, 0.0
    %4795 = vadd.xlane.f32.xlu0 %v4794
    %v4796 = vpop.xlane.xlu0 %4795
    %v4797 = vsel %vm4651, %v4759, 0.0
    %4798 = vadd.xlane.f32.xlu0 %v4797
    %v4799 = vpop.xlane.xlu0 %4798
    %v4800 = vsel %vm4651, %v4760, 0.0
    %4801 = vadd.xlane.f32.xlu0 %v4800
    %v4802 = vpop.xlane.xlu0 %4801
    %v4803 = vsel %vm4651, %v4761, 0.0
    %4804 = vadd.xlane.f32.xlu0 %v4803
    %v4805 = vpop.xlane.xlu0 %4804
    %v4806 = vsel %vm4651, %v4762, 0.0
    %4807 = vadd.xlane.f32.xlu0 %v4806
    %v4808 = vpop.xlane.xlu0 %4807
    %v4809 = vsel %vm4651, %v4763, 0.0
    %4810 = vadd.xlane.f32.xlu0 %v4809
    %v4811 = vpop.xlane.xlu0 %4810
    %v4812 = vmax.f32 %v4766, 1e-20
    %v4813 = vmax.f32 %v4769, 1e-20
    %v4814 = vmax.f32 %v4772, 1e-20
    %v4815 = vmax.f32 %v4775, 1e-20
    %v4816 = vmax.f32 %v4778, 1e-20
    %v4817 = vmax.f32 %v4781, 1e-20
    %v4818 = vmax.f32 %v4784, 1e-20
    %v4819 = vmax.f32 %v4787, 1e-20
    %v4820 = vmax.f32 %v4790, 1e-20
    %v4821 = vmax.f32 %v4793, 1e-20
    %v4822 = vmax.f32 %v4796, 1e-20
    %v4823 = vmax.f32 %v4799, 1e-20
    %v4824 = vmax.f32 %v4802, 1e-20
    %v4825 = vmax.f32 %v4805, 1e-20
    %v4826 = vmax.f32 %v4808, 1e-20
    %v4827 = vmax.f32 %v4811, 1e-20
    %v4828 = vrcp.pop %v4812
    %v4829 = vrcp.pop %v4813
    %v4830 = vrcp.pop %v4814
    %v4831 = vrcp.pop %v4815
    %v4832 = vrcp.pop %v4816
    %v4833 = vrcp.pop %v4817
    %v4834 = vrcp.pop %v4818
    %v4835 = vrcp.pop %v4819
    %v4836 = vrcp.pop %v4820
    %v4837 = vrcp.pop %v4821
    %v4838 = vrcp.pop %v4822
    %v4839 = vrcp.pop %v4823
    %v4840 = vrcp.pop %v4824
    %v4841 = vrcp.pop %v4825
    %v4842 = vrcp.pop %v4826
    %v4843 = vrcp.pop %v4827
    %v4844 = vmul.f32 %v4748, %v4828
    %v4845 = vmul.f32 %v4749, %v4829
    %v4846 = vmul.f32 %v4750, %v4830
    %v4847 = vmul.f32 %v4751, %v4831
    %v4848 = vmul.f32 %v4752, %v4832
    %v4849 = vmul.f32 %v4753, %v4833
    %v4850 = vmul.f32 %v4754, %v4834
    %v4851 = vmul.f32 %v4755, %v4835
    %v4852 = vmul.f32 %v4756, %v4836
    %v4853 = vmul.f32 %v4757, %v4837
    %v4854 = vmul.f32 %v4758, %v4838
    %v4855 = vmul.f32 %v4759, %v4839
    %v4856 = vmul.f32 %v4760, %v4840
    %v4857 = vmul.f32 %v4761, %v4841
    %v4858 = vmul.f32 %v4762, %v4842
    %v4859 = vmul.f32 %v4763, %v4843
    %v4860 = vmul.f32 %v2172, %v559
    %vm4861 = vcmask 39936
    %v4863 = vsel %vm4861, %v4844, 0
    %vm4865 = vcmask 1044480
    %v4867 = vsel %vm4865, %v4860, 0
    %4869 = vmatprep.subr.mxu0 0.0
    %4870 = vmatpush1.msra.mxu0 %v4867
    %4871 = vmatprep.subr.mxu0 0.0
    %4872 = vmatpush1.msra.mxu0 0.0
    %4873 = vmatprep.subr.mxu0 0.0
    %4874 = vmatpush1.msra.mxu0 0.0
    %4875 = vmatprep.subr.mxu0 0.0
    %4876 = vmatpush1.msra.mxu0 0.0
    %4877 = vmatprep.subr.mxu0 0.0
    %4878 = vmatpush1.msra.mxu0 0.0
    %4879 = vmatprep.subr.mxu0 0.0
    %4880 = vmatpush1.msra.mxu0 0.0
    %4881 = vmatprep.subr.mxu0 0.0
    %4882 = vmatpush1.msra.mxu0 0.0
    %4883 = vmatprep.subr.mxu0 0.0
    %4884 = vmatpush1.msra.mxu0 0.0
    %4885 = vmatprep.subr.mxu0 0.0
    %4886 = vmatpush1.msra.mxu0 0.0
    %4887 = vmatprep.subr.mxu0 0.0
    %4888 = vmatpush1.msra.mxu0 0.0
    %4889 = vmatprep.subr.mxu0 0.0
    %4890 = vmatpush1.msra.mxu0 0.0
    %4891 = vmatprep.subr.mxu0 0.0
    %4892 = vmatpush1.msra.mxu0 0.0
    %4893 = vmatprep.subr.mxu0 0.0
    %4894 = vmatpush1.msra.mxu0 0.0
    %4895 = vmatprep.subr.mxu0 0.0
    %4896 = vmatpush1.msra.mxu0 0.0
    %4897 = vmatprep.subr.mxu0 0.0
    %4898 = vmatpush1.msra.mxu0 0.0
    %4899 = vmatprep.subr.mxu0 0.0
    %4900 = vmatpush1.msra.mxu0 0.0
    %4901 = vmatprep.subr.mxu0 0.0
    %4902 = vmatpush1.msra.mxu0 0.0
    %4903 = vmatprep.subr.mxu0 0.0
    %4904 = vmatpush1.msra.mxu0 0.0
    %4905 = vmatprep.subr.mxu0 0.0
    %4906 = vmatpush1.msra.mxu0 0.0
    %4907 = vmatprep.subr.mxu0 0.0
    %4908 = vmatpush1.msra.mxu0 0.0
    %4909 = vmatprep.subr.mxu0 0.0
    %4910 = vmatpush1.msra.mxu0 0.0
    %4911 = vmatprep.subr.mxu0 0.0
    %4912 = vmatpush1.msra.mxu0 0.0
    %4913 = vmatprep.subr.mxu0 0.0
    %4914 = vmatpush1.msra.mxu0 0.0
    %4915 = vmatprep.subr.mxu0 0.0
    %4916 = vmatpush1.msra.mxu0 0.0
    %4917 = vmatprep.subr.mxu0 0.0
    %4918 = vmatpush1.msra.mxu0 0.0
    %4919 = vmatprep.subr.mxu0 0.0
    %4920 = vmatpush1.msra.mxu0 0.0
    %4921 = vmatprep.subr.mxu0 0.0
    %4922 = vmatpush1.msra.mxu0 0.0
    %4923 = vmatprep.subr.mxu0 0.0
    %4924 = vmatpush1.msra.mxu0 0.0
    %4925 = vmatprep.subr.mxu0 0.0
    %4926 = vmatpush1.msra.mxu0 0.0
    %4927 = vmatprep.subr.mxu0 0.0
    %4928 = vmatpush1.msra.mxu0 0.0
    %4929 = vmatprep.subr.mxu0 0.0
    %4930 = vmatpush1.msra.mxu0 0.0
    %4931 = vmatprep.subr.mxu0 0.0
    %4932 = vmatpush1.msra.mxu0 0.0
    %4933 = vmatprep.mubr.f32.mxu0 0.0
    %4934 = vmatmul.mubr.f32.gmra.mrb[0].mxu0 %v4863
    %v4935 = vpop.f32.mrb[0].mxu0
    %v4936 = vadd.f32 0.0, %v4935
    %v4937 = vpop.f32.mrb[0].mxu0
    %4938 = vdwg.mxu0
    %v4939 = vadd.f32 %v2251, %v4936
    %v4940 = vmul.f32 %v2172, %v644
    %v4942 = vsel %vm4861, %v4845, 0
    %v4945 = vsel %vm4865, %v4940, 0
    %4947 = vmatprep.subr.mxu0 0.0
    %4948 = vmatpush1.msra.mxu0 %v4945
    %4949 = vmatprep.subr.mxu0 0.0
    %4950 = vmatpush1.msra.mxu0 0.0
    %4951 = vmatprep.subr.mxu0 0.0
    %4952 = vmatpush1.msra.mxu0 0.0
    %4953 = vmatprep.subr.mxu0 0.0
    %4954 = vmatpush1.msra.mxu0 0.0
    %4955 = vmatprep.subr.mxu0 0.0
    %4956 = vmatpush1.msra.mxu0 0.0
    %4957 = vmatprep.subr.mxu0 0.0
    %4958 = vmatpush1.msra.mxu0 0.0
    %4959 = vmatprep.subr.mxu0 0.0
    %4960 = vmatpush1.msra.mxu0 0.0
    %4961 = vmatprep.subr.mxu0 0.0
    %4962 = vmatpush1.msra.mxu0 0.0
    %4963 = vmatprep.subr.mxu0 0.0
    %4964 = vmatpush1.msra.mxu0 0.0
    %4965 = vmatprep.subr.mxu0 0.0
    %4966 = vmatpush1.msra.mxu0 0.0
    %4967 = vmatprep.subr.mxu0 0.0
    %4968 = vmatpush1.msra.mxu0 0.0
    %4969 = vmatprep.subr.mxu0 0.0
    %4970 = vmatpush1.msra.mxu0 0.0
    %4971 = vmatprep.subr.mxu0 0.0
    %4972 = vmatpush1.msra.mxu0 0.0
    %4973 = vmatprep.subr.mxu0 0.0
    %4974 = vmatpush1.msra.mxu0 0.0
    %4975 = vmatprep.subr.mxu0 0.0
    %4976 = vmatpush1.msra.mxu0 0.0
    %4977 = vmatprep.subr.mxu0 0.0
    %4978 = vmatpush1.msra.mxu0 0.0
    %4979 = vmatprep.subr.mxu0 0.0
    %4980 = vmatpush1.msra.mxu0 0.0
    %4981 = vmatprep.subr.mxu0 0.0
    %4982 = vmatpush1.msra.mxu0 0.0
    %4983 = vmatprep.subr.mxu0 0.0
    %4984 = vmatpush1.msra.mxu0 0.0
    %4985 = vmatprep.subr.mxu0 0.0
    %4986 = vmatpush1.msra.mxu0 0.0
    %4987 = vmatprep.subr.mxu0 0.0
    %4988 = vmatpush1.msra.mxu0 0.0
    %4989 = vmatprep.subr.mxu0 0.0
    %4990 = vmatpush1.msra.mxu0 0.0
    %4991 = vmatprep.subr.mxu0 0.0
    %4992 = vmatpush1.msra.mxu0 0.0
    %4993 = vmatprep.subr.mxu0 0.0
    %4994 = vmatpush1.msra.mxu0 0.0
    %4995 = vmatprep.subr.mxu0 0.0
    %4996 = vmatpush1.msra.mxu0 0.0
    %4997 = vmatprep.subr.mxu0 0.0
    %4998 = vmatpush1.msra.mxu0 0.0
    %4999 = vmatprep.subr.mxu0 0.0
    %5000 = vmatpush1.msra.mxu0 0.0
    %5001 = vmatprep.subr.mxu0 0.0
    %5002 = vmatpush1.msra.mxu0 0.0
    %5003 = vmatprep.subr.mxu0 0.0
    %5004 = vmatpush1.msra.mxu0 0.0
    %5005 = vmatprep.subr.mxu0 0.0
    %5006 = vmatpush1.msra.mxu0 0.0
    %5007 = vmatprep.subr.mxu0 0.0
    %5008 = vmatpush1.msra.mxu0 0.0
    %5009 = vmatprep.subr.mxu0 0.0
    %5010 = vmatpush1.msra.mxu0 0.0
    %5011 = vmatprep.mubr.f32.mxu0 0.0
    %5012 = vmatmul.mubr.f32.gmra.mrb[0].mxu0 %v4942
    %v5013 = vpop.f32.mrb[0].mxu0
    %v5014 = vadd.f32 0.0, %v5013
    %v5015 = vpop.f32.mrb[0].mxu0
    %5016 = vdwg.mxu0
    %v5017 = vadd.f32 %v4939, %v5014
    %v5018 = vmul.f32 %v2172, %v727
    %v5020 = vsel %vm4861, %v4846, 0
    %v5023 = vsel %vm4865, %v5018, 0
    %5025 = vmatprep.subr.mxu0 0.0
    %5026 = vmatpush1.msra.mxu0 %v5023
    %5027 = vmatprep.subr.mxu0 0.0
    %5028 = vmatpush1.msra.mxu0 0.0
    %5029 = vmatprep.subr.mxu0 0.0
    %5030 = vmatpush1.msra.mxu0 0.0
    %5031 = vmatprep.subr.mxu0 0.0
    %5032 = vmatpush1.msra.mxu0 0.0
    %5033 = vmatprep.subr.mxu0 0.0
    %5034 = vmatpush1.msra.mxu0 0.0
    %5035 = vmatprep.subr.mxu0 0.0
    %5036 = vmatpush1.msra.mxu0 0.0
    %5037 = vmatprep.subr.mxu0 0.0
    %5038 = vmatpush1.msra.mxu0 0.0
    %5039 = vmatprep.subr.mxu0 0.0
    %5040 = vmatpush1.msra.mxu0 0.0
    %5041 = vmatprep.subr.mxu0 0.0
    %5042 = vmatpush1.msra.mxu0 0.0
    %5043 = vmatprep.subr.mxu0 0.0
    %5044 = vmatpush1.msra.mxu0 0.0
    %5045 = vmatprep.subr.mxu0 0.0
    %5046 = vmatpush1.msra.mxu0 0.0
    %5047 = vmatprep.subr.mxu0 0.0
    %5048 = vmatpush1.msra.mxu0 0.0
    %5049 = vmatprep.subr.mxu0 0.0
    %5050 = vmatpush1.msra.mxu0 0.0
    %5051 = vmatprep.subr.mxu0 0.0
    %5052 = vmatpush1.msra.mxu0 0.0
    %5053 = vmatprep.subr.mxu0 0.0
    %5054 = vmatpush1.msra.mxu0 0.0
    %5055 = vmatprep.subr.mxu0 0.0
    %5056 = vmatpush1.msra.mxu0 0.0
    %5057 = vmatprep.subr.mxu0 0.0
    %5058 = vmatpush1.msra.mxu0 0.0
    %5059 = vmatprep.subr.mxu0 0.0
    %5060 = vmatpush1.msra.mxu0 0.0
    %5061 = vmatprep.subr.mxu0 0.0
    %5062 = vmatpush1.msra.mxu0 0.0
    %5063 = vmatprep.subr.mxu0 0.0
    %5064 = vmatpush1.msra.mxu0 0.0
    %5065 = vmatprep.subr.mxu0 0.0
    %5066 = vmatpush1.msra.mxu0 0.0
    %5067 = vmatprep.subr.mxu0 0.0
    %5068 = vmatpush1.msra.mxu0 0.0
    %5069 = vmatprep.subr.mxu0 0.0
    %5070 = vmatpush1.msra.mxu0 0.0
    %5071 = vmatprep.subr.mxu0 0.0
    %5072 = vmatpush1.msra.mxu0 0.0
    %5073 = vmatprep.subr.mxu0 0.0
    %5074 = vmatpush1.msra.mxu0 0.0
    %5075 = vmatprep.subr.mxu0 0.0
    %5076 = vmatpush1.msra.mxu0 0.0
    %5077 = vmatprep.subr.mxu0 0.0
    %5078 = vmatpush1.msra.mxu0 0.0
    %5079 = vmatprep.subr.mxu0 0.0
    %5080 = vmatpush1.msra.mxu0 0.0
    %5081 = vmatprep.subr.mxu0 0.0
    %5082 = vmatpush1.msra.mxu0 0.0
    %5083 = vmatprep.subr.mxu0 0.0
    %5084 = vmatpush1.msra.mxu0 0.0
    %5085 = vmatprep.subr.mxu0 0.0
    %5086 = vmatpush1.msra.mxu0 0.0
    %5087 = vmatprep.subr.mxu0 0.0
    %5088 = vmatpush1.msra.mxu0 0.0
    %5089 = vmatprep.mubr.f32.mxu0 0.0
    %5090 = vmatmul.mubr.f32.gmra.mrb[0].mxu0 %v5020
    %v5091 = vpop.f32.mrb[0].mxu0
    %v5092 = vadd.f32 0.0, %v5091
    %v5093 = vpop.f32.mrb[0].mxu0
    %5094 = vdwg.mxu0
    %v5095 = vadd.f32 %v5017, %v5092
    %v5096 = vmul.f32 %v2172, %v810
    %v5098 = vsel %vm4861, %v4847, 0
    %v5101 = vsel %vm4865, %v5096, 0
    %5103 = vmatprep.subr.mxu0 0.0
    %5104 = vmatpush1.msra.mxu0 %v5101
    %5105 = vmatprep.subr.mxu0 0.0
    %5106 = vmatpush1.msra.mxu0 0.0
    %5107 = vmatprep.subr.mxu0 0.0
    %5108 = vmatpush1.msra.mxu0 0.0
    %5109 = vmatprep.subr.mxu0 0.0
    %5110 = vmatpush1.msra.mxu0 0.0
    %5111 = vmatprep.subr.mxu0 0.0
    %5112 = vmatpush1.msra.mxu0 0.0
    %5113 = vmatprep.subr.mxu0 0.0
    %5114 = vmatpush1.msra.mxu0 0.0
    %5115 = vmatprep.subr.mxu0 0.0
    %5116 = vmatpush1.msra.mxu0 0.0
    %5117 = vmatprep.subr.mxu0 0.0
    %5118 = vmatpush1.msra.mxu0 0.0
    %5119 = vmatprep.subr.mxu0 0.0
    %5120 = vmatpush1.msra.mxu0 0.0
    %5121 = vmatprep.subr.mxu0 0.0
    %5122 = vmatpush1.msra.mxu0 0.0
    %5123 = vmatprep.subr.mxu0 0.0
    %5124 = vmatpush1.msra.mxu0 0.0
    %5125 = vmatprep.subr.mxu0 0.0
    %5126 = vmatpush1.msra.mxu0 0.0
    %5127 = vmatprep.subr.mxu0 0.0
    %5128 = vmatpush1.msra.mxu0 0.0
    %5129 = vmatprep.subr.mxu0 0.0
    %5130 = vmatpush1.msra.mxu0 0.0
    %5131 = vmatprep.subr.mxu0 0.0
    %5132 = vmatpush1.msra.mxu0 0.0
    %5133 = vmatprep.subr.mxu0 0.0
    %5134 = vmatpush1.msra.mxu0 0.0
    %5135 = vmatprep.subr.mxu0 0.0
    %5136 = vmatpush1.msra.mxu0 0.0
    %5137 = vmatprep.subr.mxu0 0.0
    %5138 = vmatpush1.msra.mxu0 0.0
    %5139 = vmatprep.subr.mxu0 0.0
    %5140 = vmatpush1.msra.mxu0 0.0
    %5141 = vmatprep.subr.mxu0 0.0
    %5142 = vmatpush1.msra.mxu0 0.0
    %5143 = vmatprep.subr.mxu0 0.0
    %5144 = vmatpush1.msra.mxu0 0.0
    %5145 = vmatprep.subr.mxu0 0.0
    %5146 = vmatpush1.msra.mxu0 0.0
    %5147 = vmatprep.subr.mxu0 0.0
    %5148 = vmatpush1.msra.mxu0 0.0
    %5149 = vmatprep.subr.mxu0 0.0
    %5150 = vmatpush1.msra.mxu0 0.0
    %5151 = vmatprep.subr.mxu0 0.0
    %5152 = vmatpush1.msra.mxu0 0.0
    %5153 = vmatprep.subr.mxu0 0.0
    %5154 = vmatpush1.msra.mxu0 0.0
    %5155 = vmatprep.subr.mxu0 0.0
    %5156 = vmatpush1.msra.mxu0 0.0
    %5157 = vmatprep.subr.mxu0 0.0
    %5158 = vmatpush1.msra.mxu0 0.0
    %5159 = vmatprep.subr.mxu0 0.0
    %5160 = vmatpush1.msra.mxu0 0.0
    %5161 = vmatprep.subr.mxu0 0.0
    %5162 = vmatpush1.msra.mxu0 0.0
    %5163 = vmatprep.subr.mxu0 0.0
    %5164 = vmatpush1.msra.mxu0 0.0
    %5165 = vmatprep.subr.mxu0 0.0
    %5166 = vmatpush1.msra.mxu0 0.0
    %5167 = vmatprep.mubr.f32.mxu0 0.0
    %5168 = vmatmul.mubr.f32.gmra.mrb[0].mxu0 %v5098
    %v5169 = vpop.f32.mrb[0].mxu0
    %v5170 = vadd.f32 0.0, %v5169
    %v5171 = vpop.f32.mrb[0].mxu0
    %5172 = vdwg.mxu0
    %v5173 = vadd.f32 %v5095, %v5170
    %v5174 = vmul.f32 %v2172, %v3228
    %v5176 = vsel %vm4861, %v4848, 0
    %v5179 = vsel %vm4865, %v5174, 0
    %5181 = vmatprep.subr.mxu0 0.0
    %5182 = vmatpush1.msra.mxu0 %v5179
    %5183 = vmatprep.subr.mxu0 0.0
    %5184 = vmatpush1.msra.mxu0 0.0
    %5185 = vmatprep.subr.mxu0 0.0
    %5186 = vmatpush1.msra.mxu0 0.0
    %5187 = vmatprep.subr.mxu0 0.0
    %5188 = vmatpush1.msra.mxu0 0.0
    %5189 = vmatprep.subr.mxu0 0.0
    %5190 = vmatpush1.msra.mxu0 0.0
    %5191 = vmatprep.subr.mxu0 0.0
    %5192 = vmatpush1.msra.mxu0 0.0
    %5193 = vmatprep.subr.mxu0 0.0
    %5194 = vmatpush1.msra.mxu0 0.0
    %5195 = vmatprep.subr.mxu0 0.0
    %5196 = vmatpush1.msra.mxu0 0.0
    %5197 = vmatprep.subr.mxu0 0.0
    %5198 = vmatpush1.msra.mxu0 0.0
    %5199 = vmatprep.subr.mxu0 0.0
    %5200 = vmatpush1.msra.mxu0 0.0
    %5201 = vmatprep.subr.mxu0 0.0
    %5202 = vmatpush1.msra.mxu0 0.0
    %5203 = vmatprep.subr.mxu0 0.0
    %5204 = vmatpush1.msra.mxu0 0.0
    %5205 = vmatprep.subr.mxu0 0.0
    %5206 = vmatpush1.msra.mxu0 0.0
    %5207 = vmatprep.subr.mxu0 0.0
    %5208 = vmatpush1.msra.mxu0 0.0
    %5209 = vmatprep.subr.mxu0 0.0
    %5210 = vmatpush1.msra.mxu0 0.0
    %5211 = vmatprep.subr.mxu0 0.0
    %5212 = vmatpush1.msra.mxu0 0.0
    %5213 = vmatprep.subr.mxu0 0.0
    %5214 = vmatpush1.msra.mxu0 0.0
    %5215 = vmatprep.subr.mxu0 0.0
    %5216 = vmatpush1.msra.mxu0 0.0
    %5217 = vmatprep.subr.mxu0 0.0
    %5218 = vmatpush1.msra.mxu0 0.0
    %5219 = vmatprep.subr.mxu0 0.0
    %5220 = vmatpush1.msra.mxu0 0.0
    %5221 = vmatprep.subr.mxu0 0.0
    %5222 = vmatpush1.msra.mxu0 0.0
    %5223 = vmatprep.subr.mxu0 0.0
    %5224 = vmatpush1.msra.mxu0 0.0
    %5225 = vmatprep.subr.mxu0 0.0
    %5226 = vmatpush1.msra.mxu0 0.0
    %5227 = vmatprep.subr.mxu0 0.0
    %5228 = vmatpush1.msra.mxu0 0.0
    %5229 = vmatprep.subr.mxu0 0.0
    %5230 = vmatpush1.msra.mxu0 0.0
    %5231 = vmatprep.subr.mxu0 0.0
    %5232 = vmatpush1.msra.mxu0 0.0
    %5233 = vmatprep.subr.mxu0 0.0
    %5234 = vmatpush1.msra.mxu0 0.0
    %5235 = vmatprep.subr.mxu0 0.0
    %5236 = vmatpush1.msra.mxu0 0.0
    %5237 = vmatprep.subr.mxu0 0.0
    %5238 = vmatpush1.msra.mxu0 0.0
    %5239 = vmatprep.subr.mxu0 0.0
    %5240 = vmatpush1.msra.mxu0 0.0
    %5241 = vmatprep.subr.mxu0 0.0
    %5242 = vmatpush1.msra.mxu0 0.0
    %5243 = vmatprep.subr.mxu0 0.0
    %5244 = vmatpush1.msra.mxu0 0.0
    %5245 = vmatprep.mubr.f32.mxu0 0.0
    %5246 = vmatmul.mubr.f32.gmra.mrb[0].mxu0 %v5176
    %v5247 = vpop.f32.mrb[0].mxu0
    %v5248 = vadd.f32 0.0, %v5247
    %v5249 = vpop.f32.mrb[0].mxu0
    %5250 = vdwg.mxu0
    %v5251 = vadd.f32 %v5173, %v5248
    %v5252 = vmul.f32 %v2172, %v3310
    %v5254 = vsel %vm4861, %v4849, 0
    %v5257 = vsel %vm4865, %v5252, 0
    %5259 = vmatprep.subr.mxu0 0.0
    %5260 = vmatpush1.msra.mxu0 %v5257
    %5261 = vmatprep.subr.mxu0 0.0
    %5262 = vmatpush1.msra.mxu0 0.0
    %5263 = vmatprep.subr.mxu0 0.0
    %5264 = vmatpush1.msra.mxu0 0.0
    %5265 = vmatprep.subr.mxu0 0.0
    %5266 = vmatpush1.msra.mxu0 0.0
    %5267 = vmatprep.subr.mxu0 0.0
    %5268 = vmatpush1.msra.mxu0 0.0
    %5269 = vmatprep.subr.mxu0 0.0
    %5270 = vmatpush1.msra.mxu0 0.0
    %5271 = vmatprep.subr.mxu0 0.0
    %5272 = vmatpush1.msra.mxu0 0.0
    %5273 = vmatprep.subr.mxu0 0.0
    %5274 = vmatpush1.msra.mxu0 0.0
    %5275 = vmatprep.subr.mxu0 0.0
    %5276 = vmatpush1.msra.mxu0 0.0
    %5277 = vmatprep.subr.mxu0 0.0
    %5278 = vmatpush1.msra.mxu0 0.0
    %5279 = vmatprep.subr.mxu0 0.0
    %5280 = vmatpush1.msra.mxu0 0.0
    %5281 = vmatprep.subr.mxu0 0.0
    %5282 = vmatpush1.msra.mxu0 0.0
    %5283 = vmatprep.subr.mxu0 0.0
    %5284 = vmatpush1.msra.mxu0 0.0
    %5285 = vmatprep.subr.mxu0 0.0
    %5286 = vmatpush1.msra.mxu0 0.0
    %5287 = vmatprep.subr.mxu0 0.0
    %5288 = vmatpush1.msra.mxu0 0.0
    %5289 = vmatprep.subr.mxu0 0.0
    %5290 = vmatpush1.msra.mxu0 0.0
    %5291 = vmatprep.subr.mxu0 0.0
    %5292 = vmatpush1.msra.mxu0 0.0
    %5293 = vmatprep.subr.mxu0 0.0
    %5294 = vmatpush1.msra.mxu0 0.0
    %5295 = vmatprep.subr.mxu0 0.0
    %5296 = vmatpush1.msra.mxu0 0.0
    %5297 = vmatprep.subr.mxu0 0.0
    %5298 = vmatpush1.msra.mxu0 0.0
    %5299 = vmatprep.subr.mxu0 0.0
    %5300 = vmatpush1.msra.mxu0 0.0
    %5301 = vmatprep.subr.mxu0 0.0
    %5302 = vmatpush1.msra.mxu0 0.0
    %5303 = vmatprep.subr.mxu0 0.0
    %5304 = vmatpush1.msra.mxu0 0.0
    %5305 = vmatprep.subr.mxu0 0.0
    %5306 = vmatpush1.msra.mxu0 0.0
    %5307 = vmatprep.subr.mxu0 0.0
    %5308 = vmatpush1.msra.mxu0 0.0
    %5309 = vmatprep.subr.mxu0 0.0
    %5310 = vmatpush1.msra.mxu0 0.0
    %5311 = vmatprep.subr.mxu0 0.0
    %5312 = vmatpush1.msra.mxu0 0.0
    %5313 = vmatprep.subr.mxu0 0.0
    %5314 = vmatpush1.msra.mxu0 0.0
    %5315 = vmatprep.subr.mxu0 0.0
    %5316 = vmatpush1.msra.mxu0 0.0
    %5317 = vmatprep.subr.mxu0 0.0
    %5318 = vmatpush1.msra.mxu0 0.0
    %5319 = vmatprep.subr.mxu0 0.0
    %5320 = vmatpush1.msra.mxu0 0.0
    %5321 = vmatprep.subr.mxu0 0.0
    %5322 = vmatpush1.msra.mxu0 0.0
    %5323 = vmatprep.mubr.f32.mxu0 0.0
    %5324 = vmatmul.mubr.f32.gmra.mrb[0].mxu0 %v5254
    %v5325 = vpop.f32.mrb[0].mxu0
    %v5326 = vadd.f32 0.0, %v5325
    %v5327 = vpop.f32.mrb[0].mxu0
    %5328 = vdwg.mxu0
    %v5329 = vadd.f32 %v5251, %v5326
    %v5330 = vmul.f32 %v2172, %v3392
    %v5332 = vsel %vm4861, %v4850, 0
    %v5335 = vsel %vm4865, %v5330, 0
    %5337 = vmatprep.subr.mxu0 0.0
    %5338 = vmatpush1.msra.mxu0 %v5335
    %5339 = vmatprep.subr.mxu0 0.0
    %5340 = vmatpush1.msra.mxu0 0.0
    %5341 = vmatprep.subr.mxu0 0.0
    %5342 = vmatpush1.msra.mxu0 0.0
    %5343 = vmatprep.subr.mxu0 0.0
    %5344 = vmatpush1.msra.mxu0 0.0
    %5345 = vmatprep.subr.mxu0 0.0
    %5346 = vmatpush1.msra.mxu0 0.0
    %5347 = vmatprep.subr.mxu0 0.0
    %5348 = vmatpush1.msra.mxu0 0.0
    %5349 = vmatprep.subr.mxu0 0.0
    %5350 = vmatpush1.msra.mxu0 0.0
    %5351 = vmatprep.subr.mxu0 0.0
    %5352 = vmatpush1.msra.mxu0 0.0
    %5353 = vmatprep.subr.mxu0 0.0
    %5354 = vmatpush1.msra.mxu0 0.0
    %5355 = vmatprep.subr.mxu0 0.0
    %5356 = vmatpush1.msra.mxu0 0.0
    %5357 = vmatprep.subr.mxu0 0.0
    %5358 = vmatpush1.msra.mxu0 0.0
    %5359 = vmatprep.subr.mxu0 0.0
    %5360 = vmatpush1.msra.mxu0 0.0
    %5361 = vmatprep.subr.mxu0 0.0
    %5362 = vmatpush1.msra.mxu0 0.0
    %5363 = vmatprep.subr.mxu0 0.0
    %5364 = vmatpush1.msra.mxu0 0.0
    %5365 = vmatprep.subr.mxu0 0.0
    %5366 = vmatpush1.msra.mxu0 0.0
    %5367 = vmatprep.subr.mxu0 0.0
    %5368 = vmatpush1.msra.mxu0 0.0
    %5369 = vmatprep.subr.mxu0 0.0
    %5370 = vmatpush1.msra.mxu0 0.0
    %5371 = vmatprep.subr.mxu0 0.0
    %5372 = vmatpush1.msra.mxu0 0.0
    %5373 = vmatprep.subr.mxu0 0.0
    %5374 = vmatpush1.msra.mxu0 0.0
    %5375 = vmatprep.subr.mxu0 0.0
    %5376 = vmatpush1.msra.mxu0 0.0
    %5377 = vmatprep.subr.mxu0 0.0
    %5378 = vmatpush1.msra.mxu0 0.0
    %5379 = vmatprep.subr.mxu0 0.0
    %5380 = vmatpush1.msra.mxu0 0.0
    %5381 = vmatprep.subr.mxu0 0.0
    %5382 = vmatpush1.msra.mxu0 0.0
    %5383 = vmatprep.subr.mxu0 0.0
    %5384 = vmatpush1.msra.mxu0 0.0
    %5385 = vmatprep.subr.mxu0 0.0
    %5386 = vmatpush1.msra.mxu0 0.0
    %5387 = vmatprep.subr.mxu0 0.0
    %5388 = vmatpush1.msra.mxu0 0.0
    %5389 = vmatprep.subr.mxu0 0.0
    %5390 = vmatpush1.msra.mxu0 0.0
    %5391 = vmatprep.subr.mxu0 0.0
    %5392 = vmatpush1.msra.mxu0 0.0
    %5393 = vmatprep.subr.mxu0 0.0
    %5394 = vmatpush1.msra.mxu0 0.0
    %5395 = vmatprep.subr.mxu0 0.0
    %5396 = vmatpush1.msra.mxu0 0.0
    %5397 = vmatprep.subr.mxu0 0.0
    %5398 = vmatpush1.msra.mxu0 0.0
    %5399 = vmatprep.subr.mxu0 0.0
    %5400 = vmatpush1.msra.mxu0 0.0
    %5401 = vmatprep.mubr.f32.mxu0 0.0
    %5402 = vmatmul.mubr.f32.gmra.mrb[0].mxu0 %v5332
    %v5403 = vpop.f32.mrb[0].mxu0
    %v5404 = vadd.f32 0.0, %v5403
    %v5405 = vpop.f32.mrb[0].mxu0
    %5406 = vdwg.mxu0
    %v5407 = vadd.f32 %v5329, %v5404
    %v5408 = vmul.f32 %v2172, %v3474
    %v5410 = vsel %vm4861, %v4851, 0
    %v5413 = vsel %vm4865, %v5408, 0
    %5415 = vmatprep.subr.mxu0 0.0
    %5416 = vmatpush1.msra.mxu0 %v5413
    %5417 = vmatprep.subr.mxu0 0.0
    %5418 = vmatpush1.msra.mxu0 0.0
    %5419 = vmatprep.subr.mxu0 0.0
    %5420 = vmatpush1.msra.mxu0 0.0
    %5421 = vmatprep.subr.mxu0 0.0
    %5422 = vmatpush1.msra.mxu0 0.0
    %5423 = vmatprep.subr.mxu0 0.0
    %5424 = vmatpush1.msra.mxu0 0.0
    %5425 = vmatprep.subr.mxu0 0.0
    %5426 = vmatpush1.msra.mxu0 0.0
    %5427 = vmatprep.subr.mxu0 0.0
    %5428 = vmatpush1.msra.mxu0 0.0
    %5429 = vmatprep.subr.mxu0 0.0
    %5430 = vmatpush1.msra.mxu0 0.0
    %5431 = vmatprep.subr.mxu0 0.0
    %5432 = vmatpush1.msra.mxu0 0.0
    %5433 = vmatprep.subr.mxu0 0.0
    %5434 = vmatpush1.msra.mxu0 0.0
    %5435 = vmatprep.subr.mxu0 0.0
    %5436 = vmatpush1.msra.mxu0 0.0
    %5437 = vmatprep.subr.mxu0 0.0
    %5438 = vmatpush1.msra.mxu0 0.0
    %5439 = vmatprep.subr.mxu0 0.0
    %5440 = vmatpush1.msra.mxu0 0.0
    %5441 = vmatprep.subr.mxu0 0.0
    %5442 = vmatpush1.msra.mxu0 0.0
    %5443 = vmatprep.subr.mxu0 0.0
    %5444 = vmatpush1.msra.mxu0 0.0
    %5445 = vmatprep.subr.mxu0 0.0
    %5446 = vmatpush1.msra.mxu0 0.0
    %5447 = vmatprep.subr.mxu0 0.0
    %5448 = vmatpush1.msra.mxu0 0.0
    %5449 = vmatprep.subr.mxu0 0.0
    %5450 = vmatpush1.msra.mxu0 0.0
    %5451 = vmatprep.subr.mxu0 0.0
    %5452 = vmatpush1.msra.mxu0 0.0
    %5453 = vmatprep.subr.mxu0 0.0
    %5454 = vmatpush1.msra.mxu0 0.0
    %5455 = vmatprep.subr.mxu0 0.0
    %5456 = vmatpush1.msra.mxu0 0.0
    %5457 = vmatprep.subr.mxu0 0.0
    %5458 = vmatpush1.msra.mxu0 0.0
    %5459 = vmatprep.subr.mxu0 0.0
    %5460 = vmatpush1.msra.mxu0 0.0
    %5461 = vmatprep.subr.mxu0 0.0
    %5462 = vmatpush1.msra.mxu0 0.0
    %5463 = vmatprep.subr.mxu0 0.0
    %5464 = vmatpush1.msra.mxu0 0.0
    %5465 = vmatprep.subr.mxu0 0.0
    %5466 = vmatpush1.msra.mxu0 0.0
    %5467 = vmatprep.subr.mxu0 0.0
    %5468 = vmatpush1.msra.mxu0 0.0
    %5469 = vmatprep.subr.mxu0 0.0
    %5470 = vmatpush1.msra.mxu0 0.0
    %5471 = vmatprep.subr.mxu0 0.0
    %5472 = vmatpush1.msra.mxu0 0.0
    %5473 = vmatprep.subr.mxu0 0.0
    %5474 = vmatpush1.msra.mxu0 0.0
    %5475 = vmatprep.subr.mxu0 0.0
    %5476 = vmatpush1.msra.mxu0 0.0
    %5477 = vmatprep.subr.mxu0 0.0
    %5478 = vmatpush1.msra.mxu0 0.0
    %5479 = vmatprep.mubr.f32.mxu0 0.0
    %5480 = vmatmul.mubr.f32.gmra.mrb[0].mxu0 %v5410
    %v5481 = vpop.f32.mrb[0].mxu0
    %v5482 = vadd.f32 0.0, %v5481
    %v5483 = vpop.f32.mrb[0].mxu0
    %5484 = vdwg.mxu0
    %v5485 = vadd.f32 %v5407, %v5482
    %v5486 = vmul.f32 %v2172, %v3556
    %v5488 = vsel %vm4861, %v4852, 0
    %v5491 = vsel %vm4865, %v5486, 0
    %5493 = vmatprep.subr.mxu0 0.0
    %5494 = vmatpush1.msra.mxu0 %v5491
    %5495 = vmatprep.subr.mxu0 0.0
    %5496 = vmatpush1.msra.mxu0 0.0
    %5497 = vmatprep.subr.mxu0 0.0
    %5498 = vmatpush1.msra.mxu0 0.0
    %5499 = vmatprep.subr.mxu0 0.0
    %5500 = vmatpush1.msra.mxu0 0.0
    %5501 = vmatprep.subr.mxu0 0.0
    %5502 = vmatpush1.msra.mxu0 0.0
    %5503 = vmatprep.subr.mxu0 0.0
    %5504 = vmatpush1.msra.mxu0 0.0
    %5505 = vmatprep.subr.mxu0 0.0
    %5506 = vmatpush1.msra.mxu0 0.0
    %5507 = vmatprep.subr.mxu0 0.0
    %5508 = vmatpush1.msra.mxu0 0.0
    %5509 = vmatprep.subr.mxu0 0.0
    %5510 = vmatpush1.msra.mxu0 0.0
    %5511 = vmatprep.subr.mxu0 0.0
    %5512 = vmatpush1.msra.mxu0 0.0
    %5513 = vmatprep.subr.mxu0 0.0
    %5514 = vmatpush1.msra.mxu0 0.0
    %5515 = vmatprep.subr.mxu0 0.0
    %5516 = vmatpush1.msra.mxu0 0.0
    %5517 = vmatprep.subr.mxu0 0.0
    %5518 = vmatpush1.msra.mxu0 0.0
    %5519 = vmatprep.subr.mxu0 0.0
    %5520 = vmatpush1.msra.mxu0 0.0
    %5521 = vmatprep.subr.mxu0 0.0
    %5522 = vmatpush1.msra.mxu0 0.0
    %5523 = vmatprep.subr.mxu0 0.0
    %5524 = vmatpush1.msra.mxu0 0.0
    %5525 = vmatprep.subr.mxu0 0.0
    %5526 = vmatpush1.msra.mxu0 0.0
    %5527 = vmatprep.subr.mxu0 0.0
    %5528 = vmatpush1.msra.mxu0 0.0
    %5529 = vmatprep.subr.mxu0 0.0
    %5530 = vmatpush1.msra.mxu0 0.0
    %5531 = vmatprep.subr.mxu0 0.0
    %5532 = vmatpush1.msra.mxu0 0.0
    %5533 = vmatprep.subr.mxu0 0.0
    %5534 = vmatpush1.msra.mxu0 0.0
    %5535 = vmatprep.subr.mxu0 0.0
    %5536 = vmatpush1.msra.mxu0 0.0
    %5537 = vmatprep.subr.mxu0 0.0
    %5538 = vmatpush1.msra.mxu0 0.0
    %5539 = vmatprep.subr.mxu0 0.0
    %5540 = vmatpush1.msra.mxu0 0.0
    %5541 = vmatprep.subr.mxu0 0.0
    %5542 = vmatpush1.msra.mxu0 0.0
    %5543 = vmatprep.subr.mxu0 0.0
    %5544 = vmatpush1.msra.mxu0 0.0
    %5545 = vmatprep.subr.mxu0 0.0
    %5546 = vmatpush1.msra.mxu0 0.0
    %5547 = vmatprep.subr.mxu0 0.0
    %5548 = vmatpush1.msra.mxu0 0.0
    %5549 = vmatprep.subr.mxu0 0.0
    %5550 = vmatpush1.msra.mxu0 0.0
    %5551 = vmatprep.subr.mxu0 0.0
    %5552 = vmatpush1.msra.mxu0 0.0
    %5553 = vmatprep.subr.mxu0 0.0
    %5554 = vmatpush1.msra.mxu0 0.0
    %5555 = vmatprep.subr.mxu0 0.0
    %5556 = vmatpush1.msra.mxu0 0.0
    %5557 = vmatprep.mubr.f32.mxu0 0.0
    %5558 = vmatmul.mubr.f32.gmra.mrb[0].mxu0 %v5488
    %v5559 = vpop.f32.mrb[0].mxu0
    %v5560 = vadd.f32 0.0, %v5559
    %v5561 = vpop.f32.mrb[0].mxu0
    %5562 = vdwg.mxu0
    %v5563 = vadd.f32 %v5485, %v5560
    %v5564 = vmul.f32 %v2172, %v3638
    %v5566 = vsel %vm4861, %v4853, 0
    %v5569 = vsel %vm4865, %v5564, 0
    %5571 = vmatprep.subr.mxu0 0.0
    %5572 = vmatpush1.msra.mxu0 %v5569
    %5573 = vmatprep.subr.mxu0 0.0
    %5574 = vmatpush1.msra.mxu0 0.0
    %5575 = vmatprep.subr.mxu0 0.0
    %5576 = vmatpush1.msra.mxu0 0.0
    %5577 = vmatprep.subr.mxu0 0.0
    %5578 = vmatpush1.msra.mxu0 0.0
    %5579 = vmatprep.subr.mxu0 0.0
    %5580 = vmatpush1.msra.mxu0 0.0
    %5581 = vmatprep.subr.mxu0 0.0
    %5582 = vmatpush1.msra.mxu0 0.0
    %5583 = vmatprep.subr.mxu0 0.0
    %5584 = vmatpush1.msra.mxu0 0.0
    %5585 = vmatprep.subr.mxu0 0.0
    %5586 = vmatpush1.msra.mxu0 0.0
    %5587 = vmatprep.subr.mxu0 0.0
    %5588 = vmatpush1.msra.mxu0 0.0
    %5589 = vmatprep.subr.mxu0 0.0
    %5590 = vmatpush1.msra.mxu0 0.0
    %5591 = vmatprep.subr.mxu0 0.0
    %5592 = vmatpush1.msra.mxu0 0.0
    %5593 = vmatprep.subr.mxu0 0.0
    %5594 = vmatpush1.msra.mxu0 0.0
    %5595 = vmatprep.subr.mxu0 0.0
    %5596 = vmatpush1.msra.mxu0 0.0
    %5597 = vmatprep.subr.mxu0 0.0
    %5598 = vmatpush1.msra.mxu0 0.0
    %5599 = vmatprep.subr.mxu0 0.0
    %5600 = vmatpush1.msra.mxu0 0.0
    %5601 = vmatprep.subr.mxu0 0.0
    %5602 = vmatpush1.msra.mxu0 0.0
    %5603 = vmatprep.subr.mxu0 0.0
    %5604 = vmatpush1.msra.mxu0 0.0
    %5605 = vmatprep.subr.mxu0 0.0
    %5606 = vmatpush1.msra.mxu0 0.0
    %5607 = vmatprep.subr.mxu0 0.0
    %5608 = vmatpush1.msra.mxu0 0.0
    %5609 = vmatprep.subr.mxu0 0.0
    %5610 = vmatpush1.msra.mxu0 0.0
    %5611 = vmatprep.subr.mxu0 0.0
    %5612 = vmatpush1.msra.mxu0 0.0
    %5613 = vmatprep.subr.mxu0 0.0
    %5614 = vmatpush1.msra.mxu0 0.0
    %5615 = vmatprep.subr.mxu0 0.0
    %5616 = vmatpush1.msra.mxu0 0.0
    %5617 = vmatprep.subr.mxu0 0.0
    %5618 = vmatpush1.msra.mxu0 0.0
    %5619 = vmatprep.subr.mxu0 0.0
    %5620 = vmatpush1.msra.mxu0 0.0
    %5621 = vmatprep.subr.mxu0 0.0
    %5622 = vmatpush1.msra.mxu0 0.0
    %5623 = vmatprep.subr.mxu0 0.0
    %5624 = vmatpush1.msra.mxu0 0.0
    %5625 = vmatprep.subr.mxu0 0.0
    %5626 = vmatpush1.msra.mxu0 0.0
    %5627 = vmatprep.subr.mxu0 0.0
    %5628 = vmatpush1.msra.mxu0 0.0
    %5629 = vmatprep.subr.mxu0 0.0
    %5630 = vmatpush1.msra.mxu0 0.0
    %5631 = vmatprep.subr.mxu0 0.0
    %5632 = vmatpush1.msra.mxu0 0.0
    %5633 = vmatprep.subr.mxu0 0.0
    %5634 = vmatpush1.msra.mxu0 0.0
    %5635 = vmatprep.mubr.f32.mxu0 0.0
    %5636 = vmatmul.mubr.f32.gmra.mrb[0].mxu0 %v5566
    %v5637 = vpop.f32.mrb[0].mxu0
    %v5638 = vadd.f32 0.0, %v5637
    %v5639 = vpop.f32.mrb[0].mxu0
    %5640 = vdwg.mxu0
    %v5641 = vadd.f32 %v5563, %v5638
    %v5642 = vmul.f32 %v2172, %v3720
    %v5644 = vsel %vm4861, %v4854, 0
    %v5647 = vsel %vm4865, %v5642, 0
    %5649 = vmatprep.subr.mxu0 0.0
    %5650 = vmatpush1.msra.mxu0 %v5647
    %5651 = vmatprep.subr.mxu0 0.0
    %5652 = vmatpush1.msra.mxu0 0.0
    %5653 = vmatprep.subr.mxu0 0.0
    %5654 = vmatpush1.msra.mxu0 0.0
    %5655 = vmatprep.subr.mxu0 0.0
    %5656 = vmatpush1.msra.mxu0 0.0
    %5657 = vmatprep.subr.mxu0 0.0
    %5658 = vmatpush1.msra.mxu0 0.0
    %5659 = vmatprep.subr.mxu0 0.0
    %5660 = vmatpush1.msra.mxu0 0.0
    %5661 = vmatprep.subr.mxu0 0.0
    %5662 = vmatpush1.msra.mxu0 0.0
    %5663 = vmatprep.subr.mxu0 0.0
    %5664 = vmatpush1.msra.mxu0 0.0
    %5665 = vmatprep.subr.mxu0 0.0
    %5666 = vmatpush1.msra.mxu0 0.0
    %5667 = vmatprep.subr.mxu0 0.0
    %5668 = vmatpush1.msra.mxu0 0.0
    %5669 = vmatprep.subr.mxu0 0.0
    %5670 = vmatpush1.msra.mxu0 0.0
    %5671 = vmatprep.subr.mxu0 0.0
    %5672 = vmatpush1.msra.mxu0 0.0
    %5673 = vmatprep.subr.mxu0 0.0
    %5674 = vmatpush1.msra.mxu0 0.0
    %5675 = vmatprep.subr.mxu0 0.0
    %5676 = vmatpush1.msra.mxu0 0.0
    %5677 = vmatprep.subr.mxu0 0.0
    %5678 = vmatpush1.msra.mxu0 0.0
    %5679 = vmatprep.subr.mxu0 0.0
    %5680 = vmatpush1.msra.mxu0 0.0
    %5681 = vmatprep.subr.mxu0 0.0
    %5682 = vmatpush1.msra.mxu0 0.0
    %5683 = vmatprep.subr.mxu0 0.0
    %5684 = vmatpush1.msra.mxu0 0.0
    %5685 = vmatprep.subr.mxu0 0.0
    %5686 = vmatpush1.msra.mxu0 0.0
    %5687 = vmatprep.subr.mxu0 0.0
    %5688 = vmatpush1.msra.mxu0 0.0
    %5689 = vmatprep.subr.mxu0 0.0
    %5690 = vmatpush1.msra.mxu0 0.0
    %5691 = vmatprep.subr.mxu0 0.0
    %5692 = vmatpush1.msra.mxu0 0.0
    %5693 = vmatprep.subr.mxu0 0.0
    %5694 = vmatpush1.msra.mxu0 0.0
    %5695 = vmatprep.subr.mxu0 0.0
    %5696 = vmatpush1.msra.mxu0 0.0
    %5697 = vmatprep.subr.mxu0 0.0
    %5698 = vmatpush1.msra.mxu0 0.0
    %5699 = vmatprep.subr.mxu0 0.0
    %5700 = vmatpush1.msra.mxu0 0.0
    %5701 = vmatprep.subr.mxu0 0.0
    %5702 = vmatpush1.msra.mxu0 0.0
    %5703 = vmatprep.subr.mxu0 0.0
    %5704 = vmatpush1.msra.mxu0 0.0
    %5705 = vmatprep.subr.mxu0 0.0
    %5706 = vmatpush1.msra.mxu0 0.0
    %5707 = vmatprep.subr.mxu0 0.0
    %5708 = vmatpush1.msra.mxu0 0.0
    %5709 = vmatprep.subr.mxu0 0.0
    %5710 = vmatpush1.msra.mxu0 0.0
    %5711 = vmatprep.subr.mxu0 0.0
    %5712 = vmatpush1.msra.mxu0 0.0
    %5713 = vmatprep.mubr.f32.mxu0 0.0
    %5714 = vmatmul.mubr.f32.gmra.mrb[0].mxu0 %v5644
    %v5715 = vpop.f32.mrb[0].mxu0
    %v5716 = vadd.f32 0.0, %v5715
    %v5717 = vpop.f32.mrb[0].mxu0
    %5718 = vdwg.mxu0
    %v5719 = vadd.f32 %v5641, %v5716
    %v5720 = vmul.f32 %v2172, %v3802
    %v5722 = vsel %vm4861, %v4855, 0
    %v5725 = vsel %vm4865, %v5720, 0
    %5727 = vmatprep.subr.mxu0 0.0
    %5728 = vmatpush1.msra.mxu0 %v5725
    %5729 = vmatprep.subr.mxu0 0.0
    %5730 = vmatpush1.msra.mxu0 0.0
    %5731 = vmatprep.subr.mxu0 0.0
    %5732 = vmatpush1.msra.mxu0 0.0
    %5733 = vmatprep.subr.mxu0 0.0
    %5734 = vmatpush1.msra.mxu0 0.0
    %5735 = vmatprep.subr.mxu0 0.0
    %5736 = vmatpush1.msra.mxu0 0.0
    %5737 = vmatprep.subr.mxu0 0.0
    %5738 = vmatpush1.msra.mxu0 0.0
    %5739 = vmatprep.subr.mxu0 0.0
    %5740 = vmatpush1.msra.mxu0 0.0
    %5741 = vmatprep.subr.mxu0 0.0
    %5742 = vmatpush1.msra.mxu0 0.0
    %5743 = vmatprep.subr.mxu0 0.0
    %5744 = vmatpush1.msra.mxu0 0.0
    %5745 = vmatprep.subr.mxu0 0.0
    %5746 = vmatpush1.msra.mxu0 0.0
    %5747 = vmatprep.subr.mxu0 0.0
    %5748 = vmatpush1.msra.mxu0 0.0
    %5749 = vmatprep.subr.mxu0 0.0
    %5750 = vmatpush1.msra.mxu0 0.0
    %5751 = vmatprep.subr.mxu0 0.0
    %5752 = vmatpush1.msra.mxu0 0.0
    %5753 = vmatprep.subr.mxu0 0.0
    %5754 = vmatpush1.msra.mxu0 0.0
    %5755 = vmatprep.subr.mxu0 0.0
    %5756 = vmatpush1.msra.mxu0 0.0
    %5757 = vmatprep.subr.mxu0 0.0
    %5758 = vmatpush1.msra.mxu0 0.0
    %5759 = vmatprep.subr.mxu0 0.0
    %5760 = vmatpush1.msra.mxu0 0.0
    %5761 = vmatprep.subr.mxu0 0.0
    %5762 = vmatpush1.msra.mxu0 0.0
    %5763 = vmatprep.subr.mxu0 0.0
    %5764 = vmatpush1.msra.mxu0 0.0
    %5765 = vmatprep.subr.mxu0 0.0
    %5766 = vmatpush1.msra.mxu0 0.0
    %5767 = vmatprep.subr.mxu0 0.0
    %5768 = vmatpush1.msra.mxu0 0.0
    %5769 = vmatprep.subr.mxu0 0.0
    %5770 = vmatpush1.msra.mxu0 0.0
    %5771 = vmatprep.subr.mxu0 0.0
    %5772 = vmatpush1.msra.mxu0 0.0
    %5773 = vmatprep.subr.mxu0 0.0
    %5774 = vmatpush1.msra.mxu0 0.0
    %5775 = vmatprep.subr.mxu0 0.0
    %5776 = vmatpush1.msra.mxu0 0.0
    %5777 = vmatprep.subr.mxu0 0.0
    %5778 = vmatpush1.msra.mxu0 0.0
    %5779 = vmatprep.subr.mxu0 0.0
    %5780 = vmatpush1.msra.mxu0 0.0
    %5781 = vmatprep.subr.mxu0 0.0
    %5782 = vmatpush1.msra.mxu0 0.0
    %5783 = vmatprep.subr.mxu0 0.0
    %5784 = vmatpush1.msra.mxu0 0.0
    %5785 = vmatprep.subr.mxu0 0.0
    %5786 = vmatpush1.msra.mxu0 0.0
    %5787 = vmatprep.subr.mxu0 0.0
    %5788 = vmatpush1.msra.mxu0 0.0
    %5789 = vmatprep.subr.mxu0 0.0
    %5790 = vmatpush1.msra.mxu0 0.0
    %5791 = vmatprep.mubr.f32.mxu0 0.0
    %5792 = vmatmul.mubr.f32.gmra.mrb[0].mxu0 %v5722
    %v5793 = vpop.f32.mrb[0].mxu0
    %v5794 = vadd.f32 0.0, %v5793
    %v5795 = vpop.f32.mrb[0].mxu0
    %5796 = vdwg.mxu0
    %v5797 = vadd.f32 %v5719, %v5794
    %v5798 = vmul.f32 %v2172, %v3884
    %v5800 = vsel %vm4861, %v4856, 0
    %v5803 = vsel %vm4865, %v5798, 0
    %5805 = vmatprep.subr.mxu0 0.0
    %5806 = vmatpush1.msra.mxu0 %v5803
    %5807 = vmatprep.subr.mxu0 0.0
    %5808 = vmatpush1.msra.mxu0 0.0
    %5809 = vmatprep.subr.mxu0 0.0
    %5810 = vmatpush1.msra.mxu0 0.0
    %5811 = vmatprep.subr.mxu0 0.0
    %5812 = vmatpush1.msra.mxu0 0.0
    %5813 = vmatprep.subr.mxu0 0.0
    %5814 = vmatpush1.msra.mxu0 0.0
    %5815 = vmatprep.subr.mxu0 0.0
    %5816 = vmatpush1.msra.mxu0 0.0
    %5817 = vmatprep.subr.mxu0 0.0
    %5818 = vmatpush1.msra.mxu0 0.0
    %5819 = vmatprep.subr.mxu0 0.0
    %5820 = vmatpush1.msra.mxu0 0.0
    %5821 = vmatprep.subr.mxu0 0.0
    %5822 = vmatpush1.msra.mxu0 0.0
    %5823 = vmatprep.subr.mxu0 0.0
    %5824 = vmatpush1.msra.mxu0 0.0
    %5825 = vmatprep.subr.mxu0 0.0
    %5826 = vmatpush1.msra.mxu0 0.0
    %5827 = vmatprep.subr.mxu0 0.0
    %5828 = vmatpush1.msra.mxu0 0.0
    %5829 = vmatprep.subr.mxu0 0.0
    %5830 = vmatpush1.msra.mxu0 0.0
    %5831 = vmatprep.subr.mxu0 0.0
    %5832 = vmatpush1.msra.mxu0 0.0
    %5833 = vmatprep.subr.mxu0 0.0
    %5834 = vmatpush1.msra.mxu0 0.0
    %5835 = vmatprep.subr.mxu0 0.0
    %5836 = vmatpush1.msra.mxu0 0.0
    %5837 = vmatprep.subr.mxu0 0.0
    %5838 = vmatpush1.msra.mxu0 0.0
    %5839 = vmatprep.subr.mxu0 0.0
    %5840 = vmatpush1.msra.mxu0 0.0
    %5841 = vmatprep.subr.mxu0 0.0
    %5842 = vmatpush1.msra.mxu0 0.0
    %5843 = vmatprep.subr.mxu0 0.0
    %5844 = vmatpush1.msra.mxu0 0.0
    %5845 = vmatprep.subr.mxu0 0.0
    %5846 = vmatpush1.msra.mxu0 0.0
    %5847 = vmatprep.subr.mxu0 0.0
    %5848 = vmatpush1.msra.mxu0 0.0
    %5849 = vmatprep.subr.mxu0 0.0
    %5850 = vmatpush1.msra.mxu0 0.0
    %5851 = vmatprep.subr.mxu0 0.0
    %5852 = vmatpush1.msra.mxu0 0.0
    %5853 = vmatprep.subr.mxu0 0.0
    %5854 = vmatpush1.msra.mxu0 0.0
    %5855 = vmatprep.subr.mxu0 0.0
    %5856 = vmatpush1.msra.mxu0 0.0
    %5857 = vmatprep.subr.mxu0 0.0
    %5858 = vmatpush1.msra.mxu0 0.0
    %5859 = vmatprep.subr.mxu0 0.0
    %5860 = vmatpush1.msra.mxu0 0.0
    %5861 = vmatprep.subr.mxu0 0.0
    %5862 = vmatpush1.msra.mxu0 0.0
    %5863 = vmatprep.subr.mxu0 0.0
    %5864 = vmatpush1.msra.mxu0 0.0
    %5865 = vmatprep.subr.mxu0 0.0
    %5866 = vmatpush1.msra.mxu0 0.0
    %5867 = vmatprep.subr.mxu0 0.0
    %5868 = vmatpush1.msra.mxu0 0.0
    %5869 = vmatprep.mubr.f32.mxu0 0.0
    %5870 = vmatmul.mubr.f32.gmra.mrb[0].mxu0 %v5800
    %v5871 = vpop.f32.mrb[0].mxu0
    %v5872 = vadd.f32 0.0, %v5871
    %v5873 = vpop.f32.mrb[0].mxu0
    %5874 = vdwg.mxu0
    %v5875 = vadd.f32 %v5797, %v5872
    %v5876 = vmul.f32 %v2172, %v3966
    %v5878 = vsel %vm4861, %v4857, 0
    %v5881 = vsel %vm4865, %v5876, 0
    %5883 = vmatprep.subr.mxu0 0.0
    %5884 = vmatpush1.msra.mxu0 %v5881
    %5885 = vmatprep.subr.mxu0 0.0
    %5886 = vmatpush1.msra.mxu0 0.0
    %5887 = vmatprep.subr.mxu0 0.0
    %5888 = vmatpush1.msra.mxu0 0.0
    %5889 = vmatprep.subr.mxu0 0.0
    %5890 = vmatpush1.msra.mxu0 0.0
    %5891 = vmatprep.subr.mxu0 0.0
    %5892 = vmatpush1.msra.mxu0 0.0
    %5893 = vmatprep.subr.mxu0 0.0
    %5894 = vmatpush1.msra.mxu0 0.0
    %5895 = vmatprep.subr.mxu0 0.0
    %5896 = vmatpush1.msra.mxu0 0.0
    %5897 = vmatprep.subr.mxu0 0.0
    %5898 = vmatpush1.msra.mxu0 0.0
    %5899 = vmatprep.subr.mxu0 0.0
    %5900 = vmatpush1.msra.mxu0 0.0
    %5901 = vmatprep.subr.mxu0 0.0
    %5902 = vmatpush1.msra.mxu0 0.0
    %5903 = vmatprep.subr.mxu0 0.0
    %5904 = vmatpush1.msra.mxu0 0.0
    %5905 = vmatprep.subr.mxu0 0.0
    %5906 = vmatpush1.msra.mxu0 0.0
    %5907 = vmatprep.subr.mxu0 0.0
    %5908 = vmatpush1.msra.mxu0 0.0
    %5909 = vmatprep.subr.mxu0 0.0
    %5910 = vmatpush1.msra.mxu0 0.0
    %5911 = vmatprep.subr.mxu0 0.0
    %5912 = vmatpush1.msra.mxu0 0.0
    %5913 = vmatprep.subr.mxu0 0.0
    %5914 = vmatpush1.msra.mxu0 0.0
    %5915 = vmatprep.subr.mxu0 0.0
    %5916 = vmatpush1.msra.mxu0 0.0
    %5917 = vmatprep.subr.mxu0 0.0
    %5918 = vmatpush1.msra.mxu0 0.0
    %5919 = vmatprep.subr.mxu0 0.0
    %5920 = vmatpush1.msra.mxu0 0.0
    %5921 = vmatprep.subr.mxu0 0.0
    %5922 = vmatpush1.msra.mxu0 0.0
    %5923 = vmatprep.subr.mxu0 0.0
    %5924 = vmatpush1.msra.mxu0 0.0
    %5925 = vmatprep.subr.mxu0 0.0
    %5926 = vmatpush1.msra.mxu0 0.0
    %5927 = vmatprep.subr.mxu0 0.0
    %5928 = vmatpush1.msra.mxu0 0.0
    %5929 = vmatprep.subr.mxu0 0.0
    %5930 = vmatpush1.msra.mxu0 0.0
    %5931 = vmatprep.subr.mxu0 0.0
    %5932 = vmatpush1.msra.mxu0 0.0
    %5933 = vmatprep.subr.mxu0 0.0
    %5934 = vmatpush1.msra.mxu0 0.0
    %5935 = vmatprep.subr.mxu0 0.0
    %5936 = vmatpush1.msra.mxu0 0.0
    %5937 = vmatprep.subr.mxu0 0.0
    %5938 = vmatpush1.msra.mxu0 0.0
    %5939 = vmatprep.subr.mxu0 0.0
    %5940 = vmatpush1.msra.mxu0 0.0
    %5941 = vmatprep.subr.mxu0 0.0
    %5942 = vmatpush1.msra.mxu0 0.0
    %5943 = vmatprep.subr.mxu0 0.0
    %5944 = vmatpush1.msra.mxu0 0.0
    %5945 = vmatprep.subr.mxu0 0.0
    %5946 = vmatpush1.msra.mxu0 0.0
    %5947 = vmatprep.mubr.f32.mxu0 0.0
    %5948 = vmatmul.mubr.f32.gmra.mrb[0].mxu0 %v5878
    %v5949 = vpop.f32.mrb[0].mxu0
    %v5950 = vadd.f32 0.0, %v5949
    %v5951 = vpop.f32.mrb[0].mxu0
    %5952 = vdwg.mxu0
    %v5953 = vadd.f32 %v5875, %v5950
    %v5954 = vmul.f32 %v2172, %v4048
    %v5956 = vsel %vm4861, %v4858, 0
    %v5959 = vsel %vm4865, %v5954, 0
    %5961 = vmatprep.subr.mxu0 0.0
    %5962 = vmatpush1.msra.mxu0 %v5959
    %5963 = vmatprep.subr.mxu0 0.0
    %5964 = vmatpush1.msra.mxu0 0.0
    %5965 = vmatprep.subr.mxu0 0.0
    %5966 = vmatpush1.msra.mxu0 0.0
    %5967 = vmatprep.subr.mxu0 0.0
    %5968 = vmatpush1.msra.mxu0 0.0
    %5969 = vmatprep.subr.mxu0 0.0
    %5970 = vmatpush1.msra.mxu0 0.0
    %5971 = vmatprep.subr.mxu0 0.0
    %5972 = vmatpush1.msra.mxu0 0.0
    %5973 = vmatprep.subr.mxu0 0.0
    %5974 = vmatpush1.msra.mxu0 0.0
    %5975 = vmatprep.subr.mxu0 0.0
    %5976 = vmatpush1.msra.mxu0 0.0
    %5977 = vmatprep.subr.mxu0 0.0
    %5978 = vmatpush1.msra.mxu0 0.0
    %5979 = vmatprep.subr.mxu0 0.0
    %5980 = vmatpush1.msra.mxu0 0.0
    %5981 = vmatprep.subr.mxu0 0.0
    %5982 = vmatpush1.msra.mxu0 0.0
    %5983 = vmatprep.subr.mxu0 0.0
    %5984 = vmatpush1.msra.mxu0 0.0
    %5985 = vmatprep.subr.mxu0 0.0
    %5986 = vmatpush1.msra.mxu0 0.0
    %5987 = vmatprep.subr.mxu0 0.0
    %5988 = vmatpush1.msra.mxu0 0.0
    %5989 = vmatprep.subr.mxu0 0.0
    %5990 = vmatpush1.msra.mxu0 0.0
    %5991 = vmatprep.subr.mxu0 0.0
    %5992 = vmatpush1.msra.mxu0 0.0
    %5993 = vmatprep.subr.mxu0 0.0
    %5994 = vmatpush1.msra.mxu0 0.0
    %5995 = vmatprep.subr.mxu0 0.0
    %5996 = vmatpush1.msra.mxu0 0.0
    %5997 = vmatprep.subr.mxu0 0.0
    %5998 = vmatpush1.msra.mxu0 0.0
    %5999 = vmatprep.subr.mxu0 0.0
    %6000 = vmatpush1.msra.mxu0 0.0
    %6001 = vmatprep.subr.mxu0 0.0
    %6002 = vmatpush1.msra.mxu0 0.0
    %6003 = vmatprep.subr.mxu0 0.0
    %6004 = vmatpush1.msra.mxu0 0.0
    %6005 = vmatprep.subr.mxu0 0.0
    %6006 = vmatpush1.msra.mxu0 0.0
    %6007 = vmatprep.subr.mxu0 0.0
    %6008 = vmatpush1.msra.mxu0 0.0
    %6009 = vmatprep.subr.mxu0 0.0
    %6010 = vmatpush1.msra.mxu0 0.0
    %6011 = vmatprep.subr.mxu0 0.0
    %6012 = vmatpush1.msra.mxu0 0.0
    %6013 = vmatprep.subr.mxu0 0.0
    %6014 = vmatpush1.msra.mxu0 0.0
    %6015 = vmatprep.subr.mxu0 0.0
    %6016 = vmatpush1.msra.mxu0 0.0
    %6017 = vmatprep.subr.mxu0 0.0
    %6018 = vmatpush1.msra.mxu0 0.0
    %6019 = vmatprep.subr.mxu0 0.0
    %6020 = vmatpush1.msra.mxu0 0.0
    %6021 = vmatprep.subr.mxu0 0.0
    %6022 = vmatpush1.msra.mxu0 0.0
    %6023 = vmatprep.subr.mxu0 0.0
    %6024 = vmatpush1.msra.mxu0 0.0
    %6025 = vmatprep.mubr.f32.mxu0 0.0
    %6026 = vmatmul.mubr.f32.gmra.mrb[0].mxu0 %v5956
    %v6027 = vpop.f32.mrb[0].mxu0
    %v6028 = vadd.f32 0.0, %v6027
    %v6029 = vpop.f32.mrb[0].mxu0
    %6030 = vdwg.mxu0
    %v6031 = vadd.f32 %v5953, %v6028
    %v6032 = vmul.f32 %v2172, %v4130
    %v6034 = vsel %vm4861, %v4859, 0
    %v6037 = vsel %vm4865, %v6032, 0
    %6039 = vmatprep.subr.mxu0 0.0
    %6040 = vmatpush1.msra.mxu0 %v6037
    %6041 = vmatprep.subr.mxu0 0.0
    %6042 = vmatpush1.msra.mxu0 0.0
    %6043 = vmatprep.subr.mxu0 0.0
    %6044 = vmatpush1.msra.mxu0 0.0
    %6045 = vmatprep.subr.mxu0 0.0
    %6046 = vmatpush1.msra.mxu0 0.0
    %6047 = vmatprep.subr.mxu0 0.0
    %6048 = vmatpush1.msra.mxu0 0.0
    %6049 = vmatprep.subr.mxu0 0.0
    %6050 = vmatpush1.msra.mxu0 0.0
    %6051 = vmatprep.subr.mxu0 0.0
    %6052 = vmatpush1.msra.mxu0 0.0
    %6053 = vmatprep.subr.mxu0 0.0
    %6054 = vmatpush1.msra.mxu0 0.0
    %6055 = vmatprep.subr.mxu0 0.0
    %6056 = vmatpush1.msra.mxu0 0.0
    %6057 = vmatprep.subr.mxu0 0.0
    %6058 = vmatpush1.msra.mxu0 0.0
    %6059 = vmatprep.subr.mxu0 0.0
    %6060 = vmatpush1.msra.mxu0 0.0
    %6061 = vmatprep.subr.mxu0 0.0
    %6062 = vmatpush1.msra.mxu0 0.0
    %6063 = vmatprep.subr.mxu0 0.0
    %6064 = vmatpush1.msra.mxu0 0.0
    %6065 = vmatprep.subr.mxu0 0.0
    %6066 = vmatpush1.msra.mxu0 0.0
    %6067 = vmatprep.subr.mxu0 0.0
    %6068 = vmatpush1.msra.mxu0 0.0
    %6069 = vmatprep.subr.mxu0 0.0
    %6070 = vmatpush1.msra.mxu0 0.0
    %6071 = vmatprep.subr.mxu0 0.0
    %6072 = vmatpush1.msra.mxu0 0.0
    %6073 = vmatprep.subr.mxu0 0.0
    %6074 = vmatpush1.msra.mxu0 0.0
    %6075 = vmatprep.subr.mxu0 0.0
    %6076 = vmatpush1.msra.mxu0 0.0
    %6077 = vmatprep.subr.mxu0 0.0
    %6078 = vmatpush1.msra.mxu0 0.0
    %6079 = vmatprep.subr.mxu0 0.0
    %6080 = vmatpush1.msra.mxu0 0.0
    %6081 = vmatprep.subr.mxu0 0.0
    %6082 = vmatpush1.msra.mxu0 0.0
    %6083 = vmatprep.subr.mxu0 0.0
    %6084 = vmatpush1.msra.mxu0 0.0
    %6085 = vmatprep.subr.mxu0 0.0
    %6086 = vmatpush1.msra.mxu0 0.0
    %6087 = vmatprep.subr.mxu0 0.0
    %6088 = vmatpush1.msra.mxu0 0.0
    %6089 = vmatprep.subr.mxu0 0.0
    %6090 = vmatpush1.msra.mxu0 0.0
    %6091 = vmatprep.subr.mxu0 0.0
    %6092 = vmatpush1.msra.mxu0 0.0
    %6093 = vmatprep.subr.mxu0 0.0
    %6094 = vmatpush1.msra.mxu0 0.0
    %6095 = vmatprep.subr.mxu0 0.0
    %6096 = vmatpush1.msra.mxu0 0.0
    %6097 = vmatprep.subr.mxu0 0.0
    %6098 = vmatpush1.msra.mxu0 0.0
    %6099 = vmatprep.subr.mxu0 0.0
    %6100 = vmatpush1.msra.mxu0 0.0
    %6101 = vmatprep.subr.mxu0 0.0
    %6102 = vmatpush1.msra.mxu0 0.0
    %6103 = vmatprep.mubr.f32.mxu0 0.0
    %6104 = vmatmul.mubr.f32.gmra.mrb[0].mxu0 %v6034
    %v6105 = vpop.f32.mrb[0].mxu0
    %v6106 = vadd.f32 0.0, %v6105
    %v6107 = vpop.f32.mrb[0].mxu0
    %6108 = vdwg.mxu0
    %v6109 = vadd.f32 %v6031, %v6106
    %6110 = vrot.lane.b32.xlu0 %v2243, 80
    %v6111 = vpop.permute.xlu0 %6110
    %6113 = vxpose.xlu0.b32.start [1/16] %v6111, 128
    %6114 = vxpose.xlu0.b32.cont [2/16] 0.0, 128
    %6115 = vxpose.xlu0.b32.cont [3/16] 0.0, 128
    %6116 = vxpose.xlu0.b32.cont [4/16] 0.0, 128
    %6117 = vxpose.xlu0.b32.cont [5/16] 0.0, 128
    %6118 = vxpose.xlu0.b32.cont [6/16] 0.0, 128
    %6119 = vxpose.xlu0.b32.cont [7/16] 0.0, 128
    %6120 = vxpose.xlu0.b32.cont [8/16] 0.0, 128
    %6121 = vxpose.xlu0.b32.cont [9/16] 0.0, 128
    %6122 = vxpose.xlu0.b32.cont [10/16] 0.0, 128
    %6123 = vxpose.xlu0.b32.cont [11/16] 0.0, 128
    %6124 = vxpose.xlu0.b32.cont [12/16] 0.0, 128
    %6125 = vxpose.xlu0.b32.cont [13/16] 0.0, 128
    %6126 = vxpose.xlu0.b32.cont [14/16] 0.0, 128
    %6127 = vxpose.xlu0.b32.cont [15/16] 0.0, 128
    %6128 = vxpose.xlu0.b32.end [16/16] 0.0, 128
    %v6129 = vpop.trf.xlu0
    %v6130 = vpop.trf.xlu0
    %v6131 = vpop.trf.xlu0
    %v6132 = vpop.trf.xlu0
    %v6133 = vpop.trf.xlu0
    %v6134 = vpop.trf.xlu0
    %v6135 = vpop.trf.xlu0
    %v6136 = vpop.trf.xlu0
    %v6137 = vpop.trf.xlu0
    %v6138 = vpop.trf.xlu0
    %v6139 = vpop.trf.xlu0
    %v6140 = vpop.trf.xlu0
    %v6141 = vpop.trf.xlu0
    %v6142 = vpop.trf.xlu0
    %v6143 = vpop.trf.xlu0
    %v6144 = vpop.trf.xlu0
    %v6145 = vlaneseq
    %v6146 = vshrl.u32 %v6145, 7
    %v6147 = vsub.s32 0, %v6146
    %v6148 = vrot.slane %v6129, %v6147
    %6150 = vbcast.lane.b32.xlu0 %v6148, 256
    %v6151 = vpop.permute.xlu0 %6150
    %v6152 = vlaneseq
    %v6153 = vshrl.u32 %v6152, 7
    %v6154 = vsub.s32 1, %v6153
    %v6155 = vrot.slane %v6129, %v6154
    %6157 = vbcast.lane.b32.xlu0 %v6155, 256
    %v6158 = vpop.permute.xlu0 %6157
    %v6159 = vlaneseq
    %v6160 = vshrl.u32 %v6159, 7
    %v6161 = vsub.s32 2, %v6160
    %v6162 = vrot.slane %v6129, %v6161
    %6164 = vbcast.lane.b32.xlu0 %v6162, 256
    %v6165 = vpop.permute.xlu0 %6164
    %v6166 = vlaneseq
    %v6167 = vshrl.u32 %v6166, 7
    %v6168 = vsub.s32 3, %v6167
    %v6169 = vrot.slane %v6129, %v6168
    %6171 = vbcast.lane.b32.xlu0 %v6169, 256
    %v6172 = vpop.permute.xlu0 %6171
    %v6173 = vlaneseq
    %v6174 = vshrl.u32 %v6173, 7
    %v6175 = vsub.s32 4, %v6174
    %v6176 = vrot.slane %v6129, %v6175
    %6178 = vbcast.lane.b32.xlu0 %v6176, 256
    %v6179 = vpop.permute.xlu0 %6178
    %v6180 = vlaneseq
    %v6181 = vshrl.u32 %v6180, 7
    %v6182 = vsub.s32 5, %v6181
    %v6183 = vrot.slane %v6129, %v6182
    %6185 = vbcast.lane.b32.xlu0 %v6183, 256
    %v6186 = vpop.permute.xlu0 %6185
    %v6187 = vlaneseq
    %v6188 = vshrl.u32 %v6187, 7
    %v6189 = vsub.s32 6, %v6188
    %v6190 = vrot.slane %v6129, %v6189
    %6192 = vbcast.lane.b32.xlu0 %v6190, 256
    %v6193 = vpop.permute.xlu0 %6192
    %v6194 = vlaneseq
    %v6195 = vshrl.u32 %v6194, 7
    %v6196 = vsub.s32 7, %v6195
    %v6197 = vrot.slane %v6129, %v6196
    %6199 = vbcast.lane.b32.xlu0 %v6197, 256
    %v6200 = vpop.permute.xlu0 %6199
    %v6201 = vlaneseq
    %v6202 = vshrl.u32 %v6201, 7
    %v6203 = vsub.s32 0, %v6202
    %v6204 = vrot.slane %v6130, %v6203
    %6206 = vbcast.lane.b32.xlu0 %v6204, 256
    %v6207 = vpop.permute.xlu0 %6206
    %v6208 = vlaneseq
    %v6209 = vshrl.u32 %v6208, 7
    %v6210 = vsub.s32 1, %v6209
    %v6211 = vrot.slane %v6130, %v6210
    %6213 = vbcast.lane.b32.xlu0 %v6211, 256
    %v6214 = vpop.permute.xlu0 %6213
    %v6215 = vlaneseq
    %v6216 = vshrl.u32 %v6215, 7
    %v6217 = vsub.s32 2, %v6216
    %v6218 = vrot.slane %v6130, %v6217
    %6220 = vbcast.lane.b32.xlu0 %v6218, 256
    %v6221 = vpop.permute.xlu0 %6220
    %v6222 = vlaneseq
    %v6223 = vshrl.u32 %v6222, 7
    %v6224 = vsub.s32 3, %v6223
    %v6225 = vrot.slane %v6130, %v6224
    %6227 = vbcast.lane.b32.xlu0 %v6225, 256
    %v6228 = vpop.permute.xlu0 %6227
    %v6229 = vlaneseq
    %v6230 = vshrl.u32 %v6229, 7
    %v6231 = vsub.s32 4, %v6230
    %v6232 = vrot.slane %v6130, %v6231
    %6234 = vbcast.lane.b32.xlu0 %v6232, 256
    %v6235 = vpop.permute.xlu0 %6234
    %v6236 = vlaneseq
    %v6237 = vshrl.u32 %v6236, 7
    %v6238 = vsub.s32 5, %v6237
    %v6239 = vrot.slane %v6130, %v6238
    %6241 = vbcast.lane.b32.xlu0 %v6239, 256
    %v6242 = vpop.permute.xlu0 %6241
    %v6243 = vlaneseq
    %v6244 = vshrl.u32 %v6243, 7
    %v6245 = vsub.s32 6, %v6244
    %v6246 = vrot.slane %v6130, %v6245
    %6248 = vbcast.lane.b32.xlu0 %v6246, 256
    %v6249 = vpop.permute.xlu0 %6248
    %v6250 = vlaneseq
    %v6251 = vshrl.u32 %v6250, 7
    %v6252 = vsub.s32 7, %v6251
    %v6253 = vrot.slane %v6130, %v6252
    %6255 = vbcast.lane.b32.xlu0 %v6253, 256
    %v6256 = vpop.permute.xlu0 %6255
    %6257 = vrot.lane.b32.xlu0 %v2243, 112
    %v6258 = vpop.permute.xlu0 %6257
    %6260 = vxpose.xlu0.b32.start [1/16] %v6258, 128
    %6261 = vxpose.xlu0.b32.cont [2/16] 0.0, 128
    %6262 = vxpose.xlu0.b32.cont [3/16] 0.0, 128
    %6263 = vxpose.xlu0.b32.cont [4/16] 0.0, 128
    %6264 = vxpose.xlu0.b32.cont [5/16] 0.0, 128
    %6265 = vxpose.xlu0.b32.cont [6/16] 0.0, 128
    %6266 = vxpose.xlu0.b32.cont [7/16] 0.0, 128
    %6267 = vxpose.xlu0.b32.cont [8/16] 0.0, 128
    %6268 = vxpose.xlu0.b32.cont [9/16] 0.0, 128
    %6269 = vxpose.xlu0.b32.cont [10/16] 0.0, 128
    %6270 = vxpose.xlu0.b32.cont [11/16] 0.0, 128
    %6271 = vxpose.xlu0.b32.cont [12/16] 0.0, 128
    %6272 = vxpose.xlu0.b32.cont [13/16] 0.0, 128
    %6273 = vxpose.xlu0.b32.cont [14/16] 0.0, 128
    %6274 = vxpose.xlu0.b32.cont [15/16] 0.0, 128
    %6275 = vxpose.xlu0.b32.end [16/16] 0.0, 128
    %v6276 = vpop.trf.xlu0
    %v6277 = vpop.trf.xlu0
    %v6278 = vpop.trf.xlu0
    %v6279 = vpop.trf.xlu0
    %v6280 = vpop.trf.xlu0
    %v6281 = vpop.trf.xlu0
    %v6282 = vpop.trf.xlu0
    %v6283 = vpop.trf.xlu0
    %v6284 = vpop.trf.xlu0
    %v6285 = vpop.trf.xlu0
    %v6286 = vpop.trf.xlu0
    %v6287 = vpop.trf.xlu0
    %v6288 = vpop.trf.xlu0
    %v6289 = vpop.trf.xlu0
    %v6290 = vpop.trf.xlu0
    %v6291 = vpop.trf.xlu0
    %v6294 = vcombine.high %v6276, %v6276
    %v6296 = vunpack.c.l.s4 1966171168
    %v6297 = vunpack.c.0.s8 %v6296
    %v6298 = vlaneseq
    %v6299 = vshrl.u32 %v6298, 7
    %v6300 = vsub.s32 %v6297, %v6299
    %v6301 = vrot.slane %v6276, %v6300
    %v6303 = vunpack.c.l.s4 1966171168
    %v6304 = vunpack.c.0.s8 %v6303
    %v6305 = vlaneseq
    %v6306 = vshrl.u32 %v6305, 7
    %v6307 = vsub.s32 %v6304, %v6306
    %v6308 = vrot.slane %v6294, %v6307
    %v6309 = vcombine.high %v6301, %v6301
    %v6310 = vcombine.high %v6308, %v6308
    %v6312 = vunpack.c.l.s4 1966171168
    %v6313 = vunpack.c.0.s8 %v6312
    %v6314 = vlaneseq
    %v6315 = vshrl.u32 %v6314, 7
    %v6316 = vsub.s32 %v6313, %v6315
    %v6317 = vrot.slane %v6301, %v6316
    %v6319 = vunpack.c.l.s4 1966171168
    %v6320 = vunpack.c.0.s8 %v6319
    %v6321 = vlaneseq
    %v6322 = vshrl.u32 %v6321, 7
    %v6323 = vsub.s32 %v6320, %v6322
    %v6324 = vrot.slane %v6308, %v6323
    %v6326 = vunpack.c.l.s4 1966171168
    %v6327 = vunpack.c.0.s8 %v6326
    %v6328 = vlaneseq
    %v6329 = vshrl.u32 %v6328, 7
    %v6330 = vsub.s32 %v6327, %v6329
    %v6331 = vrot.slane %v6309, %v6330
    %v6333 = vunpack.c.l.s4 1966171168
    %v6334 = vunpack.c.0.s8 %v6333
    %v6335 = vlaneseq
    %v6336 = vshrl.u32 %v6335, 7
    %v6337 = vsub.s32 %v6334, %v6336
    %v6338 = vrot.slane %v6310, %v6337
    %v6339 = vcombine.high %v6317, %v6317
    %v6340 = vcombine.high %v6324, %v6324
    %v6341 = vcombine.high %v6331, %v6331
    %v6342 = vcombine.high %v6338, %v6338
    %v6343 = vcombine.high %v6277, %v6277
    %v6345 = vunpack.c.l.s4 1966171168
    %v6346 = vunpack.c.0.s8 %v6345
    %v6347 = vlaneseq
    %v6348 = vshrl.u32 %v6347, 7
    %v6349 = vsub.s32 %v6346, %v6348
    %v6350 = vrot.slane %v6277, %v6349
    %v6352 = vunpack.c.l.s4 1966171168
    %v6353 = vunpack.c.0.s8 %v6352
    %v6354 = vlaneseq
    %v6355 = vshrl.u32 %v6354, 7
    %v6356 = vsub.s32 %v6353, %v6355
    %v6357 = vrot.slane %v6343, %v6356
    %v6358 = vcombine.high %v6350, %v6350
    %v6359 = vcombine.high %v6357, %v6357
    %v6361 = vunpack.c.l.s4 1966171168
    %v6362 = vunpack.c.0.s8 %v6361
    %v6363 = vlaneseq
    %v6364 = vshrl.u32 %v6363, 7
    %v6365 = vsub.s32 %v6362, %v6364
    %v6366 = vrot.slane %v6350, %v6365
    %v6368 = vunpack.c.l.s4 1966171168
    %v6369 = vunpack.c.0.s8 %v6368
    %v6370 = vlaneseq
    %v6371 = vshrl.u32 %v6370, 7
    %v6372 = vsub.s32 %v6369, %v6371
    %v6373 = vrot.slane %v6357, %v6372
    %v6375 = vunpack.c.l.s4 1966171168
    %v6376 = vunpack.c.0.s8 %v6375
    %v6377 = vlaneseq
    %v6378 = vshrl.u32 %v6377, 7
    %v6379 = vsub.s32 %v6376, %v6378
    %v6380 = vrot.slane %v6358, %v6379
    %v6382 = vunpack.c.l.s4 1966171168
    %v6383 = vunpack.c.0.s8 %v6382
    %v6384 = vlaneseq
    %v6385 = vshrl.u32 %v6384, 7
    %v6386 = vsub.s32 %v6383, %v6385
    %v6387 = vrot.slane %v6359, %v6386
    %v6388 = vcombine.high %v6366, %v6366
    %v6389 = vcombine.high %v6373, %v6373
    %v6390 = vcombine.high %v6380, %v6380
    %v6391 = vcombine.high %v6387, %v6387
    %v6392 = vlaneseq
    %v6393 = vshrl.u32 %v6392, 7
    %v6394 = vsub.s32 0, %v6393
    %v6395 = vrot.slane %v6317, %v6394
    %v6396 = vlaneseq
    %v6397 = vshrl.u32 %v6396, 7
    %v6398 = vsub.s32 0, %v6397
    %v6399 = vrot.slane %v6331, %v6398
    %v6400 = vlaneseq
    %v6401 = vshrl.u32 %v6400, 7
    %v6402 = vsub.s32 0, %v6401
    %v6403 = vrot.slane %v6339, %v6402
    %v6404 = vlaneseq
    %v6405 = vshrl.u32 %v6404, 7
    %v6406 = vsub.s32 0, %v6405
    %v6407 = vrot.slane %v6341, %v6406
    %v6408 = vlaneseq
    %v6409 = vshrl.u32 %v6408, 7
    %v6410 = vsub.s32 0, %v6409
    %v6411 = vrot.slane %v6324, %v6410
    %v6412 = vlaneseq
    %v6413 = vshrl.u32 %v6412, 7
    %v6414 = vsub.s32 0, %v6413
    %v6415 = vrot.slane %v6338, %v6414
    %v6416 = vlaneseq
    %v6417 = vshrl.u32 %v6416, 7
    %v6418 = vsub.s32 0, %v6417
    %v6419 = vrot.slane %v6340, %v6418
    %v6420 = vlaneseq
    %v6421 = vshrl.u32 %v6420, 7
    %v6422 = vsub.s32 0, %v6421
    %v6423 = vrot.slane %v6342, %v6422
    %v6424 = vlaneseq
    %v6425 = vshrl.u32 %v6424, 7
    %v6426 = vsub.s32 0, %v6425
    %v6427 = vrot.slane %v6366, %v6426
    %v6428 = vlaneseq
    %v6429 = vshrl.u32 %v6428, 7
    %v6430 = vsub.s32 0, %v6429
    %v6431 = vrot.slane %v6380, %v6430
    %v6432 = vlaneseq
    %v6433 = vshrl.u32 %v6432, 7
    %v6434 = vsub.s32 0, %v6433
    %v6435 = vrot.slane %v6388, %v6434
    %v6436 = vlaneseq
    %v6437 = vshrl.u32 %v6436, 7
    %v6438 = vsub.s32 0, %v6437
    %v6439 = vrot.slane %v6390, %v6438
    %v6440 = vlaneseq
    %v6441 = vshrl.u32 %v6440, 7
    %v6442 = vsub.s32 0, %v6441
    %v6443 = vrot.slane %v6373, %v6442
    %v6444 = vlaneseq
    %v6445 = vshrl.u32 %v6444, 7
    %v6446 = vsub.s32 0, %v6445
    %v6447 = vrot.slane %v6387, %v6446
    %v6448 = vlaneseq
    %v6449 = vshrl.u32 %v6448, 7
    %v6450 = vsub.s32 0, %v6449
    %v6451 = vrot.slane %v6389, %v6450
    %v6452 = vlaneseq
    %v6453 = vshrl.u32 %v6452, 7
    %v6454 = vsub.s32 0, %v6453
    %v6455 = vrot.slane %v6391, %v6454
    %v6472 = vadd.f32 %v6151, %v6395
    %v6473 = vadd.f32 %v6158, %v6399
    %v6474 = vadd.f32 %v6165, %v6403
    %v6475 = vadd.f32 %v6172, %v6407
    %v6476 = vadd.f32 %v6179, %v6411
    %v6477 = vadd.f32 %v6186, %v6415
    %v6478 = vadd.f32 %v6193, %v6419
    %v6479 = vadd.f32 %v6200, %v6423
    %v6480 = vadd.f32 %v6207, %v6427
    %v6481 = vadd.f32 %v6214, %v6431
    %v6482 = vadd.f32 %v6221, %v6435
    %v6483 = vadd.f32 %v6228, %v6439
    %v6484 = vadd.f32 %v6235, %v6443
    %v6485 = vadd.f32 %v6242, %v6447
    %v6486 = vadd.f32 %v6249, %v6451
    %v6487 = vadd.f32 %v6256, %v6455
    %vm6488 = vcmp.gt.f32.partialorder %v6472, 0.0
    %vm6489 = vcmp.gt.f32.partialorder %v6473, 0.0
    %vm6490 = vcmp.gt.f32.partialorder %v6474, 0.0
    %vm6491 = vcmp.gt.f32.partialorder %v6475, 0.0
    %vm6492 = vcmp.gt.f32.partialorder %v6476, 0.0
    %vm6493 = vcmp.gt.f32.partialorder %v6477, 0.0
    %vm6494 = vcmp.gt.f32.partialorder %v6478, 0.0
    %vm6495 = vcmp.gt.f32.partialorder %v6479, 0.0
    %vm6496 = vcmp.gt.f32.partialorder %v6480, 0.0
    %vm6497 = vcmp.gt.f32.partialorder %v6481, 0.0
    %vm6498 = vcmp.gt.f32.partialorder %v6482, 0.0
    %vm6499 = vcmp.gt.f32.partialorder %v6483, 0.0
    %vm6500 = vcmp.gt.f32.partialorder %v6484, 0.0
    %vm6501 = vcmp.gt.f32.partialorder %v6485, 0.0
    %vm6502 = vcmp.gt.f32.partialorder %v6486, 0.0
    %vm6503 = vcmp.gt.f32.partialorder %v6487, 0.0
    %v6504 = vmul.f32 %v6472, 0.2
    %v6505 = vmul.f32 %v6473, 0.2
    %v6506 = vmul.f32 %v6474, 0.2
    %v6507 = vmul.f32 %v6475, 0.2
    %v6508 = vmul.f32 %v6476, 0.2
    %v6509 = vmul.f32 %v6477, 0.2
    %v6510 = vmul.f32 %v6478, 0.2
    %v6511 = vmul.f32 %v6479, 0.2
    %v6512 = vmul.f32 %v6480, 0.2
    %v6513 = vmul.f32 %v6481, 0.2
    %v6514 = vmul.f32 %v6482, 0.2
    %v6515 = vmul.f32 %v6483, 0.2
    %v6516 = vmul.f32 %v6484, 0.2
    %v6517 = vmul.f32 %v6485, 0.2
    %v6518 = vmul.f32 %v6486, 0.2
    %v6519 = vmul.f32 %v6487, 0.2
    %v6520 = vsel %vm6488, %v6472, %v6504
    %v6521 = vsel %vm6489, %v6473, %v6505
    %v6522 = vsel %vm6490, %v6474, %v6506
    %v6523 = vsel %vm6491, %v6475, %v6507
    %v6524 = vsel %vm6492, %v6476, %v6508
    %v6525 = vsel %vm6493, %v6477, %v6509
    %v6526 = vsel %vm6494, %v6478, %v6510
    %v6527 = vsel %vm6495, %v6479, %v6511
    %v6528 = vsel %vm6496, %v6480, %v6512
    %v6529 = vsel %vm6497, %v6481, %v6513
    %v6530 = vsel %vm6498, %v6482, %v6514
    %v6531 = vsel %vm6499, %v6483, %v6515
    %v6532 = vsel %vm6500, %v6484, %v6516
    %v6533 = vsel %vm6501, %v6485, %v6517
    %v6534 = vsel %vm6502, %v6486, %v6518
    %v6535 = vsel %vm6503, %v6487, %v6519
    %v6536 = vsel %vm148, 1, 0
    %vm6537 = vcmp.eq.s32.totalorder %v6536, 1
    %v6538 = vsel %vm6537, %v6520, -1e+30
    %v6539 = vsel %vm6537, %v6521, -1e+30
    %v6540 = vsel %vm6537, %v6522, -1e+30
    %v6541 = vsel %vm6537, %v6523, -1e+30
    %v6542 = vsel %vm6537, %v6524, -1e+30
    %v6543 = vsel %vm6537, %v6525, -1e+30
    %v6544 = vsel %vm6537, %v6526, -1e+30
    %v6545 = vsel %vm6537, %v6527, -1e+30
    %v6546 = vsel %vm6537, %v6528, -1e+30
    %v6547 = vsel %vm6537, %v6529, -1e+30
    %v6548 = vsel %vm6537, %v6530, -1e+30
    %v6549 = vsel %vm6537, %v6531, -1e+30
    %v6550 = vsel %vm6537, %v6532, -1e+30
    %v6551 = vsel %vm6537, %v6533, -1e+30
    %v6552 = vsel %vm6537, %v6534, -1e+30
    %v6553 = vsel %vm6537, %v6535, -1e+30
    %vm6554 = vcmask 33792
    %v6555 = vsel %vm6554, %v6538, -inf
    %6556 = vmax.xlane.f32.xlu0 %v6555
    %v6557 = vpop.xlane.xlu0 %6556
    %v6558 = vsel %vm6554, %v6539, -inf
    %6559 = vmax.xlane.f32.xlu0 %v6558
    %v6560 = vpop.xlane.xlu0 %6559
    %v6561 = vsel %vm6554, %v6540, -inf
    %6562 = vmax.xlane.f32.xlu0 %v6561
    %v6563 = vpop.xlane.xlu0 %6562
    %v6564 = vsel %vm6554, %v6541, -inf
    %6565 = vmax.xlane.f32.xlu0 %v6564
    %v6566 = vpop.xlane.xlu0 %6565
    %v6567 = vsel %vm6554, %v6542, -inf
    %6568 = vmax.xlane.f32.xlu0 %v6567
    %v6569 = vpop.xlane.xlu0 %6568
    %v6570 = vsel %vm6554, %v6543, -inf
    %6571 = vmax.xlane.f32.xlu0 %v6570
    %v6572 = vpop.xlane.xlu0 %6571
    %v6573 = vsel %vm6554, %v6544, -inf
    %6574 = vmax.xlane.f32.xlu0 %v6573
    %v6575 = vpop.xlane.xlu0 %6574
    %v6576 = vsel %vm6554, %v6545, -inf
    %6577 = vmax.xlane.f32.xlu0 %v6576
    %v6578 = vpop.xlane.xlu0 %6577
    %v6579 = vsel %vm6554, %v6546, -inf
    %6580 = vmax.xlane.f32.xlu0 %v6579
    %v6581 = vpop.xlane.xlu0 %6580
    %v6582 = vsel %vm6554, %v6547, -inf
    %6583 = vmax.xlane.f32.xlu0 %v6582
    %v6584 = vpop.xlane.xlu0 %6583
    %v6585 = vsel %vm6554, %v6548, -inf
    %6586 = vmax.xlane.f32.xlu0 %v6585
    %v6587 = vpop.xlane.xlu0 %6586
    %v6588 = vsel %vm6554, %v6549, -inf
    %6589 = vmax.xlane.f32.xlu0 %v6588
    %v6590 = vpop.xlane.xlu0 %6589
    %v6591 = vsel %vm6554, %v6550, -inf
    %6592 = vmax.xlane.f32.xlu0 %v6591
    %v6593 = vpop.xlane.xlu0 %6592
    %v6594 = vsel %vm6554, %v6551, -inf
    %6595 = vmax.xlane.f32.xlu0 %v6594
    %v6596 = vpop.xlane.xlu0 %6595
    %v6597 = vsel %vm6554, %v6552, -inf
    %6598 = vmax.xlane.f32.xlu0 %v6597
    %v6599 = vpop.xlane.xlu0 %6598
    %v6600 = vsel %vm6554, %v6553, -inf
    %6601 = vmax.xlane.f32.xlu0 %v6600
    %v6602 = vpop.xlane.xlu0 %6601
    %v6603 = vsub.f32 %v6538, %v6557
    %v6604 = vsub.f32 %v6539, %v6560
    %v6605 = vsub.f32 %v6540, %v6563
    %v6606 = vsub.f32 %v6541, %v6566
    %v6607 = vsub.f32 %v6542, %v6569
    %v6608 = vsub.f32 %v6543, %v6572
    %v6609 = vsub.f32 %v6544, %v6575
    %v6610 = vsub.f32 %v6545, %v6578
    %v6611 = vsub.f32 %v6546, %v6581
    %v6612 = vsub.f32 %v6547, %v6584
    %v6613 = vsub.f32 %v6548, %v6587
    %v6614 = vsub.f32 %v6549, %v6590
    %v6615 = vsub.f32 %v6550, %v6593
    %v6616 = vsub.f32 %v6551, %v6596
    %v6617 = vsub.f32 %v6552, %v6599
    %v6618 = vsub.f32 %v6553, %v6602
    %v6619 = vmul.f32 %v6603, 1.442695
    %v6620 = vpow.pop %v6619
    %v6621 = vmul.f32 %v6604, 1.442695
    %v6622 = vpow.pop %v6621
    %v6623 = vmul.f32 %v6605, 1.442695
    %v6624 = vpow.pop %v6623
    %v6625 = vmul.f32 %v6606, 1.442695
    %v6626 = vpow.pop %v6625
    %v6627 = vmul.f32 %v6607, 1.442695
    %v6628 = vpow.pop %v6627
    %v6629 = vmul.f32 %v6608, 1.442695
    %v6630 = vpow.pop %v6629
    %v6631 = vmul.f32 %v6609, 1.442695
    %v6632 = vpow.pop %v6631
    %v6633 = vmul.f32 %v6610, 1.442695
    %v6634 = vpow.pop %v6633
    %v6635 = vmul.f32 %v6611, 1.442695
    %v6636 = vpow.pop %v6635
    %v6637 = vmul.f32 %v6612, 1.442695
    %v6638 = vpow.pop %v6637
    %v6639 = vmul.f32 %v6613, 1.442695
    %v6640 = vpow.pop %v6639
    %v6641 = vmul.f32 %v6614, 1.442695
    %v6642 = vpow.pop %v6641
    %v6643 = vmul.f32 %v6615, 1.442695
    %v6644 = vpow.pop %v6643
    %v6645 = vmul.f32 %v6616, 1.442695
    %v6646 = vpow.pop %v6645
    %v6647 = vmul.f32 %v6617, 1.442695
    %v6648 = vpow.pop %v6647
    %v6649 = vmul.f32 %v6618, 1.442695
    %v6650 = vpow.pop %v6649
    %v6651 = vsel %vm6537, %v6620, 0.0
    %v6652 = vsel %vm6537, %v6622, 0.0
    %v6653 = vsel %vm6537, %v6624, 0.0
    %v6654 = vsel %vm6537, %v6626, 0.0
    %v6655 = vsel %vm6537, %v6628, 0.0
    %v6656 = vsel %vm6537, %v6630, 0.0
    %v6657 = vsel %vm6537, %v6632, 0.0
    %v6658 = vsel %vm6537, %v6634, 0.0
    %v6659 = vsel %vm6537, %v6636, 0.0
    %v6660 = vsel %vm6537, %v6638, 0.0
    %v6661 = vsel %vm6537, %v6640, 0.0
    %v6662 = vsel %vm6537, %v6642, 0.0
    %v6663 = vsel %vm6537, %v6644, 0.0
    %v6664 = vsel %vm6537, %v6646, 0.0
    %v6665 = vsel %vm6537, %v6648, 0.0
    %v6666 = vsel %vm6537, %v6650, 0.0
    %v6667 = vsel %vm6554, %v6651, 0.0
    %6668 = vadd.xlane.f32.xlu0 %v6667
    %v6669 = vpop.xlane.xlu0 %6668
    %v6670 = vsel %vm6554, %v6652, 0.0
    %6671 = vadd.xlane.f32.xlu0 %v6670
    %v6672 = vpop.xlane.xlu0 %6671
    %v6673 = vsel %vm6554, %v6653, 0.0
    %6674 = vadd.xlane.f32.xlu0 %v6673
    %v6675 = vpop.xlane.xlu0 %6674
    %v6676 = vsel %vm6554, %v6654, 0.0
    %6677 = vadd.xlane.f32.xlu0 %v6676
    %v6678 = vpop.xlane.xlu0 %6677
    %v6679 = vsel %vm6554, %v6655, 0.0
    %6680 = vadd.xlane.f32.xlu0 %v6679
    %v6681 = vpop.xlane.xlu0 %6680
    %v6682 = vsel %vm6554, %v6656, 0.0
    %6683 = vadd.xlane.f32.xlu0 %v6682
    %v6684 = vpop.xlane.xlu0 %6683
    %v6685 = vsel %vm6554, %v6657, 0.0
    %6686 = vadd.xlane.f32.xlu0 %v6685
    %v6687 = vpop.xlane.xlu0 %6686
    %v6688 = vsel %vm6554, %v6658, 0.0
    %6689 = vadd.xlane.f32.xlu0 %v6688
    %v6690 = vpop.xlane.xlu0 %6689
    %v6691 = vsel %vm6554, %v6659, 0.0
    %6692 = vadd.xlane.f32.xlu0 %v6691
    %v6693 = vpop.xlane.xlu0 %6692
    %v6694 = vsel %vm6554, %v6660, 0.0
    %6695 = vadd.xlane.f32.xlu0 %v6694
    %v6696 = vpop.xlane.xlu0 %6695
    %v6697 = vsel %vm6554, %v6661, 0.0
    %6698 = vadd.xlane.f32.xlu0 %v6697
    %v6699 = vpop.xlane.xlu0 %6698
    %v6700 = vsel %vm6554, %v6662, 0.0
    %6701 = vadd.xlane.f32.xlu0 %v6700
    %v6702 = vpop.xlane.xlu0 %6701
    %v6703 = vsel %vm6554, %v6663, 0.0
    %6704 = vadd.xlane.f32.xlu0 %v6703
    %v6705 = vpop.xlane.xlu0 %6704
    %v6706 = vsel %vm6554, %v6664, 0.0
    %6707 = vadd.xlane.f32.xlu0 %v6706
    %v6708 = vpop.xlane.xlu0 %6707
    %v6709 = vsel %vm6554, %v6665, 0.0
    %6710 = vadd.xlane.f32.xlu0 %v6709
    %v6711 = vpop.xlane.xlu0 %6710
    %v6712 = vsel %vm6554, %v6666, 0.0
    %6713 = vadd.xlane.f32.xlu0 %v6712
    %v6714 = vpop.xlane.xlu0 %6713
    %v6715 = vmax.f32 %v6669, 1e-20
    %v6716 = vmax.f32 %v6672, 1e-20
    %v6717 = vmax.f32 %v6675, 1e-20
    %v6718 = vmax.f32 %v6678, 1e-20
    %v6719 = vmax.f32 %v6681, 1e-20
    %v6720 = vmax.f32 %v6684, 1e-20
    %v6721 = vmax.f32 %v6687, 1e-20
    %v6722 = vmax.f32 %v6690, 1e-20
    %v6723 = vmax.f32 %v6693, 1e-20
    %v6724 = vmax.f32 %v6696, 1e-20
    %v6725 = vmax.f32 %v6699, 1e-20
    %v6726 = vmax.f32 %v6702, 1e-20
    %v6727 = vmax.f32 %v6705, 1e-20
    %v6728 = vmax.f32 %v6708, 1e-20
    %v6729 = vmax.f32 %v6711, 1e-20
    %v6730 = vmax.f32 %v6714, 1e-20
    %v6731 = vrcp.pop %v6715
    %v6732 = vrcp.pop %v6716
    %v6733 = vrcp.pop %v6717
    %v6734 = vrcp.pop %v6718
    %v6735 = vrcp.pop %v6719
    %v6736 = vrcp.pop %v6720
    %v6737 = vrcp.pop %v6721
    %v6738 = vrcp.pop %v6722
    %v6739 = vrcp.pop %v6723
    %v6740 = vrcp.pop %v6724
    %v6741 = vrcp.pop %v6725
    %v6742 = vrcp.pop %v6726
    %v6743 = vrcp.pop %v6727
    %v6744 = vrcp.pop %v6728
    %v6745 = vrcp.pop %v6729
    %v6746 = vrcp.pop %v6730
    %v6747 = vmul.f32 %v6651, %v6731
    %v6748 = vmul.f32 %v6652, %v6732
    %v6749 = vmul.f32 %v6653, %v6733
    %v6750 = vmul.f32 %v6654, %v6734
    %v6751 = vmul.f32 %v6655, %v6735
    %v6752 = vmul.f32 %v6656, %v6736
    %v6753 = vmul.f32 %v6657, %v6737
    %v6754 = vmul.f32 %v6658, %v6738
    %v6755 = vmul.f32 %v6659, %v6739
    %v6756 = vmul.f32 %v6660, %v6740
    %v6757 = vmul.f32 %v6661, %v6741
    %v6758 = vmul.f32 %v6662, %v6742
    %v6759 = vmul.f32 %v6663, %v6743
    %v6760 = vmul.f32 %v6664, %v6744
    %v6761 = vmul.f32 %v6665, %v6745
    %v6762 = vmul.f32 %v6666, %v6746
    %v6763 = vmul.f32 %v2174, %v559
    %v6765 = vsel %vm4861, %v6747, 0
    %v6768 = vsel %vm4865, %v6763, 0
    %6770 = vmatprep.subr.mxu0 0.0
    %6771 = vmatpush1.msra.mxu0 %v6768
    %6772 = vmatprep.subr.mxu0 0.0
    %6773 = vmatpush1.msra.mxu0 0.0
    %6774 = vmatprep.subr.mxu0 0.0
    %6775 = vmatpush1.msra.mxu0 0.0
    %6776 = vmatprep.subr.mxu0 0.0
    %6777 = vmatpush1.msra.mxu0 0.0
    %6778 = vmatprep.subr.mxu0 0.0
    %6779 = vmatpush1.msra.mxu0 0.0
    %6780 = vmatprep.subr.mxu0 0.0
    %6781 = vmatpush1.msra.mxu0 0.0
    %6782 = vmatprep.subr.mxu0 0.0
    %6783 = vmatpush1.msra.mxu0 0.0
    %6784 = vmatprep.subr.mxu0 0.0
    %6785 = vmatpush1.msra.mxu0 0.0
    %6786 = vmatprep.subr.mxu0 0.0
    %6787 = vmatpush1.msra.mxu0 0.0
    %6788 = vmatprep.subr.mxu0 0.0
    %6789 = vmatpush1.msra.mxu0 0.0
    %6790 = vmatprep.subr.mxu0 0.0
    %6791 = vmatpush1.msra.mxu0 0.0
    %6792 = vmatprep.subr.mxu0 0.0
    %6793 = vmatpush1.msra.mxu0 0.0
    %6794 = vmatprep.subr.mxu0 0.0
    %6795 = vmatpush1.msra.mxu0 0.0
    %6796 = vmatprep.subr.mxu0 0.0
    %6797 = vmatpush1.msra.mxu0 0.0
    %6798 = vmatprep.subr.mxu0 0.0
    %6799 = vmatpush1.msra.mxu0 0.0
    %6800 = vmatprep.subr.mxu0 0.0
    %6801 = vmatpush1.msra.mxu0 0.0
    %6802 = vmatprep.subr.mxu0 0.0
    %6803 = vmatpush1.msra.mxu0 0.0
    %6804 = vmatprep.subr.mxu0 0.0
    %6805 = vmatpush1.msra.mxu0 0.0
    %6806 = vmatprep.subr.mxu0 0.0
    %6807 = vmatpush1.msra.mxu0 0.0
    %6808 = vmatprep.subr.mxu0 0.0
    %6809 = vmatpush1.msra.mxu0 0.0
    %6810 = vmatprep.subr.mxu0 0.0
    %6811 = vmatpush1.msra.mxu0 0.0
    %6812 = vmatprep.subr.mxu0 0.0
    %6813 = vmatpush1.msra.mxu0 0.0
    %6814 = vmatprep.subr.mxu0 0.0
    %6815 = vmatpush1.msra.mxu0 0.0
    %6816 = vmatprep.subr.mxu0 0.0
    %6817 = vmatpush1.msra.mxu0 0.0
    %6818 = vmatprep.subr.mxu0 0.0
    %6819 = vmatpush1.msra.mxu0 0.0
    %6820 = vmatprep.subr.mxu0 0.0
    %6821 = vmatpush1.msra.mxu0 0.0
    %6822 = vmatprep.subr.mxu0 0.0
    %6823 = vmatpush1.msra.mxu0 0.0
    %6824 = vmatprep.subr.mxu0 0.0
    %6825 = vmatpush1.msra.mxu0 0.0
    %6826 = vmatprep.subr.mxu0 0.0
    %6827 = vmatpush1.msra.mxu0 0.0
    %6828 = vmatprep.subr.mxu0 0.0
    %6829 = vmatpush1.msra.mxu0 0.0
    %6830 = vmatprep.subr.mxu0 0.0
    %6831 = vmatpush1.msra.mxu0 0.0
    %6832 = vmatprep.subr.mxu0 0.0
    %6833 = vmatpush1.msra.mxu0 0.0
    %6834 = vmatprep.mubr.f32.mxu0 0.0
    %6835 = vmatmul.mubr.f32.gmra.mrb[0].mxu0 %v6765
    %v6836 = vpop.f32.mrb[0].mxu0
    %v6837 = vadd.f32 0.0, %v6836
    %v6838 = vpop.f32.mrb[0].mxu0
    %6839 = vdwg.mxu0
    %v6840 = vadd.f32 %v4208, %v6837
    %v6841 = vmul.f32 %v2174, %v644
    %v6843 = vsel %vm4861, %v6748, 0
    %v6846 = vsel %vm4865, %v6841, 0
    %6848 = vmatprep.subr.mxu0 0.0
    %6849 = vmatpush1.msra.mxu0 %v6846
    %6850 = vmatprep.subr.mxu0 0.0
    %6851 = vmatpush1.msra.mxu0 0.0
    %6852 = vmatprep.subr.mxu0 0.0
    %6853 = vmatpush1.msra.mxu0 0.0
    %6854 = vmatprep.subr.mxu0 0.0
    %6855 = vmatpush1.msra.mxu0 0.0
    %6856 = vmatprep.subr.mxu0 0.0
    %6857 = vmatpush1.msra.mxu0 0.0
    %6858 = vmatprep.subr.mxu0 0.0
    %6859 = vmatpush1.msra.mxu0 0.0
    %6860 = vmatprep.subr.mxu0 0.0
    %6861 = vmatpush1.msra.mxu0 0.0
    %6862 = vmatprep.subr.mxu0 0.0
    %6863 = vmatpush1.msra.mxu0 0.0
    %6864 = vmatprep.subr.mxu0 0.0
    %6865 = vmatpush1.msra.mxu0 0.0
    %6866 = vmatprep.subr.mxu0 0.0
    %6867 = vmatpush1.msra.mxu0 0.0
    %6868 = vmatprep.subr.mxu0 0.0
    %6869 = vmatpush1.msra.mxu0 0.0
    %6870 = vmatprep.subr.mxu0 0.0
    %6871 = vmatpush1.msra.mxu0 0.0
    %6872 = vmatprep.subr.mxu0 0.0
    %6873 = vmatpush1.msra.mxu0 0.0
    %6874 = vmatprep.subr.mxu0 0.0
    %6875 = vmatpush1.msra.mxu0 0.0
    %6876 = vmatprep.subr.mxu0 0.0
    %6877 = vmatpush1.msra.mxu0 0.0
    %6878 = vmatprep.subr.mxu0 0.0
    %6879 = vmatpush1.msra.mxu0 0.0
    %6880 = vmatprep.subr.mxu0 0.0
    %6881 = vmatpush1.msra.mxu0 0.0
    %6882 = vmatprep.subr.mxu0 0.0
    %6883 = vmatpush1.msra.mxu0 0.0
    %6884 = vmatprep.subr.mxu0 0.0
    %6885 = vmatpush1.msra.mxu0 0.0
    %6886 = vmatprep.subr.mxu0 0.0
    %6887 = vmatpush1.msra.mxu0 0.0
    %6888 = vmatprep.subr.mxu0 0.0
    %6889 = vmatpush1.msra.mxu0 0.0
    %6890 = vmatprep.subr.mxu0 0.0
    %6891 = vmatpush1.msra.mxu0 0.0
    %6892 = vmatprep.subr.mxu0 0.0
    %6893 = vmatpush1.msra.mxu0 0.0
    %6894 = vmatprep.subr.mxu0 0.0
    %6895 = vmatpush1.msra.mxu0 0.0
    %6896 = vmatprep.subr.mxu0 0.0
    %6897 = vmatpush1.msra.mxu0 0.0
    %6898 = vmatprep.subr.mxu0 0.0
    %6899 = vmatpush1.msra.mxu0 0.0
    %6900 = vmatprep.subr.mxu0 0.0
    %6901 = vmatpush1.msra.mxu0 0.0
    %6902 = vmatprep.subr.mxu0 0.0
    %6903 = vmatpush1.msra.mxu0 0.0
    %6904 = vmatprep.subr.mxu0 0.0
    %6905 = vmatpush1.msra.mxu0 0.0
    %6906 = vmatprep.subr.mxu0 0.0
    %6907 = vmatpush1.msra.mxu0 0.0
    %6908 = vmatprep.subr.mxu0 0.0
    %6909 = vmatpush1.msra.mxu0 0.0
    %6910 = vmatprep.subr.mxu0 0.0
    %6911 = vmatpush1.msra.mxu0 0.0
    %6912 = vmatprep.mubr.f32.mxu0 0.0
    %6913 = vmatmul.mubr.f32.gmra.mrb[0].mxu0 %v6843
    %v6914 = vpop.f32.mrb[0].mxu0
    %v6915 = vadd.f32 0.0, %v6914
    %v6916 = vpop.f32.mrb[0].mxu0
    %6917 = vdwg.mxu0
    %v6918 = vadd.f32 %v6840, %v6915
    %v6919 = vmul.f32 %v2174, %v727
    %v6921 = vsel %vm4861, %v6749, 0
    %v6924 = vsel %vm4865, %v6919, 0
    %6926 = vmatprep.subr.mxu0 0.0
    %6927 = vmatpush1.msra.mxu0 %v6924
    %6928 = vmatprep.subr.mxu0 0.0
    %6929 = vmatpush1.msra.mxu0 0.0
    %6930 = vmatprep.subr.mxu0 0.0
    %6931 = vmatpush1.msra.mxu0 0.0
    %6932 = vmatprep.subr.mxu0 0.0
    %6933 = vmatpush1.msra.mxu0 0.0
    %6934 = vmatprep.subr.mxu0 0.0
    %6935 = vmatpush1.msra.mxu0 0.0
    %6936 = vmatprep.subr.mxu0 0.0
    %6937 = vmatpush1.msra.mxu0 0.0
    %6938 = vmatprep.subr.mxu0 0.0
    %6939 = vmatpush1.msra.mxu0 0.0
    %6940 = vmatprep.subr.mxu0 0.0
    %6941 = vmatpush1.msra.mxu0 0.0
    %6942 = vmatprep.subr.mxu0 0.0
    %6943 = vmatpush1.msra.mxu0 0.0
    %6944 = vmatprep.subr.mxu0 0.0
    %6945 = vmatpush1.msra.mxu0 0.0
    %6946 = vmatprep.subr.mxu0 0.0
    %6947 = vmatpush1.msra.mxu0 0.0
    %6948 = vmatprep.subr.mxu0 0.0
    %6949 = vmatpush1.msra.mxu0 0.0
    %6950 = vmatprep.subr.mxu0 0.0
    %6951 = vmatpush1.msra.mxu0 0.0
    %6952 = vmatprep.subr.mxu0 0.0
    %6953 = vmatpush1.msra.mxu0 0.0
    %6954 = vmatprep.subr.mxu0 0.0
    %6955 = vmatpush1.msra.mxu0 0.0
    %6956 = vmatprep.subr.mxu0 0.0
    %6957 = vmatpush1.msra.mxu0 0.0
    %6958 = vmatprep.subr.mxu0 0.0
    %6959 = vmatpush1.msra.mxu0 0.0
    %6960 = vmatprep.subr.mxu0 0.0
    %6961 = vmatpush1.msra.mxu0 0.0
    %6962 = vmatprep.subr.mxu0 0.0
    %6963 = vmatpush1.msra.mxu0 0.0
    %6964 = vmatprep.subr.mxu0 0.0
    %6965 = vmatpush1.msra.mxu0 0.0
    %6966 = vmatprep.subr.mxu0 0.0
    %6967 = vmatpush1.msra.mxu0 0.0
    %6968 = vmatprep.subr.mxu0 0.0
    %6969 = vmatpush1.msra.mxu0 0.0
    %6970 = vmatprep.subr.mxu0 0.0
    %6971 = vmatpush1.msra.mxu0 0.0
    %6972 = vmatprep.subr.mxu0 0.0
    %6973 = vmatpush1.msra.mxu0 0.0
    %6974 = vmatprep.subr.mxu0 0.0
    %6975 = vmatpush1.msra.mxu0 0.0
    %6976 = vmatprep.subr.mxu0 0.0
    %6977 = vmatpush1.msra.mxu0 0.0
    %6978 = vmatprep.subr.mxu0 0.0
    %6979 = vmatpush1.msra.mxu0 0.0
    %6980 = vmatprep.subr.mxu0 0.0
    %6981 = vmatpush1.msra.mxu0 0.0
    %6982 = vmatprep.subr.mxu0 0.0
    %6983 = vmatpush1.msra.mxu0 0.0
    %6984 = vmatprep.subr.mxu0 0.0
    %6985 = vmatpush1.msra.mxu0 0.0
    %6986 = vmatprep.subr.mxu0 0.0
    %6987 = vmatpush1.msra.mxu0 0.0
    %6988 = vmatprep.subr.mxu0 0.0
    %6989 = vmatpush1.msra.mxu0 0.0
    %6990 = vmatprep.mubr.f32.mxu0 0.0
    %6991 = vmatmul.mubr.f32.gmra.mrb[0].mxu0 %v6921
    %v6992 = vpop.f32.mrb[0].mxu0
    %v6993 = vadd.f32 0.0, %v6992
    %v6994 = vpop.f32.mrb[0].mxu0
    %6995 = vdwg.mxu0
    %v6996 = vadd.f32 %v6918, %v6993
    %v6997 = vmul.f32 %v2174, %v810
    %v6999 = vsel %vm4861, %v6750, 0
    %v7002 = vsel %vm4865, %v6997, 0
    %7004 = vmatprep.subr.mxu0 0.0
    %7005 = vmatpush1.msra.mxu0 %v7002
    %7006 = vmatprep.subr.mxu0 0.0
    %7007 = vmatpush1.msra.mxu0 0.0
    %7008 = vmatprep.subr.mxu0 0.0
    %7009 = vmatpush1.msra.mxu0 0.0
    %7010 = vmatprep.subr.mxu0 0.0
    %7011 = vmatpush1.msra.mxu0 0.0
    %7012 = vmatprep.subr.mxu0 0.0
    %7013 = vmatpush1.msra.mxu0 0.0
    %7014 = vmatprep.subr.mxu0 0.0
    %7015 = vmatpush1.msra.mxu0 0.0
    %7016 = vmatprep.subr.mxu0 0.0
    %7017 = vmatpush1.msra.mxu0 0.0
    %7018 = vmatprep.subr.mxu0 0.0
    %7019 = vmatpush1.msra.mxu0 0.0
    %7020 = vmatprep.subr.mxu0 0.0
    %7021 = vmatpush1.msra.mxu0 0.0
    %7022 = vmatprep.subr.mxu0 0.0
    %7023 = vmatpush1.msra.mxu0 0.0
    %7024 = vmatprep.subr.mxu0 0.0
    %7025 = vmatpush1.msra.mxu0 0.0
    %7026 = vmatprep.subr.mxu0 0.0
    %7027 = vmatpush1.msra.mxu0 0.0
    %7028 = vmatprep.subr.mxu0 0.0
    %7029 = vmatpush1.msra.mxu0 0.0
    %7030 = vmatprep.subr.mxu0 0.0
    %7031 = vmatpush1.msra.mxu0 0.0
    %7032 = vmatprep.subr.mxu0 0.0
    %7033 = vmatpush1.msra.mxu0 0.0
    %7034 = vmatprep.subr.mxu0 0.0
    %7035 = vmatpush1.msra.mxu0 0.0
    %7036 = vmatprep.subr.mxu0 0.0
    %7037 = vmatpush1.msra.mxu0 0.0
    %7038 = vmatprep.subr.mxu0 0.0
    %7039 = vmatpush1.msra.mxu0 0.0
    %7040 = vmatprep.subr.mxu0 0.0
    %7041 = vmatpush1.msra.mxu0 0.0
    %7042 = vmatprep.subr.mxu0 0.0
    %7043 = vmatpush1.msra.mxu0 0.0
    %7044 = vmatprep.subr.mxu0 0.0
    %7045 = vmatpush1.msra.mxu0 0.0
    %7046 = vmatprep.subr.mxu0 0.0
    %7047 = vmatpush1.msra.mxu0 0.0
    %7048 = vmatprep.subr.mxu0 0.0
    %7049 = vmatpush1.msra.mxu0 0.0
    %7050 = vmatprep.subr.mxu0 0.0
    %7051 = vmatpush1.msra.mxu0 0.0
    %7052 = vmatprep.subr.mxu0 0.0
    %7053 = vmatpush1.msra.mxu0 0.0
    %7054 = vmatprep.subr.mxu0 0.0
    %7055 = vmatpush1.msra.mxu0 0.0
    %7056 = vmatprep.subr.mxu0 0.0
    %7057 = vmatpush1.msra.mxu0 0.0
    %7058 = vmatprep.subr.mxu0 0.0
    %7059 = vmatpush1.msra.mxu0 0.0
    %7060 = vmatprep.subr.mxu0 0.0
    %7061 = vmatpush1.msra.mxu0 0.0
    %7062 = vmatprep.subr.mxu0 0.0
    %7063 = vmatpush1.msra.mxu0 0.0
    %7064 = vmatprep.subr.mxu0 0.0
    %7065 = vmatpush1.msra.mxu0 0.0
    %7066 = vmatprep.subr.mxu0 0.0
    %7067 = vmatpush1.msra.mxu0 0.0
    %7068 = vmatprep.mubr.f32.mxu0 0.0
    %7069 = vmatmul.mubr.f32.gmra.mrb[0].mxu0 %v6999
    %v7070 = vpop.f32.mrb[0].mxu0
    %v7071 = vadd.f32 0.0, %v7070
    %v7072 = vpop.f32.mrb[0].mxu0
    %7073 = vdwg.mxu0
    %v7074 = vadd.f32 %v6996, %v7071
    %v7075 = vmul.f32 %v2174, %v3228
    %v7077 = vsel %vm4861, %v6751, 0
    %v7080 = vsel %vm4865, %v7075, 0
    %7082 = vmatprep.subr.mxu0 0.0
    %7083 = vmatpush1.msra.mxu0 %v7080
    %7084 = vmatprep.subr.mxu0 0.0
    %7085 = vmatpush1.msra.mxu0 0.0
    %7086 = vmatprep.subr.mxu0 0.0
    %7087 = vmatpush1.msra.mxu0 0.0
    %7088 = vmatprep.subr.mxu0 0.0
    %7089 = vmatpush1.msra.mxu0 0.0
    %7090 = vmatprep.subr.mxu0 0.0
    %7091 = vmatpush1.msra.mxu0 0.0
    %7092 = vmatprep.subr.mxu0 0.0
    %7093 = vmatpush1.msra.mxu0 0.0
    %7094 = vmatprep.subr.mxu0 0.0
    %7095 = vmatpush1.msra.mxu0 0.0
    %7096 = vmatprep.subr.mxu0 0.0
    %7097 = vmatpush1.msra.mxu0 0.0
    %7098 = vmatprep.subr.mxu0 0.0
    %7099 = vmatpush1.msra.mxu0 0.0
    %7100 = vmatprep.subr.mxu0 0.0
    %7101 = vmatpush1.msra.mxu0 0.0
    %7102 = vmatprep.subr.mxu0 0.0
    %7103 = vmatpush1.msra.mxu0 0.0
    %7104 = vmatprep.subr.mxu0 0.0
    %7105 = vmatpush1.msra.mxu0 0.0
    %7106 = vmatprep.subr.mxu0 0.0
    %7107 = vmatpush1.msra.mxu0 0.0
    %7108 = vmatprep.subr.mxu0 0.0
    %7109 = vmatpush1.msra.mxu0 0.0
    %7110 = vmatprep.subr.mxu0 0.0
    %7111 = vmatpush1.msra.mxu0 0.0
    %7112 = vmatprep.subr.mxu0 0.0
    %7113 = vmatpush1.msra.mxu0 0.0
    %7114 = vmatprep.subr.mxu0 0.0
    %7115 = vmatpush1.msra.mxu0 0.0
    %7116 = vmatprep.subr.mxu0 0.0
    %7117 = vmatpush1.msra.mxu0 0.0
    %7118 = vmatprep.subr.mxu0 0.0
    %7119 = vmatpush1.msra.mxu0 0.0
    %7120 = vmatprep.subr.mxu0 0.0
    %7121 = vmatpush1.msra.mxu0 0.0
    %7122 = vmatprep.subr.mxu0 0.0
    %7123 = vmatpush1.msra.mxu0 0.0
    %7124 = vmatprep.subr.mxu0 0.0
    %7125 = vmatpush1.msra.mxu0 0.0
    %7126 = vmatprep.subr.mxu0 0.0
    %7127 = vmatpush1.msra.mxu0 0.0
    %7128 = vmatprep.subr.mxu0 0.0
    %7129 = vmatpush1.msra.mxu0 0.0
    %7130 = vmatprep.subr.mxu0 0.0
    %7131 = vmatpush1.msra.mxu0 0.0
    %7132 = vmatprep.subr.mxu0 0.0
    %7133 = vmatpush1.msra.mxu0 0.0
    %7134 = vmatprep.subr.mxu0 0.0
    %7135 = vmatpush1.msra.mxu0 0.0
    %7136 = vmatprep.subr.mxu0 0.0
    %7137 = vmatpush1.msra.mxu0 0.0
    %7138 = vmatprep.subr.mxu0 0.0
    %7139 = vmatpush1.msra.mxu0 0.0
    %7140 = vmatprep.subr.mxu0 0.0
    %7141 = vmatpush1.msra.mxu0 0.0
    %7142 = vmatprep.subr.mxu0 0.0
    %7143 = vmatpush1.msra.mxu0 0.0
    %7144 = vmatprep.subr.mxu0 0.0
    %7145 = vmatpush1.msra.mxu0 0.0
    %7146 = vmatprep.mubr.f32.mxu0 0.0
    %7147 = vmatmul.mubr.f32.gmra.mrb[0].mxu0 %v7077
    %v7148 = vpop.f32.mrb[0].mxu0
    %v7149 = vadd.f32 0.0, %v7148
    %v7150 = vpop.f32.mrb[0].mxu0
    %7151 = vdwg.mxu0
    %v7152 = vadd.f32 %v7074, %v7149
    %v7153 = vmul.f32 %v2174, %v3310
    %v7155 = vsel %vm4861, %v6752, 0
    %v7158 = vsel %vm4865, %v7153, 0
    %7160 = vmatprep.subr.mxu0 0.0
    %7161 = vmatpush1.msra.mxu0 %v7158
    %7162 = vmatprep.subr.mxu0 0.0
    %7163 = vmatpush1.msra.mxu0 0.0
    %7164 = vmatprep.subr.mxu0 0.0
    %7165 = vmatpush1.msra.mxu0 0.0
    %7166 = vmatprep.subr.mxu0 0.0
    %7167 = vmatpush1.msra.mxu0 0.0
    %7168 = vmatprep.subr.mxu0 0.0
    %7169 = vmatpush1.msra.mxu0 0.0
    %7170 = vmatprep.subr.mxu0 0.0
    %7171 = vmatpush1.msra.mxu0 0.0
    %7172 = vmatprep.subr.mxu0 0.0
    %7173 = vmatpush1.msra.mxu0 0.0
    %7174 = vmatprep.subr.mxu0 0.0
    %7175 = vmatpush1.msra.mxu0 0.0
    %7176 = vmatprep.subr.mxu0 0.0
    %7177 = vmatpush1.msra.mxu0 0.0
    %7178 = vmatprep.subr.mxu0 0.0
    %7179 = vmatpush1.msra.mxu0 0.0
    %7180 = vmatprep.subr.mxu0 0.0
    %7181 = vmatpush1.msra.mxu0 0.0
    %7182 = vmatprep.subr.mxu0 0.0
    %7183 = vmatpush1.msra.mxu0 0.0
    %7184 = vmatprep.subr.mxu0 0.0
    %7185 = vmatpush1.msra.mxu0 0.0
    %7186 = vmatprep.subr.mxu0 0.0
    %7187 = vmatpush1.msra.mxu0 0.0
    %7188 = vmatprep.subr.mxu0 0.0
    %7189 = vmatpush1.msra.mxu0 0.0
    %7190 = vmatprep.subr.mxu0 0.0
    %7191 = vmatpush1.msra.mxu0 0.0
    %7192 = vmatprep.subr.mxu0 0.0
    %7193 = vmatpush1.msra.mxu0 0.0
    %7194 = vmatprep.subr.mxu0 0.0
    %7195 = vmatpush1.msra.mxu0 0.0
    %7196 = vmatprep.subr.mxu0 0.0
    %7197 = vmatpush1.msra.mxu0 0.0
    %7198 = vmatprep.subr.mxu0 0.0
    %7199 = vmatpush1.msra.mxu0 0.0
    %7200 = vmatprep.subr.mxu0 0.0
    %7201 = vmatpush1.msra.mxu0 0.0
    %7202 = vmatprep.subr.mxu0 0.0
    %7203 = vmatpush1.msra.mxu0 0.0
    %7204 = vmatprep.subr.mxu0 0.0
    %7205 = vmatpush1.msra.mxu0 0.0
    %7206 = vmatprep.subr.mxu0 0.0
    %7207 = vmatpush1.msra.mxu0 0.0
    %7208 = vmatprep.subr.mxu0 0.0
    %7209 = vmatpush1.msra.mxu0 0.0
    %7210 = vmatprep.subr.mxu0 0.0
    %7211 = vmatpush1.msra.mxu0 0.0
    %7212 = vmatprep.subr.mxu0 0.0
    %7213 = vmatpush1.msra.mxu0 0.0
    %7214 = vmatprep.subr.mxu0 0.0
    %7215 = vmatpush1.msra.mxu0 0.0
    %7216 = vmatprep.subr.mxu0 0.0
    %7217 = vmatpush1.msra.mxu0 0.0
    %7218 = vmatprep.subr.mxu0 0.0
    %7219 = vmatpush1.msra.mxu0 0.0
    %7220 = vmatprep.subr.mxu0 0.0
    %7221 = vmatpush1.msra.mxu0 0.0
    %7222 = vmatprep.subr.mxu0 0.0
    %7223 = vmatpush1.msra.mxu0 0.0
    %7224 = vmatprep.mubr.f32.mxu0 0.0
    %7225 = vmatmul.mubr.f32.gmra.mrb[0].mxu0 %v7155
    %v7226 = vpop.f32.mrb[0].mxu0
    %v7227 = vadd.f32 0.0, %v7226
    %v7228 = vpop.f32.mrb[0].mxu0
    %7229 = vdwg.mxu0
    %v7230 = vadd.f32 %v7152, %v7227
    %v7231 = vmul.f32 %v2174, %v3392
    %v7233 = vsel %vm4861, %v6753, 0
    %v7236 = vsel %vm4865, %v7231, 0
    %7238 = vmatprep.subr.mxu0 0.0
    %7239 = vmatpush1.msra.mxu0 %v7236
    %7240 = vmatprep.subr.mxu0 0.0
    %7241 = vmatpush1.msra.mxu0 0.0
    %7242 = vmatprep.subr.mxu0 0.0
    %7243 = vmatpush1.msra.mxu0 0.0
    %7244 = vmatprep.subr.mxu0 0.0
    %7245 = vmatpush1.msra.mxu0 0.0
    %7246 = vmatprep.subr.mxu0 0.0
    %7247 = vmatpush1.msra.mxu0 0.0
    %7248 = vmatprep.subr.mxu0 0.0
    %7249 = vmatpush1.msra.mxu0 0.0
    %7250 = vmatprep.subr.mxu0 0.0
    %7251 = vmatpush1.msra.mxu0 0.0
    %7252 = vmatprep.subr.mxu0 0.0
    %7253 = vmatpush1.msra.mxu0 0.0
    %7254 = vmatprep.subr.mxu0 0.0
    %7255 = vmatpush1.msra.mxu0 0.0
    %7256 = vmatprep.subr.mxu0 0.0
    %7257 = vmatpush1.msra.mxu0 0.0
    %7258 = vmatprep.subr.mxu0 0.0
    %7259 = vmatpush1.msra.mxu0 0.0
    %7260 = vmatprep.subr.mxu0 0.0
    %7261 = vmatpush1.msra.mxu0 0.0
    %7262 = vmatprep.subr.mxu0 0.0
    %7263 = vmatpush1.msra.mxu0 0.0
    %7264 = vmatprep.subr.mxu0 0.0
    %7265 = vmatpush1.msra.mxu0 0.0
    %7266 = vmatprep.subr.mxu0 0.0
    %7267 = vmatpush1.msra.mxu0 0.0
    %7268 = vmatprep.subr.mxu0 0.0
    %7269 = vmatpush1.msra.mxu0 0.0
    %7270 = vmatprep.subr.mxu0 0.0
    %7271 = vmatpush1.msra.mxu0 0.0
    %7272 = vmatprep.subr.mxu0 0.0
    %7273 = vmatpush1.msra.mxu0 0.0
    %7274 = vmatprep.subr.mxu0 0.0
    %7275 = vmatpush1.msra.mxu0 0.0
    %7276 = vmatprep.subr.mxu0 0.0
    %7277 = vmatpush1.msra.mxu0 0.0
    %7278 = vmatprep.subr.mxu0 0.0
    %7279 = vmatpush1.msra.mxu0 0.0
    %7280 = vmatprep.subr.mxu0 0.0
    %7281 = vmatpush1.msra.mxu0 0.0
    %7282 = vmatprep.subr.mxu0 0.0
    %7283 = vmatpush1.msra.mxu0 0.0
    %7284 = vmatprep.subr.mxu0 0.0
    %7285 = vmatpush1.msra.mxu0 0.0
    %7286 = vmatprep.subr.mxu0 0.0
    %7287 = vmatpush1.msra.mxu0 0.0
    %7288 = vmatprep.subr.mxu0 0.0
    %7289 = vmatpush1.msra.mxu0 0.0
    %7290 = vmatprep.subr.mxu0 0.0
    %7291 = vmatpush1.msra.mxu0 0.0
    %7292 = vmatprep.subr.mxu0 0.0
    %7293 = vmatpush1.msra.mxu0 0.0
    %7294 = vmatprep.subr.mxu0 0.0
    %7295 = vmatpush1.msra.mxu0 0.0
    %7296 = vmatprep.subr.mxu0 0.0
    %7297 = vmatpush1.msra.mxu0 0.0
    %7298 = vmatprep.subr.mxu0 0.0
    %7299 = vmatpush1.msra.mxu0 0.0
    %7300 = vmatprep.subr.mxu0 0.0
    %7301 = vmatpush1.msra.mxu0 0.0
    %7302 = vmatprep.mubr.f32.mxu0 0.0
    %7303 = vmatmul.mubr.f32.gmra.mrb[0].mxu0 %v7233
    %v7304 = vpop.f32.mrb[0].mxu0
    %v7305 = vadd.f32 0.0, %v7304
    %v7306 = vpop.f32.mrb[0].mxu0
    %7307 = vdwg.mxu0
    %v7308 = vadd.f32 %v7230, %v7305
    %v7309 = vmul.f32 %v2174, %v3474
    %v7311 = vsel %vm4861, %v6754, 0
    %v7314 = vsel %vm4865, %v7309, 0
    %7316 = vmatprep.subr.mxu0 0.0
    %7317 = vmatpush1.msra.mxu0 %v7314
    %7318 = vmatprep.subr.mxu0 0.0
    %7319 = vmatpush1.msra.mxu0 0.0
    %7320 = vmatprep.subr.mxu0 0.0
    %7321 = vmatpush1.msra.mxu0 0.0
    %7322 = vmatprep.subr.mxu0 0.0
    %7323 = vmatpush1.msra.mxu0 0.0
    %7324 = vmatprep.subr.mxu0 0.0
    %7325 = vmatpush1.msra.mxu0 0.0
    %7326 = vmatprep.subr.mxu0 0.0
    %7327 = vmatpush1.msra.mxu0 0.0
    %7328 = vmatprep.subr.mxu0 0.0
    %7329 = vmatpush1.msra.mxu0 0.0
    %7330 = vmatprep.subr.mxu0 0.0
    %7331 = vmatpush1.msra.mxu0 0.0
    %7332 = vmatprep.subr.mxu0 0.0
    %7333 = vmatpush1.msra.mxu0 0.0
    %7334 = vmatprep.subr.mxu0 0.0
    %7335 = vmatpush1.msra.mxu0 0.0
    %7336 = vmatprep.subr.mxu0 0.0
    %7337 = vmatpush1.msra.mxu0 0.0
    %7338 = vmatprep.subr.mxu0 0.0
    %7339 = vmatpush1.msra.mxu0 0.0
    %7340 = vmatprep.subr.mxu0 0.0
    %7341 = vmatpush1.msra.mxu0 0.0
    %7342 = vmatprep.subr.mxu0 0.0
    %7343 = vmatpush1.msra.mxu0 0.0
    %7344 = vmatprep.subr.mxu0 0.0
    %7345 = vmatpush1.msra.mxu0 0.0
    %7346 = vmatprep.subr.mxu0 0.0
    %7347 = vmatpush1.msra.mxu0 0.0
    %7348 = vmatprep.subr.mxu0 0.0
    %7349 = vmatpush1.msra.mxu0 0.0
    %7350 = vmatprep.subr.mxu0 0.0
    %7351 = vmatpush1.msra.mxu0 0.0
    %7352 = vmatprep.subr.mxu0 0.0
    %7353 = vmatpush1.msra.mxu0 0.0
    %7354 = vmatprep.subr.mxu0 0.0
    %7355 = vmatpush1.msra.mxu0 0.0
    %7356 = vmatprep.subr.mxu0 0.0
    %7357 = vmatpush1.msra.mxu0 0.0
    %7358 = vmatprep.subr.mxu0 0.0
    %7359 = vmatpush1.msra.mxu0 0.0
    %7360 = vmatprep.subr.mxu0 0.0
    %7361 = vmatpush1.msra.mxu0 0.0
    %7362 = vmatprep.subr.mxu0 0.0
    %7363 = vmatpush1.msra.mxu0 0.0
    %7364 = vmatprep.subr.mxu0 0.0
    %7365 = vmatpush1.msra.mxu0 0.0
    %7366 = vmatprep.subr.mxu0 0.0
    %7367 = vmatpush1.msra.mxu0 0.0
    %7368 = vmatprep.subr.mxu0 0.0
    %7369 = vmatpush1.msra.mxu0 0.0
    %7370 = vmatprep.subr.mxu0 0.0
    %7371 = vmatpush1.msra.mxu0 0.0
    %7372 = vmatprep.subr.mxu0 0.0
    %7373 = vmatpush1.msra.mxu0 0.0
    %7374 = vmatprep.subr.mxu0 0.0
    %7375 = vmatpush1.msra.mxu0 0.0
    %7376 = vmatprep.subr.mxu0 0.0
    %7377 = vmatpush1.msra.mxu0 0.0
    %7378 = vmatprep.subr.mxu0 0.0
    %7379 = vmatpush1.msra.mxu0 0.0
    %7380 = vmatprep.mubr.f32.mxu0 0.0
    %7381 = vmatmul.mubr.f32.gmra.mrb[0].mxu0 %v7311
    %v7382 = vpop.f32.mrb[0].mxu0
    %v7383 = vadd.f32 0.0, %v7382
    %v7384 = vpop.f32.mrb[0].mxu0
    %7385 = vdwg.mxu0
    %v7386 = vadd.f32 %v7308, %v7383
    %v7387 = vmul.f32 %v2174, %v3556
    %v7389 = vsel %vm4861, %v6755, 0
    %v7392 = vsel %vm4865, %v7387, 0
    %7394 = vmatprep.subr.mxu0 0.0
    %7395 = vmatpush1.msra.mxu0 %v7392
    %7396 = vmatprep.subr.mxu0 0.0
    %7397 = vmatpush1.msra.mxu0 0.0
    %7398 = vmatprep.subr.mxu0 0.0
    %7399 = vmatpush1.msra.mxu0 0.0
    %7400 = vmatprep.subr.mxu0 0.0
    %7401 = vmatpush1.msra.mxu0 0.0
    %7402 = vmatprep.subr.mxu0 0.0
    %7403 = vmatpush1.msra.mxu0 0.0
    %7404 = vmatprep.subr.mxu0 0.0
    %7405 = vmatpush1.msra.mxu0 0.0
    %7406 = vmatprep.subr.mxu0 0.0
    %7407 = vmatpush1.msra.mxu0 0.0
    %7408 = vmatprep.subr.mxu0 0.0
    %7409 = vmatpush1.msra.mxu0 0.0
    %7410 = vmatprep.subr.mxu0 0.0
    %7411 = vmatpush1.msra.mxu0 0.0
    %7412 = vmatprep.subr.mxu0 0.0
    %7413 = vmatpush1.msra.mxu0 0.0
    %7414 = vmatprep.subr.mxu0 0.0
    %7415 = vmatpush1.msra.mxu0 0.0
    %7416 = vmatprep.subr.mxu0 0.0
    %7417 = vmatpush1.msra.mxu0 0.0
    %7418 = vmatprep.subr.mxu0 0.0
    %7419 = vmatpush1.msra.mxu0 0.0
    %7420 = vmatprep.subr.mxu0 0.0
    %7421 = vmatpush1.msra.mxu0 0.0
    %7422 = vmatprep.subr.mxu0 0.0
    %7423 = vmatpush1.msra.mxu0 0.0
    %7424 = vmatprep.subr.mxu0 0.0
    %7425 = vmatpush1.msra.mxu0 0.0
    %7426 = vmatprep.subr.mxu0 0.0
    %7427 = vmatpush1.msra.mxu0 0.0
    %7428 = vmatprep.subr.mxu0 0.0
    %7429 = vmatpush1.msra.mxu0 0.0
    %7430 = vmatprep.subr.mxu0 0.0
    %7431 = vmatpush1.msra.mxu0 0.0
    %7432 = vmatprep.subr.mxu0 0.0
    %7433 = vmatpush1.msra.mxu0 0.0
    %7434 = vmatprep.subr.mxu0 0.0
    %7435 = vmatpush1.msra.mxu0 0.0
    %7436 = vmatprep.subr.mxu0 0.0
    %7437 = vmatpush1.msra.mxu0 0.0
    %7438 = vmatprep.subr.mxu0 0.0
    %7439 = vmatpush1.msra.mxu0 0.0
    %7440 = vmatprep.subr.mxu0 0.0
    %7441 = vmatpush1.msra.mxu0 0.0
    %7442 = vmatprep.subr.mxu0 0.0
    %7443 = vmatpush1.msra.mxu0 0.0
    %7444 = vmatprep.subr.mxu0 0.0
    %7445 = vmatpush1.msra.mxu0 0.0
    %7446 = vmatprep.subr.mxu0 0.0
    %7447 = vmatpush1.msra.mxu0 0.0
    %7448 = vmatprep.subr.mxu0 0.0
    %7449 = vmatpush1.msra.mxu0 0.0
    %7450 = vmatprep.subr.mxu0 0.0
    %7451 = vmatpush1.msra.mxu0 0.0
    %7452 = vmatprep.subr.mxu0 0.0
    %7453 = vmatpush1.msra.mxu0 0.0
    %7454 = vmatprep.subr.mxu0 0.0
    %7455 = vmatpush1.msra.mxu0 0.0
    %7456 = vmatprep.subr.mxu0 0.0
    %7457 = vmatpush1.msra.mxu0 0.0
    %7458 = vmatprep.mubr.f32.mxu0 0.0
    %7459 = vmatmul.mubr.f32.gmra.mrb[0].mxu0 %v7389
    %v7460 = vpop.f32.mrb[0].mxu0
    %v7461 = vadd.f32 0.0, %v7460
    %v7462 = vpop.f32.mrb[0].mxu0
    %7463 = vdwg.mxu0
    %v7464 = vadd.f32 %v7386, %v7461
    %v7465 = vmul.f32 %v2174, %v3638
    %v7467 = vsel %vm4861, %v6756, 0
    %v7470 = vsel %vm4865, %v7465, 0
    %7472 = vmatprep.subr.mxu0 0.0
    %7473 = vmatpush1.msra.mxu0 %v7470
    %7474 = vmatprep.subr.mxu0 0.0
    %7475 = vmatpush1.msra.mxu0 0.0
    %7476 = vmatprep.subr.mxu0 0.0
    %7477 = vmatpush1.msra.mxu0 0.0
    %7478 = vmatprep.subr.mxu0 0.0
    %7479 = vmatpush1.msra.mxu0 0.0
    %7480 = vmatprep.subr.mxu0 0.0
    %7481 = vmatpush1.msra.mxu0 0.0
    %7482 = vmatprep.subr.mxu0 0.0
    %7483 = vmatpush1.msra.mxu0 0.0
    %7484 = vmatprep.subr.mxu0 0.0
    %7485 = vmatpush1.msra.mxu0 0.0
    %7486 = vmatprep.subr.mxu0 0.0
    %7487 = vmatpush1.msra.mxu0 0.0
    %7488 = vmatprep.subr.mxu0 0.0
    %7489 = vmatpush1.msra.mxu0 0.0
    %7490 = vmatprep.subr.mxu0 0.0
    %7491 = vmatpush1.msra.mxu0 0.0
    %7492 = vmatprep.subr.mxu0 0.0
    %7493 = vmatpush1.msra.mxu0 0.0
    %7494 = vmatprep.subr.mxu0 0.0
    %7495 = vmatpush1.msra.mxu0 0.0
    %7496 = vmatprep.subr.mxu0 0.0
    %7497 = vmatpush1.msra.mxu0 0.0
    %7498 = vmatprep.subr.mxu0 0.0
    %7499 = vmatpush1.msra.mxu0 0.0
    %7500 = vmatprep.subr.mxu0 0.0
    %7501 = vmatpush1.msra.mxu0 0.0
    %7502 = vmatprep.subr.mxu0 0.0
    %7503 = vmatpush1.msra.mxu0 0.0
    %7504 = vmatprep.subr.mxu0 0.0
    %7505 = vmatpush1.msra.mxu0 0.0
    %7506 = vmatprep.subr.mxu0 0.0
    %7507 = vmatpush1.msra.mxu0 0.0
    %7508 = vmatprep.subr.mxu0 0.0
    %7509 = vmatpush1.msra.mxu0 0.0
    %7510 = vmatprep.subr.mxu0 0.0
    %7511 = vmatpush1.msra.mxu0 0.0
    %7512 = vmatprep.subr.mxu0 0.0
    %7513 = vmatpush1.msra.mxu0 0.0
    %7514 = vmatprep.subr.mxu0 0.0
    %7515 = vmatpush1.msra.mxu0 0.0
    %7516 = vmatprep.subr.mxu0 0.0
    %7517 = vmatpush1.msra.mxu0 0.0
    %7518 = vmatprep.subr.mxu0 0.0
    %7519 = vmatpush1.msra.mxu0 0.0
    %7520 = vmatprep.subr.mxu0 0.0
    %7521 = vmatpush1.msra.mxu0 0.0
    %7522 = vmatprep.subr.mxu0 0.0
    %7523 = vmatpush1.msra.mxu0 0.0
    %7524 = vmatprep.subr.mxu0 0.0
    %7525 = vmatpush1.msra.mxu0 0.0
    %7526 = vmatprep.subr.mxu0 0.0
    %7527 = vmatpush1.msra.mxu0 0.0
    %7528 = vmatprep.subr.mxu0 0.0
    %7529 = vmatpush1.msra.mxu0 0.0
    %7530 = vmatprep.subr.mxu0 0.0
    %7531 = vmatpush1.msra.mxu0 0.0
    %7532 = vmatprep.subr.mxu0 0.0
    %7533 = vmatpush1.msra.mxu0 0.0
    %7534 = vmatprep.subr.mxu0 0.0
    %7535 = vmatpush1.msra.mxu0 0.0
    %7536 = vmatprep.mubr.f32.mxu0 0.0
    %7537 = vmatmul.mubr.f32.gmra.mrb[0].mxu0 %v7467
    %v7538 = vpop.f32.mrb[0].mxu0
    %v7539 = vadd.f32 0.0, %v7538
    %v7540 = vpop.f32.mrb[0].mxu0
    %7541 = vdwg.mxu0
    %v7542 = vadd.f32 %v7464, %v7539
    %v7543 = vmul.f32 %v2174, %v3720
    %v7545 = vsel %vm4861, %v6757, 0
    %v7548 = vsel %vm4865, %v7543, 0
    %7550 = vmatprep.subr.mxu0 0.0
    %7551 = vmatpush1.msra.mxu0 %v7548
    %7552 = vmatprep.subr.mxu0 0.0
    %7553 = vmatpush1.msra.mxu0 0.0
    %7554 = vmatprep.subr.mxu0 0.0
    %7555 = vmatpush1.msra.mxu0 0.0
    %7556 = vmatprep.subr.mxu0 0.0
    %7557 = vmatpush1.msra.mxu0 0.0
    %7558 = vmatprep.subr.mxu0 0.0
    %7559 = vmatpush1.msra.mxu0 0.0
    %7560 = vmatprep.subr.mxu0 0.0
    %7561 = vmatpush1.msra.mxu0 0.0
    %7562 = vmatprep.subr.mxu0 0.0
    %7563 = vmatpush1.msra.mxu0 0.0
    %7564 = vmatprep.subr.mxu0 0.0
    %7565 = vmatpush1.msra.mxu0 0.0
    %7566 = vmatprep.subr.mxu0 0.0
    %7567 = vmatpush1.msra.mxu0 0.0
    %7568 = vmatprep.subr.mxu0 0.0
    %7569 = vmatpush1.msra.mxu0 0.0
    %7570 = vmatprep.subr.mxu0 0.0
    %7571 = vmatpush1.msra.mxu0 0.0
    %7572 = vmatprep.subr.mxu0 0.0
    %7573 = vmatpush1.msra.mxu0 0.0
    %7574 = vmatprep.subr.mxu0 0.0
    %7575 = vmatpush1.msra.mxu0 0.0
    %7576 = vmatprep.subr.mxu0 0.0
    %7577 = vmatpush1.msra.mxu0 0.0
    %7578 = vmatprep.subr.mxu0 0.0
    %7579 = vmatpush1.msra.mxu0 0.0
    %7580 = vmatprep.subr.mxu0 0.0
    %7581 = vmatpush1.msra.mxu0 0.0
    %7582 = vmatprep.subr.mxu0 0.0
    %7583 = vmatpush1.msra.mxu0 0.0
    %7584 = vmatprep.subr.mxu0 0.0
    %7585 = vmatpush1.msra.mxu0 0.0
    %7586 = vmatprep.subr.mxu0 0.0
    %7587 = vmatpush1.msra.mxu0 0.0
    %7588 = vmatprep.subr.mxu0 0.0
    %7589 = vmatpush1.msra.mxu0 0.0
    %7590 = vmatprep.subr.mxu0 0.0
    %7591 = vmatpush1.msra.mxu0 0.0
    %7592 = vmatprep.subr.mxu0 0.0
    %7593 = vmatpush1.msra.mxu0 0.0
    %7594 = vmatprep.subr.mxu0 0.0
    %7595 = vmatpush1.msra.mxu0 0.0
    %7596 = vmatprep.subr.mxu0 0.0
    %7597 = vmatpush1.msra.mxu0 0.0
    %7598 = vmatprep.subr.mxu0 0.0
    %7599 = vmatpush1.msra.mxu0 0.0
    %7600 = vmatprep.subr.mxu0 0.0
    %7601 = vmatpush1.msra.mxu0 0.0
    %7602 = vmatprep.subr.mxu0 0.0
    %7603 = vmatpush1.msra.mxu0 0.0
    %7604 = vmatprep.subr.mxu0 0.0
    %7605 = vmatpush1.msra.mxu0 0.0
    %7606 = vmatprep.subr.mxu0 0.0
    %7607 = vmatpush1.msra.mxu0 0.0
    %7608 = vmatprep.subr.mxu0 0.0
    %7609 = vmatpush1.msra.mxu0 0.0
    %7610 = vmatprep.subr.mxu0 0.0
    %7611 = vmatpush1.msra.mxu0 0.0
    %7612 = vmatprep.subr.mxu0 0.0
    %7613 = vmatpush1.msra.mxu0 0.0
    %7614 = vmatprep.mubr.f32.mxu0 0.0
    %7615 = vmatmul.mubr.f32.gmra.mrb[0].mxu0 %v7545
    %v7616 = vpop.f32.mrb[0].mxu0
    %v7617 = vadd.f32 0.0, %v7616
    %v7618 = vpop.f32.mrb[0].mxu0
    %7619 = vdwg.mxu0
    %v7620 = vadd.f32 %v7542, %v7617
    %v7621 = vmul.f32 %v2174, %v3802
    %v7623 = vsel %vm4861, %v6758, 0
    %v7626 = vsel %vm4865, %v7621, 0
    %7628 = vmatprep.subr.mxu0 0.0
    %7629 = vmatpush1.msra.mxu0 %v7626
    %7630 = vmatprep.subr.mxu0 0.0
    %7631 = vmatpush1.msra.mxu0 0.0
    %7632 = vmatprep.subr.mxu0 0.0
    %7633 = vmatpush1.msra.mxu0 0.0
    %7634 = vmatprep.subr.mxu0 0.0
    %7635 = vmatpush1.msra.mxu0 0.0
    %7636 = vmatprep.subr.mxu0 0.0
    %7637 = vmatpush1.msra.mxu0 0.0
    %7638 = vmatprep.subr.mxu0 0.0
    %7639 = vmatpush1.msra.mxu0 0.0
    %7640 = vmatprep.subr.mxu0 0.0
    %7641 = vmatpush1.msra.mxu0 0.0
    %7642 = vmatprep.subr.mxu0 0.0
    %7643 = vmatpush1.msra.mxu0 0.0
    %7644 = vmatprep.subr.mxu0 0.0
    %7645 = vmatpush1.msra.mxu0 0.0
    %7646 = vmatprep.subr.mxu0 0.0
    %7647 = vmatpush1.msra.mxu0 0.0
    %7648 = vmatprep.subr.mxu0 0.0
    %7649 = vmatpush1.msra.mxu0 0.0
    %7650 = vmatprep.subr.mxu0 0.0
    %7651 = vmatpush1.msra.mxu0 0.0
    %7652 = vmatprep.subr.mxu0 0.0
    %7653 = vmatpush1.msra.mxu0 0.0
    %7654 = vmatprep.subr.mxu0 0.0
    %7655 = vmatpush1.msra.mxu0 0.0
    %7656 = vmatprep.subr.mxu0 0.0
    %7657 = vmatpush1.msra.mxu0 0.0
    %7658 = vmatprep.subr.mxu0 0.0
    %7659 = vmatpush1.msra.mxu0 0.0
    %7660 = vmatprep.subr.mxu0 0.0
    %7661 = vmatpush1.msra.mxu0 0.0
    %7662 = vmatprep.subr.mxu0 0.0
    %7663 = vmatpush1.msra.mxu0 0.0
    %7664 = vmatprep.subr.mxu0 0.0
    %7665 = vmatpush1.msra.mxu0 0.0
    %7666 = vmatprep.subr.mxu0 0.0
    %7667 = vmatpush1.msra.mxu0 0.0
    %7668 = vmatprep.subr.mxu0 0.0
    %7669 = vmatpush1.msra.mxu0 0.0
    %7670 = vmatprep.subr.mxu0 0.0
    %7671 = vmatpush1.msra.mxu0 0.0
    %7672 = vmatprep.subr.mxu0 0.0
    %7673 = vmatpush1.msra.mxu0 0.0
    %7674 = vmatprep.subr.mxu0 0.0
    %7675 = vmatpush1.msra.mxu0 0.0
    %7676 = vmatprep.subr.mxu0 0.0
    %7677 = vmatpush1.msra.mxu0 0.0
    %7678 = vmatprep.subr.mxu0 0.0
    %7679 = vmatpush1.msra.mxu0 0.0
    %7680 = vmatprep.subr.mxu0 0.0
    %7681 = vmatpush1.msra.mxu0 0.0
    %7682 = vmatprep.subr.mxu0 0.0
    %7683 = vmatpush1.msra.mxu0 0.0
    %7684 = vmatprep.subr.mxu0 0.0
    %7685 = vmatpush1.msra.mxu0 0.0
    %7686 = vmatprep.subr.mxu0 0.0
    %7687 = vmatpush1.msra.mxu0 0.0
    %7688 = vmatprep.subr.mxu0 0.0
    %7689 = vmatpush1.msra.mxu0 0.0
    %7690 = vmatprep.subr.mxu0 0.0
    %7691 = vmatpush1.msra.mxu0 0.0
    %7692 = vmatprep.mubr.f32.mxu0 0.0
    %7693 = vmatmul.mubr.f32.gmra.mrb[0].mxu0 %v7623
    %v7694 = vpop.f32.mrb[0].mxu0
    %v7695 = vadd.f32 0.0, %v7694
    %v7696 = vpop.f32.mrb[0].mxu0
    %7697 = vdwg.mxu0
    %v7698 = vadd.f32 %v7620, %v7695
    %v7699 = vmul.f32 %v2174, %v3884
    %v7701 = vsel %vm4861, %v6759, 0
    %v7704 = vsel %vm4865, %v7699, 0
    %7706 = vmatprep.subr.mxu0 0.0
    %7707 = vmatpush1.msra.mxu0 %v7704
    %7708 = vmatprep.subr.mxu0 0.0
    %7709 = vmatpush1.msra.mxu0 0.0
    %7710 = vmatprep.subr.mxu0 0.0
    %7711 = vmatpush1.msra.mxu0 0.0
    %7712 = vmatprep.subr.mxu0 0.0
    %7713 = vmatpush1.msra.mxu0 0.0
    %7714 = vmatprep.subr.mxu0 0.0
    %7715 = vmatpush1.msra.mxu0 0.0
    %7716 = vmatprep.subr.mxu0 0.0
    %7717 = vmatpush1.msra.mxu0 0.0
    %7718 = vmatprep.subr.mxu0 0.0
    %7719 = vmatpush1.msra.mxu0 0.0
    %7720 = vmatprep.subr.mxu0 0.0
    %7721 = vmatpush1.msra.mxu0 0.0
    %7722 = vmatprep.subr.mxu0 0.0
    %7723 = vmatpush1.msra.mxu0 0.0
    %7724 = vmatprep.subr.mxu0 0.0
    %7725 = vmatpush1.msra.mxu0 0.0
    %7726 = vmatprep.subr.mxu0 0.0
    %7727 = vmatpush1.msra.mxu0 0.0
    %7728 = vmatprep.subr.mxu0 0.0
    %7729 = vmatpush1.msra.mxu0 0.0
    %7730 = vmatprep.subr.mxu0 0.0
    %7731 = vmatpush1.msra.mxu0 0.0
    %7732 = vmatprep.subr.mxu0 0.0
    %7733 = vmatpush1.msra.mxu0 0.0
    %7734 = vmatprep.subr.mxu0 0.0
    %7735 = vmatpush1.msra.mxu0 0.0
    %7736 = vmatprep.subr.mxu0 0.0
    %7737 = vmatpush1.msra.mxu0 0.0
    %7738 = vmatprep.subr.mxu0 0.0
    %7739 = vmatpush1.msra.mxu0 0.0
    %7740 = vmatprep.subr.mxu0 0.0
    %7741 = vmatpush1.msra.mxu0 0.0
    %7742 = vmatprep.subr.mxu0 0.0
    %7743 = vmatpush1.msra.mxu0 0.0
    %7744 = vmatprep.subr.mxu0 0.0
    %7745 = vmatpush1.msra.mxu0 0.0
    %7746 = vmatprep.subr.mxu0 0.0
    %7747 = vmatpush1.msra.mxu0 0.0
    %7748 = vmatprep.subr.mxu0 0.0
    %7749 = vmatpush1.msra.mxu0 0.0
    %7750 = vmatprep.subr.mxu0 0.0
    %7751 = vmatpush1.msra.mxu0 0.0
    %7752 = vmatprep.subr.mxu0 0.0
    %7753 = vmatpush1.msra.mxu0 0.0
    %7754 = vmatprep.subr.mxu0 0.0
    %7755 = vmatpush1.msra.mxu0 0.0
    %7756 = vmatprep.subr.mxu0 0.0
    %7757 = vmatpush1.msra.mxu0 0.0
    %7758 = vmatprep.subr.mxu0 0.0
    %7759 = vmatpush1.msra.mxu0 0.0
    %7760 = vmatprep.subr.mxu0 0.0
    %7761 = vmatpush1.msra.mxu0 0.0
    %7762 = vmatprep.subr.mxu0 0.0
    %7763 = vmatpush1.msra.mxu0 0.0
    %7764 = vmatprep.subr.mxu0 0.0
    %7765 = vmatpush1.msra.mxu0 0.0
    %7766 = vmatprep.subr.mxu0 0.0
    %7767 = vmatpush1.msra.mxu0 0.0
    %7768 = vmatprep.subr.mxu0 0.0
    %7769 = vmatpush1.msra.mxu0 0.0
    %7770 = vmatprep.mubr.f32.mxu0 0.0
    %7771 = vmatmul.mubr.f32.gmra.mrb[0].mxu0 %v7701
    %v7772 = vpop.f32.mrb[0].mxu0
    %v7773 = vadd.f32 0.0, %v7772
    %v7774 = vpop.f32.mrb[0].mxu0
    %7775 = vdwg.mxu0
    %v7776 = vadd.f32 %v7698, %v7773
    %v7777 = vmul.f32 %v2174, %v3966
    %v7779 = vsel %vm4861, %v6760, 0
    %v7782 = vsel %vm4865, %v7777, 0
    %7784 = vmatprep.subr.mxu0 0.0
    %7785 = vmatpush1.msra.mxu0 %v7782
    %7786 = vmatprep.subr.mxu0 0.0
    %7787 = vmatpush1.msra.mxu0 0.0
    %7788 = vmatprep.subr.mxu0 0.0
    %7789 = vmatpush1.msra.mxu0 0.0
    %7790 = vmatprep.subr.mxu0 0.0
    %7791 = vmatpush1.msra.mxu0 0.0
    %7792 = vmatprep.subr.mxu0 0.0
    %7793 = vmatpush1.msra.mxu0 0.0
    %7794 = vmatprep.subr.mxu0 0.0
    %7795 = vmatpush1.msra.mxu0 0.0
    %7796 = vmatprep.subr.mxu0 0.0
    %7797 = vmatpush1.msra.mxu0 0.0
    %7798 = vmatprep.subr.mxu0 0.0
    %7799 = vmatpush1.msra.mxu0 0.0
    %7800 = vmatprep.subr.mxu0 0.0
    %7801 = vmatpush1.msra.mxu0 0.0
    %7802 = vmatprep.subr.mxu0 0.0
    %7803 = vmatpush1.msra.mxu0 0.0
    %7804 = vmatprep.subr.mxu0 0.0
    %7805 = vmatpush1.msra.mxu0 0.0
    %7806 = vmatprep.subr.mxu0 0.0
    %7807 = vmatpush1.msra.mxu0 0.0
    %7808 = vmatprep.subr.mxu0 0.0
    %7809 = vmatpush1.msra.mxu0 0.0
    %7810 = vmatprep.subr.mxu0 0.0
    %7811 = vmatpush1.msra.mxu0 0.0
    %7812 = vmatprep.subr.mxu0 0.0
    %7813 = vmatpush1.msra.mxu0 0.0
    %7814 = vmatprep.subr.mxu0 0.0
    %7815 = vmatpush1.msra.mxu0 0.0
    %7816 = vmatprep.subr.mxu0 0.0
    %7817 = vmatpush1.msra.mxu0 0.0
    %7818 = vmatprep.subr.mxu0 0.0
    %7819 = vmatpush1.msra.mxu0 0.0
    %7820 = vmatprep.subr.mxu0 0.0
    %7821 = vmatpush1.msra.mxu0 0.0
    %7822 = vmatprep.subr.mxu0 0.0
    %7823 = vmatpush1.msra.mxu0 0.0
    %7824 = vmatprep.subr.mxu0 0.0
    %7825 = vmatpush1.msra.mxu0 0.0
    %7826 = vmatprep.subr.mxu0 0.0
    %7827 = vmatpush1.msra.mxu0 0.0
    %7828 = vmatprep.subr.mxu0 0.0
    %7829 = vmatpush1.msra.mxu0 0.0
    %7830 = vmatprep.subr.mxu0 0.0
    %7831 = vmatpush1.msra.mxu0 0.0
    %7832 = vmatprep.subr.mxu0 0.0
    %7833 = vmatpush1.msra.mxu0 0.0
    %7834 = vmatprep.subr.mxu0 0.0
    %7835 = vmatpush1.msra.mxu0 0.0
    %7836 = vmatprep.subr.mxu0 0.0
    %7837 = vmatpush1.msra.mxu0 0.0
    %7838 = vmatprep.subr.mxu0 0.0
    %7839 = vmatpush1.msra.mxu0 0.0
    %7840 = vmatprep.subr.mxu0 0.0
    %7841 = vmatpush1.msra.mxu0 0.0
    %7842 = vmatprep.subr.mxu0 0.0
    %7843 = vmatpush1.msra.mxu0 0.0
    %7844 = vmatprep.subr.mxu0 0.0
    %7845 = vmatpush1.msra.mxu0 0.0
    %7846 = vmatprep.subr.mxu0 0.0
    %7847 = vmatpush1.msra.mxu0 0.0
    %7848 = vmatprep.mubr.f32.mxu0 0.0
    %7849 = vmatmul.mubr.f32.gmra.mrb[0].mxu0 %v7779
    %v7850 = vpop.f32.mrb[0].mxu0
    %v7851 = vadd.f32 0.0, %v7850
    %v7852 = vpop.f32.mrb[0].mxu0
    %7853 = vdwg.mxu0
    %v7854 = vadd.f32 %v7776, %v7851
    %v7855 = vmul.f32 %v2174, %v4048
    %v7857 = vsel %vm4861, %v6761, 0
    %v7860 = vsel %vm4865, %v7855, 0
    %7862 = vmatprep.subr.mxu0 0.0
    %7863 = vmatpush1.msra.mxu0 %v7860
    %7864 = vmatprep.subr.mxu0 0.0
    %7865 = vmatpush1.msra.mxu0 0.0
    %7866 = vmatprep.subr.mxu0 0.0
    %7867 = vmatpush1.msra.mxu0 0.0
    %7868 = vmatprep.subr.mxu0 0.0
    %7869 = vmatpush1.msra.mxu0 0.0
    %7870 = vmatprep.subr.mxu0 0.0
    %7871 = vmatpush1.msra.mxu0 0.0
    %7872 = vmatprep.subr.mxu0 0.0
    %7873 = vmatpush1.msra.mxu0 0.0
    %7874 = vmatprep.subr.mxu0 0.0
    %7875 = vmatpush1.msra.mxu0 0.0
    %7876 = vmatprep.subr.mxu0 0.0
    %7877 = vmatpush1.msra.mxu0 0.0
    %7878 = vmatprep.subr.mxu0 0.0
    %7879 = vmatpush1.msra.mxu0 0.0
    %7880 = vmatprep.subr.mxu0 0.0
    %7881 = vmatpush1.msra.mxu0 0.0
    %7882 = vmatprep.subr.mxu0 0.0
    %7883 = vmatpush1.msra.mxu0 0.0
    %7884 = vmatprep.subr.mxu0 0.0
    %7885 = vmatpush1.msra.mxu0 0.0
    %7886 = vmatprep.subr.mxu0 0.0
    %7887 = vmatpush1.msra.mxu0 0.0
    %7888 = vmatprep.subr.mxu0 0.0
    %7889 = vmatpush1.msra.mxu0 0.0
    %7890 = vmatprep.subr.mxu0 0.0
    %7891 = vmatpush1.msra.mxu0 0.0
    %7892 = vmatprep.subr.mxu0 0.0
    %7893 = vmatpush1.msra.mxu0 0.0
    %7894 = vmatprep.subr.mxu0 0.0
    %7895 = vmatpush1.msra.mxu0 0.0
    %7896 = vmatprep.subr.mxu0 0.0
    %7897 = vmatpush1.msra.mxu0 0.0
    %7898 = vmatprep.subr.mxu0 0.0
    %7899 = vmatpush1.msra.mxu0 0.0
    %7900 = vmatprep.subr.mxu0 0.0
    %7901 = vmatpush1.msra.mxu0 0.0
    %7902 = vmatprep.subr.mxu0 0.0
    %7903 = vmatpush1.msra.mxu0 0.0
    %7904 = vmatprep.subr.mxu0 0.0
    %7905 = vmatpush1.msra.mxu0 0.0
    %7906 = vmatprep.subr.mxu0 0.0
    %7907 = vmatpush1.msra.mxu0 0.0
    %7908 = vmatprep.subr.mxu0 0.0
    %7909 = vmatpush1.msra.mxu0 0.0
    %7910 = vmatprep.subr.mxu0 0.0
    %7911 = vmatpush1.msra.mxu0 0.0
    %7912 = vmatprep.subr.mxu0 0.0
    %7913 = vmatpush1.msra.mxu0 0.0
    %7914 = vmatprep.subr.mxu0 0.0
    %7915 = vmatpush1.msra.mxu0 0.0
    %7916 = vmatprep.subr.mxu0 0.0
    %7917 = vmatpush1.msra.mxu0 0.0
    %7918 = vmatprep.subr.mxu0 0.0
    %7919 = vmatpush1.msra.mxu0 0.0
    %7920 = vmatprep.subr.mxu0 0.0
    %7921 = vmatpush1.msra.mxu0 0.0
    %7922 = vmatprep.subr.mxu0 0.0
    %7923 = vmatpush1.msra.mxu0 0.0
    %7924 = vmatprep.subr.mxu0 0.0
    %7925 = vmatpush1.msra.mxu0 0.0
    %7926 = vmatprep.mubr.f32.mxu0 0.0
    %7927 = vmatmul.mubr.f32.gmra.mrb[0].mxu0 %v7857
    %v7928 = vpop.f32.mrb[0].mxu0
    %v7929 = vadd.f32 0.0, %v7928
    %v7930 = vpop.f32.mrb[0].mxu0
    %7931 = vdwg.mxu0
    %v7932 = vadd.f32 %v7854, %v7929
    %v7933 = vmul.f32 %v2174, %v4130
    %v7935 = vsel %vm4861, %v6762, 0
    %v7938 = vsel %vm4865, %v7933, 0
    %7940 = vmatprep.subr.mxu0 0.0
    %7941 = vmatpush1.msra.mxu0 %v7938
    %7942 = vmatprep.subr.mxu0 0.0
    %7943 = vmatpush1.msra.mxu0 0.0
    %7944 = vmatprep.subr.mxu0 0.0
    %7945 = vmatpush1.msra.mxu0 0.0
    %7946 = vmatprep.subr.mxu0 0.0
    %7947 = vmatpush1.msra.mxu0 0.0
    %7948 = vmatprep.subr.mxu0 0.0
    %7949 = vmatpush1.msra.mxu0 0.0
    %7950 = vmatprep.subr.mxu0 0.0
    %7951 = vmatpush1.msra.mxu0 0.0
    %7952 = vmatprep.subr.mxu0 0.0
    %7953 = vmatpush1.msra.mxu0 0.0
    %7954 = vmatprep.subr.mxu0 0.0
    %7955 = vmatpush1.msra.mxu0 0.0
    %7956 = vmatprep.subr.mxu0 0.0
    %7957 = vmatpush1.msra.mxu0 0.0
    %7958 = vmatprep.subr.mxu0 0.0
    %7959 = vmatpush1.msra.mxu0 0.0
    %7960 = vmatprep.subr.mxu0 0.0
    %7961 = vmatpush1.msra.mxu0 0.0
    %7962 = vmatprep.subr.mxu0 0.0
    %7963 = vmatpush1.msra.mxu0 0.0
    %7964 = vmatprep.subr.mxu0 0.0
    %7965 = vmatpush1.msra.mxu0 0.0
    %7966 = vmatprep.subr.mxu0 0.0
    %7967 = vmatpush1.msra.mxu0 0.0
    %7968 = vmatprep.subr.mxu0 0.0
    %7969 = vmatpush1.msra.mxu0 0.0
    %7970 = vmatprep.subr.mxu0 0.0
    %7971 = vmatpush1.msra.mxu0 0.0
    %7972 = vmatprep.subr.mxu0 0.0
    %7973 = vmatpush1.msra.mxu0 0.0
    %7974 = vmatprep.subr.mxu0 0.0
    %7975 = vmatpush1.msra.mxu0 0.0
    %7976 = vmatprep.subr.mxu0 0.0
    %7977 = vmatpush1.msra.mxu0 0.0
    %7978 = vmatprep.subr.mxu0 0.0
    %7979 = vmatpush1.msra.mxu0 0.0
    %7980 = vmatprep.subr.mxu0 0.0
    %7981 = vmatpush1.msra.mxu0 0.0
    %7982 = vmatprep.subr.mxu0 0.0
    %7983 = vmatpush1.msra.mxu0 0.0
    %7984 = vmatprep.subr.mxu0 0.0
    %7985 = vmatpush1.msra.mxu0 0.0
    %7986 = vmatprep.subr.mxu0 0.0
    %7987 = vmatpush1.msra.mxu0 0.0
    %7988 = vmatprep.subr.mxu0 0.0
    %7989 = vmatpush1.msra.mxu0 0.0
    %7990 = vmatprep.subr.mxu0 0.0
    %7991 = vmatpush1.msra.mxu0 0.0
    %7992 = vmatprep.subr.mxu0 0.0
    %7993 = vmatpush1.msra.mxu0 0.0
    %7994 = vmatprep.subr.mxu0 0.0
    %7995 = vmatpush1.msra.mxu0 0.0
    %7996 = vmatprep.subr.mxu0 0.0
    %7997 = vmatpush1.msra.mxu0 0.0
    %7998 = vmatprep.subr.mxu0 0.0
    %7999 = vmatpush1.msra.mxu0 0.0
    %8000 = vmatprep.subr.mxu0 0.0
    %8001 = vmatpush1.msra.mxu0 0.0
    %8002 = vmatprep.subr.mxu0 0.0
    %8003 = vmatpush1.msra.mxu0 0.0
    %8004 = vmatprep.mubr.f32.mxu0 0.0
    %8005 = vmatmul.mubr.f32.gmra.mrb[0].mxu0 %v7935
    %v8006 = vpop.f32.mrb[0].mxu0
    %v8007 = vadd.f32 0.0, %v8006
    %v8008 = vpop.f32.mrb[0].mxu0
    %8009 = vdwg.mxu0
    %v8010 = vadd.f32 %v7932, %v8007
    %8011 = vst [vmem:[#allocation10] sm:$0x7] %v6109
    %8012 = vst [vmem:[#allocation11] sm:$0x3] %v8010
    // Predicated region
    $region82: #{tpu_custom_call.1} parent=1 // pred_check
      _
    $region83: #{tpu_custom_call.1} parent=1 // pred_check_branch
      %8014 = sbr.rel (0) target = $region85
    $region84: #{tpu_custom_call.1} parent=1 // pred_region
      %s8016 = ssub.s32 64, 64
      %8017 = vsyncadd [#allocation4], %s8016
      %s8019 = sshll.u32 [#allocation10], 4
      %s8020 = int_to_ptr.vmem [resolvable:$true] %s8019
      %8022 = dma.vmem_to_hbm [thread:$0]  %s8020, 64, %s16, [#allocation4]
    $region85: #{tpu_custom_call.1} parent=1 // pred_fallthru
      _
    // Predicated region
    $region86: #{tpu_custom_call.1} parent=1 // pred_check
      _
    $region87: #{tpu_custom_call.1} parent=1 // pred_check_branch
      %8024 = sbr.rel (0) target = $region89
    $region88: #{tpu_custom_call.1} parent=1 // pred_region
      %s8026 = ssub.s32 32, 32
      %8027 = vsyncadd [#allocation12], %s8026
      %s8029 = sshll.u32 [#allocation11], 4
      %s8030 = int_to_ptr.vmem [resolvable:$true] %s8029
      %8032 = dma.vmem_to_hbm [thread:$0]  %s8030, 32, %s17, [#allocation12]
    $region89: #{tpu_custom_call.1} parent=1 // pred_fallthru
      _
    // Predicated region
    $region90: #{tpu_custom_call.1} parent=1 // pred_check
      _
    $region91: #{tpu_custom_call.1} parent=1 // pred_check_branch
      %8034 = sbr.rel (0) target = $region93
    $region92: #{tpu_custom_call.1} parent=1 // pred_region
      %8035 = dma.done [#allocation4], 64
    $region93: #{tpu_custom_call.1} parent=1 // pred_fallthru
      _
    // Predicated region
    $region94: #{tpu_custom_call.1} parent=1 // pred_check
      _
    $region95: #{tpu_custom_call.1} parent=1 // pred_check_branch
      %8037 = sbr.rel (0) target = $region97
    $region96: #{tpu_custom_call.1} parent=1 // pred_region
      %8038 = dma.done [#allocation12], 32
    $region97: #{tpu_custom_call.1} parent=1 // pred_fallthru
      _
    %8039 = vsyncpa [#allocation3], 1
    %8040 = vsyncpa [#allocation6], 1
    %8041 = vsyncpa [#allocation9], 1
    %8042 = vsyncpa [#allocation4], 1
    %8043 = vsyncpa [#allocation12], 1

</llo_original>
